<compile_context>
chip_gen: v7x
topology: tpu7x:2x2x1
jax: 0.10.0
libtpu: 0.0.40
codegen_flags: <defaults>
</compile_context>

<pallas_src>
import math

import numpy as np
import jax
import jax.numpy as jnp
from jax.experimental import pallas as pl
from jax.experimental.pallas import tpu as pltpu

# ----------------------------- small, module-consistent sizes -----------------------------
B = 2                       # batch
IMG_DIM = 16
PATCH_DIM = 8
G = IMG_DIM // PATCH_DIM    # 2  -> token grid per spatial dim
S = G * G * G               # 8  -> num_patches == seq_length
NB = B * S                  # 16 -> batch folded into the matmul M dimension
C_FEAT = 128                # Unet bottleneck channels (hardcoded 128 in the module)
EMBED = 512                 # embedding_dim (fc = nn.Linear(512, 2) hardcodes 512)
NUM_HEADS = 8
HEAD_DIM = EMBED // NUM_HEADS
NUM_LAYERS = 1
HIDDEN = 128                # transformer MLP hidden_dim
NUM_CLASSES = 2
CLS_PAD = 128               # classes zero-padded to a full 128-lane register (dense stores)
K_TAPS = 27
K_IM2COL = K_TAPS * C_FEAT  # 3456 -> single conv contraction depth
LN_EPS = 1e-5
BN_EPS = 1e-5
NEG_INF = -1e30


# ----------------------------- trace-time constants (numpy) -----------------------------

def _build_tap_selectors():
    """(27*NB, NB) 0/1 selection matrices: sel[tap*NB:(tap+1)*NB] @ act gathers, for every
    output token, its zero-padded 3x3x3 neighbour (in-kernel im2col).  Tap order
    (dz, dy, dx) nested, matching the flattened conv weight; never crosses batches."""
    sel = np.zeros((K_TAPS, NB, NB), np.float32)
    tap = 0
    for dz in (-1, 0, 1):
        for dy in (-1, 0, 1):
            for dx in (-1, 0, 1):
                for b in range(B):
                    for z in range(G):
                        for y in range(G):
                            for x in range(G):
                                zz, yy, xx = z + dz, y + dy, x + dx
                                if 0 <= zz < G and 0 <= yy < G and 0 <= xx < G:
                                    n_out = b * S + (z * G + y) * G + x
                                    n_in = b * S + (zz * G + yy) * G + xx
                                    sel[tap, n_out, n_in] = 1.0
                tap += 1
    return sel.reshape(K_TAPS * NB, NB)


_TAP_SEL = _build_tap_selectors()                                   # (27*NB, NB)
_tok = np.arange(NB)
_SAME_BATCH = (_tok[:, None] // S) == (_tok[None, :] // S)
_ATTN_MASK = np.where(_SAME_BATCH, 0.0, NEG_INF).astype(np.float32)  # (NB, NB) block-diag
_GAP_POOL = (_SAME_BATCH[::S].astype(np.float32) / S)                # (B, NB) mean pooling


# =========================== Pallas kernel ===========================

def _layer_norm(x, gamma, beta):
    mu = jnp.mean(x, axis=-1, keepdims=True)
    var = jnp.mean(jnp.square(x - mu), axis=-1, keepdims=True)
    return (x - mu) * jax.lax.rsqrt(var + LN_EPS) * gamma + beta


def _taad_kernel(feat_ref, bns_ref, bnb_ref, sel_ref, wc_ref, bpe_ref, mask_ref, pool_ref,
                 ln1g_ref, ln1b_ref, bqkv_ref, bo_ref, ln2g_ref, ln2b_ref, b1_ref, b2_ref,
                 fcb_ref,
                 wqkv_hbm, wo_hbm, w1_hbm, w2_hbm, fcw_hbm,
                 enc_ref, hm_ref, y_ref,
                 im2col_ref, wqkv_v, wo_v, w1_v, w2_v, fcw_v, sems):
    f32, bf16 = jnp.float32, jnp.bfloat16

    # ---- kick off the transformer / fc weight DMAs immediately: they run under the
    #      BN + gather + conv compute below (the kernel is weight-DMA bound) ----
    cp_qkv = pltpu.make_async_copy(wqkv_hbm, wqkv_v, sems.at[0])
    cp_o = pltpu.make_async_copy(wo_hbm, wo_v, sems.at[1])
    cp_w1 = pltpu.make_async_copy(w1_hbm, w1_v, sems.at[2])
    cp_w2 = pltpu.make_async_copy(w2_hbm, w2_v, sems.at[3])
    cp_fc = pltpu.make_async_copy(fcw_hbm, fcw_v, sems.at[4])
    cp_qkv.start(); cp_o.start(); cp_w1.start(); cp_w2.start(); cp_fc.start()

    # ---- BatchNorm3d(128) (eval mode; running stats folded into scale/shift) + ReLU ----
    act = jnp.maximum(feat_ref[...] * bns_ref[...] + bnb_ref[...], 0.0).astype(bf16)

    # ---- conv_x (3x3x3, stride 1, zero pad 1) as im2col + ONE K=3456 MXU matmul:
    #      exact 0/1 selection matmul gathers every token's 27 neighbours, the 27 tap
    #      blocks are scattered into a lane-dense (NB, 27*128) slab, one big matmul ----
    gath = jnp.dot(sel_ref[...], act, preferred_element_type=f32).astype(bf16)  # (27*NB,128)
    for t in range(K_TAPS):
        im2col_ref[:, t * C_FEAT:(t + 1) * C_FEAT] = gath[t * NB:(t + 1) * NB, :]
    h = jnp.dot(im2col_ref[...], wc_ref[...], preferred_element_type=f32)       # (NB, 512)
    # conv bias + learned positional encoding, pre-folded; pe_dropout has p = 0.0
    h = h + bpe_ref[...]

    mask = mask_ref[...]                      # forbids attention across folded batch rows

    # transformer weights must have landed before the layer loop
    cp_qkv.wait(); cp_o.wait(); cp_w1.wait(); cp_w2.wait()

    for l in range(NUM_LAYERS):
        # ---- pre-norm multi-head self-attention + residual (fused QKV / O projections;
        #      1/sqrt(head_dim) is folded into the Q weights at init) ----
        ln = _layer_norm(h, ln1g_ref[l], ln1b_ref[l]).astype(bf16)
        qkv = jnp.dot(ln, wqkv_v[l], preferred_element_type=f32) + bqkv_ref[l]   # (NB, 3E)
        ctx = []
        for hd in range(NUM_HEADS):
            q = qkv[:, hd * HEAD_DIM:(hd + 1) * HEAD_DIM]
            k = qkv[:, EMBED + hd * HEAD_DIM:EMBED + (hd + 1) * HEAD_DIM]
            v = qkv[:, 2 * EMBED + hd * HEAD_DIM:2 * EMBED + (hd + 1) * HEAD_DIM]
            s = jax.lax.dot_general(q.astype(bf16), k.astype(bf16),
                                    (((1,), (1,)), ((), ())),
                                    preferred_element_type=f32) + mask          # (NB, NB)
            s = s - jnp.max(s, axis=-1, keepdims=True)
            p = jnp.exp(s)                                                       # attn_dropout p=0
            p = p * pl.reciprocal(jnp.sum(p, axis=-1, keepdims=True), approx=True)
            ctx.append(jnp.dot(p.astype(bf16), v.astype(bf16),
                               preferred_element_type=f32))                      # (NB, 64)
        ctx = jnp.concatenate(ctx, axis=-1).astype(bf16)                         # (NB, 512)
        h = h + jnp.dot(ctx, wo_v[l], preferred_element_type=f32) + bo_ref[l]

        # ---- pre-norm MLP (GELU) + residual ----
        ln2 = _layer_norm(h, ln2g_ref[l], ln2b_ref[l]).astype(bf16)
        f = jnp.dot(ln2, w1_v[l], preferred_element_type=f32) + b1_ref[l]
        f = jax.nn.gelu(f, approximate=True)   # TODO(synk): torch nn.GELU default is erf
        f = jnp.dot(f.astype(bf16), w2_v[l], preferred_element_type=f32) + b2_ref[l]
        h = h + f

    enc_ref[...] = h                                                             # (NB, EMBED)

    # ---- cls_branch: hm[n,k] = sum_e h[n,e] * fc_w[k,e] (matches feat*fc_weights, sum(2));
    #      logits y = fc(GAP(h)) == pool @ hm + fc_b by linearity, reusing the hm matmul ----
    cp_fc.wait()
    hm = jnp.dot(h.astype(bf16), fcw_v[...], preferred_element_type=f32)         # (NB, 128)
    hm_ref[...] = hm
    y_ref[...] = jnp.dot(pool_ref[...], hm, preferred_element_type=f32) + fcb_ref[...]


# =========================== wrapper (glue) ===========================

def deep_taad_forward(feat_ncdhw, params):
    """feat_ncdhw: (B, 128, g, g, g) Unet bottleneck feature, torch NCDHW layout.
    Returns (y, heatmap, encoder_output).
    TODO(synk): decode() raises NotImplementedError in the reference -> no decoder_output.
    """
    assert feat_ncdhw.shape == (B, C_FEAT, G, G, G)
    # NCDHW -> channels-last; flatten (batch, z, y, x) into the matmul M dimension.
    feat = jnp.transpose(feat_ncdhw, (0, 2, 3, 4, 1)).reshape(NB, C_FEAT)

    # Fold BatchNorm3d(128) eval-mode running stats into a single scale/shift.
    bn_scale = params["bn_gamma"] * jax.lax.rsqrt(params["bn_var"] + BN_EPS)
    bn_shift = (params["bn_beta"] - params["bn_mean"] * bn_scale).reshape(1, C_FEAT)
    bn_scale = bn_scale.reshape(1, C_FEAT)

    # conv bias + (batch-tiled) learned positional encoding as one additive slab.
    bias_pe = params["conv_b"] + jnp.tile(params["pos_emb"], (B, 1))   # (NB, EMBED)

    sel = jnp.asarray(_TAP_SEL, jnp.bfloat16)                 # exact 0/1 gather matrix
    mask = jnp.asarray(_ATTN_MASK)
    pool = jnp.asarray(_GAP_POOL)

    vmem = pl.BlockSpec(memory_space=pltpu.MemorySpace.VMEM)  # small operands: resident
    hbm = pl.BlockSpec(memory_space=pl.ANY)                   # big weights: manual DMA

    out_shape = (jax.ShapeDtypeStruct((NB, EMBED), jnp.float32),    # encoder output
                 jax.ShapeDtypeStruct((NB, CLS_PAD), jnp.float32),  # CAM heatmap (lane padded)
                 jax.ShapeDtypeStruct((B, CLS_PAD), jnp.float32))   # logits (lane padded)

    enc, hm, y = pl.pallas_call(
        _taad_kernel,
        out_shape=out_shape,
        in_specs=[vmem] * 17 + [hbm] * 5,
        scratch_shapes=[
            pltpu.VMEM((NB, K_IM2COL), jnp.bfloat16),                     # im2col slab
            pltpu.VMEM((NUM_LAYERS, EMBED, 3 * EMBED), jnp.bfloat16),     # fused Wqkv
            pltpu.VMEM((NUM_LAYERS, EMBED, EMBED), jnp.bfloat16),         # Wo
            pltpu.VMEM((NUM_LAYERS, EMBED, HIDDEN), jnp.bfloat16),        # W1
            pltpu.VMEM((NUM_LAYERS, HIDDEN, EMBED), jnp.bfloat16),        # W2
            pltpu.VMEM((EMBED, CLS_PAD), jnp.bfloat16),                   # fc weight
            pltpu.SemaphoreType.DMA((5,)),
        ],
        # No grid: one fused step.  Actual residency ~7 MB, so 16 MiB leaves headroom on
        # every generation (incl. v7x's 64 MiB physical / 32 MiB scoped default).
        compiler_params=pltpu.CompilerParams(vmem_limit_bytes=16 * 1024 * 1024),
    )(feat, bn_scale, bn_shift, sel, params["conv_w"], bias_pe, mask, pool,
      params["ln1_g"], params["ln1_b"], params["bqkv"], params["bo"],
      params["ln2_g"], params["ln2_b"], params["b1"], params["b2"], params["fc_b"],
      params["wqkv"], params["wo"], params["w1"], params["w2"], params["fc_w"])

    y = y[:, :NUM_CLASSES]                                           # (B, 2)
    # (NB, 2) -> (B, g, g, g, 2) -> NCDHW (B, 2, g, g, g), matching hm.sum(2) in torch.
    heatmap = jnp.transpose(hm[:, :NUM_CLASSES].reshape(B, G, G, G, NUM_CLASSES),
                            (0, 4, 1, 2, 3))
    return y, heatmap, enc.reshape(B, S, EMBED)


# =========================== deterministic parameter init ===========================

def init_params(key):
    keys = iter(jax.random.split(key, 24))
    bf = jnp.bfloat16

    def nrm(shape, s=0.02):
        return jax.random.normal(next(keys), shape, jnp.float32) * s

    scale = 1.0 / math.sqrt(HEAD_DIM)

    # Fused in-projection [Wq | Wk | Wv], each (EMBED, EMBED) stored (in, out) with
    # per-head 64-lane column blocks; 1/sqrt(head_dim) folded into the Q block/bias.
    wqkv = nrm((NUM_LAYERS, EMBED, 3 * EMBED))
    bqkv = nrm((NUM_LAYERS, 1, 3 * EMBED))
    wqkv = wqkv.at[..., :EMBED].multiply(scale)
    bqkv = bqkv.at[..., :EMBED].multiply(scale)

    # fc = nn.Linear(512, 2): torch (out, in) -> stored (in, out), zero-padded to 128
    # output lanes so the y / heatmap stores are lane-dense, bf16 for the MXU path.
    fc_w = nrm((NUM_CLASSES, EMBED))
    fc_b = nrm((NUM_CLASSES,))
    fc_w_pad = jnp.zeros((EMBED, CLS_PAD), jnp.float32).at[:, :NUM_CLASSES].set(fc_w.T)
    fc_b_pad = jnp.zeros((1, CLS_PAD), jnp.float32).at[0, :NUM_CLASSES].set(fc_b)

    params = {
        # BatchNorm3d(128) (eval mode running stats)
        "bn_gamma": 1.0 + 0.1 * jax.random.normal(next(keys), (C_FEAT,), jnp.float32),
        "bn_beta": nrm((C_FEAT,), 0.1),
        "bn_mean": nrm((C_FEAT,), 0.1),
        "bn_var": 1.0 + 0.1 * jnp.abs(jax.random.normal(next(keys), (C_FEAT,), jnp.float32)),
        # conv_x: torch weight (E, 128, 3, 3, 3) pre-permuted to (kz,ky,kx,Cin,E) and
        # flattened to the (27*128, E) im2col layout used by the kernel (bf16 for MXU).
        "conv_w": nrm((K_IM2COL, EMBED)).astype(bf),
        "conv_b": nrm((1, EMBED)),
        # LearnedPositionalEncoding parameter (1, seq_length, E) -> (S, E)
        "pos_emb": nrm((S, EMBED)),
        "ln1_g": 1.0 + nrm((NUM_LAYERS, 1, EMBED)),
        "ln1_b": nrm((NUM_LAYERS, 1, EMBED)),
        "wqkv": wqkv.astype(bf),
        "bqkv": bqkv,
        # out-projection (in=concatenated head dim, out=EMBED); rows h*64:(h+1)*64 = head h.
        "wo": nrm((NUM_LAYERS, EMBED, EMBED)).astype(bf),
        "bo": nrm((NUM_LAYERS, 1, EMBED)),
        "ln2_g": 1.0 + nrm((NUM_LAYERS, 1, EMBED)),
        "ln2_b": nrm((NUM_LAYERS, 1, EMBED)),
        "w1": nrm((NUM_LAYERS, EMBED, HIDDEN)).astype(bf),
        "b1": nrm((NUM_LAYERS, 1, HIDDEN)),
        "w2": nrm((NUM_LAYERS, HIDDEN, EMBED)).astype(bf),
        "b2": nrm((NUM_LAYERS, 1, EMBED)),
        "fc_w": fc_w_pad.astype(bf),
        "fc_b": fc_b_pad,
    }
    return params


if __name__ == "__main__":
    key = jax.random.PRNGKey(0)
    pkey, xkey = jax.random.split(key)
    params = init_params(pkey)

    # TODO(synk): Unet(in_channels=1, base_channels=16, num_classes=2) is external; its
    # 128-channel bottleneck output (what feeds self.bn/self.relu/self.conv_x) is the input.
    x_feat = jax.random.normal(xkey, (B, C_FEAT, G, G, G), jnp.float32)

    y, heatmap, enc = jax.jit(deep_taad_forward)(x_feat, params)
    jax.block_until_ready((y, heatmap, enc))

    assert y.shape == (B, NUM_CLASSES)
    assert heatmap.shape == (B, NUM_CLASSES, G, G, G)
    assert enc.shape == (B, S, EMBED)
    print("KERNEL_OK")
</pallas_src>

<mosaic_0001>
module attributes {stable_mosaic.version = 11 : i64} {
  func.func @_taad_kernel(%arg0: memref<16x128xf32, #tpu.memory_space<vmem>>, %arg1: memref<1x128xf32, #tpu.memory_space<vmem>>, %arg2: memref<1x128xf32, #tpu.memory_space<vmem>>, %arg3: memref<432x16xbf16, #tpu.memory_space<vmem>>, %arg4: memref<3456x512xbf16, #tpu.memory_space<vmem>>, %arg5: memref<16x512xf32, #tpu.memory_space<vmem>>, %arg6: memref<16x16xf32, #tpu.memory_space<vmem>>, %arg7: memref<2x16xf32, #tpu.memory_space<vmem>>, %arg8: memref<1x1x512xf32, #tpu.memory_space<vmem>>, %arg9: memref<1x1x512xf32, #tpu.memory_space<vmem>>, %arg10: memref<1x1x1536xf32, #tpu.memory_space<vmem>>, %arg11: memref<1x1x512xf32, #tpu.memory_space<vmem>>, %arg12: memref<1x1x512xf32, #tpu.memory_space<vmem>>, %arg13: memref<1x1x512xf32, #tpu.memory_space<vmem>>, %arg14: memref<1x1x128xf32, #tpu.memory_space<vmem>>, %arg15: memref<1x1x512xf32, #tpu.memory_space<vmem>>, %arg16: memref<1x128xf32, #tpu.memory_space<vmem>>, %arg17: memref<1x512x1536xbf16, #tpu.memory_space<any>>, %arg18: memref<1x512x512xbf16, #tpu.memory_space<any>>, %arg19: memref<1x512x128xbf16, #tpu.memory_space<any>>, %arg20: memref<1x128x512xbf16, #tpu.memory_space<any>>, %arg21: memref<512x128xbf16, #tpu.memory_space<any>>, %arg22: memref<16x512xf32, #tpu.memory_space<vmem>>, %arg23: memref<16x128xf32, #tpu.memory_space<vmem>>, %arg24: memref<2x128xf32, #tpu.memory_space<vmem>>, %arg25: memref<16x3456xbf16, #tpu.memory_space<vmem>>, %arg26: memref<1x512x1536xbf16, #tpu.memory_space<vmem>>, %arg27: memref<1x512x512xbf16, #tpu.memory_space<vmem>>, %arg28: memref<1x512x128xbf16, #tpu.memory_space<vmem>>, %arg29: memref<1x128x512xbf16, #tpu.memory_space<vmem>>, %arg30: memref<512x128xbf16, #tpu.memory_space<vmem>>, %arg31: memref<5x!tpu.dma_semaphore, #tpu.memory_space<semaphore_mem>>) attributes {dimension_semantics = [], scalar_prefetch = 0 : i64, scratch_operands = 7 : i64, tpu.core_type = #tpu.core_type<tc>} {
    %c0_i32 = arith.constant 0 : i32
    %0 = tpu.memref_slice %arg31[%c0_i32] : memref<5x!tpu.dma_semaphore, #tpu.memory_space<semaphore_mem>> -> memref<1x!tpu.dma_semaphore, #tpu.memory_space<semaphore_mem>>
    %1 = tpu.memref_squeeze %0 : memref<1x!tpu.dma_semaphore, #tpu.memory_space<semaphore_mem>> -> memref<!tpu.dma_semaphore, #tpu.memory_space<semaphore_mem>>
    tpu.enqueue_dma source(%arg17 : memref<1x512x1536xbf16, #tpu.memory_space<any>>) target(%arg26 : memref<1x512x1536xbf16, #tpu.memory_space<vmem>>) target_semaphore(%1 : memref<!tpu.dma_semaphore, #tpu.memory_space<semaphore_mem>>)
    %c1_i32 = arith.constant 1 : i32
    %2 = tpu.memref_slice %arg31[%c1_i32] : memref<5x!tpu.dma_semaphore, #tpu.memory_space<semaphore_mem>> -> memref<1x!tpu.dma_semaphore, #tpu.memory_space<semaphore_mem>>
    %3 = tpu.memref_squeeze %2 : memref<1x!tpu.dma_semaphore, #tpu.memory_space<semaphore_mem>> -> memref<!tpu.dma_semaphore, #tpu.memory_space<semaphore_mem>>
    tpu.enqueue_dma source(%arg18 : memref<1x512x512xbf16, #tpu.memory_space<any>>) target(%arg27 : memref<1x512x512xbf16, #tpu.memory_space<vmem>>) target_semaphore(%3 : memref<!tpu.dma_semaphore, #tpu.memory_space<semaphore_mem>>)
    %c2_i32 = arith.constant 2 : i32
    %4 = tpu.memref_slice %arg31[%c2_i32] : memref<5x!tpu.dma_semaphore, #tpu.memory_space<semaphore_mem>> -> memref<1x!tpu.dma_semaphore, #tpu.memory_space<semaphore_mem>>
    %5 = tpu.memref_squeeze %4 : memref<1x!tpu.dma_semaphore, #tpu.memory_space<semaphore_mem>> -> memref<!tpu.dma_semaphore, #tpu.memory_space<semaphore_mem>>
    tpu.enqueue_dma source(%arg19 : memref<1x512x128xbf16, #tpu.memory_space<any>>) target(%arg28 : memref<1x512x128xbf16, #tpu.memory_space<vmem>>) target_semaphore(%5 : memref<!tpu.dma_semaphore, #tpu.memory_space<semaphore_mem>>)
    %c3_i32 = arith.constant 3 : i32
    %6 = tpu.memref_slice %arg31[%c3_i32] : memref<5x!tpu.dma_semaphore, #tpu.memory_space<semaphore_mem>> -> memref<1x!tpu.dma_semaphore, #tpu.memory_space<semaphore_mem>>
    %7 = tpu.memref_squeeze %6 : memref<1x!tpu.dma_semaphore, #tpu.memory_space<semaphore_mem>> -> memref<!tpu.dma_semaphore, #tpu.memory_space<semaphore_mem>>
    tpu.enqueue_dma source(%arg20 : memref<1x128x512xbf16, #tpu.memory_space<any>>) target(%arg29 : memref<1x128x512xbf16, #tpu.memory_space<vmem>>) target_semaphore(%7 : memref<!tpu.dma_semaphore, #tpu.memory_space<semaphore_mem>>)
    %c4_i32 = arith.constant 4 : i32
    %8 = tpu.memref_slice %arg31[%c4_i32] : memref<5x!tpu.dma_semaphore, #tpu.memory_space<semaphore_mem>> -> memref<1x!tpu.dma_semaphore, #tpu.memory_space<semaphore_mem>>
    %9 = tpu.memref_squeeze %8 : memref<1x!tpu.dma_semaphore, #tpu.memory_space<semaphore_mem>> -> memref<!tpu.dma_semaphore, #tpu.memory_space<semaphore_mem>>
    tpu.enqueue_dma source(%arg21 : memref<512x128xbf16, #tpu.memory_space<any>>) target(%arg30 : memref<512x128xbf16, #tpu.memory_space<vmem>>) target_semaphore(%9 : memref<!tpu.dma_semaphore, #tpu.memory_space<semaphore_mem>>)
    %c0 = arith.constant 0 : index
    %c0_0 = arith.constant 0 : index
    %10 = vector.load %arg0[%c0, %c0_0] : memref<16x128xf32, #tpu.memory_space<vmem>>, vector<16x128xf32>
    %c0_1 = arith.constant 0 : index
    %c0_2 = arith.constant 0 : index
    %11 = vector.load %arg1[%c0_1, %c0_2] : memref<1x128xf32, #tpu.memory_space<vmem>>, vector<1x128xf32>
    %12 = vector.broadcast %11 : vector<1x128xf32> to vector<16x128xf32>
    %13 = arith.mulf %10, %12 : vector<16x128xf32>
    %c0_3 = arith.constant 0 : index
    %c0_4 = arith.constant 0 : index
    %14 = vector.load %arg2[%c0_3, %c0_4] : memref<1x128xf32, #tpu.memory_space<vmem>>, vector<1x128xf32>
    %15 = vector.broadcast %14 : vector<1x128xf32> to vector<16x128xf32>
    %16 = arith.addf %13, %15 : vector<16x128xf32>
    %cst = arith.constant 0.000000e+00 : f32
    %17 = vector.broadcast %cst : f32 to vector<16x128xf32>
    %18 = arith.maximumf %16, %17 : vector<16x128xf32>
    %19 = arith.truncf %18 : vector<16x128xf32> to vector<16x128xbf16>
    %c0_5 = arith.constant 0 : index
    %c0_6 = arith.constant 0 : index
    %20 = vector.load %arg3[%c0_5, %c0_6] : memref<432x16xbf16, #tpu.memory_space<vmem>>, vector<432x16xbf16>
    %cst_7 = arith.constant dense<0.000000e+00> : vector<432x128xf32>
    %21 = tpu.matmul %20, %19, %cst_7 {dimension_numbers = #tpu.dot_dimension_numbers<[1], [0], [0], [1], [0, 0, 1, 1], [], []>} : vector<432x16xbf16>, vector<16x128xbf16>, vector<432x128xf32> -> vector<432x128xf32>
    %22 = arith.truncf %21 : vector<432x128xf32> to vector<432x128xbf16>
    %23 = vector.extract_strided_slice %22 {offsets = [0, 0], sizes = [16, 128], strides = [1, 1]} : vector<432x128xbf16> to vector<16x128xbf16>
    %c0_8 = arith.constant 0 : index
    %c0_9 = arith.constant 0 : index
    %24 = vector.load %arg25[%c0_8, %c0_9] : memref<16x3456xbf16, #tpu.memory_space<vmem>>, vector<16x128xbf16>
    tpu.vector_store %arg25[%c0_8, %c0_9], %23 {strides = array<i32>} : memref<16x3456xbf16, #tpu.memory_space<vmem>>, vector<16x128xbf16>,
    %25 = vector.extract_strided_slice %22 {offsets = [16, 0], sizes = [16, 128], strides = [1, 1]} : vector<432x128xbf16> to vector<16x128xbf16>
    %c0_10 = arith.constant 0 : index
    %c128 = arith.constant 128 : index
    %26 = vector.load %arg25[%c0_10, %c128] : memref<16x3456xbf16, #tpu.memory_space<vmem>>, vector<16x128xbf16>
    tpu.vector_store %arg25[%c0_10, %c128], %25 {strides = array<i32>} : memref<16x3456xbf16, #tpu.memory_space<vmem>>, vector<16x128xbf16>,
    %27 = vector.extract_strided_slice %22 {offsets = [32, 0], sizes = [16, 128], strides = [1, 1]} : vector<432x128xbf16> to vector<16x128xbf16>
    %c0_11 = arith.constant 0 : index
    %c256 = arith.constant 256 : index
    %28 = vector.load %arg25[%c0_11, %c256] : memref<16x3456xbf16, #tpu.memory_space<vmem>>, vector<16x128xbf16>
    tpu.vector_store %arg25[%c0_11, %c256], %27 {strides = array<i32>} : memref<16x3456xbf16, #tpu.memory_space<vmem>>, vector<16x128xbf16>,
    %29 = vector.extract_strided_slice %22 {offsets = [48, 0], sizes = [16, 128], strides = [1, 1]} : vector<432x128xbf16> to vector<16x128xbf16>
    %c0_12 = arith.constant 0 : index
    %c384 = arith.constant 384 : index
    %30 = vector.load %arg25[%c0_12, %c384] : memref<16x3456xbf16, #tpu.memory_space<vmem>>, vector<16x128xbf16>
    tpu.vector_store %arg25[%c0_12, %c384], %29 {strides = array<i32>} : memref<16x3456xbf16, #tpu.memory_space<vmem>>, vector<16x128xbf16>,
    %31 = vector.extract_strided_slice %22 {offsets = [64, 0], sizes = [16, 128], strides = [1, 1]} : vector<432x128xbf16> to vector<16x128xbf16>
    %c0_13 = arith.constant 0 : index
    %c512 = arith.constant 512 : index
    %32 = vector.load %arg25[%c0_13, %c512] : memref<16x3456xbf16, #tpu.memory_space<vmem>>, vector<16x128xbf16>
    tpu.vector_store %arg25[%c0_13, %c512], %31 {strides = array<i32>} : memref<16x3456xbf16, #tpu.memory_space<vmem>>, vector<16x128xbf16>,
    %33 = vector.extract_strided_slice %22 {offsets = [80, 0], sizes = [16, 128], strides = [1, 1]} : vector<432x128xbf16> to vector<16x128xbf16>
    %c0_14 = arith.constant 0 : index
    %c640 = arith.constant 640 : index
    %34 = vector.load %arg25[%c0_14, %c640] : memref<16x3456xbf16, #tpu.memory_space<vmem>>, vector<16x128xbf16>
    tpu.vector_store %arg25[%c0_14, %c640], %33 {strides = array<i32>} : memref<16x3456xbf16, #tpu.memory_space<vmem>>, vector<16x128xbf16>,
    %35 = vector.extract_strided_slice %22 {offsets = [96, 0], sizes = [16, 128], strides = [1, 1]} : vector<432x128xbf16> to vector<16x128xbf16>
    %c0_15 = arith.constant 0 : index
    %c768 = arith.constant 768 : index
    %36 = vector.load %arg25[%c0_15, %c768] : memref<16x3456xbf16, #tpu.memory_space<vmem>>, vector<16x128xbf16>
    tpu.vector_store %arg25[%c0_15, %c768], %35 {strides = array<i32>} : memref<16x3456xbf16, #tpu.memory_space<vmem>>, vector<16x128xbf16>,
    %37 = vector.extract_strided_slice %22 {offsets = [112, 0], sizes = [16, 128], strides = [1, 1]} : vector<432x128xbf16> to vector<16x128xbf16>
    %c0_16 = arith.constant 0 : index
    %c896 = arith.constant 896 : index
    %38 = vector.load %arg25[%c0_16, %c896] : memref<16x3456xbf16, #tpu.memory_space<vmem>>, vector<16x128xbf16>
    tpu.vector_store %arg25[%c0_16, %c896], %37 {strides = array<i32>} : memref<16x3456xbf16, #tpu.memory_space<vmem>>, vector<16x128xbf16>,
    %39 = vector.extract_strided_slice %22 {offsets = [128, 0], sizes = [16, 128], strides = [1, 1]} : vector<432x128xbf16> to vector<16x128xbf16>
    %c0_17 = arith.constant 0 : index
    %c1024 = arith.constant 1024 : index
    %40 = vector.load %arg25[%c0_17, %c1024] : memref<16x3456xbf16, #tpu.memory_space<vmem>>, vector<16x128xbf16>
    tpu.vector_store %arg25[%c0_17, %c1024], %39 {strides = array<i32>} : memref<16x3456xbf16, #tpu.memory_space<vmem>>, vector<16x128xbf16>,
    %41 = vector.extract_strided_slice %22 {offsets = [144, 0], sizes = [16, 128], strides = [1, 1]} : vector<432x128xbf16> to vector<16x128xbf16>
    %c0_18 = arith.constant 0 : index
    %c1152 = arith.constant 1152 : index
    %42 = vector.load %arg25[%c0_18, %c1152] : memref<16x3456xbf16, #tpu.memory_space<vmem>>, vector<16x128xbf16>
    tpu.vector_store %arg25[%c0_18, %c1152], %41 {strides = array<i32>} : memref<16x3456xbf16, #tpu.memory_space<vmem>>, vector<16x128xbf16>,
    %43 = vector.extract_strided_slice %22 {offsets = [160, 0], sizes = [16, 128], strides = [1, 1]} : vector<432x128xbf16> to vector<16x128xbf16>
    %c0_19 = arith.constant 0 : index
    %c1280 = arith.constant 1280 : index
    %44 = vector.load %arg25[%c0_19, %c1280] : memref<16x3456xbf16, #tpu.memory_space<vmem>>, vector<16x128xbf16>
    tpu.vector_store %arg25[%c0_19, %c1280], %43 {strides = array<i32>} : memref<16x3456xbf16, #tpu.memory_space<vmem>>, vector<16x128xbf16>,
    %45 = vector.extract_strided_slice %22 {offsets = [176, 0], sizes = [16, 128], strides = [1, 1]} : vector<432x128xbf16> to vector<16x128xbf16>
    %c0_20 = arith.constant 0 : index
    %c1408 = arith.constant 1408 : index
    %46 = vector.load %arg25[%c0_20, %c1408] : memref<16x3456xbf16, #tpu.memory_space<vmem>>, vector<16x128xbf16>
    tpu.vector_store %arg25[%c0_20, %c1408], %45 {strides = array<i32>} : memref<16x3456xbf16, #tpu.memory_space<vmem>>, vector<16x128xbf16>,
    %47 = vector.extract_strided_slice %22 {offsets = [192, 0], sizes = [16, 128], strides = [1, 1]} : vector<432x128xbf16> to vector<16x128xbf16>
    %c0_21 = arith.constant 0 : index
    %c1536 = arith.constant 1536 : index
    %48 = vector.load %arg25[%c0_21, %c1536] : memref<16x3456xbf16, #tpu.memory_space<vmem>>, vector<16x128xbf16>
    tpu.vector_store %arg25[%c0_21, %c1536], %47 {strides = array<i32>} : memref<16x3456xbf16, #tpu.memory_space<vmem>>, vector<16x128xbf16>,
    %49 = vector.extract_strided_slice %22 {offsets = [208, 0], sizes = [16, 128], strides = [1, 1]} : vector<432x128xbf16> to vector<16x128xbf16>
    %c0_22 = arith.constant 0 : index
    %c1664 = arith.constant 1664 : index
    %50 = vector.load %arg25[%c0_22, %c1664] : memref<16x3456xbf16, #tpu.memory_space<vmem>>, vector<16x128xbf16>
    tpu.vector_store %arg25[%c0_22, %c1664], %49 {strides = array<i32>} : memref<16x3456xbf16, #tpu.memory_space<vmem>>, vector<16x128xbf16>,
    %51 = vector.extract_strided_slice %22 {offsets = [224, 0], sizes = [16, 128], strides = [1, 1]} : vector<432x128xbf16> to vector<16x128xbf16>
    %c0_23 = arith.constant 0 : index
    %c1792 = arith.constant 1792 : index
    %52 = vector.load %arg25[%c0_23, %c1792] : memref<16x3456xbf16, #tpu.memory_space<vmem>>, vector<16x128xbf16>
    tpu.vector_store %arg25[%c0_23, %c1792], %51 {strides = array<i32>} : memref<16x3456xbf16, #tpu.memory_space<vmem>>, vector<16x128xbf16>,
    %53 = vector.extract_strided_slice %22 {offsets = [240, 0], sizes = [16, 128], strides = [1, 1]} : vector<432x128xbf16> to vector<16x128xbf16>
    %c0_24 = arith.constant 0 : index
    %c1920 = arith.constant 1920 : index
    %54 = vector.load %arg25[%c0_24, %c1920] : memref<16x3456xbf16, #tpu.memory_space<vmem>>, vector<16x128xbf16>
    tpu.vector_store %arg25[%c0_24, %c1920], %53 {strides = array<i32>} : memref<16x3456xbf16, #tpu.memory_space<vmem>>, vector<16x128xbf16>,
    %55 = vector.extract_strided_slice %22 {offsets = [256, 0], sizes = [16, 128], strides = [1, 1]} : vector<432x128xbf16> to vector<16x128xbf16>
    %c0_25 = arith.constant 0 : index
    %c2048 = arith.constant 2048 : index
    %56 = vector.load %arg25[%c0_25, %c2048] : memref<16x3456xbf16, #tpu.memory_space<vmem>>, vector<16x128xbf16>
    tpu.vector_store %arg25[%c0_25, %c2048], %55 {strides = array<i32>} : memref<16x3456xbf16, #tpu.memory_space<vmem>>, vector<16x128xbf16>,
    %57 = vector.extract_strided_slice %22 {offsets = [272, 0], sizes = [16, 128], strides = [1, 1]} : vector<432x128xbf16> to vector<16x128xbf16>
    %c0_26 = arith.constant 0 : index
    %c2176 = arith.constant 2176 : index
    %58 = vector.load %arg25[%c0_26, %c2176] : memref<16x3456xbf16, #tpu.memory_space<vmem>>, vector<16x128xbf16>
    tpu.vector_store %arg25[%c0_26, %c2176], %57 {strides = array<i32>} : memref<16x3456xbf16, #tpu.memory_space<vmem>>, vector<16x128xbf16>,
    %59 = vector.extract_strided_slice %22 {offsets = [288, 0], sizes = [16, 128], strides = [1, 1]} : vector<432x128xbf16> to vector<16x128xbf16>
    %c0_27 = arith.constant 0 : index
    %c2304 = arith.constant 2304 : index
    %60 = vector.load %arg25[%c0_27, %c2304] : memref<16x3456xbf16, #tpu.memory_space<vmem>>, vector<16x128xbf16>
    tpu.vector_store %arg25[%c0_27, %c2304], %59 {strides = array<i32>} : memref<16x3456xbf16, #tpu.memory_space<vmem>>, vector<16x128xbf16>,
    %61 = vector.extract_strided_slice %22 {offsets = [304, 0], sizes = [16, 128], strides = [1, 1]} : vector<432x128xbf16> to vector<16x128xbf16>
    %c0_28 = arith.constant 0 : index
    %c2432 = arith.constant 2432 : index
    %62 = vector.load %arg25[%c0_28, %c2432] : memref<16x3456xbf16, #tpu.memory_space<vmem>>, vector<16x128xbf16>
    tpu.vector_store %arg25[%c0_28, %c2432], %61 {strides = array<i32>} : memref<16x3456xbf16, #tpu.memory_space<vmem>>, vector<16x128xbf16>,
    %63 = vector.extract_strided_slice %22 {offsets = [320, 0], sizes = [16, 128], strides = [1, 1]} : vector<432x128xbf16> to vector<16x128xbf16>
    %c0_29 = arith.constant 0 : index
    %c2560 = arith.constant 2560 : index
    %64 = vector.load %arg25[%c0_29, %c2560] : memref<16x3456xbf16, #tpu.memory_space<vmem>>, vector<16x128xbf16>
    tpu.vector_store %arg25[%c0_29, %c2560], %63 {strides = array<i32>} : memref<16x3456xbf16, #tpu.memory_space<vmem>>, vector<16x128xbf16>,
    %65 = vector.extract_strided_slice %22 {offsets = [336, 0], sizes = [16, 128], strides = [1, 1]} : vector<432x128xbf16> to vector<16x128xbf16>
    %c0_30 = arith.constant 0 : index
    %c2688 = arith.constant 2688 : index
    %66 = vector.load %arg25[%c0_30, %c2688] : memref<16x3456xbf16, #tpu.memory_space<vmem>>, vector<16x128xbf16>
    tpu.vector_store %arg25[%c0_30, %c2688], %65 {strides = array<i32>} : memref<16x3456xbf16, #tpu.memory_space<vmem>>, vector<16x128xbf16>,
    %67 = vector.extract_strided_slice %22 {offsets = [352, 0], sizes = [16, 128], strides = [1, 1]} : vector<432x128xbf16> to vector<16x128xbf16>
    %c0_31 = arith.constant 0 : index
    %c2816 = arith.constant 2816 : index
    %68 = vector.load %arg25[%c0_31, %c2816] : memref<16x3456xbf16, #tpu.memory_space<vmem>>, vector<16x128xbf16>
    tpu.vector_store %arg25[%c0_31, %c2816], %67 {strides = array<i32>} : memref<16x3456xbf16, #tpu.memory_space<vmem>>, vector<16x128xbf16>,
    %69 = vector.extract_strided_slice %22 {offsets = [368, 0], sizes = [16, 128], strides = [1, 1]} : vector<432x128xbf16> to vector<16x128xbf16>
    %c0_32 = arith.constant 0 : index
    %c2944 = arith.constant 2944 : index
    %70 = vector.load %arg25[%c0_32, %c2944] : memref<16x3456xbf16, #tpu.memory_space<vmem>>, vector<16x128xbf16>
    tpu.vector_store %arg25[%c0_32, %c2944], %69 {strides = array<i32>} : memref<16x3456xbf16, #tpu.memory_space<vmem>>, vector<16x128xbf16>,
    %71 = vector.extract_strided_slice %22 {offsets = [384, 0], sizes = [16, 128], strides = [1, 1]} : vector<432x128xbf16> to vector<16x128xbf16>
    %c0_33 = arith.constant 0 : index
    %c3072 = arith.constant 3072 : index
    %72 = vector.load %arg25[%c0_33, %c3072] : memref<16x3456xbf16, #tpu.memory_space<vmem>>, vector<16x128xbf16>
    tpu.vector_store %arg25[%c0_33, %c3072], %71 {strides = array<i32>} : memref<16x3456xbf16, #tpu.memory_space<vmem>>, vector<16x128xbf16>,
    %73 = vector.extract_strided_slice %22 {offsets = [400, 0], sizes = [16, 128], strides = [1, 1]} : vector<432x128xbf16> to vector<16x128xbf16>
    %c0_34 = arith.constant 0 : index
    %c3200 = arith.constant 3200 : index
    %74 = vector.load %arg25[%c0_34, %c3200] : memref<16x3456xbf16, #tpu.memory_space<vmem>>, vector<16x128xbf16>
    tpu.vector_store %arg25[%c0_34, %c3200], %73 {strides = array<i32>} : memref<16x3456xbf16, #tpu.memory_space<vmem>>, vector<16x128xbf16>,
    %75 = vector.extract_strided_slice %22 {offsets = [416, 0], sizes = [16, 128], strides = [1, 1]} : vector<432x128xbf16> to vector<16x128xbf16>
    %c0_35 = arith.constant 0 : index
    %c3328 = arith.constant 3328 : index
    %76 = vector.load %arg25[%c0_35, %c3328] : memref<16x3456xbf16, #tpu.memory_space<vmem>>, vector<16x128xbf16>
    tpu.vector_store %arg25[%c0_35, %c3328], %75 {strides = array<i32>} : memref<16x3456xbf16, #tpu.memory_space<vmem>>, vector<16x128xbf16>,
    %c0_36 = arith.constant 0 : index
    %c0_37 = arith.constant 0 : index
    %77 = vector.load %arg25[%c0_36, %c0_37] : memref<16x3456xbf16, #tpu.memory_space<vmem>>, vector<16x3456xbf16>
    %c0_38 = arith.constant 0 : index
    %c0_39 = arith.constant 0 : index
    %78 = vector.load %arg4[%c0_38, %c0_39] : memref<3456x512xbf16, #tpu.memory_space<vmem>>, vector<3456x512xbf16>
    %cst_40 = arith.constant dense<0.000000e+00> : vector<16x512xf32>
    %79 = tpu.matmul %77, %78, %cst_40 {dimension_numbers = #tpu.dot_dimension_numbers<[1], [0], [0], [1], [0, 0, 1, 1], [], []>} : vector<16x3456xbf16>, vector<3456x512xbf16>, vector<16x512xf32> -> vector<16x512xf32>
    %c0_41 = arith.constant 0 : index
    %c0_42 = arith.constant 0 : index
    %80 = vector.load %arg5[%c0_41, %c0_42] : memref<16x512xf32, #tpu.memory_space<vmem>>, vector<16x512xf32>
    %81 = arith.addf %79, %80 : vector<16x512xf32>
    %c0_43 = arith.constant 0 : index
    %c0_44 = arith.constant 0 : index
    %82 = vector.load %arg6[%c0_43, %c0_44] : memref<16x16xf32, #tpu.memory_space<vmem>>, vector<16x16xf32>
    %c0_i32_45 = arith.constant 0 : i32
    %83 = tpu.memref_slice %arg31[%c0_i32_45] : memref<5x!tpu.dma_semaphore, #tpu.memory_space<semaphore_mem>> -> memref<1x!tpu.dma_semaphore, #tpu.memory_space<semaphore_mem>>
    %84 = tpu.memref_squeeze %83 : memref<1x!tpu.dma_semaphore, #tpu.memory_space<semaphore_mem>> -> memref<!tpu.dma_semaphore, #tpu.memory_space<semaphore_mem>>
    tpu.wait_dma2 semaphore(%84 : memref<!tpu.dma_semaphore, #tpu.memory_space<semaphore_mem>>) src(%arg17 : memref<1x512x1536xbf16, #tpu.memory_space<any>>) dst(%arg26 : memref<1x512x1536xbf16, #tpu.memory_space<vmem>>)
    %c1_i32_46 = arith.constant 1 : i32
    %85 = tpu.memref_slice %arg31[%c1_i32_46] : memref<5x!tpu.dma_semaphore, #tpu.memory_space<semaphore_mem>> -> memref<1x!tpu.dma_semaphore, #tpu.memory_space<semaphore_mem>>
    %86 = tpu.memref_squeeze %85 : memref<1x!tpu.dma_semaphore, #tpu.memory_space<semaphore_mem>> -> memref<!tpu.dma_semaphore, #tpu.memory_space<semaphore_mem>>
    tpu.wait_dma2 semaphore(%86 : memref<!tpu.dma_semaphore, #tpu.memory_space<semaphore_mem>>) src(%arg18 : memref<1x512x512xbf16, #tpu.memory_space<any>>) dst(%arg27 : memref<1x512x512xbf16, #tpu.memory_space<vmem>>)
    %c2_i32_47 = arith.constant 2 : i32
    %87 = tpu.memref_slice %arg31[%c2_i32_47] : memref<5x!tpu.dma_semaphore, #tpu.memory_space<semaphore_mem>> -> memref<1x!tpu.dma_semaphore, #tpu.memory_space<semaphore_mem>>
    %88 = tpu.memref_squeeze %87 : memref<1x!tpu.dma_semaphore, #tpu.memory_space<semaphore_mem>> -> memref<!tpu.dma_semaphore, #tpu.memory_space<semaphore_mem>>
    tpu.wait_dma2 semaphore(%88 : memref<!tpu.dma_semaphore, #tpu.memory_space<semaphore_mem>>) src(%arg19 : memref<1x512x128xbf16, #tpu.memory_space<any>>) dst(%arg28 : memref<1x512x128xbf16, #tpu.memory_space<vmem>>)
    %c3_i32_48 = arith.constant 3 : i32
    %89 = tpu.memref_slice %arg31[%c3_i32_48] : memref<5x!tpu.dma_semaphore, #tpu.memory_space<semaphore_mem>> -> memref<1x!tpu.dma_semaphore, #tpu.memory_space<semaphore_mem>>
    %90 = tpu.memref_squeeze %89 : memref<1x!tpu.dma_semaphore, #tpu.memory_space<semaphore_mem>> -> memref<!tpu.dma_semaphore, #tpu.memory_space<semaphore_mem>>
    tpu.wait_dma2 semaphore(%90 : memref<!tpu.dma_semaphore, #tpu.memory_space<semaphore_mem>>) src(%arg20 : memref<1x128x512xbf16, #tpu.memory_space<any>>) dst(%arg29 : memref<1x128x512xbf16, #tpu.memory_space<vmem>>)
    %c0_49 = arith.constant 0 : index
    %c0_50 = arith.constant 0 : index
    %c0_51 = arith.constant 0 : index
    %91 = vector.load %arg8[%c0_49, %c0_50, %c0_51] : memref<1x1x512xf32, #tpu.memory_space<vmem>>, vector<1x1x512xf32>
    %92 = vector.shape_cast %91 : vector<1x1x512xf32> to vector<1x512xf32>
    %c0_52 = arith.constant 0 : index
    %c0_53 = arith.constant 0 : index
    %c0_54 = arith.constant 0 : index
    %93 = vector.load %arg9[%c0_52, %c0_53, %c0_54] : memref<1x1x512xf32, #tpu.memory_space<vmem>>, vector<1x1x512xf32>
    %94 = vector.shape_cast %93 : vector<1x1x512xf32> to vector<1x512xf32>
    %cst_55 = arith.constant dense<0.000000e+00> : vector<16xf32>
    %95 = vector.multi_reduction <add>, %81, %cst_55 [1] : vector<16x512xf32> to vector<16xf32>
    %96 = vector.shape_cast %95 : vector<16xf32> to vector<16x1xf32>
    %cst_56 = arith.constant 5.120000e+02 : f32
    %97 = vector.broadcast %cst_56 : f32 to vector<16x1xf32>
    %98 = arith.divf %96, %97 : vector<16x1xf32>
    %99 = vector.broadcast %98 : vector<16x1xf32> to vector<16x512xf32>
    %100 = arith.subf %81, %99 : vector<16x512xf32>
    %101 = arith.mulf %100, %100 : vector<16x512xf32>
    %cst_57 = arith.constant dense<0.000000e+00> : vector<16xf32>
    %102 = vector.multi_reduction <add>, %101, %cst_57 [1] : vector<16x512xf32> to vector<16xf32>
    %103 = vector.shape_cast %102 : vector<16xf32> to vector<16x1xf32>
    %cst_58 = arith.constant 5.120000e+02 : f32
    %104 = vector.broadcast %cst_58 : f32 to vector<16x1xf32>
    %105 = arith.divf %103, %104 : vector<16x1xf32>
    %106 = vector.broadcast %98 : vector<16x1xf32> to vector<16x512xf32>
    %107 = arith.subf %81, %106 : vector<16x512xf32>
    %cst_59 = arith.constant 9.99999974E-6 : f32
    %108 = vector.broadcast %cst_59 : f32 to vector<16x1xf32>
    %109 = arith.addf %105, %108 : vector<16x1xf32>
    %110 = math.rsqrt %109 : vector<16x1xf32>
    %111 = vector.broadcast %110 : vector<16x1xf32> to vector<16x512xf32>
    %112 = arith.mulf %107, %111 : vector<16x512xf32>
    %113 = vector.broadcast %92 : vector<1x512xf32> to vector<16x512xf32>
    %114 = arith.mulf %112, %113 : vector<16x512xf32>
    %115 = vector.broadcast %94 : vector<1x512xf32> to vector<16x512xf32>
    %116 = arith.addf %114, %115 : vector<16x512xf32>
    %117 = arith.truncf %116 : vector<16x512xf32> to vector<16x512xbf16>
    %c0_60 = arith.constant 0 : index
    %c0_61 = arith.constant 0 : index
    %c0_62 = arith.constant 0 : index
    %118 = vector.load %arg26[%c0_60, %c0_61, %c0_62] : memref<1x512x1536xbf16, #tpu.memory_space<vmem>>, vector<1x512x1536xbf16>
    %119 = vector.shape_cast %118 : vector<1x512x1536xbf16> to vector<512x1536xbf16>
    %cst_63 = arith.constant dense<0.000000e+00> : vector<16x1536xf32>
    %120 = tpu.matmul %117, %119, %cst_63 {dimension_numbers = #tpu.dot_dimension_numbers<[1], [0], [0], [1], [0, 0, 1, 1], [], []>} : vector<16x512xbf16>, vector<512x1536xbf16>, vector<16x1536xf32> -> vector<16x1536xf32>
    %c0_64 = arith.constant 0 : index
    %c0_65 = arith.constant 0 : index
    %c0_66 = arith.constant 0 : index
    %121 = vector.load %arg10[%c0_64, %c0_65, %c0_66] : memref<1x1x1536xf32, #tpu.memory_space<vmem>>, vector<1x1x1536xf32>
    %122 = vector.shape_cast %121 : vector<1x1x1536xf32> to vector<1x1536xf32>
    %123 = vector.broadcast %122 : vector<1x1536xf32> to vector<16x1536xf32>
    %124 = arith.addf %120, %123 : vector<16x1536xf32>
    %125 = vector.extract_strided_slice %124 {offsets = [0, 0], sizes = [16, 64], strides = [1, 1]} : vector<16x1536xf32> to vector<16x64xf32>
    %126 = vector.extract_strided_slice %124 {offsets = [0, 512], sizes = [16, 64], strides = [1, 1]} : vector<16x1536xf32> to vector<16x64xf32>
    %127 = vector.extract_strided_slice %124 {offsets = [0, 1024], sizes = [16, 64], strides = [1, 1]} : vector<16x1536xf32> to vector<16x64xf32>
    %128 = arith.truncf %125 : vector<16x64xf32> to vector<16x64xbf16>
    %129 = arith.truncf %126 : vector<16x64xf32> to vector<16x64xbf16>
    %cst_67 = arith.constant dense<0.000000e+00> : vector<16x16xf32>
    %130 = tpu.matmul %128, %129, %cst_67 {dimension_numbers = #tpu.dot_dimension_numbers<[1], [1], [0], [0], [0, 0, 1, 0], [], []>} : vector<16x64xbf16>, vector<16x64xbf16>, vector<16x16xf32> -> vector<16x16xf32>
    %131 = arith.addf %130, %82 : vector<16x16xf32>
    %cst_68 = arith.constant dense<0xFF800000> : vector<16xf32>
    %132 = vector.multi_reduction <maximumf>, %131, %cst_68 [1] : vector<16x16xf32> to vector<16xf32>
    %133 = vector.shape_cast %132 : vector<16xf32> to vector<16x1xf32>
    %134 = vector.broadcast %133 : vector<16x1xf32> to vector<16x16xf32>
    %135 = arith.subf %131, %134 : vector<16x16xf32>
    %136 = math.exp %135 : vector<16x16xf32>
    %cst_69 = arith.constant dense<0.000000e+00> : vector<16xf32>
    %137 = vector.multi_reduction <add>, %136, %cst_69 [1] : vector<16x16xf32> to vector<16xf32>
    %138 = vector.shape_cast %137 : vector<16xf32> to vector<16x1xf32>
    %139 = tpu.reciprocal %138 {approx = true} : vector<16x1xf32> -> vector<16x1xf32>
    %140 = vector.broadcast %139 : vector<16x1xf32> to vector<16x16xf32>
    %141 = arith.mulf %136, %140 : vector<16x16xf32>
    %142 = arith.truncf %141 : vector<16x16xf32> to vector<16x16xbf16>
    %143 = arith.truncf %127 : vector<16x64xf32> to vector<16x64xbf16>
    %cst_70 = arith.constant dense<0.000000e+00> : vector<16x64xf32>
    %144 = tpu.matmul %142, %143, %cst_70 {dimension_numbers = #tpu.dot_dimension_numbers<[1], [0], [0], [1], [0, 0, 1, 1], [], []>} : vector<16x16xbf16>, vector<16x64xbf16>, vector<16x64xf32> -> vector<16x64xf32>
    %145 = vector.extract_strided_slice %124 {offsets = [0, 64], sizes = [16, 64], strides = [1, 1]} : vector<16x1536xf32> to vector<16x64xf32>
    %146 = vector.extract_strided_slice %124 {offsets = [0, 576], sizes = [16, 64], strides = [1, 1]} : vector<16x1536xf32> to vector<16x64xf32>
    %147 = vector.extract_strided_slice %124 {offsets = [0, 1088], sizes = [16, 64], strides = [1, 1]} : vector<16x1536xf32> to vector<16x64xf32>
    %148 = arith.truncf %145 : vector<16x64xf32> to vector<16x64xbf16>
    %149 = arith.truncf %146 : vector<16x64xf32> to vector<16x64xbf16>
    %cst_71 = arith.constant dense<0.000000e+00> : vector<16x16xf32>
    %150 = tpu.matmul %148, %149, %cst_71 {dimension_numbers = #tpu.dot_dimension_numbers<[1], [1], [0], [0], [0, 0, 1, 0], [], []>} : vector<16x64xbf16>, vector<16x64xbf16>, vector<16x16xf32> -> vector<16x16xf32>
    %151 = arith.addf %150, %82 : vector<16x16xf32>
    %cst_72 = arith.constant dense<0xFF800000> : vector<16xf32>
    %152 = vector.multi_reduction <maximumf>, %151, %cst_72 [1] : vector<16x16xf32> to vector<16xf32>
    %153 = vector.shape_cast %152 : vector<16xf32> to vector<16x1xf32>
    %154 = vector.broadcast %153 : vector<16x1xf32> to vector<16x16xf32>
    %155 = arith.subf %151, %154 : vector<16x16xf32>
    %156 = math.exp %155 : vector<16x16xf32>
    %cst_73 = arith.constant dense<0.000000e+00> : vector<16xf32>
    %157 = vector.multi_reduction <add>, %156, %cst_73 [1] : vector<16x16xf32> to vector<16xf32>
    %158 = vector.shape_cast %157 : vector<16xf32> to vector<16x1xf32>
    %159 = tpu.reciprocal %158 {approx = true} : vector<16x1xf32> -> vector<16x1xf32>
    %160 = vector.broadcast %159 : vector<16x1xf32> to vector<16x16xf32>
    %161 = arith.mulf %156, %160 : vector<16x16xf32>
    %162 = arith.truncf %161 : vector<16x16xf32> to vector<16x16xbf16>
    %163 = arith.truncf %147 : vector<16x64xf32> to vector<16x64xbf16>
    %cst_74 = arith.constant dense<0.000000e+00> : vector<16x64xf32>
    %164 = tpu.matmul %162, %163, %cst_74 {dimension_numbers = #tpu.dot_dimension_numbers<[1], [0], [0], [1], [0, 0, 1, 1], [], []>} : vector<16x16xbf16>, vector<16x64xbf16>, vector<16x64xf32> -> vector<16x64xf32>
    %165 = vector.extract_strided_slice %124 {offsets = [0, 128], sizes = [16, 64], strides = [1, 1]} : vector<16x1536xf32> to vector<16x64xf32>
    %166 = vector.extract_strided_slice %124 {offsets = [0, 640], sizes = [16, 64], strides = [1, 1]} : vector<16x1536xf32> to vector<16x64xf32>
    %167 = vector.extract_strided_slice %124 {offsets = [0, 1152], sizes = [16, 64], strides = [1, 1]} : vector<16x1536xf32> to vector<16x64xf32>
    %168 = arith.truncf %165 : vector<16x64xf32> to vector<16x64xbf16>
    %169 = arith.truncf %166 : vector<16x64xf32> to vector<16x64xbf16>
    %cst_75 = arith.constant dense<0.000000e+00> : vector<16x16xf32>
    %170 = tpu.matmul %168, %169, %cst_75 {dimension_numbers = #tpu.dot_dimension_numbers<[1], [1], [0], [0], [0, 0, 1, 0], [], []>} : vector<16x64xbf16>, vector<16x64xbf16>, vector<16x16xf32> -> vector<16x16xf32>
    %171 = arith.addf %170, %82 : vector<16x16xf32>
    %cst_76 = arith.constant dense<0xFF800000> : vector<16xf32>
    %172 = vector.multi_reduction <maximumf>, %171, %cst_76 [1] : vector<16x16xf32> to vector<16xf32>
    %173 = vector.shape_cast %172 : vector<16xf32> to vector<16x1xf32>
    %174 = vector.broadcast %173 : vector<16x1xf32> to vector<16x16xf32>
    %175 = arith.subf %171, %174 : vector<16x16xf32>
    %176 = math.exp %175 : vector<16x16xf32>
    %cst_77 = arith.constant dense<0.000000e+00> : vector<16xf32>
    %177 = vector.multi_reduction <add>, %176, %cst_77 [1] : vector<16x16xf32> to vector<16xf32>
    %178 = vector.shape_cast %177 : vector<16xf32> to vector<16x1xf32>
    %179 = tpu.reciprocal %178 {approx = true} : vector<16x1xf32> -> vector<16x1xf32>
    %180 = vector.broadcast %179 : vector<16x1xf32> to vector<16x16xf32>
    %181 = arith.mulf %176, %180 : vector<16x16xf32>
    %182 = arith.truncf %181 : vector<16x16xf32> to vector<16x16xbf16>
    %183 = arith.truncf %167 : vector<16x64xf32> to vector<16x64xbf16>
    %cst_78 = arith.constant dense<0.000000e+00> : vector<16x64xf32>
    %184 = tpu.matmul %182, %183, %cst_78 {dimension_numbers = #tpu.dot_dimension_numbers<[1], [0], [0], [1], [0, 0, 1, 1], [], []>} : vector<16x16xbf16>, vector<16x64xbf16>, vector<16x64xf32> -> vector<16x64xf32>
    %185 = vector.extract_strided_slice %124 {offsets = [0, 192], sizes = [16, 64], strides = [1, 1]} : vector<16x1536xf32> to vector<16x64xf32>
    %186 = vector.extract_strided_slice %124 {offsets = [0, 704], sizes = [16, 64], strides = [1, 1]} : vector<16x1536xf32> to vector<16x64xf32>
    %187 = vector.extract_strided_slice %124 {offsets = [0, 1216], sizes = [16, 64], strides = [1, 1]} : vector<16x1536xf32> to vector<16x64xf32>
    %188 = arith.truncf %185 : vector<16x64xf32> to vector<16x64xbf16>
    %189 = arith.truncf %186 : vector<16x64xf32> to vector<16x64xbf16>
    %cst_79 = arith.constant dense<0.000000e+00> : vector<16x16xf32>
    %190 = tpu.matmul %188, %189, %cst_79 {dimension_numbers = #tpu.dot_dimension_numbers<[1], [1], [0], [0], [0, 0, 1, 0], [], []>} : vector<16x64xbf16>, vector<16x64xbf16>, vector<16x16xf32> -> vector<16x16xf32>
    %191 = arith.addf %190, %82 : vector<16x16xf32>
    %cst_80 = arith.constant dense<0xFF800000> : vector<16xf32>
    %192 = vector.multi_reduction <maximumf>, %191, %cst_80 [1] : vector<16x16xf32> to vector<16xf32>
    %193 = vector.shape_cast %192 : vector<16xf32> to vector<16x1xf32>
    %194 = vector.broadcast %193 : vector<16x1xf32> to vector<16x16xf32>
    %195 = arith.subf %191, %194 : vector<16x16xf32>
    %196 = math.exp %195 : vector<16x16xf32>
    %cst_81 = arith.constant dense<0.000000e+00> : vector<16xf32>
    %197 = vector.multi_reduction <add>, %196, %cst_81 [1] : vector<16x16xf32> to vector<16xf32>
    %198 = vector.shape_cast %197 : vector<16xf32> to vector<16x1xf32>
    %199 = tpu.reciprocal %198 {approx = true} : vector<16x1xf32> -> vector<16x1xf32>
    %200 = vector.broadcast %199 : vector<16x1xf32> to vector<16x16xf32>
    %201 = arith.mulf %196, %200 : vector<16x16xf32>
    %202 = arith.truncf %201 : vector<16x16xf32> to vector<16x16xbf16>
    %203 = arith.truncf %187 : vector<16x64xf32> to vector<16x64xbf16>
    %cst_82 = arith.constant dense<0.000000e+00> : vector<16x64xf32>
    %204 = tpu.matmul %202, %203, %cst_82 {dimension_numbers = #tpu.dot_dimension_numbers<[1], [0], [0], [1], [0, 0, 1, 1], [], []>} : vector<16x16xbf16>, vector<16x64xbf16>, vector<16x64xf32> -> vector<16x64xf32>
    %205 = vector.extract_strided_slice %124 {offsets = [0, 256], sizes = [16, 64], strides = [1, 1]} : vector<16x1536xf32> to vector<16x64xf32>
    %206 = vector.extract_strided_slice %124 {offsets = [0, 768], sizes = [16, 64], strides = [1, 1]} : vector<16x1536xf32> to vector<16x64xf32>
    %207 = vector.extract_strided_slice %124 {offsets = [0, 1280], sizes = [16, 64], strides = [1, 1]} : vector<16x1536xf32> to vector<16x64xf32>
    %208 = arith.truncf %205 : vector<16x64xf32> to vector<16x64xbf16>
    %209 = arith.truncf %206 : vector<16x64xf32> to vector<16x64xbf16>
    %cst_83 = arith.constant dense<0.000000e+00> : vector<16x16xf32>
    %210 = tpu.matmul %208, %209, %cst_83 {dimension_numbers = #tpu.dot_dimension_numbers<[1], [1], [0], [0], [0, 0, 1, 0], [], []>} : vector<16x64xbf16>, vector<16x64xbf16>, vector<16x16xf32> -> vector<16x16xf32>
    %211 = arith.addf %210, %82 : vector<16x16xf32>
    %cst_84 = arith.constant dense<0xFF800000> : vector<16xf32>
    %212 = vector.multi_reduction <maximumf>, %211, %cst_84 [1] : vector<16x16xf32> to vector<16xf32>
    %213 = vector.shape_cast %212 : vector<16xf32> to vector<16x1xf32>
    %214 = vector.broadcast %213 : vector<16x1xf32> to vector<16x16xf32>
    %215 = arith.subf %211, %214 : vector<16x16xf32>
    %216 = math.exp %215 : vector<16x16xf32>
    %cst_85 = arith.constant dense<0.000000e+00> : vector<16xf32>
    %217 = vector.multi_reduction <add>, %216, %cst_85 [1] : vector<16x16xf32> to vector<16xf32>
    %218 = vector.shape_cast %217 : vector<16xf32> to vector<16x1xf32>
    %219 = tpu.reciprocal %218 {approx = true} : vector<16x1xf32> -> vector<16x1xf32>
    %220 = vector.broadcast %219 : vector<16x1xf32> to vector<16x16xf32>
    %221 = arith.mulf %216, %220 : vector<16x16xf32>
    %222 = arith.truncf %221 : vector<16x16xf32> to vector<16x16xbf16>
    %223 = arith.truncf %207 : vector<16x64xf32> to vector<16x64xbf16>
    %cst_86 = arith.constant dense<0.000000e+00> : vector<16x64xf32>
    %224 = tpu.matmul %222, %223, %cst_86 {dimension_numbers = #tpu.dot_dimension_numbers<[1], [0], [0], [1], [0, 0, 1, 1], [], []>} : vector<16x16xbf16>, vector<16x64xbf16>, vector<16x64xf32> -> vector<16x64xf32>
    %225 = vector.extract_strided_slice %124 {offsets = [0, 320], sizes = [16, 64], strides = [1, 1]} : vector<16x1536xf32> to vector<16x64xf32>
    %226 = vector.extract_strided_slice %124 {offsets = [0, 832], sizes = [16, 64], strides = [1, 1]} : vector<16x1536xf32> to vector<16x64xf32>
    %227 = vector.extract_strided_slice %124 {offsets = [0, 1344], sizes = [16, 64], strides = [1, 1]} : vector<16x1536xf32> to vector<16x64xf32>
    %228 = arith.truncf %225 : vector<16x64xf32> to vector<16x64xbf16>
    %229 = arith.truncf %226 : vector<16x64xf32> to vector<16x64xbf16>
    %cst_87 = arith.constant dense<0.000000e+00> : vector<16x16xf32>
    %230 = tpu.matmul %228, %229, %cst_87 {dimension_numbers = #tpu.dot_dimension_numbers<[1], [1], [0], [0], [0, 0, 1, 0], [], []>} : vector<16x64xbf16>, vector<16x64xbf16>, vector<16x16xf32> -> vector<16x16xf32>
    %231 = arith.addf %230, %82 : vector<16x16xf32>
    %cst_88 = arith.constant dense<0xFF800000> : vector<16xf32>
    %232 = vector.multi_reduction <maximumf>, %231, %cst_88 [1] : vector<16x16xf32> to vector<16xf32>
    %233 = vector.shape_cast %232 : vector<16xf32> to vector<16x1xf32>
    %234 = vector.broadcast %233 : vector<16x1xf32> to vector<16x16xf32>
    %235 = arith.subf %231, %234 : vector<16x16xf32>
    %236 = math.exp %235 : vector<16x16xf32>
    %cst_89 = arith.constant dense<0.000000e+00> : vector<16xf32>
    %237 = vector.multi_reduction <add>, %236, %cst_89 [1] : vector<16x16xf32> to vector<16xf32>
    %238 = vector.shape_cast %237 : vector<16xf32> to vector<16x1xf32>
    %239 = tpu.reciprocal %238 {approx = true} : vector<16x1xf32> -> vector<16x1xf32>
    %240 = vector.broadcast %239 : vector<16x1xf32> to vector<16x16xf32>
    %241 = arith.mulf %236, %240 : vector<16x16xf32>
    %242 = arith.truncf %241 : vector<16x16xf32> to vector<16x16xbf16>
    %243 = arith.truncf %227 : vector<16x64xf32> to vector<16x64xbf16>
    %cst_90 = arith.constant dense<0.000000e+00> : vector<16x64xf32>
    %244 = tpu.matmul %242, %243, %cst_90 {dimension_numbers = #tpu.dot_dimension_numbers<[1], [0], [0], [1], [0, 0, 1, 1], [], []>} : vector<16x16xbf16>, vector<16x64xbf16>, vector<16x64xf32> -> vector<16x64xf32>
    %245 = vector.extract_strided_slice %124 {offsets = [0, 384], sizes = [16, 64], strides = [1, 1]} : vector<16x1536xf32> to vector<16x64xf32>
    %246 = vector.extract_strided_slice %124 {offsets = [0, 896], sizes = [16, 64], strides = [1, 1]} : vector<16x1536xf32> to vector<16x64xf32>
    %247 = vector.extract_strided_slice %124 {offsets = [0, 1408], sizes = [16, 64], strides = [1, 1]} : vector<16x1536xf32> to vector<16x64xf32>
    %248 = arith.truncf %245 : vector<16x64xf32> to vector<16x64xbf16>
    %249 = arith.truncf %246 : vector<16x64xf32> to vector<16x64xbf16>
    %cst_91 = arith.constant dense<0.000000e+00> : vector<16x16xf32>
    %250 = tpu.matmul %248, %249, %cst_91 {dimension_numbers = #tpu.dot_dimension_numbers<[1], [1], [0], [0], [0, 0, 1, 0], [], []>} : vector<16x64xbf16>, vector<16x64xbf16>, vector<16x16xf32> -> vector<16x16xf32>
    %251 = arith.addf %250, %82 : vector<16x16xf32>
    %cst_92 = arith.constant dense<0xFF800000> : vector<16xf32>
    %252 = vector.multi_reduction <maximumf>, %251, %cst_92 [1] : vector<16x16xf32> to vector<16xf32>
    %253 = vector.shape_cast %252 : vector<16xf32> to vector<16x1xf32>
    %254 = vector.broadcast %253 : vector<16x1xf32> to vector<16x16xf32>
    %255 = arith.subf %251, %254 : vector<16x16xf32>
    %256 = math.exp %255 : vector<16x16xf32>
    %cst_93 = arith.constant dense<0.000000e+00> : vector<16xf32>
    %257 = vector.multi_reduction <add>, %256, %cst_93 [1] : vector<16x16xf32> to vector<16xf32>
    %258 = vector.shape_cast %257 : vector<16xf32> to vector<16x1xf32>
    %259 = tpu.reciprocal %258 {approx = true} : vector<16x1xf32> -> vector<16x1xf32>
    %260 = vector.broadcast %259 : vector<16x1xf32> to vector<16x16xf32>
    %261 = arith.mulf %256, %260 : vector<16x16xf32>
    %262 = arith.truncf %261 : vector<16x16xf32> to vector<16x16xbf16>
    %263 = arith.truncf %247 : vector<16x64xf32> to vector<16x64xbf16>
    %cst_94 = arith.constant dense<0.000000e+00> : vector<16x64xf32>
    %264 = tpu.matmul %262, %263, %cst_94 {dimension_numbers = #tpu.dot_dimension_numbers<[1], [0], [0], [1], [0, 0, 1, 1], [], []>} : vector<16x16xbf16>, vector<16x64xbf16>, vector<16x64xf32> -> vector<16x64xf32>
    %265 = vector.extract_strided_slice %124 {offsets = [0, 448], sizes = [16, 64], strides = [1, 1]} : vector<16x1536xf32> to vector<16x64xf32>
    %266 = vector.extract_strided_slice %124 {offsets = [0, 960], sizes = [16, 64], strides = [1, 1]} : vector<16x1536xf32> to vector<16x64xf32>
    %267 = vector.extract_strided_slice %124 {offsets = [0, 1472], sizes = [16, 64], strides = [1, 1]} : vector<16x1536xf32> to vector<16x64xf32>
    %268 = arith.truncf %265 : vector<16x64xf32> to vector<16x64xbf16>
    %269 = arith.truncf %266 : vector<16x64xf32> to vector<16x64xbf16>
    %cst_95 = arith.constant dense<0.000000e+00> : vector<16x16xf32>
    %270 = tpu.matmul %268, %269, %cst_95 {dimension_numbers = #tpu.dot_dimension_numbers<[1], [1], [0], [0], [0, 0, 1, 0], [], []>} : vector<16x64xbf16>, vector<16x64xbf16>, vector<16x16xf32> -> vector<16x16xf32>
    %271 = arith.addf %270, %82 : vector<16x16xf32>
    %cst_96 = arith.constant dense<0xFF800000> : vector<16xf32>
    %272 = vector.multi_reduction <maximumf>, %271, %cst_96 [1] : vector<16x16xf32> to vector<16xf32>
    %273 = vector.shape_cast %272 : vector<16xf32> to vector<16x1xf32>
    %274 = vector.broadcast %273 : vector<16x1xf32> to vector<16x16xf32>
    %275 = arith.subf %271, %274 : vector<16x16xf32>
    %276 = math.exp %275 : vector<16x16xf32>
    %cst_97 = arith.constant dense<0.000000e+00> : vector<16xf32>
    %277 = vector.multi_reduction <add>, %276, %cst_97 [1] : vector<16x16xf32> to vector<16xf32>
    %278 = vector.shape_cast %277 : vector<16xf32> to vector<16x1xf32>
    %279 = tpu.reciprocal %278 {approx = true} : vector<16x1xf32> -> vector<16x1xf32>
    %280 = vector.broadcast %279 : vector<16x1xf32> to vector<16x16xf32>
    %281 = arith.mulf %276, %280 : vector<16x16xf32>
    %282 = arith.truncf %281 : vector<16x16xf32> to vector<16x16xbf16>
    %283 = arith.truncf %267 : vector<16x64xf32> to vector<16x64xbf16>
    %cst_98 = arith.constant dense<0.000000e+00> : vector<16x64xf32>
    %284 = tpu.matmul %282, %283, %cst_98 {dimension_numbers = #tpu.dot_dimension_numbers<[1], [0], [0], [1], [0, 0, 1, 1], [], []>} : vector<16x16xbf16>, vector<16x64xbf16>, vector<16x64xf32> -> vector<16x64xf32>
    %285 = tpu.concatenate %144, %164, %184, %204, %224, %244, %264, %284 in 1 : vector<16x64xf32>, vector<16x64xf32>, vector<16x64xf32>, vector<16x64xf32>, vector<16x64xf32>, vector<16x64xf32>, vector<16x64xf32>, vector<16x64xf32> -> vector<16x512xf32>
    %286 = arith.truncf %285 : vector<16x512xf32> to vector<16x512xbf16>
    %c0_99 = arith.constant 0 : index
    %c0_100 = arith.constant 0 : index
    %c0_101 = arith.constant 0 : index
    %287 = vector.load %arg27[%c0_99, %c0_100, %c0_101] : memref<1x512x512xbf16, #tpu.memory_space<vmem>>, vector<1x512x512xbf16>
    %288 = vector.shape_cast %287 : vector<1x512x512xbf16> to vector<512x512xbf16>
    %cst_102 = arith.constant dense<0.000000e+00> : vector<16x512xf32>
    %289 = tpu.matmul %286, %288, %cst_102 {dimension_numbers = #tpu.dot_dimension_numbers<[1], [0], [0], [1], [0, 0, 1, 1], [], []>} : vector<16x512xbf16>, vector<512x512xbf16>, vector<16x512xf32> -> vector<16x512xf32>
    %290 = arith.addf %81, %289 : vector<16x512xf32>
    %c0_103 = arith.constant 0 : index
    %c0_104 = arith.constant 0 : index
    %c0_105 = arith.constant 0 : index
    %291 = vector.load %arg11[%c0_103, %c0_104, %c0_105] : memref<1x1x512xf32, #tpu.memory_space<vmem>>, vector<1x1x512xf32>
    %292 = vector.shape_cast %291 : vector<1x1x512xf32> to vector<1x512xf32>
    %293 = vector.broadcast %292 : vector<1x512xf32> to vector<16x512xf32>
    %294 = arith.addf %290, %293 : vector<16x512xf32>
    %c0_106 = arith.constant 0 : index
    %c0_107 = arith.constant 0 : index
    %c0_108 = arith.constant 0 : index
    %295 = vector.load %arg12[%c0_106, %c0_107, %c0_108] : memref<1x1x512xf32, #tpu.memory_space<vmem>>, vector<1x1x512xf32>
    %296 = vector.shape_cast %295 : vector<1x1x512xf32> to vector<1x512xf32>
    %c0_109 = arith.constant 0 : index
    %c0_110 = arith.constant 0 : index
    %c0_111 = arith.constant 0 : index
    %297 = vector.load %arg13[%c0_109, %c0_110, %c0_111] : memref<1x1x512xf32, #tpu.memory_space<vmem>>, vector<1x1x512xf32>
    %298 = vector.shape_cast %297 : vector<1x1x512xf32> to vector<1x512xf32>
    %cst_112 = arith.constant dense<0.000000e+00> : vector<16xf32>
    %299 = vector.multi_reduction <add>, %294, %cst_112 [1] : vector<16x512xf32> to vector<16xf32>
    %300 = vector.shape_cast %299 : vector<16xf32> to vector<16x1xf32>
    %cst_113 = arith.constant 5.120000e+02 : f32
    %301 = vector.broadcast %cst_113 : f32 to vector<16x1xf32>
    %302 = arith.divf %300, %301 : vector<16x1xf32>
    %303 = vector.broadcast %302 : vector<16x1xf32> to vector<16x512xf32>
    %304 = arith.subf %294, %303 : vector<16x512xf32>
    %305 = arith.mulf %304, %304 : vector<16x512xf32>
    %cst_114 = arith.constant dense<0.000000e+00> : vector<16xf32>
    %306 = vector.multi_reduction <add>, %305, %cst_114 [1] : vector<16x512xf32> to vector<16xf32>
    %307 = vector.shape_cast %306 : vector<16xf32> to vector<16x1xf32>
    %cst_115 = arith.constant 5.120000e+02 : f32
    %308 = vector.broadcast %cst_115 : f32 to vector<16x1xf32>
    %309 = arith.divf %307, %308 : vector<16x1xf32>
    %310 = vector.broadcast %302 : vector<16x1xf32> to vector<16x512xf32>
    %311 = arith.subf %294, %310 : vector<16x512xf32>
    %cst_116 = arith.constant 9.99999974E-6 : f32
    %312 = vector.broadcast %cst_116 : f32 to vector<16x1xf32>
    %313 = arith.addf %309, %312 : vector<16x1xf32>
    %314 = math.rsqrt %313 : vector<16x1xf32>
    %315 = vector.broadcast %314 : vector<16x1xf32> to vector<16x512xf32>
    %316 = arith.mulf %311, %315 : vector<16x512xf32>
    %317 = vector.broadcast %296 : vector<1x512xf32> to vector<16x512xf32>
    %318 = arith.mulf %316, %317 : vector<16x512xf32>
    %319 = vector.broadcast %298 : vector<1x512xf32> to vector<16x512xf32>
    %320 = arith.addf %318, %319 : vector<16x512xf32>
    %321 = arith.truncf %320 : vector<16x512xf32> to vector<16x512xbf16>
    %c0_117 = arith.constant 0 : index
    %c0_118 = arith.constant 0 : index
    %c0_119 = arith.constant 0 : index
    %322 = vector.load %arg28[%c0_117, %c0_118, %c0_119] : memref<1x512x128xbf16, #tpu.memory_space<vmem>>, vector<1x512x128xbf16>
    %323 = vector.shape_cast %322 : vector<1x512x128xbf16> to vector<512x128xbf16>
    %cst_120 = arith.constant dense<0.000000e+00> : vector<16x128xf32>
    %324 = tpu.matmul %321, %323, %cst_120 {dimension_numbers = #tpu.dot_dimension_numbers<[1], [0], [0], [1], [0, 0, 1, 1], [], []>} : vector<16x512xbf16>, vector<512x128xbf16>, vector<16x128xf32> -> vector<16x128xf32>
    %c0_121 = arith.constant 0 : index
    %c0_122 = arith.constant 0 : index
    %c0_123 = arith.constant 0 : index
    %325 = vector.load %arg14[%c0_121, %c0_122, %c0_123] : memref<1x1x128xf32, #tpu.memory_space<vmem>>, vector<1x1x128xf32>
    %326 = vector.shape_cast %325 : vector<1x1x128xf32> to vector<1x128xf32>
    %327 = vector.broadcast %326 : vector<1x128xf32> to vector<16x128xf32>
    %328 = arith.addf %324, %327 : vector<16x128xf32>
    %329 = arith.mulf %328, %328 : vector<16x128xf32>
    %330 = arith.mulf %328, %329 : vector<16x128xf32>
    %cst_124 = arith.constant 4.471500e-02 : f32
    %331 = vector.broadcast %cst_124 : f32 to vector<16x128xf32>
    %332 = arith.mulf %331, %330 : vector<16x128xf32>
    %333 = arith.addf %328, %332 : vector<16x128xf32>
    %cst_125 = arith.constant 0.797884583 : f32
    %334 = vector.broadcast %cst_125 : f32 to vector<16x128xf32>
    %335 = arith.mulf %334, %333 : vector<16x128xf32>
    %336 = math.tanh %335 : vector<16x128xf32>
    %cst_126 = arith.constant 1.000000e+00 : f32
    %337 = vector.broadcast %cst_126 : f32 to vector<16x128xf32>
    %338 = arith.addf %337, %336 : vector<16x128xf32>
    %cst_127 = arith.constant 5.000000e-01 : f32
    %339 = vector.broadcast %cst_127 : f32 to vector<16x128xf32>
    %340 = arith.mulf %339, %338 : vector<16x128xf32>
    %341 = arith.mulf %328, %340 : vector<16x128xf32>
    %342 = arith.truncf %341 : vector<16x128xf32> to vector<16x128xbf16>
    %c0_128 = arith.constant 0 : index
    %c0_129 = arith.constant 0 : index
    %c0_130 = arith.constant 0 : index
    %343 = vector.load %arg29[%c0_128, %c0_129, %c0_130] : memref<1x128x512xbf16, #tpu.memory_space<vmem>>, vector<1x128x512xbf16>
    %344 = vector.shape_cast %343 : vector<1x128x512xbf16> to vector<128x512xbf16>
    %cst_131 = arith.constant dense<0.000000e+00> : vector<16x512xf32>
    %345 = tpu.matmul %342, %344, %cst_131 {dimension_numbers = #tpu.dot_dimension_numbers<[1], [0], [0], [1], [0, 0, 1, 1], [], []>} : vector<16x128xbf16>, vector<128x512xbf16>, vector<16x512xf32> -> vector<16x512xf32>
    %c0_132 = arith.constant 0 : index
    %c0_133 = arith.constant 0 : index
    %c0_134 = arith.constant 0 : index
    %346 = vector.load %arg15[%c0_132, %c0_133, %c0_134] : memref<1x1x512xf32, #tpu.memory_space<vmem>>, vector<1x1x512xf32>
    %347 = vector.shape_cast %346 : vector<1x1x512xf32> to vector<1x512xf32>
    %348 = vector.broadcast %347 : vector<1x512xf32> to vector<16x512xf32>
    %349 = arith.addf %345, %348 : vector<16x512xf32>
    %350 = arith.addf %294, %349 : vector<16x512xf32>
    %c0_135 = arith.constant 0 : index
    %c0_136 = arith.constant 0 : index
    %351 = vector.load %arg22[%c0_135, %c0_136] : memref<16x512xf32, #tpu.memory_space<vmem>>, vector<16x512xf32>
    tpu.vector_store %arg22[%c0_135, %c0_136], %350 {strides = array<i32>} : memref<16x512xf32, #tpu.memory_space<vmem>>, vector<16x512xf32>,
    %c4_i32_137 = arith.constant 4 : i32
    %352 = tpu.memref_slice %arg31[%c4_i32_137] : memref<5x!tpu.dma_semaphore, #tpu.memory_space<semaphore_mem>> -> memref<1x!tpu.dma_semaphore, #tpu.memory_space<semaphore_mem>>
    %353 = tpu.memref_squeeze %352 : memref<1x!tpu.dma_semaphore, #tpu.memory_space<semaphore_mem>> -> memref<!tpu.dma_semaphore, #tpu.memory_space<semaphore_mem>>
    tpu.wait_dma2 semaphore(%353 : memref<!tpu.dma_semaphore, #tpu.memory_space<semaphore_mem>>) src(%arg21 : memref<512x128xbf16, #tpu.memory_space<any>>) dst(%arg30 : memref<512x128xbf16, #tpu.memory_space<vmem>>)
    %354 = arith.truncf %350 : vector<16x512xf32> to vector<16x512xbf16>
    %c0_138 = arith.constant 0 : index
    %c0_139 = arith.constant 0 : index
    %355 = vector.load %arg30[%c0_138, %c0_139] : memref<512x128xbf16, #tpu.memory_space<vmem>>, vector<512x128xbf16>
    %cst_140 = arith.constant dense<0.000000e+00> : vector<16x128xf32>
    %356 = tpu.matmul %354, %355, %cst_140 {dimension_numbers = #tpu.dot_dimension_numbers<[1], [0], [0], [1], [0, 0, 1, 1], [], []>} : vector<16x512xbf16>, vector<512x128xbf16>, vector<16x128xf32> -> vector<16x128xf32>
    %c0_141 = arith.constant 0 : index
    %c0_142 = arith.constant 0 : index
    %357 = vector.load %arg23[%c0_141, %c0_142] : memref<16x128xf32, #tpu.memory_space<vmem>>, vector<16x128xf32>
    tpu.vector_store %arg23[%c0_141, %c0_142], %356 {strides = array<i32>} : memref<16x128xf32, #tpu.memory_space<vmem>>, vector<16x128xf32>,
    %c0_143 = arith.constant 0 : index
    %c0_144 = arith.constant 0 : index
    %358 = vector.load %arg7[%c0_143, %c0_144] : memref<2x16xf32, #tpu.memory_space<vmem>>, vector<2x16xf32>
    %cst_145 = arith.constant dense<0.000000e+00> : vector<2x128xf32>
    %359 = tpu.matmul %358, %356, %cst_145 {dimension_numbers = #tpu.dot_dimension_numbers<[1], [0], [0], [1], [0, 0, 1, 1], [], []>} : vector<2x16xf32>, vector<16x128xf32>, vector<2x128xf32> -> vector<2x128xf32>
    %c0_146 = arith.constant 0 : index
    %c0_147 = arith.constant 0 : index
    %360 = vector.load %arg16[%c0_146, %c0_147] : memref<1x128xf32, #tpu.memory_space<vmem>>, vector<1x128xf32>
    %361 = vector.broadcast %360 : vector<1x128xf32> to vector<2x128xf32>
    %362 = arith.addf %359, %361 : vector<2x128xf32>
    %c0_148 = arith.constant 0 : index
    %c0_149 = arith.constant 0 : index
    %363 = vector.load %arg24[%c0_148, %c0_149] : memref<2x128xf32, #tpu.memory_space<vmem>>, vector<2x128xf32>
    tpu.vector_store %arg24[%c0_148, %c0_149], %362 {strides = array<i32>} : memref<2x128xf32, #tpu.memory_space<vmem>>, vector<2x128xf32>,
    return
  }
}

</mosaic_0001>

<llo_original>
// kernel: deep_taad_forward.1
$region0: #{deep_taad_forward.1}
  #allocation0 [shape = 'u32[]', space=smem, size = 0x4, offset = 0x4, fixed_abs, tag = 'smem constant byte address 0x4 - core index']
  #allocation1 [shape = 'u32[144,128]{1,0:T(1,128)}', space=vmem, size = 0x12000, scoped, tag = 'internal scratch']
  #allocation2 [shape = 'bf16[16,3456]{1,0:T(16,128)(2,1)}', space=vmem, size = 0x1b000, scoped, tag = 'scratch operand']
  #allocation3 [shape = 'bf16[1,512,1536]{2,1,0:T(16,128)(2,1)}', space=vmem, size = 0x180000, scoped, tag = 'scratch operand']
  #allocation4 [shape = 'bf16[1,512,512]{2,1,0:T(16,128)(2,1)}', space=vmem, size = 0x80000, scoped, tag = 'scratch operand']
  #allocation5 [shape = 'bf16[1,512,128]{2,1,0:T(16,128)(2,1)}', space=vmem, size = 0x20000, scoped, tag = 'scratch operand']
  #allocation6 [shape = 'bf16[1,128,512]{2,1,0:T(16,128)(2,1)}', space=vmem, size = 0x20000, scoped, tag = 'scratch operand']
  #allocation7 [shape = 'bf16[512,128]{1,0:T(16,128)(2,1)}', space=vmem, size = 0x20000, scoped, tag = 'scratch operand']
  #allocation8 [shape = 's32[5]{0}', space=sflag, size = 0x14, scoped, tag = 'scratch operand']
  #allocation35 [shape = 's32[]', space=sflag, size = 0x4, offset = 0, fixed_abs, tag = 'sflag constant byte address 0x0 - dummy sync flag']
  #allocation37 [shape = 's32[]', space=sflag, size = 0x4, offset = 0, fixed_abs, tag = 'sflag constant byte address 0x0 - dummy sync flag']
  #allocation39 [shape = 's32[]', space=sflag, size = 0x4, offset = 0, fixed_abs, tag = 'sflag constant byte address 0x0 - dummy sync flag']
  #allocation40 [shape = 's32[]', space=sflag, size = 0x4, offset = 0, fixed_abs, tag = 'sflag constant byte address 0x0 - dummy sync flag']
  #allocation41 [shape = 'u32[]', space=smem, size = 0x4, offset = 0x44, fixed_abs, tag = 'smem constant byte address 0x44 - assertion arg 0']
  #allocation42 [shape = 'u32[]', space=smem, size = 0x4, offset = 0x48, fixed_abs, tag = 'smem constant byte address 0x48 - assertion arg 1']
  #allocation43 [shape = 's32[]', space=sflag, size = 0x4, offset = 0, fixed_abs, tag = 'sflag constant byte address 0x0 - dummy sync flag']
  #allocation45 [shape = 's32[]', space=sflag, size = 0x4, offset = 0, fixed_abs, tag = 'sflag constant byte address 0x0 - dummy sync flag']
  #allocation46 [shape = 's32[]', space=sflag, size = 0x4, offset = 0, fixed_abs, tag = 'sflag constant byte address 0x0 - dummy sync flag']
  %s0 = inlined_call_operand.hbm [shape: f32[16,128], index: 0, kind: input, shape index: {}]
  %s1 = inlined_call_operand.vmem [shape: f32[1,128], index: 1, kind: input, shape index: {}]
  %s2 = inlined_call_operand.vmem [shape: f32[1,128], index: 2, kind: input, shape index: {}]
  %s3 = inlined_call_operand.hbm [shape: bf16[432,16], index: 3, kind: input, shape index: {}]
  %s4 = inlined_call_operand.hbm [shape: bf16[3456,512], index: 4, kind: input, shape index: {}]
  %s5 = inlined_call_operand.vmem [shape: f32[16,512], index: 5, kind: input, shape index: {}]
  %s6 = inlined_call_operand.hbm [shape: f32[16,16], index: 6, kind: input, shape index: {}]
  %s7 = inlined_call_operand.hbm [shape: f32[2,16], index: 7, kind: input, shape index: {}]
  %s8 = inlined_call_operand.hbm [shape: f32[1,1,512], index: 8, kind: input, shape index: {}]
  %s9 = inlined_call_operand.hbm [shape: f32[1,1,512], index: 9, kind: input, shape index: {}]
  %s10 = inlined_call_operand.hbm [shape: f32[1,1,1536], index: 10, kind: input, shape index: {}]
  %s11 = inlined_call_operand.hbm [shape: f32[1,1,512], index: 11, kind: input, shape index: {}]
  %s12 = inlined_call_operand.hbm [shape: f32[1,1,512], index: 12, kind: input, shape index: {}]
  %s13 = inlined_call_operand.hbm [shape: f32[1,1,512], index: 13, kind: input, shape index: {}]
  %s14 = inlined_call_operand.hbm [shape: f32[1,1,128], index: 14, kind: input, shape index: {}]
  %s15 = inlined_call_operand.hbm [shape: f32[1,1,512], index: 15, kind: input, shape index: {}]
  %s16 = inlined_call_operand.hbm [shape: f32[1,128], index: 16, kind: input, shape index: {}]
  %s17 = inlined_call_operand.hbm [shape: bf16[1,512,1536], index: 17, kind: input, shape index: {}]
  %s18 = inlined_call_operand.hbm [shape: bf16[1,512,512], index: 18, kind: input, shape index: {}]
  %s19 = inlined_call_operand.hbm [shape: bf16[1,512,128], index: 19, kind: input, shape index: {}]
  %s20 = inlined_call_operand.hbm [shape: bf16[1,128,512], index: 20, kind: input, shape index: {}]
  %s21 = inlined_call_operand.hbm [shape: bf16[512,128], index: 21, kind: input, shape index: {}]
  %s22 = inlined_call_operand.hbm [shape: f32[16,512], index: 22, kind: output, shape index: {0}]
  %s23 = inlined_call_operand.vmem [shape: f32[16,128], index: 23, kind: output, shape index: {1}]
  %s24 = inlined_call_operand.hbm [shape: f32[2,128], index: 24, kind: output, shape index: {2}]
  %25 = xla_tuple %s22, %s23, %s24
  %s26 = sld [smem:[#allocation0]]
  $region158: #{deep_taad_forward.1} parent=0
    _
  %s28 = ssub.s32 1, %s26
  %s29 = scalar_select 0, %s28, %s26
  $region1: #{deep_taad_forward.1} parent=0
    #allocation9 [shape = 'u8[8192]{0}', space=vmem, size = 0x2000, scoped, tag = 'input window, operand 0, single buffered']
    #allocation10 [shape = 's32[1]{0}', space=sflag, size = 0x4, scoped, tag = 'scoped memory for deep_taad_forward.1']
    #allocation11 [shape = 's32[1]{0}', space=sflag, size = 0x4, scoped, tag = 'scoped memory for deep_taad_forward.1']
    #allocation12 [shape = 'u8[110592]{0}', space=vmem, size = 0x1b000, scoped, tag = 'input window, operand 3, single buffered']
    #allocation13 [shape = 's32[1]{0}', space=sflag, size = 0x4, scoped, tag = 'scoped memory for deep_taad_forward.1']
    #allocation14 [shape = 'u8[3538944]{0}', space=vmem, size = 0x360000, scoped, tag = 'input window, operand 4, single buffered']
    #allocation15 [shape = 'u8[8192]{0}', space=vmem, size = 0x2000, scoped, tag = 'input window, operand 6, single buffered']
    #allocation16 [shape = 's32[1]{0}', space=sflag, size = 0x4, scoped, tag = 'scoped memory for deep_taad_forward.1']
    #allocation17 [shape = 'u8[1024]{0}', space=vmem, size = 0x400, scoped, tag = 'input window, operand 7, single buffered']
    #allocation18 [shape = 'u8[2048]{0}', space=vmem, size = 0x800, scoped, tag = 'input window, operand 8, single buffered']
    #allocation19 [shape = 's32[1]{0}', space=sflag, size = 0x4, scoped, tag = 'scoped memory for deep_taad_forward.1']
    #allocation20 [shape = 'u8[2048]{0}', space=vmem, size = 0x800, scoped, tag = 'input window, operand 9, single buffered']
    #allocation21 [shape = 'u8[6144]{0}', space=vmem, size = 0x1800, scoped, tag = 'input window, operand 10, single buffered']
    #allocation22 [shape = 's32[1]{0}', space=sflag, size = 0x4, scoped, tag = 'scoped memory for deep_taad_forward.1']
    #allocation23 [shape = 'u8[2048]{0}', space=vmem, size = 0x800, scoped, tag = 'input window, operand 11, single buffered']
    #allocation24 [shape = 'u8[2048]{0}', space=vmem, size = 0x800, scoped, tag = 'input window, operand 12, single buffered']
    #allocation25 [shape = 's32[1]{0}', space=sflag, size = 0x4, scoped, tag = 'scoped memory for deep_taad_forward.1']
    #allocation26 [shape = 'u8[2048]{0}', space=vmem, size = 0x800, scoped, tag = 'input window, operand 13, single buffered']
    #allocation27 [shape = 'u8[512]{0}', space=vmem, size = 0x400, scoped, tag = 'input window, operand 14, single buffered']
    #allocation28 [shape = 's32[1]{0}', space=sflag, size = 0x4, scoped, tag = 'scoped memory for deep_taad_forward.1']
    #allocation29 [shape = 'u8[2048]{0}', space=vmem, size = 0x800, scoped, tag = 'input window, operand 15, single buffered']
    #allocation30 [shape = 'u8[512]{0}', space=vmem, size = 0x400, scoped, tag = 'input window, operand 16, single buffered']
    #allocation31 [shape = 's32[1]{0}', space=sflag, size = 0x4, scoped, tag = 'scoped memory for deep_taad_forward.1']
    #allocation32 [shape = 'u8[32768]{0}', space=vmem, size = 0x8000, scoped, tag = 'output window, operand 0, single buffered']
    #allocation33 [shape = 'u8[1024]{0}', space=vmem, size = 0x400, scoped, tag = 'output window, operand 2, single buffered']
    #allocation34 [shape = 's32[1]{0}', space=sflag, size = 0x4, scoped, tag = 'scoped memory for deep_taad_forward.1']
    #allocation36 [shape = 'u32[9]{0}', space=smem, size = 0x24, scoped, tag = 'DMA stride descriptor']
    #allocation38 [shape = 'u32[9]{0}', space=smem, size = 0x24, scoped, tag = 'DMA stride descriptor']
    #allocation44 [shape = 'u32[9]{0}', space=smem, size = 0x24, scoped, tag = 'DMA stride descriptor']
    %30 = vsyncpa [#allocation10], 0
    %31 = vsyncpa [#allocation13], 0
    %32 = vsyncpa [#allocation16], 0
    %33 = vsyncpa [#allocation19], 0
    %34 = vsyncpa [#allocation22], 0
    %35 = vsyncpa [#allocation25], 0
    %36 = vsyncpa [#allocation28], 0
    %37 = vsyncpa [#allocation31], 0
    %38 = vsyncpa [#allocation11], 0
    %39 = vsyncpa [#allocation34], 0
    // Predicated region
    $region2: #{deep_taad_forward.1} parent=1 // pred_check
      _
    $region3: #{deep_taad_forward.1} parent=1 // pred_check_branch
      %41 = sbr.rel (0) target = $region5
    $region4: #{deep_taad_forward.1} parent=1 // pred_region
      %s43 = ssub.s32 256, 256
      %44 = vsyncadd [#allocation10], %s43
      %s45 = sshll.u32 [#allocation9], 4
      %s46 = int_to_ptr.vmem [resolvable:$true] %s45
      %51 = dma.hbm_to_vmem [thread:$0]  %s0, 256, %s46, [#allocation10], 128, 128, 8
    $region5: #{deep_taad_forward.1} parent=1 // pred_fallthru
      _
    // Predicated region
    $region6: #{deep_taad_forward.1} parent=1 // pred_check
      _
    $region7: #{deep_taad_forward.1} parent=1 // pred_check_branch
      %53 = sbr.rel (0) target = $region9
    $region8: #{deep_taad_forward.1} parent=1 // pred_region
      _
    $region9: #{deep_taad_forward.1} parent=1 // pred_fallthru
      _
    // Predicated region
    $region10: #{deep_taad_forward.1} parent=1 // pred_check
      _
    $region11: #{deep_taad_forward.1} parent=1 // pred_check_branch
      %55 = sbr.rel (0) target = $region13
    $region12: #{deep_taad_forward.1} parent=1 // pred_region
      _
    $region13: #{deep_taad_forward.1} parent=1 // pred_fallthru
      _
    // Predicated region
    $region14: #{deep_taad_forward.1} parent=1 // pred_check
      _
    $region15: #{deep_taad_forward.1} parent=1 // pred_check_branch
      %57 = sbr.rel (0) target = $region17
    $region16: #{deep_taad_forward.1} parent=1 // pred_region
      %s59 = ssub.s32 3456, 3456
      %60 = vsyncadd [#allocation13], %s59
      %s61 = sshll.u32 [#allocation12], 4
      %s62 = int_to_ptr.vmem [resolvable:$true] %s61
      %67 = dma.hbm_to_vmem [thread:$0]  %s3, 3456, %s62, [#allocation13], 64, 64, 4
    $region17: #{deep_taad_forward.1} parent=1 // pred_fallthru
      _
    // Predicated region
    $region18: #{deep_taad_forward.1} parent=1 // pred_check
      _
    $region19: #{deep_taad_forward.1} parent=1 // pred_check_branch
      %69 = sbr.rel (0) target = $region21
    $region20: #{deep_taad_forward.1} parent=1 // pred_region
      %s71 = ssub.s32 110592, 110592
      %72 = vsyncadd [#allocation13], %s71
      %s73 = sshll.u32 [#allocation14], 4
      %s74 = int_to_ptr.vmem [resolvable:$true] %s73
      %79 = dma.hbm_to_vmem [thread:$0]  %s4, 110592, %s74, [#allocation13], 256, 256, 16
    $region21: #{deep_taad_forward.1} parent=1 // pred_fallthru
      _
    // Predicated region
    $region22: #{deep_taad_forward.1} parent=1 // pred_check
      _
    $region23: #{deep_taad_forward.1} parent=1 // pred_check_branch
      %81 = sbr.rel (0) target = $region25
    $region24: #{deep_taad_forward.1} parent=1 // pred_region
      _
    $region25: #{deep_taad_forward.1} parent=1 // pred_fallthru
      _
    // Predicated region
    $region26: #{deep_taad_forward.1} parent=1 // pred_check
      _
    $region27: #{deep_taad_forward.1} parent=1 // pred_check_branch
      %83 = sbr.rel (0) target = $region29
    $region28: #{deep_taad_forward.1} parent=1 // pred_region
      %s85 = ssub.s32 256, 256
      %86 = vsyncadd [#allocation16], %s85
      %s87 = sshll.u32 [#allocation15], 4
      %s88 = int_to_ptr.vmem [resolvable:$true] %s87
      %93 = dma.hbm_to_vmem [thread:$0]  %s6, 256, %s88, [#allocation16], 128, 128, 8
    $region29: #{deep_taad_forward.1} parent=1 // pred_fallthru
      _
    // Predicated region
    $region30: #{deep_taad_forward.1} parent=1 // pred_check
      _
    $region31: #{deep_taad_forward.1} parent=1 // pred_check_branch
      %95 = sbr.rel (0) target = $region33
    $region32: #{deep_taad_forward.1} parent=1 // pred_region
      %s97 = ssub.s32 32, 32
      %98 = vsyncadd [#allocation16], %s97
      %s100 = sshll.u32 [#allocation17], 4
      %s101 = int_to_ptr.vmem [resolvable:$true] %s100
      %103 = dma.hbm_to_vmem [thread:$0]  %s7, 32, %s101, [#allocation16]
    $region33: #{deep_taad_forward.1} parent=1 // pred_fallthru
      _
    // Predicated region
    $region34: #{deep_taad_forward.1} parent=1 // pred_check
      _
    $region35: #{deep_taad_forward.1} parent=1 // pred_check_branch
      %105 = sbr.rel (0) target = $region37
    $region36: #{deep_taad_forward.1} parent=1 // pred_region
      %s107 = ssub.s32 64, 64
      %108 = vsyncadd [#allocation19], %s107
      %s110 = sshll.u32 [#allocation18], 4
      %s111 = int_to_ptr.vmem [resolvable:$true] %s110
      %113 = dma.hbm_to_vmem [thread:$0]  %s8, 64, %s111, [#allocation19]
    $region37: #{deep_taad_forward.1} parent=1 // pred_fallthru
      _
    // Predicated region
    $region38: #{deep_taad_forward.1} parent=1 // pred_check
      _
    $region39: #{deep_taad_forward.1} parent=1 // pred_check_branch
      %115 = sbr.rel (0) target = $region41
    $region40: #{deep_taad_forward.1} parent=1 // pred_region
      %s117 = ssub.s32 64, 64
      %118 = vsyncadd [#allocation19], %s117
      %s120 = sshll.u32 [#allocation20], 4
      %s121 = int_to_ptr.vmem [resolvable:$true] %s120
      %123 = dma.hbm_to_vmem [thread:$0]  %s9, 64, %s121, [#allocation19]
    $region41: #{deep_taad_forward.1} parent=1 // pred_fallthru
      _
    // Predicated region
    $region42: #{deep_taad_forward.1} parent=1 // pred_check
      _
    $region43: #{deep_taad_forward.1} parent=1 // pred_check_branch
      %125 = sbr.rel (0) target = $region45
    $region44: #{deep_taad_forward.1} parent=1 // pred_region
      %s127 = ssub.s32 192, 192
      %128 = vsyncadd [#allocation22], %s127
      %s130 = sshll.u32 [#allocation21], 4
      %s131 = int_to_ptr.vmem [resolvable:$true] %s130
      %133 = dma.hbm_to_vmem [thread:$0]  %s10, 192, %s131, [#allocation22]
    $region45: #{deep_taad_forward.1} parent=1 // pred_fallthru
      _
    // Predicated region
    $region46: #{deep_taad_forward.1} parent=1 // pred_check
      _
    $region47: #{deep_taad_forward.1} parent=1 // pred_check_branch
      %135 = sbr.rel (0) target = $region49
    $region48: #{deep_taad_forward.1} parent=1 // pred_region
      %s137 = ssub.s32 64, 64
      %138 = vsyncadd [#allocation22], %s137
      %s140 = sshll.u32 [#allocation23], 4
      %s141 = int_to_ptr.vmem [resolvable:$true] %s140
      %143 = dma.hbm_to_vmem [thread:$0]  %s11, 64, %s141, [#allocation22]
    $region49: #{deep_taad_forward.1} parent=1 // pred_fallthru
      _
    // Predicated region
    $region50: #{deep_taad_forward.1} parent=1 // pred_check
      _
    $region51: #{deep_taad_forward.1} parent=1 // pred_check_branch
      %145 = sbr.rel (0) target = $region53
    $region52: #{deep_taad_forward.1} parent=1 // pred_region
      %s147 = ssub.s32 64, 64
      %148 = vsyncadd [#allocation25], %s147
      %s150 = sshll.u32 [#allocation24], 4
      %s151 = int_to_ptr.vmem [resolvable:$true] %s150
      %153 = dma.hbm_to_vmem [thread:$0]  %s12, 64, %s151, [#allocation25]
    $region53: #{deep_taad_forward.1} parent=1 // pred_fallthru
      _
    // Predicated region
    $region54: #{deep_taad_forward.1} parent=1 // pred_check
      _
    $region55: #{deep_taad_forward.1} parent=1 // pred_check_branch
      %155 = sbr.rel (0) target = $region57
    $region56: #{deep_taad_forward.1} parent=1 // pred_region
      %s157 = ssub.s32 64, 64
      %158 = vsyncadd [#allocation25], %s157
      %s160 = sshll.u32 [#allocation26], 4
      %s161 = int_to_ptr.vmem [resolvable:$true] %s160
      %163 = dma.hbm_to_vmem [thread:$0]  %s13, 64, %s161, [#allocation25]
    $region57: #{deep_taad_forward.1} parent=1 // pred_fallthru
      _
    // Predicated region
    $region58: #{deep_taad_forward.1} parent=1 // pred_check
      _
    $region59: #{deep_taad_forward.1} parent=1 // pred_check_branch
      %165 = sbr.rel (0) target = $region61
    $region60: #{deep_taad_forward.1} parent=1 // pred_region
      %s167 = ssub.s32 16, 16
      %168 = vsyncadd [#allocation28], %s167
      %s170 = sshll.u32 [#allocation27], 4
      %s171 = int_to_ptr.vmem [resolvable:$true] %s170
      %173 = dma.hbm_to_vmem [thread:$0]  %s14, 16, %s171, [#allocation28]
    $region61: #{deep_taad_forward.1} parent=1 // pred_fallthru
      _
    // Predicated region
    $region62: #{deep_taad_forward.1} parent=1 // pred_check
      _
    $region63: #{deep_taad_forward.1} parent=1 // pred_check_branch
      %175 = sbr.rel (0) target = $region65
    $region64: #{deep_taad_forward.1} parent=1 // pred_region
      %s177 = ssub.s32 64, 64
      %178 = vsyncadd [#allocation28], %s177
      %s180 = sshll.u32 [#allocation29], 4
      %s181 = int_to_ptr.vmem [resolvable:$true] %s180
      %183 = dma.hbm_to_vmem [thread:$0]  %s15, 64, %s181, [#allocation28]
    $region65: #{deep_taad_forward.1} parent=1 // pred_fallthru
      _
    // Predicated region
    $region66: #{deep_taad_forward.1} parent=1 // pred_check
      _
    $region67: #{deep_taad_forward.1} parent=1 // pred_check_branch
      %185 = sbr.rel (0) target = $region69
    $region68: #{deep_taad_forward.1} parent=1 // pred_region
      %s187 = ssub.s32 16, 16
      %188 = vsyncadd [#allocation31], %s187
      %s190 = sshll.u32 [#allocation30], 4
      %s191 = int_to_ptr.vmem [resolvable:$true] %s190
      %193 = dma.hbm_to_vmem [thread:$0]  %s16, 16, %s191, [#allocation31]
    $region69: #{deep_taad_forward.1} parent=1 // pred_fallthru
      _
    // Predicated region
    $region70: #{deep_taad_forward.1} parent=1 // pred_check
      _
    $region71: #{deep_taad_forward.1} parent=1 // pred_check_branch
      %195 = sbr.rel (0) target = $region73
    $region72: #{deep_taad_forward.1} parent=1 // pred_region
      %196 = dma.done [#allocation10], 256
    $region73: #{deep_taad_forward.1} parent=1 // pred_fallthru
      _
    // Predicated region
    $region74: #{deep_taad_forward.1} parent=1 // pred_check
      _
    $region75: #{deep_taad_forward.1} parent=1 // pred_check_branch
      %198 = sbr.rel (0) target = $region77
    $region76: #{deep_taad_forward.1} parent=1 // pred_region
      %199 = dma.done [#allocation13], 3456
    $region77: #{deep_taad_forward.1} parent=1 // pred_fallthru
      _
    // Predicated region
    $region78: #{deep_taad_forward.1} parent=1 // pred_check
      _
    $region79: #{deep_taad_forward.1} parent=1 // pred_check_branch
      %201 = sbr.rel (0) target = $region81
    $region80: #{deep_taad_forward.1} parent=1 // pred_region
      %202 = dma.done [#allocation13], 110592
    $region81: #{deep_taad_forward.1} parent=1 // pred_fallthru
      _
    // Predicated region
    $region82: #{deep_taad_forward.1} parent=1 // pred_check
      _
    $region83: #{deep_taad_forward.1} parent=1 // pred_check_branch
      %204 = sbr.rel (0) target = $region85
    $region84: #{deep_taad_forward.1} parent=1 // pred_region
      %205 = dma.done [#allocation16], 256
    $region85: #{deep_taad_forward.1} parent=1 // pred_fallthru
      _
    // Predicated region
    $region86: #{deep_taad_forward.1} parent=1 // pred_check
      _
    $region87: #{deep_taad_forward.1} parent=1 // pred_check_branch
      %207 = sbr.rel (0) target = $region89
    $region88: #{deep_taad_forward.1} parent=1 // pred_region
      %208 = dma.done [#allocation16], 32
    $region89: #{deep_taad_forward.1} parent=1 // pred_fallthru
      _
    // Predicated region
    $region90: #{deep_taad_forward.1} parent=1 // pred_check
      _
    $region91: #{deep_taad_forward.1} parent=1 // pred_check_branch
      %210 = sbr.rel (0) target = $region93
    $region92: #{deep_taad_forward.1} parent=1 // pred_region
      %211 = dma.done [#allocation19], 64
    $region93: #{deep_taad_forward.1} parent=1 // pred_fallthru
      _
    // Predicated region
    $region94: #{deep_taad_forward.1} parent=1 // pred_check
      _
    $region95: #{deep_taad_forward.1} parent=1 // pred_check_branch
      %213 = sbr.rel (0) target = $region97
    $region96: #{deep_taad_forward.1} parent=1 // pred_region
      %214 = dma.done [#allocation19], 64
    $region97: #{deep_taad_forward.1} parent=1 // pred_fallthru
      _
    // Predicated region
    $region98: #{deep_taad_forward.1} parent=1 // pred_check
      _
    $region99: #{deep_taad_forward.1} parent=1 // pred_check_branch
      %216 = sbr.rel (0) target = $region101
    $region100: #{deep_taad_forward.1} parent=1 // pred_region
      %217 = dma.done [#allocation22], 192
    $region101: #{deep_taad_forward.1} parent=1 // pred_fallthru
      _
    // Predicated region
    $region102: #{deep_taad_forward.1} parent=1 // pred_check
      _
    $region103: #{deep_taad_forward.1} parent=1 // pred_check_branch
      %219 = sbr.rel (0) target = $region105
    $region104: #{deep_taad_forward.1} parent=1 // pred_region
      %220 = dma.done [#allocation22], 64
    $region105: #{deep_taad_forward.1} parent=1 // pred_fallthru
      _
    // Predicated region
    $region106: #{deep_taad_forward.1} parent=1 // pred_check
      _
    $region107: #{deep_taad_forward.1} parent=1 // pred_check_branch
      %222 = sbr.rel (0) target = $region109
    $region108: #{deep_taad_forward.1} parent=1 // pred_region
      %223 = dma.done [#allocation25], 64
    $region109: #{deep_taad_forward.1} parent=1 // pred_fallthru
      _
    // Predicated region
    $region110: #{deep_taad_forward.1} parent=1 // pred_check
      _
    $region111: #{deep_taad_forward.1} parent=1 // pred_check_branch
      %225 = sbr.rel (0) target = $region113
    $region112: #{deep_taad_forward.1} parent=1 // pred_region
      %226 = dma.done [#allocation25], 64
    $region113: #{deep_taad_forward.1} parent=1 // pred_fallthru
      _
    // Predicated region
    $region114: #{deep_taad_forward.1} parent=1 // pred_check
      _
    $region115: #{deep_taad_forward.1} parent=1 // pred_check_branch
      %228 = sbr.rel (0) target = $region117
    $region116: #{deep_taad_forward.1} parent=1 // pred_region
      %229 = dma.done [#allocation28], 16
    $region117: #{deep_taad_forward.1} parent=1 // pred_fallthru
      _
    // Predicated region
    $region118: #{deep_taad_forward.1} parent=1 // pred_check
      _
    $region119: #{deep_taad_forward.1} parent=1 // pred_check_branch
      %231 = sbr.rel (0) target = $region121
    $region120: #{deep_taad_forward.1} parent=1 // pred_region
      %232 = dma.done [#allocation28], 64
    $region121: #{deep_taad_forward.1} parent=1 // pred_fallthru
      _
    // Predicated region
    $region122: #{deep_taad_forward.1} parent=1 // pred_check
      _
    $region123: #{deep_taad_forward.1} parent=1 // pred_check_branch
      %234 = sbr.rel (0) target = $region125
    $region124: #{deep_taad_forward.1} parent=1 // pred_region
      %235 = dma.done [#allocation31], 16
    $region125: #{deep_taad_forward.1} parent=1 // pred_fallthru
      _
    %s238 = sshll.u32 1, 14
    %s239 = sxor.u32 4294967295, %s238
    %s241 = sld [smem:[#allocation0]]
    %s242 = sadd.s32 2, %s241
    %s244 = sshll.u32 7, 26
    %s245 = sxor.u32 4294967295, %s244
    %s246 = sand.u32 0, %s245
    %s247 = sshll.u32 %s242, 26
    %s248 = sor.u32 %s246, %s247
    %s249 = sshll.u32 [#allocation3], 4
    %s250 = int_to_ptr.vmem [resolvable:$true] %s249
    %253 = sst [smem:[#allocation36]] 1536
    %s254 = scalar_lea.smem [#allocation36], 1
    %255 = sst [smem:[%s254]] 1536
    %s256 = scalar_lea.smem [#allocation36], 2
    %257 = sst [smem:[%s256]] 12
    %s258 = scalar_lea.smem [#allocation36], 3
    %259 = sst [smem:[%s258]] 64
    %s260 = scalar_lea.smem [#allocation36], 4
    %261 = sst [smem:[%s260]] 128
    %s262 = scalar_lea.smem [#allocation36], 5
    %263 = sst [smem:[%s262]] 2
    %s264 = scalar_lea.smem [#allocation36], 6
    %265 = sst [smem:[%s264]] 768
    %s266 = scalar_lea.smem [#allocation36], 7
    %267 = sst [smem:[%s266]] 64
    %s268 = scalar_lea.smem [#allocation36], 8
    %269 = sst [smem:[%s268]] 4
    %271 = dma.general %s17, 49152, %s250, [#allocation8], [#allocation35], [#allocation36], %s248, 0
    %s272 = scalar_lea.sflag [#allocation8], 1
    %s274 = sshll.u32 1, 14
    %s275 = sxor.u32 4294967295, %s274
    %s277 = sadd.s32 2, %s241
    %s279 = sshll.u32 7, 26
    %s280 = sxor.u32 4294967295, %s279
    %s281 = sand.u32 0, %s280
    %s282 = sshll.u32 %s277, 26
    %s283 = sor.u32 %s281, %s282
    %s284 = sshll.u32 [#allocation4], 4
    %s285 = int_to_ptr.vmem [resolvable:$true] %s284
    %288 = sst [smem:[#allocation38]] 512
    %s289 = scalar_lea.smem [#allocation38], 1
    %290 = sst [smem:[%s289]] 512
    %s291 = scalar_lea.smem [#allocation38], 2
    %292 = sst [smem:[%s291]] 4
    %s293 = scalar_lea.smem [#allocation38], 3
    %294 = sst [smem:[%s293]] 64
    %s295 = scalar_lea.smem [#allocation38], 4
    %296 = sst [smem:[%s295]] 128
    %s297 = scalar_lea.smem [#allocation38], 5
    %298 = sst [smem:[%s297]] 2
    %s299 = scalar_lea.smem [#allocation38], 6
    %300 = sst [smem:[%s299]] 256
    %s301 = scalar_lea.smem [#allocation38], 7
    %302 = sst [smem:[%s301]] 64
    %s303 = scalar_lea.smem [#allocation38], 8
    %304 = sst [smem:[%s303]] 4
    %306 = dma.general %s18, 16384, %s285, %s272, [#allocation37], [#allocation38], %s283, 0
    %s307 = scalar_lea.sflag [#allocation8], 2
    // Predicated region
    $region126: #{deep_taad_forward.1} parent=1 // pred_check
      _
    $region127: #{deep_taad_forward.1} parent=1 // pred_check_branch
      %309 = sbr.rel target = $region129
    $region128: #{deep_taad_forward.1} parent=1 // pred_region
      %310 = sst [smem:[#allocation41]] [#allocation40]
      %311 = sst [smem:[#allocation42]] [#allocation39]
    $region129: #{deep_taad_forward.1} parent=1 // pred_fallthru
      _
    %313 = shalt.err (0)
    %s315 = sshll.u32 [#allocation5], 4
    %s316 = int_to_ptr.vmem [resolvable:$true] %s315
    %318 = dma.hbm_to_vmem [thread:$0]  %s19, 4096, %s316, %s307
    %s319 = scalar_lea.sflag [#allocation8], 3
    %s321 = sshll.u32 1, 14
    %s322 = sxor.u32 4294967295, %s321
    %s324 = sadd.s32 2, %s241
    %s326 = sshll.u32 7, 26
    %s327 = sxor.u32 4294967295, %s326
    %s328 = sand.u32 0, %s327
    %s329 = sshll.u32 %s324, 26
    %s330 = sor.u32 %s328, %s329
    %s331 = sshll.u32 [#allocation6], 4
    %s332 = int_to_ptr.vmem [resolvable:$true] %s331
    %335 = sst [smem:[#allocation44]] 512
    %s336 = scalar_lea.smem [#allocation44], 1
    %337 = sst [smem:[%s336]] 512
    %s338 = scalar_lea.smem [#allocation44], 2
    %339 = sst [smem:[%s338]] 4
    %s340 = scalar_lea.smem [#allocation44], 3
    %341 = sst [smem:[%s340]] 64
    %s342 = scalar_lea.smem [#allocation44], 4
    %343 = sst [smem:[%s342]] 128
    %s344 = scalar_lea.smem [#allocation44], 5
    %345 = sst [smem:[%s344]] 2
    %s346 = scalar_lea.smem [#allocation44], 6
    %347 = sst [smem:[%s346]] 256
    %s348 = scalar_lea.smem [#allocation44], 7
    %349 = sst [smem:[%s348]] 64
    %s350 = scalar_lea.smem [#allocation44], 8
    %351 = sst [smem:[%s350]] 4
    %353 = dma.general %s20, 4096, %s332, %s319, [#allocation43], [#allocation44], %s330, 0
    %s354 = scalar_lea.sflag [#allocation8], 4
    // Predicated region
    $region130: #{deep_taad_forward.1} parent=1 // pred_check
      _
    $region131: #{deep_taad_forward.1} parent=1 // pred_check_branch
      %356 = sbr.rel target = $region133
    $region132: #{deep_taad_forward.1} parent=1 // pred_region
      %357 = sst [smem:[#allocation41]] [#allocation46]
      %358 = sst [smem:[#allocation42]] [#allocation45]
    $region133: #{deep_taad_forward.1} parent=1 // pred_fallthru
      _
    %360 = shalt.err (0)
    %s362 = sshll.u32 [#allocation7], 4
    %s363 = int_to_ptr.vmem [resolvable:$true] %s362
    %365 = dma.hbm_to_vmem [thread:$0]  %s21, 4096, %s363, %s354
    %v366 = vld [vmem:[#allocation9] sm:$0xff]
    %v367 = vld [vmem:[#allocation9 + $0x8] sm:$0xff]
    %v368 = vld [vmem:[%s1] sm:$0x1]
    %v370 = vlaneseq
    %v371 = vshrl.u32 %v370, 7
    %v372 = vsub.s32 0, %v371
    %v373 = vrot.slane %v368, %v372
    %v375 = vmul.f32 %v366, %v373
    %v376 = vmul.f32 %v367, %v373
    %v377 = vld [vmem:[%s2] sm:$0x1]
    %v379 = vlaneseq
    %v380 = vshrl.u32 %v379, 7
    %v381 = vsub.s32 0, %v380
    %v382 = vrot.slane %v377, %v381
    %v384 = vadd.f32 %v375, %v382
    %v385 = vadd.f32 %v376, %v382
    %v386 = vmax.f32 %v384, 0.0
    %v387 = vmax.f32 %v385, 0.0
    %v388 = vpack.c.bf16 %v387, %v386
    %v389 = vld [vmem:[#allocation12] sm:$0xf]
    %v390 = vld [vmem:[#allocation12 + $0x4] sm:$0xf]
    %v391 = vld [vmem:[#allocation12 + $0x8] sm:$0xf]
    %v392 = vld [vmem:[#allocation12 + $0xc] sm:$0xf]
    %v393 = vld [vmem:[#allocation12 + $0x10] sm:$0xf]
    %v394 = vld [vmem:[#allocation12 + $0x14] sm:$0xf]
    %v395 = vld [vmem:[#allocation12 + $0x18] sm:$0xf]
    %v396 = vld [vmem:[#allocation12 + $0x1c] sm:$0xf]
    %v397 = vld [vmem:[#allocation12 + $0x20] sm:$0xf]
    %v398 = vld [vmem:[#allocation12 + $0x24] sm:$0xf]
    %v399 = vld [vmem:[#allocation12 + $0x28] sm:$0xf]
    %v400 = vld [vmem:[#allocation12 + $0x2c] sm:$0xf]
    %v401 = vld [vmem:[#allocation12 + $0x30] sm:$0xf]
    %v402 = vld [vmem:[#allocation12 + $0x34] sm:$0xf]
    %v403 = vld [vmem:[#allocation12 + $0x38] sm:$0xf]
    %v404 = vld [vmem:[#allocation12 + $0x3c] sm:$0xf]
    %v405 = vld [vmem:[#allocation12 + $0x40] sm:$0xf]
    %v406 = vld [vmem:[#allocation12 + $0x44] sm:$0xf]
    %v407 = vld [vmem:[#allocation12 + $0x48] sm:$0xf]
    %v408 = vld [vmem:[#allocation12 + $0x4c] sm:$0xf]
    %v409 = vld [vmem:[#allocation12 + $0x50] sm:$0xf]
    %v410 = vld [vmem:[#allocation12 + $0x54] sm:$0xf]
    %v411 = vld [vmem:[#allocation12 + $0x58] sm:$0xf]
    %v412 = vld [vmem:[#allocation12 + $0x5c] sm:$0xf]
    %v413 = vld [vmem:[#allocation12 + $0x60] sm:$0xf]
    %v414 = vld [vmem:[#allocation12 + $0x64] sm:$0xf]
    %v415 = vld [vmem:[#allocation12 + $0x68] sm:$0xf]
    %v416 = vld [vmem:[#allocation12 + $0x6c] sm:$0xf]
    %v417 = vld [vmem:[#allocation12 + $0x70] sm:$0xf]
    %v418 = vld [vmem:[#allocation12 + $0x74] sm:$0xf]
    %v419 = vld [vmem:[#allocation12 + $0x78] sm:$0xf]
    %v420 = vld [vmem:[#allocation12 + $0x7c] sm:$0xf]
    %v421 = vld [vmem:[#allocation12 + $0x80] sm:$0xf]
    %v422 = vld [vmem:[#allocation12 + $0x84] sm:$0xf]
    %v423 = vld [vmem:[#allocation12 + $0x88] sm:$0xf]
    %v424 = vld [vmem:[#allocation12 + $0x8c] sm:$0xf]
    %v425 = vld [vmem:[#allocation12 + $0x90] sm:$0xf]
    %v426 = vld [vmem:[#allocation12 + $0x94] sm:$0xf]
    %v427 = vld [vmem:[#allocation12 + $0x98] sm:$0xf]
    %v428 = vld [vmem:[#allocation12 + $0x9c] sm:$0xf]
    %v429 = vld [vmem:[#allocation12 + $0xa0] sm:$0xf]
    %v430 = vld [vmem:[#allocation12 + $0xa4] sm:$0xf]
    %v431 = vld [vmem:[#allocation12 + $0xa8] sm:$0xf]
    %v432 = vld [vmem:[#allocation12 + $0xac] sm:$0xf]
    %v433 = vld [vmem:[#allocation12 + $0xb0] sm:$0xf]
    %v434 = vld [vmem:[#allocation12 + $0xb4] sm:$0xf]
    %v435 = vld [vmem:[#allocation12 + $0xb8] sm:$0xf]
    %v436 = vld [vmem:[#allocation12 + $0xbc] sm:$0xf]
    %v437 = vld [vmem:[#allocation12 + $0xc0] sm:$0xf]
    %v438 = vld [vmem:[#allocation12 + $0xc4] sm:$0xf]
    %v439 = vld [vmem:[#allocation12 + $0xc8] sm:$0xf]
    %v440 = vld [vmem:[#allocation12 + $0xcc] sm:$0xf]
    %v441 = vld [vmem:[#allocation12 + $0xd0] sm:$0xf]
    %v442 = vld [vmem:[#allocation12 + $0xd4] sm:$0xf]
    %v497 = vunpack.c.l.b16 %v389
    %v498 = vunpack.c.l.b16 %v390
    %v499 = vunpack.c.l.b16 %v391
    %v500 = vunpack.c.l.b16 %v392
    %v501 = vunpack.c.l.b16 %v393
    %v502 = vunpack.c.l.b16 %v394
    %v503 = vunpack.c.l.b16 %v395
    %v504 = vunpack.c.l.b16 %v396
    %v505 = vunpack.c.l.b16 %v397
    %v506 = vunpack.c.l.b16 %v398
    %v507 = vunpack.c.l.b16 %v399
    %v508 = vunpack.c.l.b16 %v400
    %v509 = vunpack.c.l.b16 %v401
    %v510 = vunpack.c.l.b16 %v402
    %v511 = vunpack.c.l.b16 %v403
    %v512 = vunpack.c.l.b16 %v404
    %v513 = vunpack.c.l.b16 %v405
    %v514 = vunpack.c.l.b16 %v406
    %v515 = vunpack.c.l.b16 %v407
    %v516 = vunpack.c.l.b16 %v408
    %v517 = vunpack.c.l.b16 %v409
    %v518 = vunpack.c.l.b16 %v410
    %v519 = vunpack.c.l.b16 %v411
    %v520 = vunpack.c.l.b16 %v412
    %v521 = vunpack.c.l.b16 %v413
    %v522 = vunpack.c.l.b16 %v414
    %v523 = vunpack.c.l.b16 %v415
    %v524 = vunpack.c.l.b16 %v416
    %v525 = vunpack.c.l.b16 %v417
    %v526 = vunpack.c.l.b16 %v418
    %v527 = vunpack.c.l.b16 %v419
    %v528 = vunpack.c.l.b16 %v420
    %v529 = vunpack.c.l.b16 %v421
    %v530 = vunpack.c.l.b16 %v422
    %v531 = vunpack.c.l.b16 %v423
    %v532 = vunpack.c.l.b16 %v424
    %v533 = vunpack.c.l.b16 %v425
    %v534 = vunpack.c.l.b16 %v426
    %v535 = vunpack.c.l.b16 %v427
    %v536 = vunpack.c.l.b16 %v428
    %v537 = vunpack.c.l.b16 %v429
    %v538 = vunpack.c.l.b16 %v430
    %v539 = vunpack.c.l.b16 %v431
    %v540 = vunpack.c.l.b16 %v432
    %v541 = vunpack.c.l.b16 %v433
    %v542 = vunpack.c.l.b16 %v434
    %v543 = vunpack.c.l.b16 %v435
    %v544 = vunpack.c.l.b16 %v436
    %v545 = vunpack.c.l.b16 %v437
    %v546 = vunpack.c.l.b16 %v438
    %v547 = vunpack.c.l.b16 %v439
    %v548 = vunpack.c.l.b16 %v440
    %v549 = vunpack.c.l.b16 %v441
    %v550 = vunpack.c.l.b16 %v442
    %v551 = vpack.c.b16 %v498, %v497
    %v552 = vpack.c.b16 %v500, %v499
    %v553 = vpack.c.b16 %v502, %v501
    %v554 = vpack.c.b16 %v504, %v503
    %v555 = vpack.c.b16 %v506, %v505
    %v556 = vpack.c.b16 %v508, %v507
    %v557 = vpack.c.b16 %v510, %v509
    %v558 = vpack.c.b16 %v512, %v511
    %v559 = vpack.c.b16 %v514, %v513
    %v560 = vpack.c.b16 %v516, %v515
    %v561 = vpack.c.b16 %v518, %v517
    %v562 = vpack.c.b16 %v520, %v519
    %v563 = vpack.c.b16 %v522, %v521
    %v564 = vpack.c.b16 %v524, %v523
    %v565 = vpack.c.b16 %v526, %v525
    %v566 = vpack.c.b16 %v528, %v527
    %v567 = vpack.c.b16 %v530, %v529
    %v568 = vpack.c.b16 %v532, %v531
    %v569 = vpack.c.b16 %v534, %v533
    %v570 = vpack.c.b16 %v536, %v535
    %v571 = vpack.c.b16 %v538, %v537
    %v572 = vpack.c.b16 %v540, %v539
    %v573 = vpack.c.b16 %v542, %v541
    %v574 = vpack.c.b16 %v544, %v543
    %v575 = vpack.c.b16 %v546, %v545
    %v576 = vpack.c.b16 %v548, %v547
    %v577 = vpack.c.b16 %v550, %v549
    %vm578 = vcmask 130048
    %v580 = vsel %vm578, %v551, 0
    %v583 = vsel %vm578, %v552, 0
    %v586 = vsel %vm578, %v553, 0
    %v589 = vsel %vm578, %v554, 0
    %v592 = vsel %vm578, %v555, 0
    %v595 = vsel %vm578, %v556, 0
    %v598 = vsel %vm578, %v557, 0
    %v601 = vsel %vm578, %v558, 0
    %v604 = vsel %vm578, %v559, 0
    %v607 = vsel %vm578, %v560, 0
    %v610 = vsel %vm578, %v561, 0
    %v613 = vsel %vm578, %v562, 0
    %v616 = vsel %vm578, %v563, 0
    %v619 = vsel %vm578, %v564, 0
    %v622 = vsel %vm578, %v565, 0
    %v625 = vsel %vm578, %v566, 0
    %v628 = vsel %vm578, %v567, 0
    %v631 = vsel %vm578, %v568, 0
    %v634 = vsel %vm578, %v569, 0
    %v637 = vsel %vm578, %v570, 0
    %v640 = vsel %vm578, %v571, 0
    %v643 = vsel %vm578, %v572, 0
    %v646 = vsel %vm578, %v573, 0
    %v649 = vsel %vm578, %v574, 0
    %v652 = vsel %vm578, %v575, 0
    %v655 = vsel %vm578, %v576, 0
    %v658 = vsel %vm578, %v577, 0
    %660 = vmatprep.subr.bf16.mxu0 0
    %661 = vmatpush1.bf16.msra.mxu0 %v388
    %662 = vmatprep.subr.bf16.mxu0 0
    %663 = vmatpush1.bf16.msra.mxu0 0
    %664 = vmatprep.subr.bf16.mxu0 0
    %665 = vmatpush1.bf16.msra.mxu0 0
    %666 = vmatprep.subr.bf16.mxu0 0
    %667 = vmatpush1.bf16.msra.mxu0 0
    %668 = vmatprep.subr.bf16.mxu0 0
    %669 = vmatpush1.bf16.msra.mxu0 0
    %670 = vmatprep.subr.bf16.mxu0 0
    %671 = vmatpush1.bf16.msra.mxu0 0
    %672 = vmatprep.subr.bf16.mxu0 0
    %673 = vmatpush1.bf16.msra.mxu0 0
    %674 = vmatprep.subr.bf16.mxu0 0
    %675 = vmatpush1.bf16.msra.mxu0 0
    %676 = vmatprep.subr.bf16.mxu0 0
    %677 = vmatpush1.bf16.msra.mxu0 0
    %678 = vmatprep.subr.bf16.mxu0 0
    %679 = vmatpush1.bf16.msra.mxu0 0
    %680 = vmatprep.subr.bf16.mxu0 0
    %681 = vmatpush1.bf16.msra.mxu0 0
    %682 = vmatprep.subr.bf16.mxu0 0
    %683 = vmatpush1.bf16.msra.mxu0 0
    %684 = vmatprep.subr.bf16.mxu0 0
    %685 = vmatpush1.bf16.msra.mxu0 0
    %686 = vmatprep.subr.bf16.mxu0 0
    %687 = vmatpush1.bf16.msra.mxu0 0
    %688 = vmatprep.subr.bf16.mxu0 0
    %689 = vmatpush1.bf16.msra.mxu0 0
    %690 = vmatprep.subr.bf16.mxu0 0
    %691 = vmatpush1.bf16.msra.mxu0 0
    %692 = vmatprep.mubr.bf16.mxu0 0
    %693 = vmatmul.mubr.bf16.gmra.mrb[0].mxu0 %v580
    %v694 = vpop.f32.mrb[0].mxu0
    %v695 = vadd.f32 0.0, %v694
    %v696 = vpop.f32.mrb[0].mxu0
    %v697 = vpop.f32.mrb[0].mxu0
    %v698 = vadd.f32 0.0, %v697
    %v699 = vpop.f32.mrb[0].mxu0
    %700 = vmatprep.mubr.bf16.mxu0 0
    %701 = vmatmul.mubr.bf16.gmra.mrb[0].mxu0 %v583
    %v702 = vpop.f32.mrb[0].mxu0
    %v703 = vadd.f32 0.0, %v702
    %v704 = vpop.f32.mrb[0].mxu0
    %v705 = vpop.f32.mrb[0].mxu0
    %v706 = vadd.f32 0.0, %v705
    %v707 = vpop.f32.mrb[0].mxu0
    %708 = vmatprep.mubr.bf16.mxu0 0
    %709 = vmatmul.mubr.bf16.gmra.mrb[0].mxu0 %v586
    %v710 = vpop.f32.mrb[0].mxu0
    %v711 = vadd.f32 0.0, %v710
    %v712 = vpop.f32.mrb[0].mxu0
    %v713 = vpop.f32.mrb[0].mxu0
    %v714 = vadd.f32 0.0, %v713
    %v715 = vpop.f32.mrb[0].mxu0
    %716 = vmatprep.mubr.bf16.mxu0 0
    %717 = vmatmul.mubr.bf16.gmra.mrb[0].mxu0 %v589
    %v718 = vpop.f32.mrb[0].mxu0
    %v719 = vadd.f32 0.0, %v718
    %v720 = vpop.f32.mrb[0].mxu0
    %v721 = vpop.f32.mrb[0].mxu0
    %v722 = vadd.f32 0.0, %v721
    %v723 = vpop.f32.mrb[0].mxu0
    %724 = vmatprep.mubr.bf16.mxu0 0
    %725 = vmatmul.mubr.bf16.gmra.mrb[0].mxu0 %v592
    %v726 = vpop.f32.mrb[0].mxu0
    %v727 = vadd.f32 0.0, %v726
    %v728 = vpop.f32.mrb[0].mxu0
    %v729 = vpop.f32.mrb[0].mxu0
    %v730 = vadd.f32 0.0, %v729
    %v731 = vpop.f32.mrb[0].mxu0
    %732 = vmatprep.mubr.bf16.mxu0 0
    %733 = vmatmul.mubr.bf16.gmra.mrb[0].mxu0 %v595
    %v734 = vpop.f32.mrb[0].mxu0
    %v735 = vadd.f32 0.0, %v734
    %v736 = vpop.f32.mrb[0].mxu0
    %v737 = vpop.f32.mrb[0].mxu0
    %v738 = vadd.f32 0.0, %v737
    %v739 = vpop.f32.mrb[0].mxu0
    %740 = vmatprep.mubr.bf16.mxu0 0
    %741 = vmatmul.mubr.bf16.gmra.mrb[0].mxu0 %v598
    %v742 = vpop.f32.mrb[0].mxu0
    %v743 = vadd.f32 0.0, %v742
    %v744 = vpop.f32.mrb[0].mxu0
    %v745 = vpop.f32.mrb[0].mxu0
    %v746 = vadd.f32 0.0, %v745
    %v747 = vpop.f32.mrb[0].mxu0
    %748 = vmatprep.mubr.bf16.mxu0 0
    %749 = vmatmul.mubr.bf16.gmra.mrb[0].mxu0 %v601
    %v750 = vpop.f32.mrb[0].mxu0
    %v751 = vadd.f32 0.0, %v750
    %v752 = vpop.f32.mrb[0].mxu0
    %v753 = vpop.f32.mrb[0].mxu0
    %v754 = vadd.f32 0.0, %v753
    %v755 = vpop.f32.mrb[0].mxu0
    %756 = vmatprep.mubr.bf16.mxu0 0
    %757 = vmatmul.mubr.bf16.gmra.mrb[0].mxu0 %v604
    %v758 = vpop.f32.mrb[0].mxu0
    %v759 = vadd.f32 0.0, %v758
    %v760 = vpop.f32.mrb[0].mxu0
    %v761 = vpop.f32.mrb[0].mxu0
    %v762 = vadd.f32 0.0, %v761
    %v763 = vpop.f32.mrb[0].mxu0
    %764 = vmatprep.mubr.bf16.mxu0 0
    %765 = vmatmul.mubr.bf16.gmra.mrb[0].mxu0 %v607
    %v766 = vpop.f32.mrb[0].mxu0
    %v767 = vadd.f32 0.0, %v766
    %v768 = vpop.f32.mrb[0].mxu0
    %v769 = vpop.f32.mrb[0].mxu0
    %v770 = vadd.f32 0.0, %v769
    %v771 = vpop.f32.mrb[0].mxu0
    %772 = vmatprep.mubr.bf16.mxu0 0
    %773 = vmatmul.mubr.bf16.gmra.mrb[0].mxu0 %v610
    %v774 = vpop.f32.mrb[0].mxu0
    %v775 = vadd.f32 0.0, %v774
    %v776 = vpop.f32.mrb[0].mxu0
    %v777 = vpop.f32.mrb[0].mxu0
    %v778 = vadd.f32 0.0, %v777
    %v779 = vpop.f32.mrb[0].mxu0
    %780 = vmatprep.mubr.bf16.mxu0 0
    %781 = vmatmul.mubr.bf16.gmra.mrb[0].mxu0 %v613
    %v782 = vpop.f32.mrb[0].mxu0
    %v783 = vadd.f32 0.0, %v782
    %v784 = vpop.f32.mrb[0].mxu0
    %v785 = vpop.f32.mrb[0].mxu0
    %v786 = vadd.f32 0.0, %v785
    %v787 = vpop.f32.mrb[0].mxu0
    %788 = vmatprep.mubr.bf16.mxu0 0
    %789 = vmatmul.mubr.bf16.gmra.mrb[0].mxu0 %v616
    %v790 = vpop.f32.mrb[0].mxu0
    %v791 = vadd.f32 0.0, %v790
    %v792 = vpop.f32.mrb[0].mxu0
    %v793 = vpop.f32.mrb[0].mxu0
    %v794 = vadd.f32 0.0, %v793
    %v795 = vpop.f32.mrb[0].mxu0
    %796 = vmatprep.mubr.bf16.mxu0 0
    %797 = vmatmul.mubr.bf16.gmra.mrb[0].mxu0 %v619
    %v798 = vpop.f32.mrb[0].mxu0
    %v799 = vadd.f32 0.0, %v798
    %v800 = vpop.f32.mrb[0].mxu0
    %v801 = vpop.f32.mrb[0].mxu0
    %v802 = vadd.f32 0.0, %v801
    %v803 = vpop.f32.mrb[0].mxu0
    %804 = vmatprep.mubr.bf16.mxu0 0
    %805 = vmatmul.mubr.bf16.gmra.mrb[0].mxu0 %v622
    %v806 = vpop.f32.mrb[0].mxu0
    %v807 = vadd.f32 0.0, %v806
    %v808 = vpop.f32.mrb[0].mxu0
    %v809 = vpop.f32.mrb[0].mxu0
    %v810 = vadd.f32 0.0, %v809
    %v811 = vpop.f32.mrb[0].mxu0
    %812 = vmatprep.mubr.bf16.mxu0 0
    %813 = vmatmul.mubr.bf16.gmra.mrb[0].mxu0 %v625
    %v814 = vpop.f32.mrb[0].mxu0
    %v815 = vadd.f32 0.0, %v814
    %v816 = vpop.f32.mrb[0].mxu0
    %v817 = vpop.f32.mrb[0].mxu0
    %v818 = vadd.f32 0.0, %v817
    %v819 = vpop.f32.mrb[0].mxu0
    %820 = vmatprep.mubr.bf16.mxu0 0
    %821 = vmatmul.mubr.bf16.gmra.mrb[0].mxu0 %v628
    %v822 = vpop.f32.mrb[0].mxu0
    %v823 = vadd.f32 0.0, %v822
    %v824 = vpop.f32.mrb[0].mxu0
    %v825 = vpop.f32.mrb[0].mxu0
    %v826 = vadd.f32 0.0, %v825
    %v827 = vpop.f32.mrb[0].mxu0
    %828 = vmatprep.mubr.bf16.mxu0 0
    %829 = vmatmul.mubr.bf16.gmra.mrb[0].mxu0 %v631
    %v830 = vpop.f32.mrb[0].mxu0
    %v831 = vadd.f32 0.0, %v830
    %v832 = vpop.f32.mrb[0].mxu0
    %v833 = vpop.f32.mrb[0].mxu0
    %v834 = vadd.f32 0.0, %v833
    %v835 = vpop.f32.mrb[0].mxu0
    %836 = vmatprep.mubr.bf16.mxu0 0
    %837 = vmatmul.mubr.bf16.gmra.mrb[0].mxu0 %v634
    %v838 = vpop.f32.mrb[0].mxu0
    %v839 = vadd.f32 0.0, %v838
    %v840 = vpop.f32.mrb[0].mxu0
    %v841 = vpop.f32.mrb[0].mxu0
    %v842 = vadd.f32 0.0, %v841
    %v843 = vpop.f32.mrb[0].mxu0
    %844 = vmatprep.mubr.bf16.mxu0 0
    %845 = vmatmul.mubr.bf16.gmra.mrb[0].mxu0 %v637
    %v846 = vpop.f32.mrb[0].mxu0
    %v847 = vadd.f32 0.0, %v846
    %v848 = vpop.f32.mrb[0].mxu0
    %v849 = vpop.f32.mrb[0].mxu0
    %v850 = vadd.f32 0.0, %v849
    %v851 = vpop.f32.mrb[0].mxu0
    %852 = vmatprep.mubr.bf16.mxu0 0
    %853 = vmatmul.mubr.bf16.gmra.mrb[0].mxu0 %v640
    %v854 = vpop.f32.mrb[0].mxu0
    %v855 = vadd.f32 0.0, %v854
    %v856 = vpop.f32.mrb[0].mxu0
    %v857 = vpop.f32.mrb[0].mxu0
    %v858 = vadd.f32 0.0, %v857
    %v859 = vpop.f32.mrb[0].mxu0
    %860 = vmatprep.mubr.bf16.mxu0 0
    %861 = vmatmul.mubr.bf16.gmra.mrb[0].mxu0 %v643
    %v862 = vpop.f32.mrb[0].mxu0
    %v863 = vadd.f32 0.0, %v862
    %v864 = vpop.f32.mrb[0].mxu0
    %v865 = vpop.f32.mrb[0].mxu0
    %v866 = vadd.f32 0.0, %v865
    %v867 = vpop.f32.mrb[0].mxu0
    %868 = vmatprep.mubr.bf16.mxu0 0
    %869 = vmatmul.mubr.bf16.gmra.mrb[0].mxu0 %v646
    %v870 = vpop.f32.mrb[0].mxu0
    %v871 = vadd.f32 0.0, %v870
    %v872 = vpop.f32.mrb[0].mxu0
    %v873 = vpop.f32.mrb[0].mxu0
    %v874 = vadd.f32 0.0, %v873
    %v875 = vpop.f32.mrb[0].mxu0
    %876 = vmatprep.mubr.bf16.mxu0 0
    %877 = vmatmul.mubr.bf16.gmra.mrb[0].mxu0 %v649
    %v878 = vpop.f32.mrb[0].mxu0
    %v879 = vadd.f32 0.0, %v878
    %v880 = vpop.f32.mrb[0].mxu0
    %v881 = vpop.f32.mrb[0].mxu0
    %v882 = vadd.f32 0.0, %v881
    %v883 = vpop.f32.mrb[0].mxu0
    %884 = vmatprep.mubr.bf16.mxu0 0
    %885 = vmatmul.mubr.bf16.gmra.mrb[0].mxu0 %v652
    %v886 = vpop.f32.mrb[0].mxu0
    %v887 = vadd.f32 0.0, %v886
    %v888 = vpop.f32.mrb[0].mxu0
    %v889 = vpop.f32.mrb[0].mxu0
    %v890 = vadd.f32 0.0, %v889
    %v891 = vpop.f32.mrb[0].mxu0
    %892 = vmatprep.mubr.bf16.mxu0 0
    %893 = vmatmul.mubr.bf16.gmra.mrb[0].mxu0 %v655
    %v894 = vpop.f32.mrb[0].mxu0
    %v895 = vadd.f32 0.0, %v894
    %v896 = vpop.f32.mrb[0].mxu0
    %v897 = vpop.f32.mrb[0].mxu0
    %v898 = vadd.f32 0.0, %v897
    %v899 = vpop.f32.mrb[0].mxu0
    %900 = vmatprep.mubr.bf16.mxu0 0
    %901 = vmatmul.mubr.bf16.gmra.mrb[0].mxu0 %v658
    %v902 = vpop.f32.mrb[0].mxu0
    %v903 = vadd.f32 0.0, %v902
    %v904 = vpop.f32.mrb[0].mxu0
    %v905 = vpop.f32.mrb[0].mxu0
    %v906 = vadd.f32 0.0, %v905
    %v907 = vpop.f32.mrb[0].mxu0
    %908 = vdwg.mxu0
    %v909 = vpack.c.bf16 %v698, %v695
    %v910 = vpack.c.bf16 %v706, %v703
    %v911 = vpack.c.bf16 %v714, %v711
    %v912 = vpack.c.bf16 %v722, %v719
    %v913 = vpack.c.bf16 %v730, %v727
    %v914 = vpack.c.bf16 %v738, %v735
    %v915 = vpack.c.bf16 %v746, %v743
    %v916 = vpack.c.bf16 %v754, %v751
    %v917 = vpack.c.bf16 %v762, %v759
    %v918 = vpack.c.bf16 %v770, %v767
    %v919 = vpack.c.bf16 %v778, %v775
    %v920 = vpack.c.bf16 %v786, %v783
    %v921 = vpack.c.bf16 %v794, %v791
    %v922 = vpack.c.bf16 %v802, %v799
    %v923 = vpack.c.bf16 %v810, %v807
    %v924 = vpack.c.bf16 %v818, %v815
    %v925 = vpack.c.bf16 %v826, %v823
    %v926 = vpack.c.bf16 %v834, %v831
    %v927 = vpack.c.bf16 %v842, %v839
    %v928 = vpack.c.bf16 %v850, %v847
    %v929 = vpack.c.bf16 %v858, %v855
    %v930 = vpack.c.bf16 %v866, %v863
    %v931 = vpack.c.bf16 %v874, %v871
    %v932 = vpack.c.bf16 %v882, %v879
    %v933 = vpack.c.bf16 %v890, %v887
    %v934 = vpack.c.bf16 %v898, %v895
    %v935 = vpack.c.bf16 %v906, %v903
    %936 = vst [vmem:[#allocation2] sm:$0xff] %v909
    %937 = vst [vmem:[#allocation2 + $0x8] sm:$0xff] %v910
    %938 = vst [vmem:[#allocation2 + $0x10] sm:$0xff] %v911
    %939 = vst [vmem:[#allocation2 + $0x18] sm:$0xff] %v912
    %940 = vst [vmem:[#allocation2 + $0x20] sm:$0xff] %v913
    %941 = vst [vmem:[#allocation2 + $0x28] sm:$0xff] %v914
    %942 = vst [vmem:[#allocation2 + $0x30] sm:$0xff] %v915
    %943 = vst [vmem:[#allocation2 + $0x38] sm:$0xff] %v916
    %944 = vst [vmem:[#allocation2 + $0x40] sm:$0xff] %v917
    %945 = vst [vmem:[#allocation2 + $0x48] sm:$0xff] %v918
    %946 = vst [vmem:[#allocation2 + $0x50] sm:$0xff] %v919
    %947 = vst [vmem:[#allocation2 + $0x58] sm:$0xff] %v920
    %948 = vst [vmem:[#allocation2 + $0x60] sm:$0xff] %v921
    %949 = vst [vmem:[#allocation2 + $0x68] sm:$0xff] %v922
    %950 = vst [vmem:[#allocation2 + $0x70] sm:$0xff] %v923
    %951 = vst [vmem:[#allocation2 + $0x78] sm:$0xff] %v924
    %952 = vst [vmem:[#allocation2 + $0x80] sm:$0xff] %v925
    %953 = vst [vmem:[#allocation2 + $0x88] sm:$0xff] %v926
    %954 = vst [vmem:[#allocation2 + $0x90] sm:$0xff] %v927
    %955 = vst [vmem:[#allocation2 + $0x98] sm:$0xff] %v928
    %956 = vst [vmem:[#allocation2 + $0xa0] sm:$0xff] %v929
    %957 = vst [vmem:[#allocation2 + $0xa8] sm:$0xff] %v930
    %958 = vst [vmem:[#allocation2 + $0xb0] sm:$0xff] %v931
    %959 = vst [vmem:[#allocation2 + $0xb8] sm:$0xff] %v932
    %960 = vst [vmem:[#allocation2 + $0xc0] sm:$0xff] %v933
    %961 = vst [vmem:[#allocation2 + $0xc8] sm:$0xff] %v934
    %962 = vst [vmem:[#allocation2 + $0xd0] sm:$0xff] %v935
    %v963 = vld [vmem:[#allocation2] sm:$0xff]
    %v964 = vld [vmem:[#allocation2 + $0x8] sm:$0xff]
    %v965 = vld [vmem:[#allocation2 + $0x10] sm:$0xff]
    %v966 = vld [vmem:[#allocation2 + $0x18] sm:$0xff]
    %v967 = vld [vmem:[#allocation2 + $0x20] sm:$0xff]
    %v968 = vld [vmem:[#allocation2 + $0x28] sm:$0xff]
    %v969 = vld [vmem:[#allocation2 + $0x30] sm:$0xff]
    %v970 = vld [vmem:[#allocation2 + $0x38] sm:$0xff]
    %v971 = vld [vmem:[#allocation2 + $0x40] sm:$0xff]
    %v972 = vld [vmem:[#allocation2 + $0x48] sm:$0xff]
    %v973 = vld [vmem:[#allocation2 + $0x50] sm:$0xff]
    %v974 = vld [vmem:[#allocation2 + $0x58] sm:$0xff]
    %v975 = vld [vmem:[#allocation2 + $0x60] sm:$0xff]
    %v976 = vld [vmem:[#allocation2 + $0x68] sm:$0xff]
    %v977 = vld [vmem:[#allocation2 + $0x70] sm:$0xff]
    %v978 = vld [vmem:[#allocation2 + $0x78] sm:$0xff]
    %v979 = vld [vmem:[#allocation2 + $0x80] sm:$0xff]
    %v980 = vld [vmem:[#allocation2 + $0x88] sm:$0xff]
    %v981 = vld [vmem:[#allocation2 + $0x90] sm:$0xff]
    %v982 = vld [vmem:[#allocation2 + $0x98] sm:$0xff]
    %v983 = vld [vmem:[#allocation2 + $0xa0] sm:$0xff]
    %v984 = vld [vmem:[#allocation2 + $0xa8] sm:$0xff]
    %v985 = vld [vmem:[#allocation2 + $0xb0] sm:$0xff]
    %v986 = vld [vmem:[#allocation2 + $0xb8] sm:$0xff]
    %v987 = vld [vmem:[#allocation2 + $0xc0] sm:$0xff]
    %v988 = vld [vmem:[#allocation2 + $0xc8] sm:$0xff]
    %v989 = vld [vmem:[#allocation2 + $0xd0] sm:$0xff]
    %v990 = vld [vmem:[#allocation14] sm:$0xff]
    %v991 = vld [vmem:[#allocation14 + $0x8] sm:$0xff]
    %v992 = vld [vmem:[#allocation14 + $0x10] sm:$0xff]
    %v993 = vld [vmem:[#allocation14 + $0x18] sm:$0xff]
    %v994 = vld [vmem:[#allocation14 + $0x20] sm:$0xff]
    %v995 = vld [vmem:[#allocation14 + $0x28] sm:$0xff]
    %v996 = vld [vmem:[#allocation14 + $0x30] sm:$0xff]
    %v997 = vld [vmem:[#allocation14 + $0x38] sm:$0xff]
    %v998 = vld [vmem:[#allocation14 + $0x40] sm:$0xff]
    %v999 = vld [vmem:[#allocation14 + $0x48] sm:$0xff]
    %v1000 = vld [vmem:[#allocation14 + $0x50] sm:$0xff]
    %v1001 = vld [vmem:[#allocation14 + $0x58] sm:$0xff]
    %v1002 = vld [vmem:[#allocation14 + $0x60] sm:$0xff]
    %v1003 = vld [vmem:[#allocation14 + $0x68] sm:$0xff]
    %v1004 = vld [vmem:[#allocation14 + $0x70] sm:$0xff]
    %v1005 = vld [vmem:[#allocation14 + $0x78] sm:$0xff]
    %v1006 = vld [vmem:[#allocation14 + $0x80] sm:$0xff]
    %v1007 = vld [vmem:[#allocation14 + $0x88] sm:$0xff]
    %v1008 = vld [vmem:[#allocation14 + $0x90] sm:$0xff]
    %v1009 = vld [vmem:[#allocation14 + $0x98] sm:$0xff]
    %v1010 = vld [vmem:[#allocation14 + $0xa0] sm:$0xff]
    %v1011 = vld [vmem:[#allocation14 + $0xa8] sm:$0xff]
    %v1012 = vld [vmem:[#allocation14 + $0xb0] sm:$0xff]
    %v1013 = vld [vmem:[#allocation14 + $0xb8] sm:$0xff]
    %v1014 = vld [vmem:[#allocation14 + $0xc0] sm:$0xff]
    %v1015 = vld [vmem:[#allocation14 + $0xc8] sm:$0xff]
    %v1016 = vld [vmem:[#allocation14 + $0xd0] sm:$0xff]
    %v1017 = vld [vmem:[#allocation14 + $0xd8] sm:$0xff]
    %v1018 = vld [vmem:[#allocation14 + $0xe0] sm:$0xff]
    %v1019 = vld [vmem:[#allocation14 + $0xe8] sm:$0xff]
    %v1020 = vld [vmem:[#allocation14 + $0xf0] sm:$0xff]
    %v1021 = vld [vmem:[#allocation14 + $0xf8] sm:$0xff]
    %v1022 = vld [vmem:[#allocation14 + $0x100] sm:$0xff]
    %v1023 = vld [vmem:[#allocation14 + $0x108] sm:$0xff]
    %v1024 = vld [vmem:[#allocation14 + $0x110] sm:$0xff]
    %v1025 = vld [vmem:[#allocation14 + $0x118] sm:$0xff]
    %v1026 = vld [vmem:[#allocation14 + $0x120] sm:$0xff]
    %v1027 = vld [vmem:[#allocation14 + $0x128] sm:$0xff]
    %v1028 = vld [vmem:[#allocation14 + $0x130] sm:$0xff]
    %v1029 = vld [vmem:[#allocation14 + $0x138] sm:$0xff]
    %v1030 = vld [vmem:[#allocation14 + $0x140] sm:$0xff]
    %v1031 = vld [vmem:[#allocation14 + $0x148] sm:$0xff]
    %v1032 = vld [vmem:[#allocation14 + $0x150] sm:$0xff]
    %v1033 = vld [vmem:[#allocation14 + $0x158] sm:$0xff]
    %v1034 = vld [vmem:[#allocation14 + $0x160] sm:$0xff]
    %v1035 = vld [vmem:[#allocation14 + $0x168] sm:$0xff]
    %v1036 = vld [vmem:[#allocation14 + $0x170] sm:$0xff]
    %v1037 = vld [vmem:[#allocation14 + $0x178] sm:$0xff]
    %v1038 = vld [vmem:[#allocation14 + $0x180] sm:$0xff]
    %v1039 = vld [vmem:[#allocation14 + $0x188] sm:$0xff]
    %v1040 = vld [vmem:[#allocation14 + $0x190] sm:$0xff]
    %v1041 = vld [vmem:[#allocation14 + $0x198] sm:$0xff]
    %v1042 = vld [vmem:[#allocation14 + $0x1a0] sm:$0xff]
    %v1043 = vld [vmem:[#allocation14 + $0x1a8] sm:$0xff]
    %v1044 = vld [vmem:[#allocation14 + $0x1b0] sm:$0xff]
    %v1045 = vld [vmem:[#allocation14 + $0x1b8] sm:$0xff]
    %v1046 = vld [vmem:[#allocation14 + $0x1c0] sm:$0xff]
    %v1047 = vld [vmem:[#allocation14 + $0x1c8] sm:$0xff]
    %v1048 = vld [vmem:[#allocation14 + $0x1d0] sm:$0xff]
    %v1049 = vld [vmem:[#allocation14 + $0x1d8] sm:$0xff]
    %v1050 = vld [vmem:[#allocation14 + $0x1e0] sm:$0xff]
    %v1051 = vld [vmem:[#allocation14 + $0x1e8] sm:$0xff]
    %v1052 = vld [vmem:[#allocation14 + $0x1f0] sm:$0xff]
    %v1053 = vld [vmem:[#allocation14 + $0x1f8] sm:$0xff]
    %v1054 = vld [vmem:[#allocation14 + $0x200] sm:$0xff]
    %v1055 = vld [vmem:[#allocation14 + $0x208] sm:$0xff]
    %v1056 = vld [vmem:[#allocation14 + $0x210] sm:$0xff]
    %v1057 = vld [vmem:[#allocation14 + $0x218] sm:$0xff]
    %v1058 = vld [vmem:[#allocation14 + $0x220] sm:$0xff]
    %v1059 = vld [vmem:[#allocation14 + $0x228] sm:$0xff]
    %v1060 = vld [vmem:[#allocation14 + $0x230] sm:$0xff]
    %v1061 = vld [vmem:[#allocation14 + $0x238] sm:$0xff]
    %v1062 = vld [vmem:[#allocation14 + $0x240] sm:$0xff]
    %v1063 = vld [vmem:[#allocation14 + $0x248] sm:$0xff]
    %v1064 = vld [vmem:[#allocation14 + $0x250] sm:$0xff]
    %v1065 = vld [vmem:[#allocation14 + $0x258] sm:$0xff]
    %v1066 = vld [vmem:[#allocation14 + $0x260] sm:$0xff]
    %v1067 = vld [vmem:[#allocation14 + $0x268] sm:$0xff]
    %v1068 = vld [vmem:[#allocation14 + $0x270] sm:$0xff]
    %v1069 = vld [vmem:[#allocation14 + $0x278] sm:$0xff]
    %v1070 = vld [vmem:[#allocation14 + $0x280] sm:$0xff]
    %v1071 = vld [vmem:[#allocation14 + $0x288] sm:$0xff]
    %v1072 = vld [vmem:[#allocation14 + $0x290] sm:$0xff]
    %v1073 = vld [vmem:[#allocation14 + $0x298] sm:$0xff]
    %v1074 = vld [vmem:[#allocation14 + $0x2a0] sm:$0xff]
    %v1075 = vld [vmem:[#allocation14 + $0x2a8] sm:$0xff]
    %v1076 = vld [vmem:[#allocation14 + $0x2b0] sm:$0xff]
    %v1077 = vld [vmem:[#allocation14 + $0x2b8] sm:$0xff]
    %v1078 = vld [vmem:[#allocation14 + $0x2c0] sm:$0xff]
    %v1079 = vld [vmem:[#allocation14 + $0x2c8] sm:$0xff]
    %v1080 = vld [vmem:[#allocation14 + $0x2d0] sm:$0xff]
    %v1081 = vld [vmem:[#allocation14 + $0x2d8] sm:$0xff]
    %v1082 = vld [vmem:[#allocation14 + $0x2e0] sm:$0xff]
    %v1083 = vld [vmem:[#allocation14 + $0x2e8] sm:$0xff]
    %v1084 = vld [vmem:[#allocation14 + $0x2f0] sm:$0xff]
    %v1085 = vld [vmem:[#allocation14 + $0x2f8] sm:$0xff]
    %v1086 = vld [vmem:[#allocation14 + $0x300] sm:$0xff]
    %v1087 = vld [vmem:[#allocation14 + $0x308] sm:$0xff]
    %v1088 = vld [vmem:[#allocation14 + $0x310] sm:$0xff]
    %v1089 = vld [vmem:[#allocation14 + $0x318] sm:$0xff]
    %v1090 = vld [vmem:[#allocation14 + $0x320] sm:$0xff]
    %v1091 = vld [vmem:[#allocation14 + $0x328] sm:$0xff]
    %v1092 = vld [vmem:[#allocation14 + $0x330] sm:$0xff]
    %v1093 = vld [vmem:[#allocation14 + $0x338] sm:$0xff]
    %v1094 = vld [vmem:[#allocation14 + $0x340] sm:$0xff]
    %v1095 = vld [vmem:[#allocation14 + $0x348] sm:$0xff]
    %v1096 = vld [vmem:[#allocation14 + $0x350] sm:$0xff]
    %v1097 = vld [vmem:[#allocation14 + $0x358] sm:$0xff]
    %v1098 = vld [vmem:[#allocation14 + $0x360] sm:$0xff]
    %v1099 = vld [vmem:[#allocation14 + $0x368] sm:$0xff]
    %v1100 = vld [vmem:[#allocation14 + $0x370] sm:$0xff]
    %v1101 = vld [vmem:[#allocation14 + $0x378] sm:$0xff]
    %v1102 = vld [vmem:[#allocation14 + $0x380] sm:$0xff]
    %v1103 = vld [vmem:[#allocation14 + $0x388] sm:$0xff]
    %v1104 = vld [vmem:[#allocation14 + $0x390] sm:$0xff]
    %v1105 = vld [vmem:[#allocation14 + $0x398] sm:$0xff]
    %v1106 = vld [vmem:[#allocation14 + $0x3a0] sm:$0xff]
    %v1107 = vld [vmem:[#allocation14 + $0x3a8] sm:$0xff]
    %v1108 = vld [vmem:[#allocation14 + $0x3b0] sm:$0xff]
    %v1109 = vld [vmem:[#allocation14 + $0x3b8] sm:$0xff]
    %v1110 = vld [vmem:[#allocation14 + $0x3c0] sm:$0xff]
    %v1111 = vld [vmem:[#allocation14 + $0x3c8] sm:$0xff]
    %v1112 = vld [vmem:[#allocation14 + $0x3d0] sm:$0xff]
    %v1113 = vld [vmem:[#allocation14 + $0x3d8] sm:$0xff]
    %v1114 = vld [vmem:[#allocation14 + $0x3e0] sm:$0xff]
    %v1115 = vld [vmem:[#allocation14 + $0x3e8] sm:$0xff]
    %v1116 = vld [vmem:[#allocation14 + $0x3f0] sm:$0xff]
    %v1117 = vld [vmem:[#allocation14 + $0x3f8] sm:$0xff]
    %v1118 = vld [vmem:[#allocation14 + $0x400] sm:$0xff]
    %v1119 = vld [vmem:[#allocation14 + $0x408] sm:$0xff]
    %v1120 = vld [vmem:[#allocation14 + $0x410] sm:$0xff]
    %v1121 = vld [vmem:[#allocation14 + $0x418] sm:$0xff]
    %v1122 = vld [vmem:[#allocation14 + $0x420] sm:$0xff]
    %v1123 = vld [vmem:[#allocation14 + $0x428] sm:$0xff]
    %v1124 = vld [vmem:[#allocation14 + $0x430] sm:$0xff]
    %v1125 = vld [vmem:[#allocation14 + $0x438] sm:$0xff]
    %v1126 = vld [vmem:[#allocation14 + $0x440] sm:$0xff]
    %v1127 = vld [vmem:[#allocation14 + $0x448] sm:$0xff]
    %v1128 = vld [vmem:[#allocation14 + $0x450] sm:$0xff]
    %v1129 = vld [vmem:[#allocation14 + $0x458] sm:$0xff]
    %v1130 = vld [vmem:[#allocation14 + $0x460] sm:$0xff]
    %v1131 = vld [vmem:[#allocation14 + $0x468] sm:$0xff]
    %v1132 = vld [vmem:[#allocation14 + $0x470] sm:$0xff]
    %v1133 = vld [vmem:[#allocation14 + $0x478] sm:$0xff]
    %v1134 = vld [vmem:[#allocation14 + $0x480] sm:$0xff]
    %v1135 = vld [vmem:[#allocation14 + $0x488] sm:$0xff]
    %v1136 = vld [vmem:[#allocation14 + $0x490] sm:$0xff]
    %v1137 = vld [vmem:[#allocation14 + $0x498] sm:$0xff]
    %v1138 = vld [vmem:[#allocation14 + $0x4a0] sm:$0xff]
    %v1139 = vld [vmem:[#allocation14 + $0x4a8] sm:$0xff]
    %v1140 = vld [vmem:[#allocation14 + $0x4b0] sm:$0xff]
    %v1141 = vld [vmem:[#allocation14 + $0x4b8] sm:$0xff]
    %v1142 = vld [vmem:[#allocation14 + $0x4c0] sm:$0xff]
    %v1143 = vld [vmem:[#allocation14 + $0x4c8] sm:$0xff]
    %v1144 = vld [vmem:[#allocation14 + $0x4d0] sm:$0xff]
    %v1145 = vld [vmem:[#allocation14 + $0x4d8] sm:$0xff]
    %v1146 = vld [vmem:[#allocation14 + $0x4e0] sm:$0xff]
    %v1147 = vld [vmem:[#allocation14 + $0x4e8] sm:$0xff]
    %v1148 = vld [vmem:[#allocation14 + $0x4f0] sm:$0xff]
    %v1149 = vld [vmem:[#allocation14 + $0x4f8] sm:$0xff]
    %v1150 = vld [vmem:[#allocation14 + $0x500] sm:$0xff]
    %v1151 = vld [vmem:[#allocation14 + $0x508] sm:$0xff]
    %v1152 = vld [vmem:[#allocation14 + $0x510] sm:$0xff]
    %v1153 = vld [vmem:[#allocation14 + $0x518] sm:$0xff]
    %v1154 = vld [vmem:[#allocation14 + $0x520] sm:$0xff]
    %v1155 = vld [vmem:[#allocation14 + $0x528] sm:$0xff]
    %v1156 = vld [vmem:[#allocation14 + $0x530] sm:$0xff]
    %v1157 = vld [vmem:[#allocation14 + $0x538] sm:$0xff]
    %v1158 = vld [vmem:[#allocation14 + $0x540] sm:$0xff]
    %v1159 = vld [vmem:[#allocation14 + $0x548] sm:$0xff]
    %v1160 = vld [vmem:[#allocation14 + $0x550] sm:$0xff]
    %v1161 = vld [vmem:[#allocation14 + $0x558] sm:$0xff]
    %v1162 = vld [vmem:[#allocation14 + $0x560] sm:$0xff]
    %v1163 = vld [vmem:[#allocation14 + $0x568] sm:$0xff]
    %v1164 = vld [vmem:[#allocation14 + $0x570] sm:$0xff]
    %v1165 = vld [vmem:[#allocation14 + $0x578] sm:$0xff]
    %v1166 = vld [vmem:[#allocation14 + $0x580] sm:$0xff]
    %v1167 = vld [vmem:[#allocation14 + $0x588] sm:$0xff]
    %v1168 = vld [vmem:[#allocation14 + $0x590] sm:$0xff]
    %v1169 = vld [vmem:[#allocation14 + $0x598] sm:$0xff]
    %v1170 = vld [vmem:[#allocation14 + $0x5a0] sm:$0xff]
    %v1171 = vld [vmem:[#allocation14 + $0x5a8] sm:$0xff]
    %v1172 = vld [vmem:[#allocation14 + $0x5b0] sm:$0xff]
    %v1173 = vld [vmem:[#allocation14 + $0x5b8] sm:$0xff]
    %v1174 = vld [vmem:[#allocation14 + $0x5c0] sm:$0xff]
    %v1175 = vld [vmem:[#allocation14 + $0x5c8] sm:$0xff]
    %v1176 = vld [vmem:[#allocation14 + $0x5d0] sm:$0xff]
    %v1177 = vld [vmem:[#allocation14 + $0x5d8] sm:$0xff]
    %v1178 = vld [vmem:[#allocation14 + $0x5e0] sm:$0xff]
    %v1179 = vld [vmem:[#allocation14 + $0x5e8] sm:$0xff]
    %v1180 = vld [vmem:[#allocation14 + $0x5f0] sm:$0xff]
    %v1181 = vld [vmem:[#allocation14 + $0x5f8] sm:$0xff]
    %v1182 = vld [vmem:[#allocation14 + $0x600] sm:$0xff]
    %v1183 = vld [vmem:[#allocation14 + $0x608] sm:$0xff]
    %v1184 = vld [vmem:[#allocation14 + $0x610] sm:$0xff]
    %v1185 = vld [vmem:[#allocation14 + $0x618] sm:$0xff]
    %v1186 = vld [vmem:[#allocation14 + $0x620] sm:$0xff]
    %v1187 = vld [vmem:[#allocation14 + $0x628] sm:$0xff]
    %v1188 = vld [vmem:[#allocation14 + $0x630] sm:$0xff]
    %v1189 = vld [vmem:[#allocation14 + $0x638] sm:$0xff]
    %v1190 = vld [vmem:[#allocation14 + $0x640] sm:$0xff]
    %v1191 = vld [vmem:[#allocation14 + $0x648] sm:$0xff]
    %v1192 = vld [vmem:[#allocation14 + $0x650] sm:$0xff]
    %v1193 = vld [vmem:[#allocation14 + $0x658] sm:$0xff]
    %v1194 = vld [vmem:[#allocation14 + $0x660] sm:$0xff]
    %v1195 = vld [vmem:[#allocation14 + $0x668] sm:$0xff]
    %v1196 = vld [vmem:[#allocation14 + $0x670] sm:$0xff]
    %v1197 = vld [vmem:[#allocation14 + $0x678] sm:$0xff]
    %v1198 = vld [vmem:[#allocation14 + $0x680] sm:$0xff]
    %v1199 = vld [vmem:[#allocation14 + $0x688] sm:$0xff]
    %v1200 = vld [vmem:[#allocation14 + $0x690] sm:$0xff]
    %v1201 = vld [vmem:[#allocation14 + $0x698] sm:$0xff]
    %v1202 = vld [vmem:[#allocation14 + $0x6a0] sm:$0xff]
    %v1203 = vld [vmem:[#allocation14 + $0x6a8] sm:$0xff]
    %v1204 = vld [vmem:[#allocation14 + $0x6b0] sm:$0xff]
    %v1205 = vld [vmem:[#allocation14 + $0x6b8] sm:$0xff]
    %v1206 = vld [vmem:[#allocation14 + $0x6c0] sm:$0xff]
    %v1207 = vld [vmem:[#allocation14 + $0x6c8] sm:$0xff]
    %v1208 = vld [vmem:[#allocation14 + $0x6d0] sm:$0xff]
    %v1209 = vld [vmem:[#allocation14 + $0x6d8] sm:$0xff]
    %v1210 = vld [vmem:[#allocation14 + $0x6e0] sm:$0xff]
    %v1211 = vld [vmem:[#allocation14 + $0x6e8] sm:$0xff]
    %v1212 = vld [vmem:[#allocation14 + $0x6f0] sm:$0xff]
    %v1213 = vld [vmem:[#allocation14 + $0x6f8] sm:$0xff]
    %v1214 = vld [vmem:[#allocation14 + $0x700] sm:$0xff]
    %v1215 = vld [vmem:[#allocation14 + $0x708] sm:$0xff]
    %v1216 = vld [vmem:[#allocation14 + $0x710] sm:$0xff]
    %v1217 = vld [vmem:[#allocation14 + $0x718] sm:$0xff]
    %v1218 = vld [vmem:[#allocation14 + $0x720] sm:$0xff]
    %v1219 = vld [vmem:[#allocation14 + $0x728] sm:$0xff]
    %v1220 = vld [vmem:[#allocation14 + $0x730] sm:$0xff]
    %v1221 = vld [vmem:[#allocation14 + $0x738] sm:$0xff]
    %v1222 = vld [vmem:[#allocation14 + $0x740] sm:$0xff]
    %v1223 = vld [vmem:[#allocation14 + $0x748] sm:$0xff]
    %v1224 = vld [vmem:[#allocation14 + $0x750] sm:$0xff]
    %v1225 = vld [vmem:[#allocation14 + $0x758] sm:$0xff]
    %v1226 = vld [vmem:[#allocation14 + $0x760] sm:$0xff]
    %v1227 = vld [vmem:[#allocation14 + $0x768] sm:$0xff]
    %v1228 = vld [vmem:[#allocation14 + $0x770] sm:$0xff]
    %v1229 = vld [vmem:[#allocation14 + $0x778] sm:$0xff]
    %v1230 = vld [vmem:[#allocation14 + $0x780] sm:$0xff]
    %v1231 = vld [vmem:[#allocation14 + $0x788] sm:$0xff]
    %v1232 = vld [vmem:[#allocation14 + $0x790] sm:$0xff]
    %v1233 = vld [vmem:[#allocation14 + $0x798] sm:$0xff]
    %v1234 = vld [vmem:[#allocation14 + $0x7a0] sm:$0xff]
    %v1235 = vld [vmem:[#allocation14 + $0x7a8] sm:$0xff]
    %v1236 = vld [vmem:[#allocation14 + $0x7b0] sm:$0xff]
    %v1237 = vld [vmem:[#allocation14 + $0x7b8] sm:$0xff]
    %v1238 = vld [vmem:[#allocation14 + $0x7c0] sm:$0xff]
    %v1239 = vld [vmem:[#allocation14 + $0x7c8] sm:$0xff]
    %v1240 = vld [vmem:[#allocation14 + $0x7d0] sm:$0xff]
    %v1241 = vld [vmem:[#allocation14 + $0x7d8] sm:$0xff]
    %v1242 = vld [vmem:[#allocation14 + $0x7e0] sm:$0xff]
    %v1243 = vld [vmem:[#allocation14 + $0x7e8] sm:$0xff]
    %v1244 = vld [vmem:[#allocation14 + $0x7f0] sm:$0xff]
    %v1245 = vld [vmem:[#allocation14 + $0x7f8] sm:$0xff]
    %v1246 = vld [vmem:[#allocation14 + $0x800] sm:$0xff]
    %v1247 = vld [vmem:[#allocation14 + $0x808] sm:$0xff]
    %v1248 = vld [vmem:[#allocation14 + $0x810] sm:$0xff]
    %v1249 = vld [vmem:[#allocation14 + $0x818] sm:$0xff]
    %v1250 = vld [vmem:[#allocation14 + $0x820] sm:$0xff]
    %v1251 = vld [vmem:[#allocation14 + $0x828] sm:$0xff]
    %v1252 = vld [vmem:[#allocation14 + $0x830] sm:$0xff]
    %v1253 = vld [vmem:[#allocation14 + $0x838] sm:$0xff]
    %v1254 = vld [vmem:[#allocation14 + $0x840] sm:$0xff]
    %v1255 = vld [vmem:[#allocation14 + $0x848] sm:$0xff]
    %v1256 = vld [vmem:[#allocation14 + $0x850] sm:$0xff]
    %v1257 = vld [vmem:[#allocation14 + $0x858] sm:$0xff]
    %v1258 = vld [vmem:[#allocation14 + $0x860] sm:$0xff]
    %v1259 = vld [vmem:[#allocation14 + $0x868] sm:$0xff]
    %v1260 = vld [vmem:[#allocation14 + $0x870] sm:$0xff]
    %v1261 = vld [vmem:[#allocation14 + $0x878] sm:$0xff]
    %v1262 = vld [vmem:[#allocation14 + $0x880] sm:$0xff]
    %v1263 = vld [vmem:[#allocation14 + $0x888] sm:$0xff]
    %v1264 = vld [vmem:[#allocation14 + $0x890] sm:$0xff]
    %v1265 = vld [vmem:[#allocation14 + $0x898] sm:$0xff]
    %v1266 = vld [vmem:[#allocation14 + $0x8a0] sm:$0xff]
    %v1267 = vld [vmem:[#allocation14 + $0x8a8] sm:$0xff]
    %v1268 = vld [vmem:[#allocation14 + $0x8b0] sm:$0xff]
    %v1269 = vld [vmem:[#allocation14 + $0x8b8] sm:$0xff]
    %v1270 = vld [vmem:[#allocation14 + $0x8c0] sm:$0xff]
    %v1271 = vld [vmem:[#allocation14 + $0x8c8] sm:$0xff]
    %v1272 = vld [vmem:[#allocation14 + $0x8d0] sm:$0xff]
    %v1273 = vld [vmem:[#allocation14 + $0x8d8] sm:$0xff]
    %v1274 = vld [vmem:[#allocation14 + $0x8e0] sm:$0xff]
    %v1275 = vld [vmem:[#allocation14 + $0x8e8] sm:$0xff]
    %v1276 = vld [vmem:[#allocation14 + $0x8f0] sm:$0xff]
    %v1277 = vld [vmem:[#allocation14 + $0x8f8] sm:$0xff]
    %v1278 = vld [vmem:[#allocation14 + $0x900] sm:$0xff]
    %v1279 = vld [vmem:[#allocation14 + $0x908] sm:$0xff]
    %v1280 = vld [vmem:[#allocation14 + $0x910] sm:$0xff]
    %v1281 = vld [vmem:[#allocation14 + $0x918] sm:$0xff]
    %v1282 = vld [vmem:[#allocation14 + $0x920] sm:$0xff]
    %v1283 = vld [vmem:[#allocation14 + $0x928] sm:$0xff]
    %v1284 = vld [vmem:[#allocation14 + $0x930] sm:$0xff]
    %v1285 = vld [vmem:[#allocation14 + $0x938] sm:$0xff]
    %v1286 = vld [vmem:[#allocation14 + $0x940] sm:$0xff]
    %v1287 = vld [vmem:[#allocation14 + $0x948] sm:$0xff]
    %v1288 = vld [vmem:[#allocation14 + $0x950] sm:$0xff]
    %v1289 = vld [vmem:[#allocation14 + $0x958] sm:$0xff]
    %v1290 = vld [vmem:[#allocation14 + $0x960] sm:$0xff]
    %v1291 = vld [vmem:[#allocation14 + $0x968] sm:$0xff]
    %v1292 = vld [vmem:[#allocation14 + $0x970] sm:$0xff]
    %v1293 = vld [vmem:[#allocation14 + $0x978] sm:$0xff]
    %v1294 = vld [vmem:[#allocation14 + $0x980] sm:$0xff]
    %v1295 = vld [vmem:[#allocation14 + $0x988] sm:$0xff]
    %v1296 = vld [vmem:[#allocation14 + $0x990] sm:$0xff]
    %v1297 = vld [vmem:[#allocation14 + $0x998] sm:$0xff]
    %v1298 = vld [vmem:[#allocation14 + $0x9a0] sm:$0xff]
    %v1299 = vld [vmem:[#allocation14 + $0x9a8] sm:$0xff]
    %v1300 = vld [vmem:[#allocation14 + $0x9b0] sm:$0xff]
    %v1301 = vld [vmem:[#allocation14 + $0x9b8] sm:$0xff]
    %v1302 = vld [vmem:[#allocation14 + $0x9c0] sm:$0xff]
    %v1303 = vld [vmem:[#allocation14 + $0x9c8] sm:$0xff]
    %v1304 = vld [vmem:[#allocation14 + $0x9d0] sm:$0xff]
    %v1305 = vld [vmem:[#allocation14 + $0x9d8] sm:$0xff]
    %v1306 = vld [vmem:[#allocation14 + $0x9e0] sm:$0xff]
    %v1307 = vld [vmem:[#allocation14 + $0x9e8] sm:$0xff]
    %v1308 = vld [vmem:[#allocation14 + $0x9f0] sm:$0xff]
    %v1309 = vld [vmem:[#allocation14 + $0x9f8] sm:$0xff]
    %v1310 = vld [vmem:[#allocation14 + $0xa00] sm:$0xff]
    %v1311 = vld [vmem:[#allocation14 + $0xa08] sm:$0xff]
    %v1312 = vld [vmem:[#allocation14 + $0xa10] sm:$0xff]
    %v1313 = vld [vmem:[#allocation14 + $0xa18] sm:$0xff]
    %v1314 = vld [vmem:[#allocation14 + $0xa20] sm:$0xff]
    %v1315 = vld [vmem:[#allocation14 + $0xa28] sm:$0xff]
    %v1316 = vld [vmem:[#allocation14 + $0xa30] sm:$0xff]
    %v1317 = vld [vmem:[#allocation14 + $0xa38] sm:$0xff]
    %v1318 = vld [vmem:[#allocation14 + $0xa40] sm:$0xff]
    %v1319 = vld [vmem:[#allocation14 + $0xa48] sm:$0xff]
    %v1320 = vld [vmem:[#allocation14 + $0xa50] sm:$0xff]
    %v1321 = vld [vmem:[#allocation14 + $0xa58] sm:$0xff]
    %v1322 = vld [vmem:[#allocation14 + $0xa60] sm:$0xff]
    %v1323 = vld [vmem:[#allocation14 + $0xa68] sm:$0xff]
    %v1324 = vld [vmem:[#allocation14 + $0xa70] sm:$0xff]
    %v1325 = vld [vmem:[#allocation14 + $0xa78] sm:$0xff]
    %v1326 = vld [vmem:[#allocation14 + $0xa80] sm:$0xff]
    %v1327 = vld [vmem:[#allocation14 + $0xa88] sm:$0xff]
    %v1328 = vld [vmem:[#allocation14 + $0xa90] sm:$0xff]
    %v1329 = vld [vmem:[#allocation14 + $0xa98] sm:$0xff]
    %v1330 = vld [vmem:[#allocation14 + $0xaa0] sm:$0xff]
    %v1331 = vld [vmem:[#allocation14 + $0xaa8] sm:$0xff]
    %v1332 = vld [vmem:[#allocation14 + $0xab0] sm:$0xff]
    %v1333 = vld [vmem:[#allocation14 + $0xab8] sm:$0xff]
    %v1334 = vld [vmem:[#allocation14 + $0xac0] sm:$0xff]
    %v1335 = vld [vmem:[#allocation14 + $0xac8] sm:$0xff]
    %v1336 = vld [vmem:[#allocation14 + $0xad0] sm:$0xff]
    %v1337 = vld [vmem:[#allocation14 + $0xad8] sm:$0xff]
    %v1338 = vld [vmem:[#allocation14 + $0xae0] sm:$0xff]
    %v1339 = vld [vmem:[#allocation14 + $0xae8] sm:$0xff]
    %v1340 = vld [vmem:[#allocation14 + $0xaf0] sm:$0xff]
    %v1341 = vld [vmem:[#allocation14 + $0xaf8] sm:$0xff]
    %v1342 = vld [vmem:[#allocation14 + $0xb00] sm:$0xff]
    %v1343 = vld [vmem:[#allocation14 + $0xb08] sm:$0xff]
    %v1344 = vld [vmem:[#allocation14 + $0xb10] sm:$0xff]
    %v1345 = vld [vmem:[#allocation14 + $0xb18] sm:$0xff]
    %v1346 = vld [vmem:[#allocation14 + $0xb20] sm:$0xff]
    %v1347 = vld [vmem:[#allocation14 + $0xb28] sm:$0xff]
    %v1348 = vld [vmem:[#allocation14 + $0xb30] sm:$0xff]
    %v1349 = vld [vmem:[#allocation14 + $0xb38] sm:$0xff]
    %v1350 = vld [vmem:[#allocation14 + $0xb40] sm:$0xff]
    %v1351 = vld [vmem:[#allocation14 + $0xb48] sm:$0xff]
    %v1352 = vld [vmem:[#allocation14 + $0xb50] sm:$0xff]
    %v1353 = vld [vmem:[#allocation14 + $0xb58] sm:$0xff]
    %v1354 = vld [vmem:[#allocation14 + $0xb60] sm:$0xff]
    %v1355 = vld [vmem:[#allocation14 + $0xb68] sm:$0xff]
    %v1356 = vld [vmem:[#allocation14 + $0xb70] sm:$0xff]
    %v1357 = vld [vmem:[#allocation14 + $0xb78] sm:$0xff]
    %v1358 = vld [vmem:[#allocation14 + $0xb80] sm:$0xff]
    %v1359 = vld [vmem:[#allocation14 + $0xb88] sm:$0xff]
    %v1360 = vld [vmem:[#allocation14 + $0xb90] sm:$0xff]
    %v1361 = vld [vmem:[#allocation14 + $0xb98] sm:$0xff]
    %v1362 = vld [vmem:[#allocation14 + $0xba0] sm:$0xff]
    %v1363 = vld [vmem:[#allocation14 + $0xba8] sm:$0xff]
    %v1364 = vld [vmem:[#allocation14 + $0xbb0] sm:$0xff]
    %v1365 = vld [vmem:[#allocation14 + $0xbb8] sm:$0xff]
    %v1366 = vld [vmem:[#allocation14 + $0xbc0] sm:$0xff]
    %v1367 = vld [vmem:[#allocation14 + $0xbc8] sm:$0xff]
    %v1368 = vld [vmem:[#allocation14 + $0xbd0] sm:$0xff]
    %v1369 = vld [vmem:[#allocation14 + $0xbd8] sm:$0xff]
    %v1370 = vld [vmem:[#allocation14 + $0xbe0] sm:$0xff]
    %v1371 = vld [vmem:[#allocation14 + $0xbe8] sm:$0xff]
    %v1372 = vld [vmem:[#allocation14 + $0xbf0] sm:$0xff]
    %v1373 = vld [vmem:[#allocation14 + $0xbf8] sm:$0xff]
    %v1374 = vld [vmem:[#allocation14 + $0xc00] sm:$0xff]
    %v1375 = vld [vmem:[#allocation14 + $0xc08] sm:$0xff]
    %v1376 = vld [vmem:[#allocation14 + $0xc10] sm:$0xff]
    %v1377 = vld [vmem:[#allocation14 + $0xc18] sm:$0xff]
    %v1378 = vld [vmem:[#allocation14 + $0xc20] sm:$0xff]
    %v1379 = vld [vmem:[#allocation14 + $0xc28] sm:$0xff]
    %v1380 = vld [vmem:[#allocation14 + $0xc30] sm:$0xff]
    %v1381 = vld [vmem:[#allocation14 + $0xc38] sm:$0xff]
    %v1382 = vld [vmem:[#allocation14 + $0xc40] sm:$0xff]
    %v1383 = vld [vmem:[#allocation14 + $0xc48] sm:$0xff]
    %v1384 = vld [vmem:[#allocation14 + $0xc50] sm:$0xff]
    %v1385 = vld [vmem:[#allocation14 + $0xc58] sm:$0xff]
    %v1386 = vld [vmem:[#allocation14 + $0xc60] sm:$0xff]
    %v1387 = vld [vmem:[#allocation14 + $0xc68] sm:$0xff]
    %v1388 = vld [vmem:[#allocation14 + $0xc70] sm:$0xff]
    %v1389 = vld [vmem:[#allocation14 + $0xc78] sm:$0xff]
    %v1390 = vld [vmem:[#allocation14 + $0xc80] sm:$0xff]
    %v1391 = vld [vmem:[#allocation14 + $0xc88] sm:$0xff]
    %v1392 = vld [vmem:[#allocation14 + $0xc90] sm:$0xff]
    %v1393 = vld [vmem:[#allocation14 + $0xc98] sm:$0xff]
    %v1394 = vld [vmem:[#allocation14 + $0xca0] sm:$0xff]
    %v1395 = vld [vmem:[#allocation14 + $0xca8] sm:$0xff]
    %v1396 = vld [vmem:[#allocation14 + $0xcb0] sm:$0xff]
    %v1397 = vld [vmem:[#allocation14 + $0xcb8] sm:$0xff]
    %v1398 = vld [vmem:[#allocation14 + $0xcc0] sm:$0xff]
    %v1399 = vld [vmem:[#allocation14 + $0xcc8] sm:$0xff]
    %v1400 = vld [vmem:[#allocation14 + $0xcd0] sm:$0xff]
    %v1401 = vld [vmem:[#allocation14 + $0xcd8] sm:$0xff]
    %v1402 = vld [vmem:[#allocation14 + $0xce0] sm:$0xff]
    %v1403 = vld [vmem:[#allocation14 + $0xce8] sm:$0xff]
    %v1404 = vld [vmem:[#allocation14 + $0xcf0] sm:$0xff]
    %v1405 = vld [vmem:[#allocation14 + $0xcf8] sm:$0xff]
    %v1406 = vld [vmem:[#allocation14 + $0xd00] sm:$0xff]
    %v1407 = vld [vmem:[#allocation14 + $0xd08] sm:$0xff]
    %v1408 = vld [vmem:[#allocation14 + $0xd10] sm:$0xff]
    %v1409 = vld [vmem:[#allocation14 + $0xd18] sm:$0xff]
    %v1410 = vld [vmem:[#allocation14 + $0xd20] sm:$0xff]
    %v1411 = vld [vmem:[#allocation14 + $0xd28] sm:$0xff]
    %v1412 = vld [vmem:[#allocation14 + $0xd30] sm:$0xff]
    %v1413 = vld [vmem:[#allocation14 + $0xd38] sm:$0xff]
    %v1414 = vld [vmem:[#allocation14 + $0xd40] sm:$0xff]
    %v1415 = vld [vmem:[#allocation14 + $0xd48] sm:$0xff]
    %v1416 = vld [vmem:[#allocation14 + $0xd50] sm:$0xff]
    %v1417 = vld [vmem:[#allocation14 + $0xd58] sm:$0xff]
    %v1418 = vld [vmem:[#allocation14 + $0xd60] sm:$0xff]
    %v1419 = vld [vmem:[#allocation14 + $0xd68] sm:$0xff]
    %v1420 = vld [vmem:[#allocation14 + $0xd70] sm:$0xff]
    %v1421 = vld [vmem:[#allocation14 + $0xd78] sm:$0xff]
    %v1422 = vld [vmem:[#allocation14 + $0xd80] sm:$0xff]
    %v1423 = vld [vmem:[#allocation14 + $0xd88] sm:$0xff]
    %v1424 = vld [vmem:[#allocation14 + $0xd90] sm:$0xff]
    %v1425 = vld [vmem:[#allocation14 + $0xd98] sm:$0xff]
    %v1426 = vld [vmem:[#allocation14 + $0xda0] sm:$0xff]
    %v1427 = vld [vmem:[#allocation14 + $0xda8] sm:$0xff]
    %v1428 = vld [vmem:[#allocation14 + $0xdb0] sm:$0xff]
    %v1429 = vld [vmem:[#allocation14 + $0xdb8] sm:$0xff]
    %v1430 = vld [vmem:[#allocation14 + $0xdc0] sm:$0xff]
    %v1431 = vld [vmem:[#allocation14 + $0xdc8] sm:$0xff]
    %v1432 = vld [vmem:[#allocation14 + $0xdd0] sm:$0xff]
    %v1433 = vld [vmem:[#allocation14 + $0xdd8] sm:$0xff]
    %v1434 = vld [vmem:[#allocation14 + $0xde0] sm:$0xff]
    %v1435 = vld [vmem:[#allocation14 + $0xde8] sm:$0xff]
    %v1436 = vld [vmem:[#allocation14 + $0xdf0] sm:$0xff]
    %v1437 = vld [vmem:[#allocation14 + $0xdf8] sm:$0xff]
    %v1438 = vld [vmem:[#allocation14 + $0xe00] sm:$0xff]
    %v1439 = vld [vmem:[#allocation14 + $0xe08] sm:$0xff]
    %v1440 = vld [vmem:[#allocation14 + $0xe10] sm:$0xff]
    %v1441 = vld [vmem:[#allocation14 + $0xe18] sm:$0xff]
    %v1442 = vld [vmem:[#allocation14 + $0xe20] sm:$0xff]
    %v1443 = vld [vmem:[#allocation14 + $0xe28] sm:$0xff]
    %v1444 = vld [vmem:[#allocation14 + $0xe30] sm:$0xff]
    %v1445 = vld [vmem:[#allocation14 + $0xe38] sm:$0xff]
    %v1446 = vld [vmem:[#allocation14 + $0xe40] sm:$0xff]
    %v1447 = vld [vmem:[#allocation14 + $0xe48] sm:$0xff]
    %v1448 = vld [vmem:[#allocation14 + $0xe50] sm:$0xff]
    %v1449 = vld [vmem:[#allocation14 + $0xe58] sm:$0xff]
    %v1450 = vld [vmem:[#allocation14 + $0xe60] sm:$0xff]
    %v1451 = vld [vmem:[#allocation14 + $0xe68] sm:$0xff]
    %v1452 = vld [vmem:[#allocation14 + $0xe70] sm:$0xff]
    %v1453 = vld [vmem:[#allocation14 + $0xe78] sm:$0xff]
    %v1454 = vld [vmem:[#allocation14 + $0xe80] sm:$0xff]
    %v1455 = vld [vmem:[#allocation14 + $0xe88] sm:$0xff]
    %v1456 = vld [vmem:[#allocation14 + $0xe90] sm:$0xff]
    %v1457 = vld [vmem:[#allocation14 + $0xe98] sm:$0xff]
    %v1458 = vld [vmem:[#allocation14 + $0xea0] sm:$0xff]
    %v1459 = vld [vmem:[#allocation14 + $0xea8] sm:$0xff]
    %v1460 = vld [vmem:[#allocation14 + $0xeb0] sm:$0xff]
    %v1461 = vld [vmem:[#allocation14 + $0xeb8] sm:$0xff]
    %v1462 = vld [vmem:[#allocation14 + $0xec0] sm:$0xff]
    %v1463 = vld [vmem:[#allocation14 + $0xec8] sm:$0xff]
    %v1464 = vld [vmem:[#allocation14 + $0xed0] sm:$0xff]
    %v1465 = vld [vmem:[#allocation14 + $0xed8] sm:$0xff]
    %v1466 = vld [vmem:[#allocation14 + $0xee0] sm:$0xff]
    %v1467 = vld [vmem:[#allocation14 + $0xee8] sm:$0xff]
    %v1468 = vld [vmem:[#allocation14 + $0xef0] sm:$0xff]
    %v1469 = vld [vmem:[#allocation14 + $0xef8] sm:$0xff]
    %v1470 = vld [vmem:[#allocation14 + $0xf00] sm:$0xff]
    %v1471 = vld [vmem:[#allocation14 + $0xf08] sm:$0xff]
    %v1472 = vld [vmem:[#allocation14 + $0xf10] sm:$0xff]
    %v1473 = vld [vmem:[#allocation14 + $0xf18] sm:$0xff]
    %v1474 = vld [vmem:[#allocation14 + $0xf20] sm:$0xff]
    %v1475 = vld [vmem:[#allocation14 + $0xf28] sm:$0xff]
    %v1476 = vld [vmem:[#allocation14 + $0xf30] sm:$0xff]
    %v1477 = vld [vmem:[#allocation14 + $0xf38] sm:$0xff]
    %v1478 = vld [vmem:[#allocation14 + $0xf40] sm:$0xff]
    %v1479 = vld [vmem:[#allocation14 + $0xf48] sm:$0xff]
    %v1480 = vld [vmem:[#allocation14 + $0xf50] sm:$0xff]
    %v1481 = vld [vmem:[#allocation14 + $0xf58] sm:$0xff]
    %v1482 = vld [vmem:[#allocation14 + $0xf60] sm:$0xff]
    %v1483 = vld [vmem:[#allocation14 + $0xf68] sm:$0xff]
    %v1484 = vld [vmem:[#allocation14 + $0xf70] sm:$0xff]
    %v1485 = vld [vmem:[#allocation14 + $0xf78] sm:$0xff]
    %v1486 = vld [vmem:[#allocation14 + $0xf80] sm:$0xff]
    %v1487 = vld [vmem:[#allocation14 + $0xf88] sm:$0xff]
    %v1488 = vld [vmem:[#allocation14 + $0xf90] sm:$0xff]
    %v1489 = vld [vmem:[#allocation14 + $0xf98] sm:$0xff]
    %v1490 = vld [vmem:[#allocation14 + $0xfa0] sm:$0xff]
    %v1491 = vld [vmem:[#allocation14 + $0xfa8] sm:$0xff]
    %v1492 = vld [vmem:[#allocation14 + $0xfb0] sm:$0xff]
    %v1493 = vld [vmem:[#allocation14 + $0xfb8] sm:$0xff]
    %v1494 = vld [vmem:[#allocation14 + $0xfc0] sm:$0xff]
    %v1495 = vld [vmem:[#allocation14 + $0xfc8] sm:$0xff]
    %v1496 = vld [vmem:[#allocation14 + $0xfd0] sm:$0xff]
    %v1497 = vld [vmem:[#allocation14 + $0xfd8] sm:$0xff]
    %v1498 = vld [vmem:[#allocation14 + $0xfe0] sm:$0xff]
    %v1499 = vld [vmem:[#allocation14 + $0xfe8] sm:$0xff]
    %v1500 = vld [vmem:[#allocation14 + $0xff0] sm:$0xff]
    %v1501 = vld [vmem:[#allocation14 + $0xff8] sm:$0xff]
    %v1502 = vld [vmem:[#allocation14 + $0x1000] sm:$0xff]
    %v1503 = vld [vmem:[#allocation14 + $0x1008] sm:$0xff]
    %v1504 = vld [vmem:[#allocation14 + $0x1010] sm:$0xff]
    %v1505 = vld [vmem:[#allocation14 + $0x1018] sm:$0xff]
    %v1506 = vld [vmem:[#allocation14 + $0x1020] sm:$0xff]
    %v1507 = vld [vmem:[#allocation14 + $0x1028] sm:$0xff]
    %v1508 = vld [vmem:[#allocation14 + $0x1030] sm:$0xff]
    %v1509 = vld [vmem:[#allocation14 + $0x1038] sm:$0xff]
    %v1510 = vld [vmem:[#allocation14 + $0x1040] sm:$0xff]
    %v1511 = vld [vmem:[#allocation14 + $0x1048] sm:$0xff]
    %v1512 = vld [vmem:[#allocation14 + $0x1050] sm:$0xff]
    %v1513 = vld [vmem:[#allocation14 + $0x1058] sm:$0xff]
    %v1514 = vld [vmem:[#allocation14 + $0x1060] sm:$0xff]
    %v1515 = vld [vmem:[#allocation14 + $0x1068] sm:$0xff]
    %v1516 = vld [vmem:[#allocation14 + $0x1070] sm:$0xff]
    %v1517 = vld [vmem:[#allocation14 + $0x1078] sm:$0xff]
    %v1518 = vld [vmem:[#allocation14 + $0x1080] sm:$0xff]
    %v1519 = vld [vmem:[#allocation14 + $0x1088] sm:$0xff]
    %v1520 = vld [vmem:[#allocation14 + $0x1090] sm:$0xff]
    %v1521 = vld [vmem:[#allocation14 + $0x1098] sm:$0xff]
    %v1522 = vld [vmem:[#allocation14 + $0x10a0] sm:$0xff]
    %v1523 = vld [vmem:[#allocation14 + $0x10a8] sm:$0xff]
    %v1524 = vld [vmem:[#allocation14 + $0x10b0] sm:$0xff]
    %v1525 = vld [vmem:[#allocation14 + $0x10b8] sm:$0xff]
    %v1526 = vld [vmem:[#allocation14 + $0x10c0] sm:$0xff]
    %v1527 = vld [vmem:[#allocation14 + $0x10c8] sm:$0xff]
    %v1528 = vld [vmem:[#allocation14 + $0x10d0] sm:$0xff]
    %v1529 = vld [vmem:[#allocation14 + $0x10d8] sm:$0xff]
    %v1530 = vld [vmem:[#allocation14 + $0x10e0] sm:$0xff]
    %v1531 = vld [vmem:[#allocation14 + $0x10e8] sm:$0xff]
    %v1532 = vld [vmem:[#allocation14 + $0x10f0] sm:$0xff]
    %v1533 = vld [vmem:[#allocation14 + $0x10f8] sm:$0xff]
    %v1534 = vld [vmem:[#allocation14 + $0x1100] sm:$0xff]
    %v1535 = vld [vmem:[#allocation14 + $0x1108] sm:$0xff]
    %v1536 = vld [vmem:[#allocation14 + $0x1110] sm:$0xff]
    %v1537 = vld [vmem:[#allocation14 + $0x1118] sm:$0xff]
    %v1538 = vld [vmem:[#allocation14 + $0x1120] sm:$0xff]
    %v1539 = vld [vmem:[#allocation14 + $0x1128] sm:$0xff]
    %v1540 = vld [vmem:[#allocation14 + $0x1130] sm:$0xff]
    %v1541 = vld [vmem:[#allocation14 + $0x1138] sm:$0xff]
    %v1542 = vld [vmem:[#allocation14 + $0x1140] sm:$0xff]
    %v1543 = vld [vmem:[#allocation14 + $0x1148] sm:$0xff]
    %v1544 = vld [vmem:[#allocation14 + $0x1150] sm:$0xff]
    %v1545 = vld [vmem:[#allocation14 + $0x1158] sm:$0xff]
    %v1546 = vld [vmem:[#allocation14 + $0x1160] sm:$0xff]
    %v1547 = vld [vmem:[#allocation14 + $0x1168] sm:$0xff]
    %v1548 = vld [vmem:[#allocation14 + $0x1170] sm:$0xff]
    %v1549 = vld [vmem:[#allocation14 + $0x1178] sm:$0xff]
    %v1550 = vld [vmem:[#allocation14 + $0x1180] sm:$0xff]
    %v1551 = vld [vmem:[#allocation14 + $0x1188] sm:$0xff]
    %v1552 = vld [vmem:[#allocation14 + $0x1190] sm:$0xff]
    %v1553 = vld [vmem:[#allocation14 + $0x1198] sm:$0xff]
    %v1554 = vld [vmem:[#allocation14 + $0x11a0] sm:$0xff]
    %v1555 = vld [vmem:[#allocation14 + $0x11a8] sm:$0xff]
    %v1556 = vld [vmem:[#allocation14 + $0x11b0] sm:$0xff]
    %v1557 = vld [vmem:[#allocation14 + $0x11b8] sm:$0xff]
    %v1558 = vld [vmem:[#allocation14 + $0x11c0] sm:$0xff]
    %v1559 = vld [vmem:[#allocation14 + $0x11c8] sm:$0xff]
    %v1560 = vld [vmem:[#allocation14 + $0x11d0] sm:$0xff]
    %v1561 = vld [vmem:[#allocation14 + $0x11d8] sm:$0xff]
    %v1562 = vld [vmem:[#allocation14 + $0x11e0] sm:$0xff]
    %v1563 = vld [vmem:[#allocation14 + $0x11e8] sm:$0xff]
    %v1564 = vld [vmem:[#allocation14 + $0x11f0] sm:$0xff]
    %v1565 = vld [vmem:[#allocation14 + $0x11f8] sm:$0xff]
    %v1566 = vld [vmem:[#allocation14 + $0x1200] sm:$0xff]
    %v1567 = vld [vmem:[#allocation14 + $0x1208] sm:$0xff]
    %v1568 = vld [vmem:[#allocation14 + $0x1210] sm:$0xff]
    %v1569 = vld [vmem:[#allocation14 + $0x1218] sm:$0xff]
    %v1570 = vld [vmem:[#allocation14 + $0x1220] sm:$0xff]
    %v1571 = vld [vmem:[#allocation14 + $0x1228] sm:$0xff]
    %v1572 = vld [vmem:[#allocation14 + $0x1230] sm:$0xff]
    %v1573 = vld [vmem:[#allocation14 + $0x1238] sm:$0xff]
    %v1574 = vld [vmem:[#allocation14 + $0x1240] sm:$0xff]
    %v1575 = vld [vmem:[#allocation14 + $0x1248] sm:$0xff]
    %v1576 = vld [vmem:[#allocation14 + $0x1250] sm:$0xff]
    %v1577 = vld [vmem:[#allocation14 + $0x1258] sm:$0xff]
    %v1578 = vld [vmem:[#allocation14 + $0x1260] sm:$0xff]
    %v1579 = vld [vmem:[#allocation14 + $0x1268] sm:$0xff]
    %v1580 = vld [vmem:[#allocation14 + $0x1270] sm:$0xff]
    %v1581 = vld [vmem:[#allocation14 + $0x1278] sm:$0xff]
    %v1582 = vld [vmem:[#allocation14 + $0x1280] sm:$0xff]
    %v1583 = vld [vmem:[#allocation14 + $0x1288] sm:$0xff]
    %v1584 = vld [vmem:[#allocation14 + $0x1290] sm:$0xff]
    %v1585 = vld [vmem:[#allocation14 + $0x1298] sm:$0xff]
    %v1586 = vld [vmem:[#allocation14 + $0x12a0] sm:$0xff]
    %v1587 = vld [vmem:[#allocation14 + $0x12a8] sm:$0xff]
    %v1588 = vld [vmem:[#allocation14 + $0x12b0] sm:$0xff]
    %v1589 = vld [vmem:[#allocation14 + $0x12b8] sm:$0xff]
    %v1590 = vld [vmem:[#allocation14 + $0x12c0] sm:$0xff]
    %v1591 = vld [vmem:[#allocation14 + $0x12c8] sm:$0xff]
    %v1592 = vld [vmem:[#allocation14 + $0x12d0] sm:$0xff]
    %v1593 = vld [vmem:[#allocation14 + $0x12d8] sm:$0xff]
    %v1594 = vld [vmem:[#allocation14 + $0x12e0] sm:$0xff]
    %v1595 = vld [vmem:[#allocation14 + $0x12e8] sm:$0xff]
    %v1596 = vld [vmem:[#allocation14 + $0x12f0] sm:$0xff]
    %v1597 = vld [vmem:[#allocation14 + $0x12f8] sm:$0xff]
    %v1598 = vld [vmem:[#allocation14 + $0x1300] sm:$0xff]
    %v1599 = vld [vmem:[#allocation14 + $0x1308] sm:$0xff]
    %v1600 = vld [vmem:[#allocation14 + $0x1310] sm:$0xff]
    %v1601 = vld [vmem:[#allocation14 + $0x1318] sm:$0xff]
    %v1602 = vld [vmem:[#allocation14 + $0x1320] sm:$0xff]
    %v1603 = vld [vmem:[#allocation14 + $0x1328] sm:$0xff]
    %v1604 = vld [vmem:[#allocation14 + $0x1330] sm:$0xff]
    %v1605 = vld [vmem:[#allocation14 + $0x1338] sm:$0xff]
    %v1606 = vld [vmem:[#allocation14 + $0x1340] sm:$0xff]
    %v1607 = vld [vmem:[#allocation14 + $0x1348] sm:$0xff]
    %v1608 = vld [vmem:[#allocation14 + $0x1350] sm:$0xff]
    %v1609 = vld [vmem:[#allocation14 + $0x1358] sm:$0xff]
    %v1610 = vld [vmem:[#allocation14 + $0x1360] sm:$0xff]
    %v1611 = vld [vmem:[#allocation14 + $0x1368] sm:$0xff]
    %v1612 = vld [vmem:[#allocation14 + $0x1370] sm:$0xff]
    %v1613 = vld [vmem:[#allocation14 + $0x1378] sm:$0xff]
    %v1614 = vld [vmem:[#allocation14 + $0x1380] sm:$0xff]
    %v1615 = vld [vmem:[#allocation14 + $0x1388] sm:$0xff]
    %v1616 = vld [vmem:[#allocation14 + $0x1390] sm:$0xff]
    %v1617 = vld [vmem:[#allocation14 + $0x1398] sm:$0xff]
    %v1618 = vld [vmem:[#allocation14 + $0x13a0] sm:$0xff]
    %v1619 = vld [vmem:[#allocation14 + $0x13a8] sm:$0xff]
    %v1620 = vld [vmem:[#allocation14 + $0x13b0] sm:$0xff]
    %v1621 = vld [vmem:[#allocation14 + $0x13b8] sm:$0xff]
    %v1622 = vld [vmem:[#allocation14 + $0x13c0] sm:$0xff]
    %v1623 = vld [vmem:[#allocation14 + $0x13c8] sm:$0xff]
    %v1624 = vld [vmem:[#allocation14 + $0x13d0] sm:$0xff]
    %v1625 = vld [vmem:[#allocation14 + $0x13d8] sm:$0xff]
    %v1626 = vld [vmem:[#allocation14 + $0x13e0] sm:$0xff]
    %v1627 = vld [vmem:[#allocation14 + $0x13e8] sm:$0xff]
    %v1628 = vld [vmem:[#allocation14 + $0x13f0] sm:$0xff]
    %v1629 = vld [vmem:[#allocation14 + $0x13f8] sm:$0xff]
    %v1630 = vld [vmem:[#allocation14 + $0x1400] sm:$0xff]
    %v1631 = vld [vmem:[#allocation14 + $0x1408] sm:$0xff]
    %v1632 = vld [vmem:[#allocation14 + $0x1410] sm:$0xff]
    %v1633 = vld [vmem:[#allocation14 + $0x1418] sm:$0xff]
    %v1634 = vld [vmem:[#allocation14 + $0x1420] sm:$0xff]
    %v1635 = vld [vmem:[#allocation14 + $0x1428] sm:$0xff]
    %v1636 = vld [vmem:[#allocation14 + $0x1430] sm:$0xff]
    %v1637 = vld [vmem:[#allocation14 + $0x1438] sm:$0xff]
    %v1638 = vld [vmem:[#allocation14 + $0x1440] sm:$0xff]
    %v1639 = vld [vmem:[#allocation14 + $0x1448] sm:$0xff]
    %v1640 = vld [vmem:[#allocation14 + $0x1450] sm:$0xff]
    %v1641 = vld [vmem:[#allocation14 + $0x1458] sm:$0xff]
    %v1642 = vld [vmem:[#allocation14 + $0x1460] sm:$0xff]
    %v1643 = vld [vmem:[#allocation14 + $0x1468] sm:$0xff]
    %v1644 = vld [vmem:[#allocation14 + $0x1470] sm:$0xff]
    %v1645 = vld [vmem:[#allocation14 + $0x1478] sm:$0xff]
    %v1646 = vld [vmem:[#allocation14 + $0x1480] sm:$0xff]
    %v1647 = vld [vmem:[#allocation14 + $0x1488] sm:$0xff]
    %v1648 = vld [vmem:[#allocation14 + $0x1490] sm:$0xff]
    %v1649 = vld [vmem:[#allocation14 + $0x1498] sm:$0xff]
    %v1650 = vld [vmem:[#allocation14 + $0x14a0] sm:$0xff]
    %v1651 = vld [vmem:[#allocation14 + $0x14a8] sm:$0xff]
    %v1652 = vld [vmem:[#allocation14 + $0x14b0] sm:$0xff]
    %v1653 = vld [vmem:[#allocation14 + $0x14b8] sm:$0xff]
    %v1654 = vld [vmem:[#allocation14 + $0x14c0] sm:$0xff]
    %v1655 = vld [vmem:[#allocation14 + $0x14c8] sm:$0xff]
    %v1656 = vld [vmem:[#allocation14 + $0x14d0] sm:$0xff]
    %v1657 = vld [vmem:[#allocation14 + $0x14d8] sm:$0xff]
    %v1658 = vld [vmem:[#allocation14 + $0x14e0] sm:$0xff]
    %v1659 = vld [vmem:[#allocation14 + $0x14e8] sm:$0xff]
    %v1660 = vld [vmem:[#allocation14 + $0x14f0] sm:$0xff]
    %v1661 = vld [vmem:[#allocation14 + $0x14f8] sm:$0xff]
    %v1662 = vld [vmem:[#allocation14 + $0x1500] sm:$0xff]
    %v1663 = vld [vmem:[#allocation14 + $0x1508] sm:$0xff]
    %v1664 = vld [vmem:[#allocation14 + $0x1510] sm:$0xff]
    %v1665 = vld [vmem:[#allocation14 + $0x1518] sm:$0xff]
    %v1666 = vld [vmem:[#allocation14 + $0x1520] sm:$0xff]
    %v1667 = vld [vmem:[#allocation14 + $0x1528] sm:$0xff]
    %v1668 = vld [vmem:[#allocation14 + $0x1530] sm:$0xff]
    %v1669 = vld [vmem:[#allocation14 + $0x1538] sm:$0xff]
    %v1670 = vld [vmem:[#allocation14 + $0x1540] sm:$0xff]
    %v1671 = vld [vmem:[#allocation14 + $0x1548] sm:$0xff]
    %v1672 = vld [vmem:[#allocation14 + $0x1550] sm:$0xff]
    %v1673 = vld [vmem:[#allocation14 + $0x1558] sm:$0xff]
    %v1674 = vld [vmem:[#allocation14 + $0x1560] sm:$0xff]
    %v1675 = vld [vmem:[#allocation14 + $0x1568] sm:$0xff]
    %v1676 = vld [vmem:[#allocation14 + $0x1570] sm:$0xff]
    %v1677 = vld [vmem:[#allocation14 + $0x1578] sm:$0xff]
    %v1678 = vld [vmem:[#allocation14 + $0x1580] sm:$0xff]
    %v1679 = vld [vmem:[#allocation14 + $0x1588] sm:$0xff]
    %v1680 = vld [vmem:[#allocation14 + $0x1590] sm:$0xff]
    %v1681 = vld [vmem:[#allocation14 + $0x1598] sm:$0xff]
    %v1682 = vld [vmem:[#allocation14 + $0x15a0] sm:$0xff]
    %v1683 = vld [vmem:[#allocation14 + $0x15a8] sm:$0xff]
    %v1684 = vld [vmem:[#allocation14 + $0x15b0] sm:$0xff]
    %v1685 = vld [vmem:[#allocation14 + $0x15b8] sm:$0xff]
    %v1686 = vld [vmem:[#allocation14 + $0x15c0] sm:$0xff]
    %v1687 = vld [vmem:[#allocation14 + $0x15c8] sm:$0xff]
    %v1688 = vld [vmem:[#allocation14 + $0x15d0] sm:$0xff]
    %v1689 = vld [vmem:[#allocation14 + $0x15d8] sm:$0xff]
    %v1690 = vld [vmem:[#allocation14 + $0x15e0] sm:$0xff]
    %v1691 = vld [vmem:[#allocation14 + $0x15e8] sm:$0xff]
    %v1692 = vld [vmem:[#allocation14 + $0x15f0] sm:$0xff]
    %v1693 = vld [vmem:[#allocation14 + $0x15f8] sm:$0xff]
    %v1694 = vld [vmem:[#allocation14 + $0x1600] sm:$0xff]
    %v1695 = vld [vmem:[#allocation14 + $0x1608] sm:$0xff]
    %v1696 = vld [vmem:[#allocation14 + $0x1610] sm:$0xff]
    %v1697 = vld [vmem:[#allocation14 + $0x1618] sm:$0xff]
    %v1698 = vld [vmem:[#allocation14 + $0x1620] sm:$0xff]
    %v1699 = vld [vmem:[#allocation14 + $0x1628] sm:$0xff]
    %v1700 = vld [vmem:[#allocation14 + $0x1630] sm:$0xff]
    %v1701 = vld [vmem:[#allocation14 + $0x1638] sm:$0xff]
    %v1702 = vld [vmem:[#allocation14 + $0x1640] sm:$0xff]
    %v1703 = vld [vmem:[#allocation14 + $0x1648] sm:$0xff]
    %v1704 = vld [vmem:[#allocation14 + $0x1650] sm:$0xff]
    %v1705 = vld [vmem:[#allocation14 + $0x1658] sm:$0xff]
    %v1706 = vld [vmem:[#allocation14 + $0x1660] sm:$0xff]
    %v1707 = vld [vmem:[#allocation14 + $0x1668] sm:$0xff]
    %v1708 = vld [vmem:[#allocation14 + $0x1670] sm:$0xff]
    %v1709 = vld [vmem:[#allocation14 + $0x1678] sm:$0xff]
    %v1710 = vld [vmem:[#allocation14 + $0x1680] sm:$0xff]
    %v1711 = vld [vmem:[#allocation14 + $0x1688] sm:$0xff]
    %v1712 = vld [vmem:[#allocation14 + $0x1690] sm:$0xff]
    %v1713 = vld [vmem:[#allocation14 + $0x1698] sm:$0xff]
    %v1714 = vld [vmem:[#allocation14 + $0x16a0] sm:$0xff]
    %v1715 = vld [vmem:[#allocation14 + $0x16a8] sm:$0xff]
    %v1716 = vld [vmem:[#allocation14 + $0x16b0] sm:$0xff]
    %v1717 = vld [vmem:[#allocation14 + $0x16b8] sm:$0xff]
    %v1718 = vld [vmem:[#allocation14 + $0x16c0] sm:$0xff]
    %v1719 = vld [vmem:[#allocation14 + $0x16c8] sm:$0xff]
    %v1720 = vld [vmem:[#allocation14 + $0x16d0] sm:$0xff]
    %v1721 = vld [vmem:[#allocation14 + $0x16d8] sm:$0xff]
    %v1722 = vld [vmem:[#allocation14 + $0x16e0] sm:$0xff]
    %v1723 = vld [vmem:[#allocation14 + $0x16e8] sm:$0xff]
    %v1724 = vld [vmem:[#allocation14 + $0x16f0] sm:$0xff]
    %v1725 = vld [vmem:[#allocation14 + $0x16f8] sm:$0xff]
    %v1726 = vld [vmem:[#allocation14 + $0x1700] sm:$0xff]
    %v1727 = vld [vmem:[#allocation14 + $0x1708] sm:$0xff]
    %v1728 = vld [vmem:[#allocation14 + $0x1710] sm:$0xff]
    %v1729 = vld [vmem:[#allocation14 + $0x1718] sm:$0xff]
    %v1730 = vld [vmem:[#allocation14 + $0x1720] sm:$0xff]
    %v1731 = vld [vmem:[#allocation14 + $0x1728] sm:$0xff]
    %v1732 = vld [vmem:[#allocation14 + $0x1730] sm:$0xff]
    %v1733 = vld [vmem:[#allocation14 + $0x1738] sm:$0xff]
    %v1734 = vld [vmem:[#allocation14 + $0x1740] sm:$0xff]
    %v1735 = vld [vmem:[#allocation14 + $0x1748] sm:$0xff]
    %v1736 = vld [vmem:[#allocation14 + $0x1750] sm:$0xff]
    %v1737 = vld [vmem:[#allocation14 + $0x1758] sm:$0xff]
    %v1738 = vld [vmem:[#allocation14 + $0x1760] sm:$0xff]
    %v1739 = vld [vmem:[#allocation14 + $0x1768] sm:$0xff]
    %v1740 = vld [vmem:[#allocation14 + $0x1770] sm:$0xff]
    %v1741 = vld [vmem:[#allocation14 + $0x1778] sm:$0xff]
    %v1742 = vld [vmem:[#allocation14 + $0x1780] sm:$0xff]
    %v1743 = vld [vmem:[#allocation14 + $0x1788] sm:$0xff]
    %v1744 = vld [vmem:[#allocation14 + $0x1790] sm:$0xff]
    %v1745 = vld [vmem:[#allocation14 + $0x1798] sm:$0xff]
    %v1746 = vld [vmem:[#allocation14 + $0x17a0] sm:$0xff]
    %v1747 = vld [vmem:[#allocation14 + $0x17a8] sm:$0xff]
    %v1748 = vld [vmem:[#allocation14 + $0x17b0] sm:$0xff]
    %v1749 = vld [vmem:[#allocation14 + $0x17b8] sm:$0xff]
    %v1750 = vld [vmem:[#allocation14 + $0x17c0] sm:$0xff]
    %v1751 = vld [vmem:[#allocation14 + $0x17c8] sm:$0xff]
    %v1752 = vld [vmem:[#allocation14 + $0x17d0] sm:$0xff]
    %v1753 = vld [vmem:[#allocation14 + $0x17d8] sm:$0xff]
    %v1754 = vld [vmem:[#allocation14 + $0x17e0] sm:$0xff]
    %v1755 = vld [vmem:[#allocation14 + $0x17e8] sm:$0xff]
    %v1756 = vld [vmem:[#allocation14 + $0x17f0] sm:$0xff]
    %v1757 = vld [vmem:[#allocation14 + $0x17f8] sm:$0xff]
    %v1758 = vld [vmem:[#allocation14 + $0x1800] sm:$0xff]
    %v1759 = vld [vmem:[#allocation14 + $0x1808] sm:$0xff]
    %v1760 = vld [vmem:[#allocation14 + $0x1810] sm:$0xff]
    %v1761 = vld [vmem:[#allocation14 + $0x1818] sm:$0xff]
    %v1762 = vld [vmem:[#allocation14 + $0x1820] sm:$0xff]
    %v1763 = vld [vmem:[#allocation14 + $0x1828] sm:$0xff]
    %v1764 = vld [vmem:[#allocation14 + $0x1830] sm:$0xff]
    %v1765 = vld [vmem:[#allocation14 + $0x1838] sm:$0xff]
    %v1766 = vld [vmem:[#allocation14 + $0x1840] sm:$0xff]
    %v1767 = vld [vmem:[#allocation14 + $0x1848] sm:$0xff]
    %v1768 = vld [vmem:[#allocation14 + $0x1850] sm:$0xff]
    %v1769 = vld [vmem:[#allocation14 + $0x1858] sm:$0xff]
    %v1770 = vld [vmem:[#allocation14 + $0x1860] sm:$0xff]
    %v1771 = vld [vmem:[#allocation14 + $0x1868] sm:$0xff]
    %v1772 = vld [vmem:[#allocation14 + $0x1870] sm:$0xff]
    %v1773 = vld [vmem:[#allocation14 + $0x1878] sm:$0xff]
    %v1774 = vld [vmem:[#allocation14 + $0x1880] sm:$0xff]
    %v1775 = vld [vmem:[#allocation14 + $0x1888] sm:$0xff]
    %v1776 = vld [vmem:[#allocation14 + $0x1890] sm:$0xff]
    %v1777 = vld [vmem:[#allocation14 + $0x1898] sm:$0xff]
    %v1778 = vld [vmem:[#allocation14 + $0x18a0] sm:$0xff]
    %v1779 = vld [vmem:[#allocation14 + $0x18a8] sm:$0xff]
    %v1780 = vld [vmem:[#allocation14 + $0x18b0] sm:$0xff]
    %v1781 = vld [vmem:[#allocation14 + $0x18b8] sm:$0xff]
    %v1782 = vld [vmem:[#allocation14 + $0x18c0] sm:$0xff]
    %v1783 = vld [vmem:[#allocation14 + $0x18c8] sm:$0xff]
    %v1784 = vld [vmem:[#allocation14 + $0x18d0] sm:$0xff]
    %v1785 = vld [vmem:[#allocation14 + $0x18d8] sm:$0xff]
    %v1786 = vld [vmem:[#allocation14 + $0x18e0] sm:$0xff]
    %v1787 = vld [vmem:[#allocation14 + $0x18e8] sm:$0xff]
    %v1788 = vld [vmem:[#allocation14 + $0x18f0] sm:$0xff]
    %v1789 = vld [vmem:[#allocation14 + $0x18f8] sm:$0xff]
    %v1790 = vld [vmem:[#allocation14 + $0x1900] sm:$0xff]
    %v1791 = vld [vmem:[#allocation14 + $0x1908] sm:$0xff]
    %v1792 = vld [vmem:[#allocation14 + $0x1910] sm:$0xff]
    %v1793 = vld [vmem:[#allocation14 + $0x1918] sm:$0xff]
    %v1794 = vld [vmem:[#allocation14 + $0x1920] sm:$0xff]
    %v1795 = vld [vmem:[#allocation14 + $0x1928] sm:$0xff]
    %v1796 = vld [vmem:[#allocation14 + $0x1930] sm:$0xff]
    %v1797 = vld [vmem:[#allocation14 + $0x1938] sm:$0xff]
    %v1798 = vld [vmem:[#allocation14 + $0x1940] sm:$0xff]
    %v1799 = vld [vmem:[#allocation14 + $0x1948] sm:$0xff]
    %v1800 = vld [vmem:[#allocation14 + $0x1950] sm:$0xff]
    %v1801 = vld [vmem:[#allocation14 + $0x1958] sm:$0xff]
    %v1802 = vld [vmem:[#allocation14 + $0x1960] sm:$0xff]
    %v1803 = vld [vmem:[#allocation14 + $0x1968] sm:$0xff]
    %v1804 = vld [vmem:[#allocation14 + $0x1970] sm:$0xff]
    %v1805 = vld [vmem:[#allocation14 + $0x1978] sm:$0xff]
    %v1806 = vld [vmem:[#allocation14 + $0x1980] sm:$0xff]
    %v1807 = vld [vmem:[#allocation14 + $0x1988] sm:$0xff]
    %v1808 = vld [vmem:[#allocation14 + $0x1990] sm:$0xff]
    %v1809 = vld [vmem:[#allocation14 + $0x1998] sm:$0xff]
    %v1810 = vld [vmem:[#allocation14 + $0x19a0] sm:$0xff]
    %v1811 = vld [vmem:[#allocation14 + $0x19a8] sm:$0xff]
    %v1812 = vld [vmem:[#allocation14 + $0x19b0] sm:$0xff]
    %v1813 = vld [vmem:[#allocation14 + $0x19b8] sm:$0xff]
    %v1814 = vld [vmem:[#allocation14 + $0x19c0] sm:$0xff]
    %v1815 = vld [vmem:[#allocation14 + $0x19c8] sm:$0xff]
    %v1816 = vld [vmem:[#allocation14 + $0x19d0] sm:$0xff]
    %v1817 = vld [vmem:[#allocation14 + $0x19d8] sm:$0xff]
    %v1818 = vld [vmem:[#allocation14 + $0x19e0] sm:$0xff]
    %v1819 = vld [vmem:[#allocation14 + $0x19e8] sm:$0xff]
    %v1820 = vld [vmem:[#allocation14 + $0x19f0] sm:$0xff]
    %v1821 = vld [vmem:[#allocation14 + $0x19f8] sm:$0xff]
    %v1822 = vld [vmem:[#allocation14 + $0x1a00] sm:$0xff]
    %v1823 = vld [vmem:[#allocation14 + $0x1a08] sm:$0xff]
    %v1824 = vld [vmem:[#allocation14 + $0x1a10] sm:$0xff]
    %v1825 = vld [vmem:[#allocation14 + $0x1a18] sm:$0xff]
    %v1826 = vld [vmem:[#allocation14 + $0x1a20] sm:$0xff]
    %v1827 = vld [vmem:[#allocation14 + $0x1a28] sm:$0xff]
    %v1828 = vld [vmem:[#allocation14 + $0x1a30] sm:$0xff]
    %v1829 = vld [vmem:[#allocation14 + $0x1a38] sm:$0xff]
    %v1830 = vld [vmem:[#allocation14 + $0x1a40] sm:$0xff]
    %v1831 = vld [vmem:[#allocation14 + $0x1a48] sm:$0xff]
    %v1832 = vld [vmem:[#allocation14 + $0x1a50] sm:$0xff]
    %v1833 = vld [vmem:[#allocation14 + $0x1a58] sm:$0xff]
    %v1834 = vld [vmem:[#allocation14 + $0x1a60] sm:$0xff]
    %v1835 = vld [vmem:[#allocation14 + $0x1a68] sm:$0xff]
    %v1836 = vld [vmem:[#allocation14 + $0x1a70] sm:$0xff]
    %v1837 = vld [vmem:[#allocation14 + $0x1a78] sm:$0xff]
    %v1838 = vld [vmem:[#allocation14 + $0x1a80] sm:$0xff]
    %v1839 = vld [vmem:[#allocation14 + $0x1a88] sm:$0xff]
    %v1840 = vld [vmem:[#allocation14 + $0x1a90] sm:$0xff]
    %v1841 = vld [vmem:[#allocation14 + $0x1a98] sm:$0xff]
    %v1842 = vld [vmem:[#allocation14 + $0x1aa0] sm:$0xff]
    %v1843 = vld [vmem:[#allocation14 + $0x1aa8] sm:$0xff]
    %v1844 = vld [vmem:[#allocation14 + $0x1ab0] sm:$0xff]
    %v1845 = vld [vmem:[#allocation14 + $0x1ab8] sm:$0xff]
    %v1846 = vld [vmem:[#allocation14 + $0x1ac0] sm:$0xff]
    %v1847 = vld [vmem:[#allocation14 + $0x1ac8] sm:$0xff]
    %v1848 = vld [vmem:[#allocation14 + $0x1ad0] sm:$0xff]
    %v1849 = vld [vmem:[#allocation14 + $0x1ad8] sm:$0xff]
    %v1850 = vld [vmem:[#allocation14 + $0x1ae0] sm:$0xff]
    %v1851 = vld [vmem:[#allocation14 + $0x1ae8] sm:$0xff]
    %v1852 = vld [vmem:[#allocation14 + $0x1af0] sm:$0xff]
    %v1853 = vld [vmem:[#allocation14 + $0x1af8] sm:$0xff]
    %v1854 = vld [vmem:[%s5] sm:$0xff]
    %v1855 = vld [vmem:[%s5 + $0x8] sm:$0xff]
    %v1856 = vld [vmem:[%s5 + $0x10] sm:$0xff]
    %v1857 = vld [vmem:[%s5 + $0x18] sm:$0xff]
    %v1858 = vld [vmem:[%s5 + $0x20] sm:$0xff]
    %v1859 = vld [vmem:[%s5 + $0x28] sm:$0xff]
    %v1860 = vld [vmem:[%s5 + $0x30] sm:$0xff]
    %v1861 = vld [vmem:[%s5 + $0x38] sm:$0xff]
    %v2726 = vunpack.c.l.b16 %v990
    %v2727 = vunpack.c.h.b16 %v990
    %v2728 = vunpack.c.l.b16 %v991
    %v2729 = vunpack.c.h.b16 %v991
    %v2730 = vunpack.c.l.b16 %v992
    %v2731 = vunpack.c.h.b16 %v992
    %v2732 = vunpack.c.l.b16 %v993
    %v2733 = vunpack.c.h.b16 %v993
    %v2734 = vunpack.c.l.b16 %v994
    %v2735 = vunpack.c.h.b16 %v994
    %v2736 = vunpack.c.l.b16 %v995
    %v2737 = vunpack.c.h.b16 %v995
    %v2738 = vunpack.c.l.b16 %v996
    %v2739 = vunpack.c.h.b16 %v996
    %v2740 = vunpack.c.l.b16 %v997
    %v2741 = vunpack.c.h.b16 %v997
    %v2742 = vunpack.c.l.b16 %v998
    %v2743 = vunpack.c.h.b16 %v998
    %v2744 = vunpack.c.l.b16 %v999
    %v2745 = vunpack.c.h.b16 %v999
    %v2746 = vunpack.c.l.b16 %v1000
    %v2747 = vunpack.c.h.b16 %v1000
    %v2748 = vunpack.c.l.b16 %v1001
    %v2749 = vunpack.c.h.b16 %v1001
    %v2750 = vunpack.c.l.b16 %v1002
    %v2751 = vunpack.c.h.b16 %v1002
    %v2752 = vunpack.c.l.b16 %v1003
    %v2753 = vunpack.c.h.b16 %v1003
    %v2754 = vunpack.c.l.b16 %v1004
    %v2755 = vunpack.c.h.b16 %v1004
    %v2756 = vunpack.c.l.b16 %v1005
    %v2757 = vunpack.c.h.b16 %v1005
    %v2758 = vunpack.c.l.b16 %v1006
    %v2759 = vunpack.c.h.b16 %v1006
    %v2760 = vunpack.c.l.b16 %v1007
    %v2761 = vunpack.c.h.b16 %v1007
    %v2762 = vunpack.c.l.b16 %v1008
    %v2763 = vunpack.c.h.b16 %v1008
    %v2764 = vunpack.c.l.b16 %v1009
    %v2765 = vunpack.c.h.b16 %v1009
    %v2766 = vunpack.c.l.b16 %v1010
    %v2767 = vunpack.c.h.b16 %v1010
    %v2768 = vunpack.c.l.b16 %v1011
    %v2769 = vunpack.c.h.b16 %v1011
    %v2770 = vunpack.c.l.b16 %v1012
    %v2771 = vunpack.c.h.b16 %v1012
    %v2772 = vunpack.c.l.b16 %v1013
    %v2773 = vunpack.c.h.b16 %v1013
    %v2774 = vunpack.c.l.b16 %v1014
    %v2775 = vunpack.c.h.b16 %v1014
    %v2776 = vunpack.c.l.b16 %v1015
    %v2777 = vunpack.c.h.b16 %v1015
    %v2778 = vunpack.c.l.b16 %v1016
    %v2779 = vunpack.c.h.b16 %v1016
    %v2780 = vunpack.c.l.b16 %v1017
    %v2781 = vunpack.c.h.b16 %v1017
    %v2782 = vunpack.c.l.b16 %v1018
    %v2783 = vunpack.c.h.b16 %v1018
    %v2784 = vunpack.c.l.b16 %v1019
    %v2785 = vunpack.c.h.b16 %v1019
    %v2786 = vunpack.c.l.b16 %v1020
    %v2787 = vunpack.c.h.b16 %v1020
    %v2788 = vunpack.c.l.b16 %v1021
    %v2789 = vunpack.c.h.b16 %v1021
    %v2790 = vunpack.c.l.b16 %v1022
    %v2791 = vunpack.c.h.b16 %v1022
    %v2792 = vunpack.c.l.b16 %v1023
    %v2793 = vunpack.c.h.b16 %v1023
    %v2794 = vunpack.c.l.b16 %v1024
    %v2795 = vunpack.c.h.b16 %v1024
    %v2796 = vunpack.c.l.b16 %v1025
    %v2797 = vunpack.c.h.b16 %v1025
    %v2798 = vunpack.c.l.b16 %v1026
    %v2799 = vunpack.c.h.b16 %v1026
    %v2800 = vunpack.c.l.b16 %v1027
    %v2801 = vunpack.c.h.b16 %v1027
    %v2802 = vunpack.c.l.b16 %v1028
    %v2803 = vunpack.c.h.b16 %v1028
    %v2804 = vunpack.c.l.b16 %v1029
    %v2805 = vunpack.c.h.b16 %v1029
    %v2806 = vunpack.c.l.b16 %v1030
    %v2807 = vunpack.c.h.b16 %v1030
    %v2808 = vunpack.c.l.b16 %v1031
    %v2809 = vunpack.c.h.b16 %v1031
    %v2810 = vunpack.c.l.b16 %v1032
    %v2811 = vunpack.c.h.b16 %v1032
    %v2812 = vunpack.c.l.b16 %v1033
    %v2813 = vunpack.c.h.b16 %v1033
    %v2814 = vunpack.c.l.b16 %v1034
    %v2815 = vunpack.c.h.b16 %v1034
    %v2816 = vunpack.c.l.b16 %v1035
    %v2817 = vunpack.c.h.b16 %v1035
    %v2818 = vunpack.c.l.b16 %v1036
    %v2819 = vunpack.c.h.b16 %v1036
    %v2820 = vunpack.c.l.b16 %v1037
    %v2821 = vunpack.c.h.b16 %v1037
    %v2822 = vunpack.c.l.b16 %v1038
    %v2823 = vunpack.c.h.b16 %v1038
    %v2824 = vunpack.c.l.b16 %v1039
    %v2825 = vunpack.c.h.b16 %v1039
    %v2826 = vunpack.c.l.b16 %v1040
    %v2827 = vunpack.c.h.b16 %v1040
    %v2828 = vunpack.c.l.b16 %v1041
    %v2829 = vunpack.c.h.b16 %v1041
    %v2830 = vunpack.c.l.b16 %v1042
    %v2831 = vunpack.c.h.b16 %v1042
    %v2832 = vunpack.c.l.b16 %v1043
    %v2833 = vunpack.c.h.b16 %v1043
    %v2834 = vunpack.c.l.b16 %v1044
    %v2835 = vunpack.c.h.b16 %v1044
    %v2836 = vunpack.c.l.b16 %v1045
    %v2837 = vunpack.c.h.b16 %v1045
    %v2838 = vunpack.c.l.b16 %v1046
    %v2839 = vunpack.c.h.b16 %v1046
    %v2840 = vunpack.c.l.b16 %v1047
    %v2841 = vunpack.c.h.b16 %v1047
    %v2842 = vunpack.c.l.b16 %v1048
    %v2843 = vunpack.c.h.b16 %v1048
    %v2844 = vunpack.c.l.b16 %v1049
    %v2845 = vunpack.c.h.b16 %v1049
    %v2846 = vunpack.c.l.b16 %v1050
    %v2847 = vunpack.c.h.b16 %v1050
    %v2848 = vunpack.c.l.b16 %v1051
    %v2849 = vunpack.c.h.b16 %v1051
    %v2850 = vunpack.c.l.b16 %v1052
    %v2851 = vunpack.c.h.b16 %v1052
    %v2852 = vunpack.c.l.b16 %v1053
    %v2853 = vunpack.c.h.b16 %v1053
    %v2854 = vunpack.c.l.b16 %v1054
    %v2855 = vunpack.c.h.b16 %v1054
    %v2856 = vunpack.c.l.b16 %v1055
    %v2857 = vunpack.c.h.b16 %v1055
    %v2858 = vunpack.c.l.b16 %v1056
    %v2859 = vunpack.c.h.b16 %v1056
    %v2860 = vunpack.c.l.b16 %v1057
    %v2861 = vunpack.c.h.b16 %v1057
    %v2862 = vunpack.c.l.b16 %v1058
    %v2863 = vunpack.c.h.b16 %v1058
    %v2864 = vunpack.c.l.b16 %v1059
    %v2865 = vunpack.c.h.b16 %v1059
    %v2866 = vunpack.c.l.b16 %v1060
    %v2867 = vunpack.c.h.b16 %v1060
    %v2868 = vunpack.c.l.b16 %v1061
    %v2869 = vunpack.c.h.b16 %v1061
    %v2870 = vunpack.c.l.b16 %v1062
    %v2871 = vunpack.c.h.b16 %v1062
    %v2872 = vunpack.c.l.b16 %v1063
    %v2873 = vunpack.c.h.b16 %v1063
    %v2874 = vunpack.c.l.b16 %v1064
    %v2875 = vunpack.c.h.b16 %v1064
    %v2876 = vunpack.c.l.b16 %v1065
    %v2877 = vunpack.c.h.b16 %v1065
    %v2878 = vunpack.c.l.b16 %v1066
    %v2879 = vunpack.c.h.b16 %v1066
    %v2880 = vunpack.c.l.b16 %v1067
    %v2881 = vunpack.c.h.b16 %v1067
    %v2882 = vunpack.c.l.b16 %v1068
    %v2883 = vunpack.c.h.b16 %v1068
    %v2884 = vunpack.c.l.b16 %v1069
    %v2885 = vunpack.c.h.b16 %v1069
    %v2886 = vunpack.c.l.b16 %v1070
    %v2887 = vunpack.c.h.b16 %v1070
    %v2888 = vunpack.c.l.b16 %v1071
    %v2889 = vunpack.c.h.b16 %v1071
    %v2890 = vunpack.c.l.b16 %v1072
    %v2891 = vunpack.c.h.b16 %v1072
    %v2892 = vunpack.c.l.b16 %v1073
    %v2893 = vunpack.c.h.b16 %v1073
    %v2894 = vunpack.c.l.b16 %v1074
    %v2895 = vunpack.c.h.b16 %v1074
    %v2896 = vunpack.c.l.b16 %v1075
    %v2897 = vunpack.c.h.b16 %v1075
    %v2898 = vunpack.c.l.b16 %v1076
    %v2899 = vunpack.c.h.b16 %v1076
    %v2900 = vunpack.c.l.b16 %v1077
    %v2901 = vunpack.c.h.b16 %v1077
    %v2902 = vunpack.c.l.b16 %v1078
    %v2903 = vunpack.c.h.b16 %v1078
    %v2904 = vunpack.c.l.b16 %v1079
    %v2905 = vunpack.c.h.b16 %v1079
    %v2906 = vunpack.c.l.b16 %v1080
    %v2907 = vunpack.c.h.b16 %v1080
    %v2908 = vunpack.c.l.b16 %v1081
    %v2909 = vunpack.c.h.b16 %v1081
    %v2910 = vunpack.c.l.b16 %v1082
    %v2911 = vunpack.c.h.b16 %v1082
    %v2912 = vunpack.c.l.b16 %v1083
    %v2913 = vunpack.c.h.b16 %v1083
    %v2914 = vunpack.c.l.b16 %v1084
    %v2915 = vunpack.c.h.b16 %v1084
    %v2916 = vunpack.c.l.b16 %v1085
    %v2917 = vunpack.c.h.b16 %v1085
    %v2918 = vunpack.c.l.b16 %v1086
    %v2919 = vunpack.c.h.b16 %v1086
    %v2920 = vunpack.c.l.b16 %v1087
    %v2921 = vunpack.c.h.b16 %v1087
    %v2922 = vunpack.c.l.b16 %v1088
    %v2923 = vunpack.c.h.b16 %v1088
    %v2924 = vunpack.c.l.b16 %v1089
    %v2925 = vunpack.c.h.b16 %v1089
    %v2926 = vunpack.c.l.b16 %v1090
    %v2927 = vunpack.c.h.b16 %v1090
    %v2928 = vunpack.c.l.b16 %v1091
    %v2929 = vunpack.c.h.b16 %v1091
    %v2930 = vunpack.c.l.b16 %v1092
    %v2931 = vunpack.c.h.b16 %v1092
    %v2932 = vunpack.c.l.b16 %v1093
    %v2933 = vunpack.c.h.b16 %v1093
    %v2934 = vunpack.c.l.b16 %v1094
    %v2935 = vunpack.c.h.b16 %v1094
    %v2936 = vunpack.c.l.b16 %v1095
    %v2937 = vunpack.c.h.b16 %v1095
    %v2938 = vunpack.c.l.b16 %v1096
    %v2939 = vunpack.c.h.b16 %v1096
    %v2940 = vunpack.c.l.b16 %v1097
    %v2941 = vunpack.c.h.b16 %v1097
    %v2942 = vunpack.c.l.b16 %v1098
    %v2943 = vunpack.c.h.b16 %v1098
    %v2944 = vunpack.c.l.b16 %v1099
    %v2945 = vunpack.c.h.b16 %v1099
    %v2946 = vunpack.c.l.b16 %v1100
    %v2947 = vunpack.c.h.b16 %v1100
    %v2948 = vunpack.c.l.b16 %v1101
    %v2949 = vunpack.c.h.b16 %v1101
    %v2950 = vunpack.c.l.b16 %v1102
    %v2951 = vunpack.c.h.b16 %v1102
    %v2952 = vunpack.c.l.b16 %v1103
    %v2953 = vunpack.c.h.b16 %v1103
    %v2954 = vunpack.c.l.b16 %v1104
    %v2955 = vunpack.c.h.b16 %v1104
    %v2956 = vunpack.c.l.b16 %v1105
    %v2957 = vunpack.c.h.b16 %v1105
    %v2958 = vunpack.c.l.b16 %v1106
    %v2959 = vunpack.c.h.b16 %v1106
    %v2960 = vunpack.c.l.b16 %v1107
    %v2961 = vunpack.c.h.b16 %v1107
    %v2962 = vunpack.c.l.b16 %v1108
    %v2963 = vunpack.c.h.b16 %v1108
    %v2964 = vunpack.c.l.b16 %v1109
    %v2965 = vunpack.c.h.b16 %v1109
    %v2966 = vunpack.c.l.b16 %v1110
    %v2967 = vunpack.c.h.b16 %v1110
    %v2968 = vunpack.c.l.b16 %v1111
    %v2969 = vunpack.c.h.b16 %v1111
    %v2970 = vunpack.c.l.b16 %v1112
    %v2971 = vunpack.c.h.b16 %v1112
    %v2972 = vunpack.c.l.b16 %v1113
    %v2973 = vunpack.c.h.b16 %v1113
    %v2974 = vunpack.c.l.b16 %v1114
    %v2975 = vunpack.c.h.b16 %v1114
    %v2976 = vunpack.c.l.b16 %v1115
    %v2977 = vunpack.c.h.b16 %v1115
    %v2978 = vunpack.c.l.b16 %v1116
    %v2979 = vunpack.c.h.b16 %v1116
    %v2980 = vunpack.c.l.b16 %v1117
    %v2981 = vunpack.c.h.b16 %v1117
    %v2982 = vunpack.c.l.b16 %v1118
    %v2983 = vunpack.c.h.b16 %v1118
    %v2984 = vunpack.c.l.b16 %v1119
    %v2985 = vunpack.c.h.b16 %v1119
    %v2986 = vunpack.c.l.b16 %v1120
    %v2987 = vunpack.c.h.b16 %v1120
    %v2988 = vunpack.c.l.b16 %v1121
    %v2989 = vunpack.c.h.b16 %v1121
    %v2990 = vunpack.c.l.b16 %v1122
    %v2991 = vunpack.c.h.b16 %v1122
    %v2992 = vunpack.c.l.b16 %v1123
    %v2993 = vunpack.c.h.b16 %v1123
    %v2994 = vunpack.c.l.b16 %v1124
    %v2995 = vunpack.c.h.b16 %v1124
    %v2996 = vunpack.c.l.b16 %v1125
    %v2997 = vunpack.c.h.b16 %v1125
    %v2998 = vunpack.c.l.b16 %v1126
    %v2999 = vunpack.c.h.b16 %v1126
    %v3000 = vunpack.c.l.b16 %v1127
    %v3001 = vunpack.c.h.b16 %v1127
    %v3002 = vunpack.c.l.b16 %v1128
    %v3003 = vunpack.c.h.b16 %v1128
    %v3004 = vunpack.c.l.b16 %v1129
    %v3005 = vunpack.c.h.b16 %v1129
    %v3006 = vunpack.c.l.b16 %v1130
    %v3007 = vunpack.c.h.b16 %v1130
    %v3008 = vunpack.c.l.b16 %v1131
    %v3009 = vunpack.c.h.b16 %v1131
    %v3010 = vunpack.c.l.b16 %v1132
    %v3011 = vunpack.c.h.b16 %v1132
    %v3012 = vunpack.c.l.b16 %v1133
    %v3013 = vunpack.c.h.b16 %v1133
    %v3014 = vunpack.c.l.b16 %v1134
    %v3015 = vunpack.c.h.b16 %v1134
    %v3016 = vunpack.c.l.b16 %v1135
    %v3017 = vunpack.c.h.b16 %v1135
    %v3018 = vunpack.c.l.b16 %v1136
    %v3019 = vunpack.c.h.b16 %v1136
    %v3020 = vunpack.c.l.b16 %v1137
    %v3021 = vunpack.c.h.b16 %v1137
    %v3022 = vunpack.c.l.b16 %v1138
    %v3023 = vunpack.c.h.b16 %v1138
    %v3024 = vunpack.c.l.b16 %v1139
    %v3025 = vunpack.c.h.b16 %v1139
    %v3026 = vunpack.c.l.b16 %v1140
    %v3027 = vunpack.c.h.b16 %v1140
    %v3028 = vunpack.c.l.b16 %v1141
    %v3029 = vunpack.c.h.b16 %v1141
    %v3030 = vunpack.c.l.b16 %v1142
    %v3031 = vunpack.c.h.b16 %v1142
    %v3032 = vunpack.c.l.b16 %v1143
    %v3033 = vunpack.c.h.b16 %v1143
    %v3034 = vunpack.c.l.b16 %v1144
    %v3035 = vunpack.c.h.b16 %v1144
    %v3036 = vunpack.c.l.b16 %v1145
    %v3037 = vunpack.c.h.b16 %v1145
    %v3038 = vunpack.c.l.b16 %v1146
    %v3039 = vunpack.c.h.b16 %v1146
    %v3040 = vunpack.c.l.b16 %v1147
    %v3041 = vunpack.c.h.b16 %v1147
    %v3042 = vunpack.c.l.b16 %v1148
    %v3043 = vunpack.c.h.b16 %v1148
    %v3044 = vunpack.c.l.b16 %v1149
    %v3045 = vunpack.c.h.b16 %v1149
    %v3046 = vunpack.c.l.b16 %v1150
    %v3047 = vunpack.c.h.b16 %v1150
    %v3048 = vunpack.c.l.b16 %v1151
    %v3049 = vunpack.c.h.b16 %v1151
    %v3050 = vunpack.c.l.b16 %v1152
    %v3051 = vunpack.c.h.b16 %v1152
    %v3052 = vunpack.c.l.b16 %v1153
    %v3053 = vunpack.c.h.b16 %v1153
    %v3054 = vunpack.c.l.b16 %v1154
    %v3055 = vunpack.c.h.b16 %v1154
    %v3056 = vunpack.c.l.b16 %v1155
    %v3057 = vunpack.c.h.b16 %v1155
    %v3058 = vunpack.c.l.b16 %v1156
    %v3059 = vunpack.c.h.b16 %v1156
    %v3060 = vunpack.c.l.b16 %v1157
    %v3061 = vunpack.c.h.b16 %v1157
    %v3062 = vunpack.c.l.b16 %v1158
    %v3063 = vunpack.c.h.b16 %v1158
    %v3064 = vunpack.c.l.b16 %v1159
    %v3065 = vunpack.c.h.b16 %v1159
    %v3066 = vunpack.c.l.b16 %v1160
    %v3067 = vunpack.c.h.b16 %v1160
    %v3068 = vunpack.c.l.b16 %v1161
    %v3069 = vunpack.c.h.b16 %v1161
    %v3070 = vunpack.c.l.b16 %v1162
    %v3071 = vunpack.c.h.b16 %v1162
    %v3072 = vunpack.c.l.b16 %v1163
    %v3073 = vunpack.c.h.b16 %v1163
    %v3074 = vunpack.c.l.b16 %v1164
    %v3075 = vunpack.c.h.b16 %v1164
    %v3076 = vunpack.c.l.b16 %v1165
    %v3077 = vunpack.c.h.b16 %v1165
    %v3078 = vunpack.c.l.b16 %v1166
    %v3079 = vunpack.c.h.b16 %v1166
    %v3080 = vunpack.c.l.b16 %v1167
    %v3081 = vunpack.c.h.b16 %v1167
    %v3082 = vunpack.c.l.b16 %v1168
    %v3083 = vunpack.c.h.b16 %v1168
    %v3084 = vunpack.c.l.b16 %v1169
    %v3085 = vunpack.c.h.b16 %v1169
    %v3086 = vunpack.c.l.b16 %v1170
    %v3087 = vunpack.c.h.b16 %v1170
    %v3088 = vunpack.c.l.b16 %v1171
    %v3089 = vunpack.c.h.b16 %v1171
    %v3090 = vunpack.c.l.b16 %v1172
    %v3091 = vunpack.c.h.b16 %v1172
    %v3092 = vunpack.c.l.b16 %v1173
    %v3093 = vunpack.c.h.b16 %v1173
    %v3094 = vunpack.c.l.b16 %v1174
    %v3095 = vunpack.c.h.b16 %v1174
    %v3096 = vunpack.c.l.b16 %v1175
    %v3097 = vunpack.c.h.b16 %v1175
    %v3098 = vunpack.c.l.b16 %v1176
    %v3099 = vunpack.c.h.b16 %v1176
    %v3100 = vunpack.c.l.b16 %v1177
    %v3101 = vunpack.c.h.b16 %v1177
    %v3102 = vunpack.c.l.b16 %v1178
    %v3103 = vunpack.c.h.b16 %v1178
    %v3104 = vunpack.c.l.b16 %v1179
    %v3105 = vunpack.c.h.b16 %v1179
    %v3106 = vunpack.c.l.b16 %v1180
    %v3107 = vunpack.c.h.b16 %v1180
    %v3108 = vunpack.c.l.b16 %v1181
    %v3109 = vunpack.c.h.b16 %v1181
    %v3110 = vunpack.c.l.b16 %v1182
    %v3111 = vunpack.c.h.b16 %v1182
    %v3112 = vunpack.c.l.b16 %v1183
    %v3113 = vunpack.c.h.b16 %v1183
    %v3114 = vunpack.c.l.b16 %v1184
    %v3115 = vunpack.c.h.b16 %v1184
    %v3116 = vunpack.c.l.b16 %v1185
    %v3117 = vunpack.c.h.b16 %v1185
    %v3118 = vunpack.c.l.b16 %v1186
    %v3119 = vunpack.c.h.b16 %v1186
    %v3120 = vunpack.c.l.b16 %v1187
    %v3121 = vunpack.c.h.b16 %v1187
    %v3122 = vunpack.c.l.b16 %v1188
    %v3123 = vunpack.c.h.b16 %v1188
    %v3124 = vunpack.c.l.b16 %v1189
    %v3125 = vunpack.c.h.b16 %v1189
    %v3126 = vunpack.c.l.b16 %v1190
    %v3127 = vunpack.c.h.b16 %v1190
    %v3128 = vunpack.c.l.b16 %v1191
    %v3129 = vunpack.c.h.b16 %v1191
    %v3130 = vunpack.c.l.b16 %v1192
    %v3131 = vunpack.c.h.b16 %v1192
    %v3132 = vunpack.c.l.b16 %v1193
    %v3133 = vunpack.c.h.b16 %v1193
    %v3134 = vunpack.c.l.b16 %v1194
    %v3135 = vunpack.c.h.b16 %v1194
    %v3136 = vunpack.c.l.b16 %v1195
    %v3137 = vunpack.c.h.b16 %v1195
    %v3138 = vunpack.c.l.b16 %v1196
    %v3139 = vunpack.c.h.b16 %v1196
    %v3140 = vunpack.c.l.b16 %v1197
    %v3141 = vunpack.c.h.b16 %v1197
    %v3142 = vunpack.c.l.b16 %v1198
    %v3143 = vunpack.c.h.b16 %v1198
    %v3144 = vunpack.c.l.b16 %v1199
    %v3145 = vunpack.c.h.b16 %v1199
    %v3146 = vunpack.c.l.b16 %v1200
    %v3147 = vunpack.c.h.b16 %v1200
    %v3148 = vunpack.c.l.b16 %v1201
    %v3149 = vunpack.c.h.b16 %v1201
    %v3150 = vunpack.c.l.b16 %v1202
    %v3151 = vunpack.c.h.b16 %v1202
    %v3152 = vunpack.c.l.b16 %v1203
    %v3153 = vunpack.c.h.b16 %v1203
    %v3154 = vunpack.c.l.b16 %v1204
    %v3155 = vunpack.c.h.b16 %v1204
    %v3156 = vunpack.c.l.b16 %v1205
    %v3157 = vunpack.c.h.b16 %v1205
    %v3158 = vunpack.c.l.b16 %v1206
    %v3159 = vunpack.c.h.b16 %v1206
    %v3160 = vunpack.c.l.b16 %v1207
    %v3161 = vunpack.c.h.b16 %v1207
    %v3162 = vunpack.c.l.b16 %v1208
    %v3163 = vunpack.c.h.b16 %v1208
    %v3164 = vunpack.c.l.b16 %v1209
    %v3165 = vunpack.c.h.b16 %v1209
    %v3166 = vunpack.c.l.b16 %v1210
    %v3167 = vunpack.c.h.b16 %v1210
    %v3168 = vunpack.c.l.b16 %v1211
    %v3169 = vunpack.c.h.b16 %v1211
    %v3170 = vunpack.c.l.b16 %v1212
    %v3171 = vunpack.c.h.b16 %v1212
    %v3172 = vunpack.c.l.b16 %v1213
    %v3173 = vunpack.c.h.b16 %v1213
    %v3174 = vunpack.c.l.b16 %v1214
    %v3175 = vunpack.c.h.b16 %v1214
    %v3176 = vunpack.c.l.b16 %v1215
    %v3177 = vunpack.c.h.b16 %v1215
    %v3178 = vunpack.c.l.b16 %v1216
    %v3179 = vunpack.c.h.b16 %v1216
    %v3180 = vunpack.c.l.b16 %v1217
    %v3181 = vunpack.c.h.b16 %v1217
    %v3182 = vunpack.c.l.b16 %v1218
    %v3183 = vunpack.c.h.b16 %v1218
    %v3184 = vunpack.c.l.b16 %v1219
    %v3185 = vunpack.c.h.b16 %v1219
    %v3186 = vunpack.c.l.b16 %v1220
    %v3187 = vunpack.c.h.b16 %v1220
    %v3188 = vunpack.c.l.b16 %v1221
    %v3189 = vunpack.c.h.b16 %v1221
    %v3190 = vunpack.c.l.b16 %v1222
    %v3191 = vunpack.c.h.b16 %v1222
    %v3192 = vunpack.c.l.b16 %v1223
    %v3193 = vunpack.c.h.b16 %v1223
    %v3194 = vunpack.c.l.b16 %v1224
    %v3195 = vunpack.c.h.b16 %v1224
    %v3196 = vunpack.c.l.b16 %v1225
    %v3197 = vunpack.c.h.b16 %v1225
    %v3198 = vunpack.c.l.b16 %v1226
    %v3199 = vunpack.c.h.b16 %v1226
    %v3200 = vunpack.c.l.b16 %v1227
    %v3201 = vunpack.c.h.b16 %v1227
    %v3202 = vunpack.c.l.b16 %v1228
    %v3203 = vunpack.c.h.b16 %v1228
    %v3204 = vunpack.c.l.b16 %v1229
    %v3205 = vunpack.c.h.b16 %v1229
    %v3206 = vunpack.c.l.b16 %v1230
    %v3207 = vunpack.c.h.b16 %v1230
    %v3208 = vunpack.c.l.b16 %v1231
    %v3209 = vunpack.c.h.b16 %v1231
    %v3210 = vunpack.c.l.b16 %v1232
    %v3211 = vunpack.c.h.b16 %v1232
    %v3212 = vunpack.c.l.b16 %v1233
    %v3213 = vunpack.c.h.b16 %v1233
    %v3214 = vunpack.c.l.b16 %v1234
    %v3215 = vunpack.c.h.b16 %v1234
    %v3216 = vunpack.c.l.b16 %v1235
    %v3217 = vunpack.c.h.b16 %v1235
    %v3218 = vunpack.c.l.b16 %v1236
    %v3219 = vunpack.c.h.b16 %v1236
    %v3220 = vunpack.c.l.b16 %v1237
    %v3221 = vunpack.c.h.b16 %v1237
    %v3222 = vunpack.c.l.b16 %v1238
    %v3223 = vunpack.c.h.b16 %v1238
    %v3224 = vunpack.c.l.b16 %v1239
    %v3225 = vunpack.c.h.b16 %v1239
    %v3226 = vunpack.c.l.b16 %v1240
    %v3227 = vunpack.c.h.b16 %v1240
    %v3228 = vunpack.c.l.b16 %v1241
    %v3229 = vunpack.c.h.b16 %v1241
    %v3230 = vunpack.c.l.b16 %v1242
    %v3231 = vunpack.c.h.b16 %v1242
    %v3232 = vunpack.c.l.b16 %v1243
    %v3233 = vunpack.c.h.b16 %v1243
    %v3234 = vunpack.c.l.b16 %v1244
    %v3235 = vunpack.c.h.b16 %v1244
    %v3236 = vunpack.c.l.b16 %v1245
    %v3237 = vunpack.c.h.b16 %v1245
    %v3238 = vunpack.c.l.b16 %v1246
    %v3239 = vunpack.c.h.b16 %v1246
    %v3240 = vunpack.c.l.b16 %v1247
    %v3241 = vunpack.c.h.b16 %v1247
    %v3242 = vunpack.c.l.b16 %v1248
    %v3243 = vunpack.c.h.b16 %v1248
    %v3244 = vunpack.c.l.b16 %v1249
    %v3245 = vunpack.c.h.b16 %v1249
    %v3246 = vunpack.c.l.b16 %v1250
    %v3247 = vunpack.c.h.b16 %v1250
    %v3248 = vunpack.c.l.b16 %v1251
    %v3249 = vunpack.c.h.b16 %v1251
    %v3250 = vunpack.c.l.b16 %v1252
    %v3251 = vunpack.c.h.b16 %v1252
    %v3252 = vunpack.c.l.b16 %v1253
    %v3253 = vunpack.c.h.b16 %v1253
    %v3254 = vunpack.c.l.b16 %v1254
    %v3255 = vunpack.c.h.b16 %v1254
    %v3256 = vunpack.c.l.b16 %v1255
    %v3257 = vunpack.c.h.b16 %v1255
    %v3258 = vunpack.c.l.b16 %v1256
    %v3259 = vunpack.c.h.b16 %v1256
    %v3260 = vunpack.c.l.b16 %v1257
    %v3261 = vunpack.c.h.b16 %v1257
    %v3262 = vunpack.c.l.b16 %v1258
    %v3263 = vunpack.c.h.b16 %v1258
    %v3264 = vunpack.c.l.b16 %v1259
    %v3265 = vunpack.c.h.b16 %v1259
    %v3266 = vunpack.c.l.b16 %v1260
    %v3267 = vunpack.c.h.b16 %v1260
    %v3268 = vunpack.c.l.b16 %v1261
    %v3269 = vunpack.c.h.b16 %v1261
    %v3270 = vunpack.c.l.b16 %v1262
    %v3271 = vunpack.c.h.b16 %v1262
    %v3272 = vunpack.c.l.b16 %v1263
    %v3273 = vunpack.c.h.b16 %v1263
    %v3274 = vunpack.c.l.b16 %v1264
    %v3275 = vunpack.c.h.b16 %v1264
    %v3276 = vunpack.c.l.b16 %v1265
    %v3277 = vunpack.c.h.b16 %v1265
    %v3278 = vunpack.c.l.b16 %v1266
    %v3279 = vunpack.c.h.b16 %v1266
    %v3280 = vunpack.c.l.b16 %v1267
    %v3281 = vunpack.c.h.b16 %v1267
    %v3282 = vunpack.c.l.b16 %v1268
    %v3283 = vunpack.c.h.b16 %v1268
    %v3284 = vunpack.c.l.b16 %v1269
    %v3285 = vunpack.c.h.b16 %v1269
    %v3286 = vunpack.c.l.b16 %v1270
    %v3287 = vunpack.c.h.b16 %v1270
    %v3288 = vunpack.c.l.b16 %v1271
    %v3289 = vunpack.c.h.b16 %v1271
    %v3290 = vunpack.c.l.b16 %v1272
    %v3291 = vunpack.c.h.b16 %v1272
    %v3292 = vunpack.c.l.b16 %v1273
    %v3293 = vunpack.c.h.b16 %v1273
    %v3294 = vunpack.c.l.b16 %v1274
    %v3295 = vunpack.c.h.b16 %v1274
    %v3296 = vunpack.c.l.b16 %v1275
    %v3297 = vunpack.c.h.b16 %v1275
    %v3298 = vunpack.c.l.b16 %v1276
    %v3299 = vunpack.c.h.b16 %v1276
    %v3300 = vunpack.c.l.b16 %v1277
    %v3301 = vunpack.c.h.b16 %v1277
    %v3302 = vunpack.c.l.b16 %v1278
    %v3303 = vunpack.c.h.b16 %v1278
    %v3304 = vunpack.c.l.b16 %v1279
    %v3305 = vunpack.c.h.b16 %v1279
    %v3306 = vunpack.c.l.b16 %v1280
    %v3307 = vunpack.c.h.b16 %v1280
    %v3308 = vunpack.c.l.b16 %v1281
    %v3309 = vunpack.c.h.b16 %v1281
    %v3310 = vunpack.c.l.b16 %v1282
    %v3311 = vunpack.c.h.b16 %v1282
    %v3312 = vunpack.c.l.b16 %v1283
    %v3313 = vunpack.c.h.b16 %v1283
    %v3314 = vunpack.c.l.b16 %v1284
    %v3315 = vunpack.c.h.b16 %v1284
    %v3316 = vunpack.c.l.b16 %v1285
    %v3317 = vunpack.c.h.b16 %v1285
    %v3318 = vunpack.c.l.b16 %v1286
    %v3319 = vunpack.c.h.b16 %v1286
    %v3320 = vunpack.c.l.b16 %v1287
    %v3321 = vunpack.c.h.b16 %v1287
    %v3322 = vunpack.c.l.b16 %v1288
    %v3323 = vunpack.c.h.b16 %v1288
    %v3324 = vunpack.c.l.b16 %v1289
    %v3325 = vunpack.c.h.b16 %v1289
    %v3326 = vunpack.c.l.b16 %v1290
    %v3327 = vunpack.c.h.b16 %v1290
    %v3328 = vunpack.c.l.b16 %v1291
    %v3329 = vunpack.c.h.b16 %v1291
    %v3330 = vunpack.c.l.b16 %v1292
    %v3331 = vunpack.c.h.b16 %v1292
    %v3332 = vunpack.c.l.b16 %v1293
    %v3333 = vunpack.c.h.b16 %v1293
    %v3334 = vunpack.c.l.b16 %v1294
    %v3335 = vunpack.c.h.b16 %v1294
    %v3336 = vunpack.c.l.b16 %v1295
    %v3337 = vunpack.c.h.b16 %v1295
    %v3338 = vunpack.c.l.b16 %v1296
    %v3339 = vunpack.c.h.b16 %v1296
    %v3340 = vunpack.c.l.b16 %v1297
    %v3341 = vunpack.c.h.b16 %v1297
    %v3342 = vunpack.c.l.b16 %v1298
    %v3343 = vunpack.c.h.b16 %v1298
    %v3344 = vunpack.c.l.b16 %v1299
    %v3345 = vunpack.c.h.b16 %v1299
    %v3346 = vunpack.c.l.b16 %v1300
    %v3347 = vunpack.c.h.b16 %v1300
    %v3348 = vunpack.c.l.b16 %v1301
    %v3349 = vunpack.c.h.b16 %v1301
    %v3350 = vunpack.c.l.b16 %v1302
    %v3351 = vunpack.c.h.b16 %v1302
    %v3352 = vunpack.c.l.b16 %v1303
    %v3353 = vunpack.c.h.b16 %v1303
    %v3354 = vunpack.c.l.b16 %v1304
    %v3355 = vunpack.c.h.b16 %v1304
    %v3356 = vunpack.c.l.b16 %v1305
    %v3357 = vunpack.c.h.b16 %v1305
    %v3358 = vunpack.c.l.b16 %v1306
    %v3359 = vunpack.c.h.b16 %v1306
    %v3360 = vunpack.c.l.b16 %v1307
    %v3361 = vunpack.c.h.b16 %v1307
    %v3362 = vunpack.c.l.b16 %v1308
    %v3363 = vunpack.c.h.b16 %v1308
    %v3364 = vunpack.c.l.b16 %v1309
    %v3365 = vunpack.c.h.b16 %v1309
    %v3366 = vunpack.c.l.b16 %v1310
    %v3367 = vunpack.c.h.b16 %v1310
    %v3368 = vunpack.c.l.b16 %v1311
    %v3369 = vunpack.c.h.b16 %v1311
    %v3370 = vunpack.c.l.b16 %v1312
    %v3371 = vunpack.c.h.b16 %v1312
    %v3372 = vunpack.c.l.b16 %v1313
    %v3373 = vunpack.c.h.b16 %v1313
    %v3374 = vunpack.c.l.b16 %v1314
    %v3375 = vunpack.c.h.b16 %v1314
    %v3376 = vunpack.c.l.b16 %v1315
    %v3377 = vunpack.c.h.b16 %v1315
    %v3378 = vunpack.c.l.b16 %v1316
    %v3379 = vunpack.c.h.b16 %v1316
    %v3380 = vunpack.c.l.b16 %v1317
    %v3381 = vunpack.c.h.b16 %v1317
    %v3382 = vunpack.c.l.b16 %v1318
    %v3383 = vunpack.c.h.b16 %v1318
    %v3384 = vunpack.c.l.b16 %v1319
    %v3385 = vunpack.c.h.b16 %v1319
    %v3386 = vunpack.c.l.b16 %v1320
    %v3387 = vunpack.c.h.b16 %v1320
    %v3388 = vunpack.c.l.b16 %v1321
    %v3389 = vunpack.c.h.b16 %v1321
    %v3390 = vunpack.c.l.b16 %v1322
    %v3391 = vunpack.c.h.b16 %v1322
    %v3392 = vunpack.c.l.b16 %v1323
    %v3393 = vunpack.c.h.b16 %v1323
    %v3394 = vunpack.c.l.b16 %v1324
    %v3395 = vunpack.c.h.b16 %v1324
    %v3396 = vunpack.c.l.b16 %v1325
    %v3397 = vunpack.c.h.b16 %v1325
    %v3398 = vunpack.c.l.b16 %v1326
    %v3399 = vunpack.c.h.b16 %v1326
    %v3400 = vunpack.c.l.b16 %v1327
    %v3401 = vunpack.c.h.b16 %v1327
    %v3402 = vunpack.c.l.b16 %v1328
    %v3403 = vunpack.c.h.b16 %v1328
    %v3404 = vunpack.c.l.b16 %v1329
    %v3405 = vunpack.c.h.b16 %v1329
    %v3406 = vunpack.c.l.b16 %v1330
    %v3407 = vunpack.c.h.b16 %v1330
    %v3408 = vunpack.c.l.b16 %v1331
    %v3409 = vunpack.c.h.b16 %v1331
    %v3410 = vunpack.c.l.b16 %v1332
    %v3411 = vunpack.c.h.b16 %v1332
    %v3412 = vunpack.c.l.b16 %v1333
    %v3413 = vunpack.c.h.b16 %v1333
    %v3414 = vunpack.c.l.b16 %v1334
    %v3415 = vunpack.c.h.b16 %v1334
    %v3416 = vunpack.c.l.b16 %v1335
    %v3417 = vunpack.c.h.b16 %v1335
    %v3418 = vunpack.c.l.b16 %v1336
    %v3419 = vunpack.c.h.b16 %v1336
    %v3420 = vunpack.c.l.b16 %v1337
    %v3421 = vunpack.c.h.b16 %v1337
    %v3422 = vunpack.c.l.b16 %v1338
    %v3423 = vunpack.c.h.b16 %v1338
    %v3424 = vunpack.c.l.b16 %v1339
    %v3425 = vunpack.c.h.b16 %v1339
    %v3426 = vunpack.c.l.b16 %v1340
    %v3427 = vunpack.c.h.b16 %v1340
    %v3428 = vunpack.c.l.b16 %v1341
    %v3429 = vunpack.c.h.b16 %v1341
    %v3430 = vunpack.c.l.b16 %v1342
    %v3431 = vunpack.c.h.b16 %v1342
    %v3432 = vunpack.c.l.b16 %v1343
    %v3433 = vunpack.c.h.b16 %v1343
    %v3434 = vunpack.c.l.b16 %v1344
    %v3435 = vunpack.c.h.b16 %v1344
    %v3436 = vunpack.c.l.b16 %v1345
    %v3437 = vunpack.c.h.b16 %v1345
    %v3438 = vunpack.c.l.b16 %v1346
    %v3439 = vunpack.c.h.b16 %v1346
    %v3440 = vunpack.c.l.b16 %v1347
    %v3441 = vunpack.c.h.b16 %v1347
    %v3442 = vunpack.c.l.b16 %v1348
    %v3443 = vunpack.c.h.b16 %v1348
    %v3444 = vunpack.c.l.b16 %v1349
    %v3445 = vunpack.c.h.b16 %v1349
    %v3446 = vunpack.c.l.b16 %v1350
    %v3447 = vunpack.c.h.b16 %v1350
    %v3448 = vunpack.c.l.b16 %v1351
    %v3449 = vunpack.c.h.b16 %v1351
    %v3450 = vunpack.c.l.b16 %v1352
    %v3451 = vunpack.c.h.b16 %v1352
    %v3452 = vunpack.c.l.b16 %v1353
    %v3453 = vunpack.c.h.b16 %v1353
    %v3454 = vunpack.c.l.b16 %v1354
    %v3455 = vunpack.c.h.b16 %v1354
    %v3456 = vunpack.c.l.b16 %v1355
    %v3457 = vunpack.c.h.b16 %v1355
    %v3458 = vunpack.c.l.b16 %v1356
    %v3459 = vunpack.c.h.b16 %v1356
    %v3460 = vunpack.c.l.b16 %v1357
    %v3461 = vunpack.c.h.b16 %v1357
    %v3462 = vunpack.c.l.b16 %v1358
    %v3463 = vunpack.c.h.b16 %v1358
    %v3464 = vunpack.c.l.b16 %v1359
    %v3465 = vunpack.c.h.b16 %v1359
    %v3466 = vunpack.c.l.b16 %v1360
    %v3467 = vunpack.c.h.b16 %v1360
    %v3468 = vunpack.c.l.b16 %v1361
    %v3469 = vunpack.c.h.b16 %v1361
    %v3470 = vunpack.c.l.b16 %v1362
    %v3471 = vunpack.c.h.b16 %v1362
    %v3472 = vunpack.c.l.b16 %v1363
    %v3473 = vunpack.c.h.b16 %v1363
    %v3474 = vunpack.c.l.b16 %v1364
    %v3475 = vunpack.c.h.b16 %v1364
    %v3476 = vunpack.c.l.b16 %v1365
    %v3477 = vunpack.c.h.b16 %v1365
    %v3478 = vunpack.c.l.b16 %v1366
    %v3479 = vunpack.c.h.b16 %v1366
    %v3480 = vunpack.c.l.b16 %v1367
    %v3481 = vunpack.c.h.b16 %v1367
    %v3482 = vunpack.c.l.b16 %v1368
    %v3483 = vunpack.c.h.b16 %v1368
    %v3484 = vunpack.c.l.b16 %v1369
    %v3485 = vunpack.c.h.b16 %v1369
    %v3486 = vunpack.c.l.b16 %v1370
    %v3487 = vunpack.c.h.b16 %v1370
    %v3488 = vunpack.c.l.b16 %v1371
    %v3489 = vunpack.c.h.b16 %v1371
    %v3490 = vunpack.c.l.b16 %v1372
    %v3491 = vunpack.c.h.b16 %v1372
    %v3492 = vunpack.c.l.b16 %v1373
    %v3493 = vunpack.c.h.b16 %v1373
    %v3494 = vunpack.c.l.b16 %v1374
    %v3495 = vunpack.c.h.b16 %v1374
    %v3496 = vunpack.c.l.b16 %v1375
    %v3497 = vunpack.c.h.b16 %v1375
    %v3498 = vunpack.c.l.b16 %v1376
    %v3499 = vunpack.c.h.b16 %v1376
    %v3500 = vunpack.c.l.b16 %v1377
    %v3501 = vunpack.c.h.b16 %v1377
    %v3502 = vunpack.c.l.b16 %v1378
    %v3503 = vunpack.c.h.b16 %v1378
    %v3504 = vunpack.c.l.b16 %v1379
    %v3505 = vunpack.c.h.b16 %v1379
    %v3506 = vunpack.c.l.b16 %v1380
    %v3507 = vunpack.c.h.b16 %v1380
    %v3508 = vunpack.c.l.b16 %v1381
    %v3509 = vunpack.c.h.b16 %v1381
    %v3510 = vunpack.c.l.b16 %v1382
    %v3511 = vunpack.c.h.b16 %v1382
    %v3512 = vunpack.c.l.b16 %v1383
    %v3513 = vunpack.c.h.b16 %v1383
    %v3514 = vunpack.c.l.b16 %v1384
    %v3515 = vunpack.c.h.b16 %v1384
    %v3516 = vunpack.c.l.b16 %v1385
    %v3517 = vunpack.c.h.b16 %v1385
    %v3518 = vunpack.c.l.b16 %v1386
    %v3519 = vunpack.c.h.b16 %v1386
    %v3520 = vunpack.c.l.b16 %v1387
    %v3521 = vunpack.c.h.b16 %v1387
    %v3522 = vunpack.c.l.b16 %v1388
    %v3523 = vunpack.c.h.b16 %v1388
    %v3524 = vunpack.c.l.b16 %v1389
    %v3525 = vunpack.c.h.b16 %v1389
    %v3526 = vunpack.c.l.b16 %v1390
    %v3527 = vunpack.c.h.b16 %v1390
    %v3528 = vunpack.c.l.b16 %v1391
    %v3529 = vunpack.c.h.b16 %v1391
    %v3530 = vunpack.c.l.b16 %v1392
    %v3531 = vunpack.c.h.b16 %v1392
    %v3532 = vunpack.c.l.b16 %v1393
    %v3533 = vunpack.c.h.b16 %v1393
    %v3534 = vunpack.c.l.b16 %v1394
    %v3535 = vunpack.c.h.b16 %v1394
    %v3536 = vunpack.c.l.b16 %v1395
    %v3537 = vunpack.c.h.b16 %v1395
    %v3538 = vunpack.c.l.b16 %v1396
    %v3539 = vunpack.c.h.b16 %v1396
    %v3540 = vunpack.c.l.b16 %v1397
    %v3541 = vunpack.c.h.b16 %v1397
    %v3542 = vunpack.c.l.b16 %v1398
    %v3543 = vunpack.c.h.b16 %v1398
    %v3544 = vunpack.c.l.b16 %v1399
    %v3545 = vunpack.c.h.b16 %v1399
    %v3546 = vunpack.c.l.b16 %v1400
    %v3547 = vunpack.c.h.b16 %v1400
    %v3548 = vunpack.c.l.b16 %v1401
    %v3549 = vunpack.c.h.b16 %v1401
    %v3550 = vunpack.c.l.b16 %v1402
    %v3551 = vunpack.c.h.b16 %v1402
    %v3552 = vunpack.c.l.b16 %v1403
    %v3553 = vunpack.c.h.b16 %v1403
    %v3554 = vunpack.c.l.b16 %v1404
    %v3555 = vunpack.c.h.b16 %v1404
    %v3556 = vunpack.c.l.b16 %v1405
    %v3557 = vunpack.c.h.b16 %v1405
    %v3558 = vunpack.c.l.b16 %v1406
    %v3559 = vunpack.c.h.b16 %v1406
    %v3560 = vunpack.c.l.b16 %v1407
    %v3561 = vunpack.c.h.b16 %v1407
    %v3562 = vunpack.c.l.b16 %v1408
    %v3563 = vunpack.c.h.b16 %v1408
    %v3564 = vunpack.c.l.b16 %v1409
    %v3565 = vunpack.c.h.b16 %v1409
    %v3566 = vunpack.c.l.b16 %v1410
    %v3567 = vunpack.c.h.b16 %v1410
    %v3568 = vunpack.c.l.b16 %v1411
    %v3569 = vunpack.c.h.b16 %v1411
    %v3570 = vunpack.c.l.b16 %v1412
    %v3571 = vunpack.c.h.b16 %v1412
    %v3572 = vunpack.c.l.b16 %v1413
    %v3573 = vunpack.c.h.b16 %v1413
    %v3574 = vunpack.c.l.b16 %v1414
    %v3575 = vunpack.c.h.b16 %v1414
    %v3576 = vunpack.c.l.b16 %v1415
    %v3577 = vunpack.c.h.b16 %v1415
    %v3578 = vunpack.c.l.b16 %v1416
    %v3579 = vunpack.c.h.b16 %v1416
    %v3580 = vunpack.c.l.b16 %v1417
    %v3581 = vunpack.c.h.b16 %v1417
    %v3582 = vunpack.c.l.b16 %v1418
    %v3583 = vunpack.c.h.b16 %v1418
    %v3584 = vunpack.c.l.b16 %v1419
    %v3585 = vunpack.c.h.b16 %v1419
    %v3586 = vunpack.c.l.b16 %v1420
    %v3587 = vunpack.c.h.b16 %v1420
    %v3588 = vunpack.c.l.b16 %v1421
    %v3589 = vunpack.c.h.b16 %v1421
    %v3590 = vunpack.c.l.b16 %v1422
    %v3591 = vunpack.c.h.b16 %v1422
    %v3592 = vunpack.c.l.b16 %v1423
    %v3593 = vunpack.c.h.b16 %v1423
    %v3594 = vunpack.c.l.b16 %v1424
    %v3595 = vunpack.c.h.b16 %v1424
    %v3596 = vunpack.c.l.b16 %v1425
    %v3597 = vunpack.c.h.b16 %v1425
    %v3598 = vunpack.c.l.b16 %v1426
    %v3599 = vunpack.c.h.b16 %v1426
    %v3600 = vunpack.c.l.b16 %v1427
    %v3601 = vunpack.c.h.b16 %v1427
    %v3602 = vunpack.c.l.b16 %v1428
    %v3603 = vunpack.c.h.b16 %v1428
    %v3604 = vunpack.c.l.b16 %v1429
    %v3605 = vunpack.c.h.b16 %v1429
    %v3606 = vunpack.c.l.b16 %v1430
    %v3607 = vunpack.c.h.b16 %v1430
    %v3608 = vunpack.c.l.b16 %v1431
    %v3609 = vunpack.c.h.b16 %v1431
    %v3610 = vunpack.c.l.b16 %v1432
    %v3611 = vunpack.c.h.b16 %v1432
    %v3612 = vunpack.c.l.b16 %v1433
    %v3613 = vunpack.c.h.b16 %v1433
    %v3614 = vunpack.c.l.b16 %v1434
    %v3615 = vunpack.c.h.b16 %v1434
    %v3616 = vunpack.c.l.b16 %v1435
    %v3617 = vunpack.c.h.b16 %v1435
    %v3618 = vunpack.c.l.b16 %v1436
    %v3619 = vunpack.c.h.b16 %v1436
    %v3620 = vunpack.c.l.b16 %v1437
    %v3621 = vunpack.c.h.b16 %v1437
    %v3622 = vunpack.c.l.b16 %v1438
    %v3623 = vunpack.c.h.b16 %v1438
    %v3624 = vunpack.c.l.b16 %v1439
    %v3625 = vunpack.c.h.b16 %v1439
    %v3626 = vunpack.c.l.b16 %v1440
    %v3627 = vunpack.c.h.b16 %v1440
    %v3628 = vunpack.c.l.b16 %v1441
    %v3629 = vunpack.c.h.b16 %v1441
    %v3630 = vunpack.c.l.b16 %v1442
    %v3631 = vunpack.c.h.b16 %v1442
    %v3632 = vunpack.c.l.b16 %v1443
    %v3633 = vunpack.c.h.b16 %v1443
    %v3634 = vunpack.c.l.b16 %v1444
    %v3635 = vunpack.c.h.b16 %v1444
    %v3636 = vunpack.c.l.b16 %v1445
    %v3637 = vunpack.c.h.b16 %v1445
    %v3638 = vunpack.c.l.b16 %v1446
    %v3639 = vunpack.c.h.b16 %v1446
    %v3640 = vunpack.c.l.b16 %v1447
    %v3641 = vunpack.c.h.b16 %v1447
    %v3642 = vunpack.c.l.b16 %v1448
    %v3643 = vunpack.c.h.b16 %v1448
    %v3644 = vunpack.c.l.b16 %v1449
    %v3645 = vunpack.c.h.b16 %v1449
    %v3646 = vunpack.c.l.b16 %v1450
    %v3647 = vunpack.c.h.b16 %v1450
    %v3648 = vunpack.c.l.b16 %v1451
    %v3649 = vunpack.c.h.b16 %v1451
    %v3650 = vunpack.c.l.b16 %v1452
    %v3651 = vunpack.c.h.b16 %v1452
    %v3652 = vunpack.c.l.b16 %v1453
    %v3653 = vunpack.c.h.b16 %v1453
    %v3654 = vunpack.c.l.b16 %v1454
    %v3655 = vunpack.c.h.b16 %v1454
    %v3656 = vunpack.c.l.b16 %v1455
    %v3657 = vunpack.c.h.b16 %v1455
    %v3658 = vunpack.c.l.b16 %v1456
    %v3659 = vunpack.c.h.b16 %v1456
    %v3660 = vunpack.c.l.b16 %v1457
    %v3661 = vunpack.c.h.b16 %v1457
    %v3662 = vunpack.c.l.b16 %v1458
    %v3663 = vunpack.c.h.b16 %v1458
    %v3664 = vunpack.c.l.b16 %v1459
    %v3665 = vunpack.c.h.b16 %v1459
    %v3666 = vunpack.c.l.b16 %v1460
    %v3667 = vunpack.c.h.b16 %v1460
    %v3668 = vunpack.c.l.b16 %v1461
    %v3669 = vunpack.c.h.b16 %v1461
    %v3670 = vunpack.c.l.b16 %v1462
    %v3671 = vunpack.c.h.b16 %v1462
    %v3672 = vunpack.c.l.b16 %v1463
    %v3673 = vunpack.c.h.b16 %v1463
    %v3674 = vunpack.c.l.b16 %v1464
    %v3675 = vunpack.c.h.b16 %v1464
    %v3676 = vunpack.c.l.b16 %v1465
    %v3677 = vunpack.c.h.b16 %v1465
    %v3678 = vunpack.c.l.b16 %v1466
    %v3679 = vunpack.c.h.b16 %v1466
    %v3680 = vunpack.c.l.b16 %v1467
    %v3681 = vunpack.c.h.b16 %v1467
    %v3682 = vunpack.c.l.b16 %v1468
    %v3683 = vunpack.c.h.b16 %v1468
    %v3684 = vunpack.c.l.b16 %v1469
    %v3685 = vunpack.c.h.b16 %v1469
    %v3686 = vunpack.c.l.b16 %v1470
    %v3687 = vunpack.c.h.b16 %v1470
    %v3688 = vunpack.c.l.b16 %v1471
    %v3689 = vunpack.c.h.b16 %v1471
    %v3690 = vunpack.c.l.b16 %v1472
    %v3691 = vunpack.c.h.b16 %v1472
    %v3692 = vunpack.c.l.b16 %v1473
    %v3693 = vunpack.c.h.b16 %v1473
    %v3694 = vunpack.c.l.b16 %v1474
    %v3695 = vunpack.c.h.b16 %v1474
    %v3696 = vunpack.c.l.b16 %v1475
    %v3697 = vunpack.c.h.b16 %v1475
    %v3698 = vunpack.c.l.b16 %v1476
    %v3699 = vunpack.c.h.b16 %v1476
    %v3700 = vunpack.c.l.b16 %v1477
    %v3701 = vunpack.c.h.b16 %v1477
    %v3702 = vunpack.c.l.b16 %v1478
    %v3703 = vunpack.c.h.b16 %v1478
    %v3704 = vunpack.c.l.b16 %v1479
    %v3705 = vunpack.c.h.b16 %v1479
    %v3706 = vunpack.c.l.b16 %v1480
    %v3707 = vunpack.c.h.b16 %v1480
    %v3708 = vunpack.c.l.b16 %v1481
    %v3709 = vunpack.c.h.b16 %v1481
    %v3710 = vunpack.c.l.b16 %v1482
    %v3711 = vunpack.c.h.b16 %v1482
    %v3712 = vunpack.c.l.b16 %v1483
    %v3713 = vunpack.c.h.b16 %v1483
    %v3714 = vunpack.c.l.b16 %v1484
    %v3715 = vunpack.c.h.b16 %v1484
    %v3716 = vunpack.c.l.b16 %v1485
    %v3717 = vunpack.c.h.b16 %v1485
    %v3718 = vunpack.c.l.b16 %v1486
    %v3719 = vunpack.c.h.b16 %v1486
    %v3720 = vunpack.c.l.b16 %v1487
    %v3721 = vunpack.c.h.b16 %v1487
    %v3722 = vunpack.c.l.b16 %v1488
    %v3723 = vunpack.c.h.b16 %v1488
    %v3724 = vunpack.c.l.b16 %v1489
    %v3725 = vunpack.c.h.b16 %v1489
    %v3726 = vunpack.c.l.b16 %v1490
    %v3727 = vunpack.c.h.b16 %v1490
    %v3728 = vunpack.c.l.b16 %v1491
    %v3729 = vunpack.c.h.b16 %v1491
    %v3730 = vunpack.c.l.b16 %v1492
    %v3731 = vunpack.c.h.b16 %v1492
    %v3732 = vunpack.c.l.b16 %v1493
    %v3733 = vunpack.c.h.b16 %v1493
    %v3734 = vunpack.c.l.b16 %v1494
    %v3735 = vunpack.c.h.b16 %v1494
    %v3736 = vunpack.c.l.b16 %v1495
    %v3737 = vunpack.c.h.b16 %v1495
    %v3738 = vunpack.c.l.b16 %v1496
    %v3739 = vunpack.c.h.b16 %v1496
    %v3740 = vunpack.c.l.b16 %v1497
    %v3741 = vunpack.c.h.b16 %v1497
    %v3742 = vunpack.c.l.b16 %v1498
    %v3743 = vunpack.c.h.b16 %v1498
    %v3744 = vunpack.c.l.b16 %v1499
    %v3745 = vunpack.c.h.b16 %v1499
    %v3746 = vunpack.c.l.b16 %v1500
    %v3747 = vunpack.c.h.b16 %v1500
    %v3748 = vunpack.c.l.b16 %v1501
    %v3749 = vunpack.c.h.b16 %v1501
    %v3750 = vunpack.c.l.b16 %v1502
    %v3751 = vunpack.c.h.b16 %v1502
    %v3752 = vunpack.c.l.b16 %v1503
    %v3753 = vunpack.c.h.b16 %v1503
    %v3754 = vunpack.c.l.b16 %v1504
    %v3755 = vunpack.c.h.b16 %v1504
    %v3756 = vunpack.c.l.b16 %v1505
    %v3757 = vunpack.c.h.b16 %v1505
    %v3758 = vunpack.c.l.b16 %v1506
    %v3759 = vunpack.c.h.b16 %v1506
    %v3760 = vunpack.c.l.b16 %v1507
    %v3761 = vunpack.c.h.b16 %v1507
    %v3762 = vunpack.c.l.b16 %v1508
    %v3763 = vunpack.c.h.b16 %v1508
    %v3764 = vunpack.c.l.b16 %v1509
    %v3765 = vunpack.c.h.b16 %v1509
    %v3766 = vunpack.c.l.b16 %v1510
    %v3767 = vunpack.c.h.b16 %v1510
    %v3768 = vunpack.c.l.b16 %v1511
    %v3769 = vunpack.c.h.b16 %v1511
    %v3770 = vunpack.c.l.b16 %v1512
    %v3771 = vunpack.c.h.b16 %v1512
    %v3772 = vunpack.c.l.b16 %v1513
    %v3773 = vunpack.c.h.b16 %v1513
    %v3774 = vunpack.c.l.b16 %v1514
    %v3775 = vunpack.c.h.b16 %v1514
    %v3776 = vunpack.c.l.b16 %v1515
    %v3777 = vunpack.c.h.b16 %v1515
    %v3778 = vunpack.c.l.b16 %v1516
    %v3779 = vunpack.c.h.b16 %v1516
    %v3780 = vunpack.c.l.b16 %v1517
    %v3781 = vunpack.c.h.b16 %v1517
    %v3782 = vunpack.c.l.b16 %v1518
    %v3783 = vunpack.c.h.b16 %v1518
    %v3784 = vunpack.c.l.b16 %v1519
    %v3785 = vunpack.c.h.b16 %v1519
    %v3786 = vunpack.c.l.b16 %v1520
    %v3787 = vunpack.c.h.b16 %v1520
    %v3788 = vunpack.c.l.b16 %v1521
    %v3789 = vunpack.c.h.b16 %v1521
    %v3790 = vunpack.c.l.b16 %v1522
    %v3791 = vunpack.c.h.b16 %v1522
    %v3792 = vunpack.c.l.b16 %v1523
    %v3793 = vunpack.c.h.b16 %v1523
    %v3794 = vunpack.c.l.b16 %v1524
    %v3795 = vunpack.c.h.b16 %v1524
    %v3796 = vunpack.c.l.b16 %v1525
    %v3797 = vunpack.c.h.b16 %v1525
    %v3798 = vunpack.c.l.b16 %v1526
    %v3799 = vunpack.c.h.b16 %v1526
    %v3800 = vunpack.c.l.b16 %v1527
    %v3801 = vunpack.c.h.b16 %v1527
    %v3802 = vunpack.c.l.b16 %v1528
    %v3803 = vunpack.c.h.b16 %v1528
    %v3804 = vunpack.c.l.b16 %v1529
    %v3805 = vunpack.c.h.b16 %v1529
    %v3806 = vunpack.c.l.b16 %v1530
    %v3807 = vunpack.c.h.b16 %v1530
    %v3808 = vunpack.c.l.b16 %v1531
    %v3809 = vunpack.c.h.b16 %v1531
    %v3810 = vunpack.c.l.b16 %v1532
    %v3811 = vunpack.c.h.b16 %v1532
    %v3812 = vunpack.c.l.b16 %v1533
    %v3813 = vunpack.c.h.b16 %v1533
    %v3814 = vunpack.c.l.b16 %v1534
    %v3815 = vunpack.c.h.b16 %v1534
    %v3816 = vunpack.c.l.b16 %v1535
    %v3817 = vunpack.c.h.b16 %v1535
    %v3818 = vunpack.c.l.b16 %v1536
    %v3819 = vunpack.c.h.b16 %v1536
    %v3820 = vunpack.c.l.b16 %v1537
    %v3821 = vunpack.c.h.b16 %v1537
    %v3822 = vunpack.c.l.b16 %v1538
    %v3823 = vunpack.c.h.b16 %v1538
    %v3824 = vunpack.c.l.b16 %v1539
    %v3825 = vunpack.c.h.b16 %v1539
    %v3826 = vunpack.c.l.b16 %v1540
    %v3827 = vunpack.c.h.b16 %v1540
    %v3828 = vunpack.c.l.b16 %v1541
    %v3829 = vunpack.c.h.b16 %v1541
    %v3830 = vunpack.c.l.b16 %v1542
    %v3831 = vunpack.c.h.b16 %v1542
    %v3832 = vunpack.c.l.b16 %v1543
    %v3833 = vunpack.c.h.b16 %v1543
    %v3834 = vunpack.c.l.b16 %v1544
    %v3835 = vunpack.c.h.b16 %v1544
    %v3836 = vunpack.c.l.b16 %v1545
    %v3837 = vunpack.c.h.b16 %v1545
    %v3838 = vunpack.c.l.b16 %v1546
    %v3839 = vunpack.c.h.b16 %v1546
    %v3840 = vunpack.c.l.b16 %v1547
    %v3841 = vunpack.c.h.b16 %v1547
    %v3842 = vunpack.c.l.b16 %v1548
    %v3843 = vunpack.c.h.b16 %v1548
    %v3844 = vunpack.c.l.b16 %v1549
    %v3845 = vunpack.c.h.b16 %v1549
    %v3846 = vunpack.c.l.b16 %v1550
    %v3847 = vunpack.c.h.b16 %v1550
    %v3848 = vunpack.c.l.b16 %v1551
    %v3849 = vunpack.c.h.b16 %v1551
    %v3850 = vunpack.c.l.b16 %v1552
    %v3851 = vunpack.c.h.b16 %v1552
    %v3852 = vunpack.c.l.b16 %v1553
    %v3853 = vunpack.c.h.b16 %v1553
    %v3854 = vunpack.c.l.b16 %v1554
    %v3855 = vunpack.c.h.b16 %v1554
    %v3856 = vunpack.c.l.b16 %v1555
    %v3857 = vunpack.c.h.b16 %v1555
    %v3858 = vunpack.c.l.b16 %v1556
    %v3859 = vunpack.c.h.b16 %v1556
    %v3860 = vunpack.c.l.b16 %v1557
    %v3861 = vunpack.c.h.b16 %v1557
    %v3862 = vunpack.c.l.b16 %v1558
    %v3863 = vunpack.c.h.b16 %v1558
    %v3864 = vunpack.c.l.b16 %v1559
    %v3865 = vunpack.c.h.b16 %v1559
    %v3866 = vunpack.c.l.b16 %v1560
    %v3867 = vunpack.c.h.b16 %v1560
    %v3868 = vunpack.c.l.b16 %v1561
    %v3869 = vunpack.c.h.b16 %v1561
    %v3870 = vunpack.c.l.b16 %v1562
    %v3871 = vunpack.c.h.b16 %v1562
    %v3872 = vunpack.c.l.b16 %v1563
    %v3873 = vunpack.c.h.b16 %v1563
    %v3874 = vunpack.c.l.b16 %v1564
    %v3875 = vunpack.c.h.b16 %v1564
    %v3876 = vunpack.c.l.b16 %v1565
    %v3877 = vunpack.c.h.b16 %v1565
    %v3878 = vunpack.c.l.b16 %v1566
    %v3879 = vunpack.c.h.b16 %v1566
    %v3880 = vunpack.c.l.b16 %v1567
    %v3881 = vunpack.c.h.b16 %v1567
    %v3882 = vunpack.c.l.b16 %v1568
    %v3883 = vunpack.c.h.b16 %v1568
    %v3884 = vunpack.c.l.b16 %v1569
    %v3885 = vunpack.c.h.b16 %v1569
    %v3886 = vunpack.c.l.b16 %v1570
    %v3887 = vunpack.c.h.b16 %v1570
    %v3888 = vunpack.c.l.b16 %v1571
    %v3889 = vunpack.c.h.b16 %v1571
    %v3890 = vunpack.c.l.b16 %v1572
    %v3891 = vunpack.c.h.b16 %v1572
    %v3892 = vunpack.c.l.b16 %v1573
    %v3893 = vunpack.c.h.b16 %v1573
    %v3894 = vunpack.c.l.b16 %v1574
    %v3895 = vunpack.c.h.b16 %v1574
    %v3896 = vunpack.c.l.b16 %v1575
    %v3897 = vunpack.c.h.b16 %v1575
    %v3898 = vunpack.c.l.b16 %v1576
    %v3899 = vunpack.c.h.b16 %v1576
    %v3900 = vunpack.c.l.b16 %v1577
    %v3901 = vunpack.c.h.b16 %v1577
    %v3902 = vunpack.c.l.b16 %v1578
    %v3903 = vunpack.c.h.b16 %v1578
    %v3904 = vunpack.c.l.b16 %v1579
    %v3905 = vunpack.c.h.b16 %v1579
    %v3906 = vunpack.c.l.b16 %v1580
    %v3907 = vunpack.c.h.b16 %v1580
    %v3908 = vunpack.c.l.b16 %v1581
    %v3909 = vunpack.c.h.b16 %v1581
    %v3910 = vunpack.c.l.b16 %v1582
    %v3911 = vunpack.c.h.b16 %v1582
    %v3912 = vunpack.c.l.b16 %v1583
    %v3913 = vunpack.c.h.b16 %v1583
    %v3914 = vunpack.c.l.b16 %v1584
    %v3915 = vunpack.c.h.b16 %v1584
    %v3916 = vunpack.c.l.b16 %v1585
    %v3917 = vunpack.c.h.b16 %v1585
    %v3918 = vunpack.c.l.b16 %v1586
    %v3919 = vunpack.c.h.b16 %v1586
    %v3920 = vunpack.c.l.b16 %v1587
    %v3921 = vunpack.c.h.b16 %v1587
    %v3922 = vunpack.c.l.b16 %v1588
    %v3923 = vunpack.c.h.b16 %v1588
    %v3924 = vunpack.c.l.b16 %v1589
    %v3925 = vunpack.c.h.b16 %v1589
    %v3926 = vunpack.c.l.b16 %v1590
    %v3927 = vunpack.c.h.b16 %v1590
    %v3928 = vunpack.c.l.b16 %v1591
    %v3929 = vunpack.c.h.b16 %v1591
    %v3930 = vunpack.c.l.b16 %v1592
    %v3931 = vunpack.c.h.b16 %v1592
    %v3932 = vunpack.c.l.b16 %v1593
    %v3933 = vunpack.c.h.b16 %v1593
    %v3934 = vunpack.c.l.b16 %v1594
    %v3935 = vunpack.c.h.b16 %v1594
    %v3936 = vunpack.c.l.b16 %v1595
    %v3937 = vunpack.c.h.b16 %v1595
    %v3938 = vunpack.c.l.b16 %v1596
    %v3939 = vunpack.c.h.b16 %v1596
    %v3940 = vunpack.c.l.b16 %v1597
    %v3941 = vunpack.c.h.b16 %v1597
    %v3942 = vunpack.c.l.b16 %v1598
    %v3943 = vunpack.c.h.b16 %v1598
    %v3944 = vunpack.c.l.b16 %v1599
    %v3945 = vunpack.c.h.b16 %v1599
    %v3946 = vunpack.c.l.b16 %v1600
    %v3947 = vunpack.c.h.b16 %v1600
    %v3948 = vunpack.c.l.b16 %v1601
    %v3949 = vunpack.c.h.b16 %v1601
    %v3950 = vunpack.c.l.b16 %v1602
    %v3951 = vunpack.c.h.b16 %v1602
    %v3952 = vunpack.c.l.b16 %v1603
    %v3953 = vunpack.c.h.b16 %v1603
    %v3954 = vunpack.c.l.b16 %v1604
    %v3955 = vunpack.c.h.b16 %v1604
    %v3956 = vunpack.c.l.b16 %v1605
    %v3957 = vunpack.c.h.b16 %v1605
    %v3958 = vunpack.c.l.b16 %v1606
    %v3959 = vunpack.c.h.b16 %v1606
    %v3960 = vunpack.c.l.b16 %v1607
    %v3961 = vunpack.c.h.b16 %v1607
    %v3962 = vunpack.c.l.b16 %v1608
    %v3963 = vunpack.c.h.b16 %v1608
    %v3964 = vunpack.c.l.b16 %v1609
    %v3965 = vunpack.c.h.b16 %v1609
    %v3966 = vunpack.c.l.b16 %v1610
    %v3967 = vunpack.c.h.b16 %v1610
    %v3968 = vunpack.c.l.b16 %v1611
    %v3969 = vunpack.c.h.b16 %v1611
    %v3970 = vunpack.c.l.b16 %v1612
    %v3971 = vunpack.c.h.b16 %v1612
    %v3972 = vunpack.c.l.b16 %v1613
    %v3973 = vunpack.c.h.b16 %v1613
    %v3974 = vunpack.c.l.b16 %v1614
    %v3975 = vunpack.c.h.b16 %v1614
    %v3976 = vunpack.c.l.b16 %v1615
    %v3977 = vunpack.c.h.b16 %v1615
    %v3978 = vunpack.c.l.b16 %v1616
    %v3979 = vunpack.c.h.b16 %v1616
    %v3980 = vunpack.c.l.b16 %v1617
    %v3981 = vunpack.c.h.b16 %v1617
    %v3982 = vunpack.c.l.b16 %v1618
    %v3983 = vunpack.c.h.b16 %v1618
    %v3984 = vunpack.c.l.b16 %v1619
    %v3985 = vunpack.c.h.b16 %v1619
    %v3986 = vunpack.c.l.b16 %v1620
    %v3987 = vunpack.c.h.b16 %v1620
    %v3988 = vunpack.c.l.b16 %v1621
    %v3989 = vunpack.c.h.b16 %v1621
    %v3990 = vunpack.c.l.b16 %v1622
    %v3991 = vunpack.c.h.b16 %v1622
    %v3992 = vunpack.c.l.b16 %v1623
    %v3993 = vunpack.c.h.b16 %v1623
    %v3994 = vunpack.c.l.b16 %v1624
    %v3995 = vunpack.c.h.b16 %v1624
    %v3996 = vunpack.c.l.b16 %v1625
    %v3997 = vunpack.c.h.b16 %v1625
    %v3998 = vunpack.c.l.b16 %v1626
    %v3999 = vunpack.c.h.b16 %v1626
    %v4000 = vunpack.c.l.b16 %v1627
    %v4001 = vunpack.c.h.b16 %v1627
    %v4002 = vunpack.c.l.b16 %v1628
    %v4003 = vunpack.c.h.b16 %v1628
    %v4004 = vunpack.c.l.b16 %v1629
    %v4005 = vunpack.c.h.b16 %v1629
    %v4006 = vunpack.c.l.b16 %v1630
    %v4007 = vunpack.c.h.b16 %v1630
    %v4008 = vunpack.c.l.b16 %v1631
    %v4009 = vunpack.c.h.b16 %v1631
    %v4010 = vunpack.c.l.b16 %v1632
    %v4011 = vunpack.c.h.b16 %v1632
    %v4012 = vunpack.c.l.b16 %v1633
    %v4013 = vunpack.c.h.b16 %v1633
    %v4014 = vunpack.c.l.b16 %v1634
    %v4015 = vunpack.c.h.b16 %v1634
    %v4016 = vunpack.c.l.b16 %v1635
    %v4017 = vunpack.c.h.b16 %v1635
    %v4018 = vunpack.c.l.b16 %v1636
    %v4019 = vunpack.c.h.b16 %v1636
    %v4020 = vunpack.c.l.b16 %v1637
    %v4021 = vunpack.c.h.b16 %v1637
    %v4022 = vunpack.c.l.b16 %v1638
    %v4023 = vunpack.c.h.b16 %v1638
    %v4024 = vunpack.c.l.b16 %v1639
    %v4025 = vunpack.c.h.b16 %v1639
    %v4026 = vunpack.c.l.b16 %v1640
    %v4027 = vunpack.c.h.b16 %v1640
    %v4028 = vunpack.c.l.b16 %v1641
    %v4029 = vunpack.c.h.b16 %v1641
    %v4030 = vunpack.c.l.b16 %v1642
    %v4031 = vunpack.c.h.b16 %v1642
    %v4032 = vunpack.c.l.b16 %v1643
    %v4033 = vunpack.c.h.b16 %v1643
    %v4034 = vunpack.c.l.b16 %v1644
    %v4035 = vunpack.c.h.b16 %v1644
    %v4036 = vunpack.c.l.b16 %v1645
    %v4037 = vunpack.c.h.b16 %v1645
    %v4038 = vunpack.c.l.b16 %v1646
    %v4039 = vunpack.c.h.b16 %v1646
    %v4040 = vunpack.c.l.b16 %v1647
    %v4041 = vunpack.c.h.b16 %v1647
    %v4042 = vunpack.c.l.b16 %v1648
    %v4043 = vunpack.c.h.b16 %v1648
    %v4044 = vunpack.c.l.b16 %v1649
    %v4045 = vunpack.c.h.b16 %v1649
    %v4046 = vunpack.c.l.b16 %v1650
    %v4047 = vunpack.c.h.b16 %v1650
    %v4048 = vunpack.c.l.b16 %v1651
    %v4049 = vunpack.c.h.b16 %v1651
    %v4050 = vunpack.c.l.b16 %v1652
    %v4051 = vunpack.c.h.b16 %v1652
    %v4052 = vunpack.c.l.b16 %v1653
    %v4053 = vunpack.c.h.b16 %v1653
    %v4054 = vunpack.c.l.b16 %v1654
    %v4055 = vunpack.c.h.b16 %v1654
    %v4056 = vunpack.c.l.b16 %v1655
    %v4057 = vunpack.c.h.b16 %v1655
    %v4058 = vunpack.c.l.b16 %v1656
    %v4059 = vunpack.c.h.b16 %v1656
    %v4060 = vunpack.c.l.b16 %v1657
    %v4061 = vunpack.c.h.b16 %v1657
    %v4062 = vunpack.c.l.b16 %v1658
    %v4063 = vunpack.c.h.b16 %v1658
    %v4064 = vunpack.c.l.b16 %v1659
    %v4065 = vunpack.c.h.b16 %v1659
    %v4066 = vunpack.c.l.b16 %v1660
    %v4067 = vunpack.c.h.b16 %v1660
    %v4068 = vunpack.c.l.b16 %v1661
    %v4069 = vunpack.c.h.b16 %v1661
    %v4070 = vunpack.c.l.b16 %v1662
    %v4071 = vunpack.c.h.b16 %v1662
    %v4072 = vunpack.c.l.b16 %v1663
    %v4073 = vunpack.c.h.b16 %v1663
    %v4074 = vunpack.c.l.b16 %v1664
    %v4075 = vunpack.c.h.b16 %v1664
    %v4076 = vunpack.c.l.b16 %v1665
    %v4077 = vunpack.c.h.b16 %v1665
    %v4078 = vunpack.c.l.b16 %v1666
    %v4079 = vunpack.c.h.b16 %v1666
    %v4080 = vunpack.c.l.b16 %v1667
    %v4081 = vunpack.c.h.b16 %v1667
    %v4082 = vunpack.c.l.b16 %v1668
    %v4083 = vunpack.c.h.b16 %v1668
    %v4084 = vunpack.c.l.b16 %v1669
    %v4085 = vunpack.c.h.b16 %v1669
    %v4086 = vunpack.c.l.b16 %v1670
    %v4087 = vunpack.c.h.b16 %v1670
    %v4088 = vunpack.c.l.b16 %v1671
    %v4089 = vunpack.c.h.b16 %v1671
    %v4090 = vunpack.c.l.b16 %v1672
    %v4091 = vunpack.c.h.b16 %v1672
    %v4092 = vunpack.c.l.b16 %v1673
    %v4093 = vunpack.c.h.b16 %v1673
    %v4094 = vunpack.c.l.b16 %v1674
    %v4095 = vunpack.c.h.b16 %v1674
    %v4096 = vunpack.c.l.b16 %v1675
    %v4097 = vunpack.c.h.b16 %v1675
    %v4098 = vunpack.c.l.b16 %v1676
    %v4099 = vunpack.c.h.b16 %v1676
    %v4100 = vunpack.c.l.b16 %v1677
    %v4101 = vunpack.c.h.b16 %v1677
    %v4102 = vunpack.c.l.b16 %v1678
    %v4103 = vunpack.c.h.b16 %v1678
    %v4104 = vunpack.c.l.b16 %v1679
    %v4105 = vunpack.c.h.b16 %v1679
    %v4106 = vunpack.c.l.b16 %v1680
    %v4107 = vunpack.c.h.b16 %v1680
    %v4108 = vunpack.c.l.b16 %v1681
    %v4109 = vunpack.c.h.b16 %v1681
    %v4110 = vunpack.c.l.b16 %v1682
    %v4111 = vunpack.c.h.b16 %v1682
    %v4112 = vunpack.c.l.b16 %v1683
    %v4113 = vunpack.c.h.b16 %v1683
    %v4114 = vunpack.c.l.b16 %v1684
    %v4115 = vunpack.c.h.b16 %v1684
    %v4116 = vunpack.c.l.b16 %v1685
    %v4117 = vunpack.c.h.b16 %v1685
    %v4118 = vunpack.c.l.b16 %v1686
    %v4119 = vunpack.c.h.b16 %v1686
    %v4120 = vunpack.c.l.b16 %v1687
    %v4121 = vunpack.c.h.b16 %v1687
    %v4122 = vunpack.c.l.b16 %v1688
    %v4123 = vunpack.c.h.b16 %v1688
    %v4124 = vunpack.c.l.b16 %v1689
    %v4125 = vunpack.c.h.b16 %v1689
    %v4126 = vunpack.c.l.b16 %v1690
    %v4127 = vunpack.c.h.b16 %v1690
    %v4128 = vunpack.c.l.b16 %v1691
    %v4129 = vunpack.c.h.b16 %v1691
    %v4130 = vunpack.c.l.b16 %v1692
    %v4131 = vunpack.c.h.b16 %v1692
    %v4132 = vunpack.c.l.b16 %v1693
    %v4133 = vunpack.c.h.b16 %v1693
    %v4134 = vunpack.c.l.b16 %v1694
    %v4135 = vunpack.c.h.b16 %v1694
    %v4136 = vunpack.c.l.b16 %v1695
    %v4137 = vunpack.c.h.b16 %v1695
    %v4138 = vunpack.c.l.b16 %v1696
    %v4139 = vunpack.c.h.b16 %v1696
    %v4140 = vunpack.c.l.b16 %v1697
    %v4141 = vunpack.c.h.b16 %v1697
    %v4142 = vunpack.c.l.b16 %v1698
    %v4143 = vunpack.c.h.b16 %v1698
    %v4144 = vunpack.c.l.b16 %v1699
    %v4145 = vunpack.c.h.b16 %v1699
    %v4146 = vunpack.c.l.b16 %v1700
    %v4147 = vunpack.c.h.b16 %v1700
    %v4148 = vunpack.c.l.b16 %v1701
    %v4149 = vunpack.c.h.b16 %v1701
    %v4150 = vunpack.c.l.b16 %v1702
    %v4151 = vunpack.c.h.b16 %v1702
    %v4152 = vunpack.c.l.b16 %v1703
    %v4153 = vunpack.c.h.b16 %v1703
    %v4154 = vunpack.c.l.b16 %v1704
    %v4155 = vunpack.c.h.b16 %v1704
    %v4156 = vunpack.c.l.b16 %v1705
    %v4157 = vunpack.c.h.b16 %v1705
    %v4158 = vunpack.c.l.b16 %v1706
    %v4159 = vunpack.c.h.b16 %v1706
    %v4160 = vunpack.c.l.b16 %v1707
    %v4161 = vunpack.c.h.b16 %v1707
    %v4162 = vunpack.c.l.b16 %v1708
    %v4163 = vunpack.c.h.b16 %v1708
    %v4164 = vunpack.c.l.b16 %v1709
    %v4165 = vunpack.c.h.b16 %v1709
    %v4166 = vunpack.c.l.b16 %v1710
    %v4167 = vunpack.c.h.b16 %v1710
    %v4168 = vunpack.c.l.b16 %v1711
    %v4169 = vunpack.c.h.b16 %v1711
    %v4170 = vunpack.c.l.b16 %v1712
    %v4171 = vunpack.c.h.b16 %v1712
    %v4172 = vunpack.c.l.b16 %v1713
    %v4173 = vunpack.c.h.b16 %v1713
    %v4174 = vunpack.c.l.b16 %v1714
    %v4175 = vunpack.c.h.b16 %v1714
    %v4176 = vunpack.c.l.b16 %v1715
    %v4177 = vunpack.c.h.b16 %v1715
    %v4178 = vunpack.c.l.b16 %v1716
    %v4179 = vunpack.c.h.b16 %v1716
    %v4180 = vunpack.c.l.b16 %v1717
    %v4181 = vunpack.c.h.b16 %v1717
    %v4182 = vunpack.c.l.b16 %v1718
    %v4183 = vunpack.c.h.b16 %v1718
    %v4184 = vunpack.c.l.b16 %v1719
    %v4185 = vunpack.c.h.b16 %v1719
    %v4186 = vunpack.c.l.b16 %v1720
    %v4187 = vunpack.c.h.b16 %v1720
    %v4188 = vunpack.c.l.b16 %v1721
    %v4189 = vunpack.c.h.b16 %v1721
    %v4190 = vunpack.c.l.b16 %v1722
    %v4191 = vunpack.c.h.b16 %v1722
    %v4192 = vunpack.c.l.b16 %v1723
    %v4193 = vunpack.c.h.b16 %v1723
    %v4194 = vunpack.c.l.b16 %v1724
    %v4195 = vunpack.c.h.b16 %v1724
    %v4196 = vunpack.c.l.b16 %v1725
    %v4197 = vunpack.c.h.b16 %v1725
    %v4198 = vunpack.c.l.b16 %v1726
    %v4199 = vunpack.c.h.b16 %v1726
    %v4200 = vunpack.c.l.b16 %v1727
    %v4201 = vunpack.c.h.b16 %v1727
    %v4202 = vunpack.c.l.b16 %v1728
    %v4203 = vunpack.c.h.b16 %v1728
    %v4204 = vunpack.c.l.b16 %v1729
    %v4205 = vunpack.c.h.b16 %v1729
    %v4206 = vunpack.c.l.b16 %v1730
    %v4207 = vunpack.c.h.b16 %v1730
    %v4208 = vunpack.c.l.b16 %v1731
    %v4209 = vunpack.c.h.b16 %v1731
    %v4210 = vunpack.c.l.b16 %v1732
    %v4211 = vunpack.c.h.b16 %v1732
    %v4212 = vunpack.c.l.b16 %v1733
    %v4213 = vunpack.c.h.b16 %v1733
    %v4214 = vunpack.c.l.b16 %v1734
    %v4215 = vunpack.c.h.b16 %v1734
    %v4216 = vunpack.c.l.b16 %v1735
    %v4217 = vunpack.c.h.b16 %v1735
    %v4218 = vunpack.c.l.b16 %v1736
    %v4219 = vunpack.c.h.b16 %v1736
    %v4220 = vunpack.c.l.b16 %v1737
    %v4221 = vunpack.c.h.b16 %v1737
    %v4222 = vunpack.c.l.b16 %v1738
    %v4223 = vunpack.c.h.b16 %v1738
    %v4224 = vunpack.c.l.b16 %v1739
    %v4225 = vunpack.c.h.b16 %v1739
    %v4226 = vunpack.c.l.b16 %v1740
    %v4227 = vunpack.c.h.b16 %v1740
    %v4228 = vunpack.c.l.b16 %v1741
    %v4229 = vunpack.c.h.b16 %v1741
    %v4230 = vunpack.c.l.b16 %v1742
    %v4231 = vunpack.c.h.b16 %v1742
    %v4232 = vunpack.c.l.b16 %v1743
    %v4233 = vunpack.c.h.b16 %v1743
    %v4234 = vunpack.c.l.b16 %v1744
    %v4235 = vunpack.c.h.b16 %v1744
    %v4236 = vunpack.c.l.b16 %v1745
    %v4237 = vunpack.c.h.b16 %v1745
    %v4238 = vunpack.c.l.b16 %v1746
    %v4239 = vunpack.c.h.b16 %v1746
    %v4240 = vunpack.c.l.b16 %v1747
    %v4241 = vunpack.c.h.b16 %v1747
    %v4242 = vunpack.c.l.b16 %v1748
    %v4243 = vunpack.c.h.b16 %v1748
    %v4244 = vunpack.c.l.b16 %v1749
    %v4245 = vunpack.c.h.b16 %v1749
    %v4246 = vunpack.c.l.b16 %v1750
    %v4247 = vunpack.c.h.b16 %v1750
    %v4248 = vunpack.c.l.b16 %v1751
    %v4249 = vunpack.c.h.b16 %v1751
    %v4250 = vunpack.c.l.b16 %v1752
    %v4251 = vunpack.c.h.b16 %v1752
    %v4252 = vunpack.c.l.b16 %v1753
    %v4253 = vunpack.c.h.b16 %v1753
    %v4254 = vunpack.c.l.b16 %v1754
    %v4255 = vunpack.c.h.b16 %v1754
    %v4256 = vunpack.c.l.b16 %v1755
    %v4257 = vunpack.c.h.b16 %v1755
    %v4258 = vunpack.c.l.b16 %v1756
    %v4259 = vunpack.c.h.b16 %v1756
    %v4260 = vunpack.c.l.b16 %v1757
    %v4261 = vunpack.c.h.b16 %v1757
    %v4262 = vunpack.c.l.b16 %v1758
    %v4263 = vunpack.c.h.b16 %v1758
    %v4264 = vunpack.c.l.b16 %v1759
    %v4265 = vunpack.c.h.b16 %v1759
    %v4266 = vunpack.c.l.b16 %v1760
    %v4267 = vunpack.c.h.b16 %v1760
    %v4268 = vunpack.c.l.b16 %v1761
    %v4269 = vunpack.c.h.b16 %v1761
    %v4270 = vunpack.c.l.b16 %v1762
    %v4271 = vunpack.c.h.b16 %v1762
    %v4272 = vunpack.c.l.b16 %v1763
    %v4273 = vunpack.c.h.b16 %v1763
    %v4274 = vunpack.c.l.b16 %v1764
    %v4275 = vunpack.c.h.b16 %v1764
    %v4276 = vunpack.c.l.b16 %v1765
    %v4277 = vunpack.c.h.b16 %v1765
    %v4278 = vunpack.c.l.b16 %v1766
    %v4279 = vunpack.c.h.b16 %v1766
    %v4280 = vunpack.c.l.b16 %v1767
    %v4281 = vunpack.c.h.b16 %v1767
    %v4282 = vunpack.c.l.b16 %v1768
    %v4283 = vunpack.c.h.b16 %v1768
    %v4284 = vunpack.c.l.b16 %v1769
    %v4285 = vunpack.c.h.b16 %v1769
    %v4286 = vunpack.c.l.b16 %v1770
    %v4287 = vunpack.c.h.b16 %v1770
    %v4288 = vunpack.c.l.b16 %v1771
    %v4289 = vunpack.c.h.b16 %v1771
    %v4290 = vunpack.c.l.b16 %v1772
    %v4291 = vunpack.c.h.b16 %v1772
    %v4292 = vunpack.c.l.b16 %v1773
    %v4293 = vunpack.c.h.b16 %v1773
    %v4294 = vunpack.c.l.b16 %v1774
    %v4295 = vunpack.c.h.b16 %v1774
    %v4296 = vunpack.c.l.b16 %v1775
    %v4297 = vunpack.c.h.b16 %v1775
    %v4298 = vunpack.c.l.b16 %v1776
    %v4299 = vunpack.c.h.b16 %v1776
    %v4300 = vunpack.c.l.b16 %v1777
    %v4301 = vunpack.c.h.b16 %v1777
    %v4302 = vunpack.c.l.b16 %v1778
    %v4303 = vunpack.c.h.b16 %v1778
    %v4304 = vunpack.c.l.b16 %v1779
    %v4305 = vunpack.c.h.b16 %v1779
    %v4306 = vunpack.c.l.b16 %v1780
    %v4307 = vunpack.c.h.b16 %v1780
    %v4308 = vunpack.c.l.b16 %v1781
    %v4309 = vunpack.c.h.b16 %v1781
    %v4310 = vunpack.c.l.b16 %v1782
    %v4311 = vunpack.c.h.b16 %v1782
    %v4312 = vunpack.c.l.b16 %v1783
    %v4313 = vunpack.c.h.b16 %v1783
    %v4314 = vunpack.c.l.b16 %v1784
    %v4315 = vunpack.c.h.b16 %v1784
    %v4316 = vunpack.c.l.b16 %v1785
    %v4317 = vunpack.c.h.b16 %v1785
    %v4318 = vunpack.c.l.b16 %v1786
    %v4319 = vunpack.c.h.b16 %v1786
    %v4320 = vunpack.c.l.b16 %v1787
    %v4321 = vunpack.c.h.b16 %v1787
    %v4322 = vunpack.c.l.b16 %v1788
    %v4323 = vunpack.c.h.b16 %v1788
    %v4324 = vunpack.c.l.b16 %v1789
    %v4325 = vunpack.c.h.b16 %v1789
    %v4326 = vunpack.c.l.b16 %v1790
    %v4327 = vunpack.c.h.b16 %v1790
    %v4328 = vunpack.c.l.b16 %v1791
    %v4329 = vunpack.c.h.b16 %v1791
    %v4330 = vunpack.c.l.b16 %v1792
    %v4331 = vunpack.c.h.b16 %v1792
    %v4332 = vunpack.c.l.b16 %v1793
    %v4333 = vunpack.c.h.b16 %v1793
    %v4334 = vunpack.c.l.b16 %v1794
    %v4335 = vunpack.c.h.b16 %v1794
    %v4336 = vunpack.c.l.b16 %v1795
    %v4337 = vunpack.c.h.b16 %v1795
    %v4338 = vunpack.c.l.b16 %v1796
    %v4339 = vunpack.c.h.b16 %v1796
    %v4340 = vunpack.c.l.b16 %v1797
    %v4341 = vunpack.c.h.b16 %v1797
    %v4342 = vunpack.c.l.b16 %v1798
    %v4343 = vunpack.c.h.b16 %v1798
    %v4344 = vunpack.c.l.b16 %v1799
    %v4345 = vunpack.c.h.b16 %v1799
    %v4346 = vunpack.c.l.b16 %v1800
    %v4347 = vunpack.c.h.b16 %v1800
    %v4348 = vunpack.c.l.b16 %v1801
    %v4349 = vunpack.c.h.b16 %v1801
    %v4350 = vunpack.c.l.b16 %v1802
    %v4351 = vunpack.c.h.b16 %v1802
    %v4352 = vunpack.c.l.b16 %v1803
    %v4353 = vunpack.c.h.b16 %v1803
    %v4354 = vunpack.c.l.b16 %v1804
    %v4355 = vunpack.c.h.b16 %v1804
    %v4356 = vunpack.c.l.b16 %v1805
    %v4357 = vunpack.c.h.b16 %v1805
    %v4358 = vunpack.c.l.b16 %v1806
    %v4359 = vunpack.c.h.b16 %v1806
    %v4360 = vunpack.c.l.b16 %v1807
    %v4361 = vunpack.c.h.b16 %v1807
    %v4362 = vunpack.c.l.b16 %v1808
    %v4363 = vunpack.c.h.b16 %v1808
    %v4364 = vunpack.c.l.b16 %v1809
    %v4365 = vunpack.c.h.b16 %v1809
    %v4366 = vunpack.c.l.b16 %v1810
    %v4367 = vunpack.c.h.b16 %v1810
    %v4368 = vunpack.c.l.b16 %v1811
    %v4369 = vunpack.c.h.b16 %v1811
    %v4370 = vunpack.c.l.b16 %v1812
    %v4371 = vunpack.c.h.b16 %v1812
    %v4372 = vunpack.c.l.b16 %v1813
    %v4373 = vunpack.c.h.b16 %v1813
    %v4374 = vunpack.c.l.b16 %v1814
    %v4375 = vunpack.c.h.b16 %v1814
    %v4376 = vunpack.c.l.b16 %v1815
    %v4377 = vunpack.c.h.b16 %v1815
    %v4378 = vunpack.c.l.b16 %v1816
    %v4379 = vunpack.c.h.b16 %v1816
    %v4380 = vunpack.c.l.b16 %v1817
    %v4381 = vunpack.c.h.b16 %v1817
    %v4382 = vunpack.c.l.b16 %v1818
    %v4383 = vunpack.c.h.b16 %v1818
    %v4384 = vunpack.c.l.b16 %v1819
    %v4385 = vunpack.c.h.b16 %v1819
    %v4386 = vunpack.c.l.b16 %v1820
    %v4387 = vunpack.c.h.b16 %v1820
    %v4388 = vunpack.c.l.b16 %v1821
    %v4389 = vunpack.c.h.b16 %v1821
    %v4390 = vunpack.c.l.b16 %v1822
    %v4391 = vunpack.c.h.b16 %v1822
    %v4392 = vunpack.c.l.b16 %v1823
    %v4393 = vunpack.c.h.b16 %v1823
    %v4394 = vunpack.c.l.b16 %v1824
    %v4395 = vunpack.c.h.b16 %v1824
    %v4396 = vunpack.c.l.b16 %v1825
    %v4397 = vunpack.c.h.b16 %v1825
    %v4398 = vunpack.c.l.b16 %v1826
    %v4399 = vunpack.c.h.b16 %v1826
    %v4400 = vunpack.c.l.b16 %v1827
    %v4401 = vunpack.c.h.b16 %v1827
    %v4402 = vunpack.c.l.b16 %v1828
    %v4403 = vunpack.c.h.b16 %v1828
    %v4404 = vunpack.c.l.b16 %v1829
    %v4405 = vunpack.c.h.b16 %v1829
    %v4406 = vunpack.c.l.b16 %v1830
    %v4407 = vunpack.c.h.b16 %v1830
    %v4408 = vunpack.c.l.b16 %v1831
    %v4409 = vunpack.c.h.b16 %v1831
    %v4410 = vunpack.c.l.b16 %v1832
    %v4411 = vunpack.c.h.b16 %v1832
    %v4412 = vunpack.c.l.b16 %v1833
    %v4413 = vunpack.c.h.b16 %v1833
    %v4414 = vunpack.c.l.b16 %v1834
    %v4415 = vunpack.c.h.b16 %v1834
    %v4416 = vunpack.c.l.b16 %v1835
    %v4417 = vunpack.c.h.b16 %v1835
    %v4418 = vunpack.c.l.b16 %v1836
    %v4419 = vunpack.c.h.b16 %v1836
    %v4420 = vunpack.c.l.b16 %v1837
    %v4421 = vunpack.c.h.b16 %v1837
    %v4422 = vunpack.c.l.b16 %v1838
    %v4423 = vunpack.c.h.b16 %v1838
    %v4424 = vunpack.c.l.b16 %v1839
    %v4425 = vunpack.c.h.b16 %v1839
    %v4426 = vunpack.c.l.b16 %v1840
    %v4427 = vunpack.c.h.b16 %v1840
    %v4428 = vunpack.c.l.b16 %v1841
    %v4429 = vunpack.c.h.b16 %v1841
    %v4430 = vunpack.c.l.b16 %v1842
    %v4431 = vunpack.c.h.b16 %v1842
    %v4432 = vunpack.c.l.b16 %v1843
    %v4433 = vunpack.c.h.b16 %v1843
    %v4434 = vunpack.c.l.b16 %v1844
    %v4435 = vunpack.c.h.b16 %v1844
    %v4436 = vunpack.c.l.b16 %v1845
    %v4437 = vunpack.c.h.b16 %v1845
    %v4438 = vunpack.c.l.b16 %v1846
    %v4439 = vunpack.c.h.b16 %v1846
    %v4440 = vunpack.c.l.b16 %v1847
    %v4441 = vunpack.c.h.b16 %v1847
    %v4442 = vunpack.c.l.b16 %v1848
    %v4443 = vunpack.c.h.b16 %v1848
    %v4444 = vunpack.c.l.b16 %v1849
    %v4445 = vunpack.c.h.b16 %v1849
    %v4446 = vunpack.c.l.b16 %v1850
    %v4447 = vunpack.c.h.b16 %v1850
    %v4448 = vunpack.c.l.b16 %v1851
    %v4449 = vunpack.c.h.b16 %v1851
    %v4450 = vunpack.c.l.b16 %v1852
    %v4451 = vunpack.c.h.b16 %v1852
    %v4452 = vunpack.c.l.b16 %v1853
    %v4453 = vunpack.c.h.b16 %v1853
    %v4454 = vpack.c.b16 %v2730, %v2726
    %v4455 = vpack.c.b16 %v2731, %v2727
    %v4456 = vpack.c.b16 %v2732, %v2728
    %v4457 = vpack.c.b16 %v2733, %v2729
    %v4458 = vpack.c.b16 %v2738, %v2734
    %v4459 = vpack.c.b16 %v2739, %v2735
    %v4460 = vpack.c.b16 %v2740, %v2736
    %v4461 = vpack.c.b16 %v2741, %v2737
    %v4462 = vpack.c.b16 %v2746, %v2742
    %v4463 = vpack.c.b16 %v2747, %v2743
    %v4464 = vpack.c.b16 %v2748, %v2744
    %v4465 = vpack.c.b16 %v2749, %v2745
    %v4466 = vpack.c.b16 %v2754, %v2750
    %v4467 = vpack.c.b16 %v2755, %v2751
    %v4468 = vpack.c.b16 %v2756, %v2752
    %v4469 = vpack.c.b16 %v2757, %v2753
    %v4470 = vpack.c.b16 %v2762, %v2758
    %v4471 = vpack.c.b16 %v2763, %v2759
    %v4472 = vpack.c.b16 %v2764, %v2760
    %v4473 = vpack.c.b16 %v2765, %v2761
    %v4474 = vpack.c.b16 %v2770, %v2766
    %v4475 = vpack.c.b16 %v2771, %v2767
    %v4476 = vpack.c.b16 %v2772, %v2768
    %v4477 = vpack.c.b16 %v2773, %v2769
    %v4478 = vpack.c.b16 %v2778, %v2774
    %v4479 = vpack.c.b16 %v2779, %v2775
    %v4480 = vpack.c.b16 %v2780, %v2776
    %v4481 = vpack.c.b16 %v2781, %v2777
    %v4482 = vpack.c.b16 %v2786, %v2782
    %v4483 = vpack.c.b16 %v2787, %v2783
    %v4484 = vpack.c.b16 %v2788, %v2784
    %v4485 = vpack.c.b16 %v2789, %v2785
    %v4486 = vpack.c.b16 %v2794, %v2790
    %v4487 = vpack.c.b16 %v2795, %v2791
    %v4488 = vpack.c.b16 %v2796, %v2792
    %v4489 = vpack.c.b16 %v2797, %v2793
    %v4490 = vpack.c.b16 %v2802, %v2798
    %v4491 = vpack.c.b16 %v2803, %v2799
    %v4492 = vpack.c.b16 %v2804, %v2800
    %v4493 = vpack.c.b16 %v2805, %v2801
    %v4494 = vpack.c.b16 %v2810, %v2806
    %v4495 = vpack.c.b16 %v2811, %v2807
    %v4496 = vpack.c.b16 %v2812, %v2808
    %v4497 = vpack.c.b16 %v2813, %v2809
    %v4498 = vpack.c.b16 %v2818, %v2814
    %v4499 = vpack.c.b16 %v2819, %v2815
    %v4500 = vpack.c.b16 %v2820, %v2816
    %v4501 = vpack.c.b16 %v2821, %v2817
    %v4502 = vpack.c.b16 %v2826, %v2822
    %v4503 = vpack.c.b16 %v2827, %v2823
    %v4504 = vpack.c.b16 %v2828, %v2824
    %v4505 = vpack.c.b16 %v2829, %v2825
    %v4506 = vpack.c.b16 %v2834, %v2830
    %v4507 = vpack.c.b16 %v2835, %v2831
    %v4508 = vpack.c.b16 %v2836, %v2832
    %v4509 = vpack.c.b16 %v2837, %v2833
    %v4510 = vpack.c.b16 %v2842, %v2838
    %v4511 = vpack.c.b16 %v2843, %v2839
    %v4512 = vpack.c.b16 %v2844, %v2840
    %v4513 = vpack.c.b16 %v2845, %v2841
    %v4514 = vpack.c.b16 %v2850, %v2846
    %v4515 = vpack.c.b16 %v2851, %v2847
    %v4516 = vpack.c.b16 %v2852, %v2848
    %v4517 = vpack.c.b16 %v2853, %v2849
    %v4518 = vpack.c.b16 %v2858, %v2854
    %v4519 = vpack.c.b16 %v2859, %v2855
    %v4520 = vpack.c.b16 %v2860, %v2856
    %v4521 = vpack.c.b16 %v2861, %v2857
    %v4522 = vpack.c.b16 %v2866, %v2862
    %v4523 = vpack.c.b16 %v2867, %v2863
    %v4524 = vpack.c.b16 %v2868, %v2864
    %v4525 = vpack.c.b16 %v2869, %v2865
    %v4526 = vpack.c.b16 %v2874, %v2870
    %v4527 = vpack.c.b16 %v2875, %v2871
    %v4528 = vpack.c.b16 %v2876, %v2872
    %v4529 = vpack.c.b16 %v2877, %v2873
    %v4530 = vpack.c.b16 %v2882, %v2878
    %v4531 = vpack.c.b16 %v2883, %v2879
    %v4532 = vpack.c.b16 %v2884, %v2880
    %v4533 = vpack.c.b16 %v2885, %v2881
    %v4534 = vpack.c.b16 %v2890, %v2886
    %v4535 = vpack.c.b16 %v2891, %v2887
    %v4536 = vpack.c.b16 %v2892, %v2888
    %v4537 = vpack.c.b16 %v2893, %v2889
    %v4538 = vpack.c.b16 %v2898, %v2894
    %v4539 = vpack.c.b16 %v2899, %v2895
    %v4540 = vpack.c.b16 %v2900, %v2896
    %v4541 = vpack.c.b16 %v2901, %v2897
    %v4542 = vpack.c.b16 %v2906, %v2902
    %v4543 = vpack.c.b16 %v2907, %v2903
    %v4544 = vpack.c.b16 %v2908, %v2904
    %v4545 = vpack.c.b16 %v2909, %v2905
    %v4546 = vpack.c.b16 %v2914, %v2910
    %v4547 = vpack.c.b16 %v2915, %v2911
    %v4548 = vpack.c.b16 %v2916, %v2912
    %v4549 = vpack.c.b16 %v2917, %v2913
    %v4550 = vpack.c.b16 %v2922, %v2918
    %v4551 = vpack.c.b16 %v2923, %v2919
    %v4552 = vpack.c.b16 %v2924, %v2920
    %v4553 = vpack.c.b16 %v2925, %v2921
    %v4554 = vpack.c.b16 %v2930, %v2926
    %v4555 = vpack.c.b16 %v2931, %v2927
    %v4556 = vpack.c.b16 %v2932, %v2928
    %v4557 = vpack.c.b16 %v2933, %v2929
    %v4558 = vpack.c.b16 %v2938, %v2934
    %v4559 = vpack.c.b16 %v2939, %v2935
    %v4560 = vpack.c.b16 %v2940, %v2936
    %v4561 = vpack.c.b16 %v2941, %v2937
    %v4562 = vpack.c.b16 %v2946, %v2942
    %v4563 = vpack.c.b16 %v2947, %v2943
    %v4564 = vpack.c.b16 %v2948, %v2944
    %v4565 = vpack.c.b16 %v2949, %v2945
    %v4566 = vpack.c.b16 %v2954, %v2950
    %v4567 = vpack.c.b16 %v2955, %v2951
    %v4568 = vpack.c.b16 %v2956, %v2952
    %v4569 = vpack.c.b16 %v2957, %v2953
    %v4570 = vpack.c.b16 %v2962, %v2958
    %v4571 = vpack.c.b16 %v2963, %v2959
    %v4572 = vpack.c.b16 %v2964, %v2960
    %v4573 = vpack.c.b16 %v2965, %v2961
    %v4574 = vpack.c.b16 %v2970, %v2966
    %v4575 = vpack.c.b16 %v2971, %v2967
    %v4576 = vpack.c.b16 %v2972, %v2968
    %v4577 = vpack.c.b16 %v2973, %v2969
    %v4578 = vpack.c.b16 %v2978, %v2974
    %v4579 = vpack.c.b16 %v2979, %v2975
    %v4580 = vpack.c.b16 %v2980, %v2976
    %v4581 = vpack.c.b16 %v2981, %v2977
    %v4582 = vpack.c.b16 %v2986, %v2982
    %v4583 = vpack.c.b16 %v2987, %v2983
    %v4584 = vpack.c.b16 %v2988, %v2984
    %v4585 = vpack.c.b16 %v2989, %v2985
    %v4586 = vpack.c.b16 %v2994, %v2990
    %v4587 = vpack.c.b16 %v2995, %v2991
    %v4588 = vpack.c.b16 %v2996, %v2992
    %v4589 = vpack.c.b16 %v2997, %v2993
    %v4590 = vpack.c.b16 %v3002, %v2998
    %v4591 = vpack.c.b16 %v3003, %v2999
    %v4592 = vpack.c.b16 %v3004, %v3000
    %v4593 = vpack.c.b16 %v3005, %v3001
    %v4594 = vpack.c.b16 %v3010, %v3006
    %v4595 = vpack.c.b16 %v3011, %v3007
    %v4596 = vpack.c.b16 %v3012, %v3008
    %v4597 = vpack.c.b16 %v3013, %v3009
    %v4598 = vpack.c.b16 %v3018, %v3014
    %v4599 = vpack.c.b16 %v3019, %v3015
    %v4600 = vpack.c.b16 %v3020, %v3016
    %v4601 = vpack.c.b16 %v3021, %v3017
    %v4602 = vpack.c.b16 %v3026, %v3022
    %v4603 = vpack.c.b16 %v3027, %v3023
    %v4604 = vpack.c.b16 %v3028, %v3024
    %v4605 = vpack.c.b16 %v3029, %v3025
    %v4606 = vpack.c.b16 %v3034, %v3030
    %v4607 = vpack.c.b16 %v3035, %v3031
    %v4608 = vpack.c.b16 %v3036, %v3032
    %v4609 = vpack.c.b16 %v3037, %v3033
    %v4610 = vpack.c.b16 %v3042, %v3038
    %v4611 = vpack.c.b16 %v3043, %v3039
    %v4612 = vpack.c.b16 %v3044, %v3040
    %v4613 = vpack.c.b16 %v3045, %v3041
    %v4614 = vpack.c.b16 %v3050, %v3046
    %v4615 = vpack.c.b16 %v3051, %v3047
    %v4616 = vpack.c.b16 %v3052, %v3048
    %v4617 = vpack.c.b16 %v3053, %v3049
    %v4618 = vpack.c.b16 %v3058, %v3054
    %v4619 = vpack.c.b16 %v3059, %v3055
    %v4620 = vpack.c.b16 %v3060, %v3056
    %v4621 = vpack.c.b16 %v3061, %v3057
    %v4622 = vpack.c.b16 %v3066, %v3062
    %v4623 = vpack.c.b16 %v3067, %v3063
    %v4624 = vpack.c.b16 %v3068, %v3064
    %v4625 = vpack.c.b16 %v3069, %v3065
    %v4626 = vpack.c.b16 %v3074, %v3070
    %v4627 = vpack.c.b16 %v3075, %v3071
    %v4628 = vpack.c.b16 %v3076, %v3072
    %v4629 = vpack.c.b16 %v3077, %v3073
    %v4630 = vpack.c.b16 %v3082, %v3078
    %v4631 = vpack.c.b16 %v3083, %v3079
    %v4632 = vpack.c.b16 %v3084, %v3080
    %v4633 = vpack.c.b16 %v3085, %v3081
    %v4634 = vpack.c.b16 %v3090, %v3086
    %v4635 = vpack.c.b16 %v3091, %v3087
    %v4636 = vpack.c.b16 %v3092, %v3088
    %v4637 = vpack.c.b16 %v3093, %v3089
    %v4638 = vpack.c.b16 %v3098, %v3094
    %v4639 = vpack.c.b16 %v3099, %v3095
    %v4640 = vpack.c.b16 %v3100, %v3096
    %v4641 = vpack.c.b16 %v3101, %v3097
    %v4642 = vpack.c.b16 %v3106, %v3102
    %v4643 = vpack.c.b16 %v3107, %v3103
    %v4644 = vpack.c.b16 %v3108, %v3104
    %v4645 = vpack.c.b16 %v3109, %v3105
    %v4646 = vpack.c.b16 %v3114, %v3110
    %v4647 = vpack.c.b16 %v3115, %v3111
    %v4648 = vpack.c.b16 %v3116, %v3112
    %v4649 = vpack.c.b16 %v3117, %v3113
    %v4650 = vpack.c.b16 %v3122, %v3118
    %v4651 = vpack.c.b16 %v3123, %v3119
    %v4652 = vpack.c.b16 %v3124, %v3120
    %v4653 = vpack.c.b16 %v3125, %v3121
    %v4654 = vpack.c.b16 %v3130, %v3126
    %v4655 = vpack.c.b16 %v3131, %v3127
    %v4656 = vpack.c.b16 %v3132, %v3128
    %v4657 = vpack.c.b16 %v3133, %v3129
    %v4658 = vpack.c.b16 %v3138, %v3134
    %v4659 = vpack.c.b16 %v3139, %v3135
    %v4660 = vpack.c.b16 %v3140, %v3136
    %v4661 = vpack.c.b16 %v3141, %v3137
    %v4662 = vpack.c.b16 %v3146, %v3142
    %v4663 = vpack.c.b16 %v3147, %v3143
    %v4664 = vpack.c.b16 %v3148, %v3144
    %v4665 = vpack.c.b16 %v3149, %v3145
    %v4666 = vpack.c.b16 %v3154, %v3150
    %v4667 = vpack.c.b16 %v3155, %v3151
    %v4668 = vpack.c.b16 %v3156, %v3152
    %v4669 = vpack.c.b16 %v3157, %v3153
    %v4670 = vpack.c.b16 %v3162, %v3158
    %v4671 = vpack.c.b16 %v3163, %v3159
    %v4672 = vpack.c.b16 %v3164, %v3160
    %v4673 = vpack.c.b16 %v3165, %v3161
    %v4674 = vpack.c.b16 %v3170, %v3166
    %v4675 = vpack.c.b16 %v3171, %v3167
    %v4676 = vpack.c.b16 %v3172, %v3168
    %v4677 = vpack.c.b16 %v3173, %v3169
    %v4678 = vpack.c.b16 %v3178, %v3174
    %v4679 = vpack.c.b16 %v3179, %v3175
    %v4680 = vpack.c.b16 %v3180, %v3176
    %v4681 = vpack.c.b16 %v3181, %v3177
    %v4682 = vpack.c.b16 %v3186, %v3182
    %v4683 = vpack.c.b16 %v3187, %v3183
    %v4684 = vpack.c.b16 %v3188, %v3184
    %v4685 = vpack.c.b16 %v3189, %v3185
    %v4686 = vpack.c.b16 %v3194, %v3190
    %v4687 = vpack.c.b16 %v3195, %v3191
    %v4688 = vpack.c.b16 %v3196, %v3192
    %v4689 = vpack.c.b16 %v3197, %v3193
    %v4690 = vpack.c.b16 %v3202, %v3198
    %v4691 = vpack.c.b16 %v3203, %v3199
    %v4692 = vpack.c.b16 %v3204, %v3200
    %v4693 = vpack.c.b16 %v3205, %v3201
    %v4694 = vpack.c.b16 %v3210, %v3206
    %v4695 = vpack.c.b16 %v3211, %v3207
    %v4696 = vpack.c.b16 %v3212, %v3208
    %v4697 = vpack.c.b16 %v3213, %v3209
    %v4698 = vpack.c.b16 %v3218, %v3214
    %v4699 = vpack.c.b16 %v3219, %v3215
    %v4700 = vpack.c.b16 %v3220, %v3216
    %v4701 = vpack.c.b16 %v3221, %v3217
    %v4702 = vpack.c.b16 %v3226, %v3222
    %v4703 = vpack.c.b16 %v3227, %v3223
    %v4704 = vpack.c.b16 %v3228, %v3224
    %v4705 = vpack.c.b16 %v3229, %v3225
    %v4706 = vpack.c.b16 %v3234, %v3230
    %v4707 = vpack.c.b16 %v3235, %v3231
    %v4708 = vpack.c.b16 %v3236, %v3232
    %v4709 = vpack.c.b16 %v3237, %v3233
    %v4710 = vpack.c.b16 %v3242, %v3238
    %v4711 = vpack.c.b16 %v3243, %v3239
    %v4712 = vpack.c.b16 %v3244, %v3240
    %v4713 = vpack.c.b16 %v3245, %v3241
    %v4714 = vpack.c.b16 %v3250, %v3246
    %v4715 = vpack.c.b16 %v3251, %v3247
    %v4716 = vpack.c.b16 %v3252, %v3248
    %v4717 = vpack.c.b16 %v3253, %v3249
    %v4718 = vpack.c.b16 %v3258, %v3254
    %v4719 = vpack.c.b16 %v3259, %v3255
    %v4720 = vpack.c.b16 %v3260, %v3256
    %v4721 = vpack.c.b16 %v3261, %v3257
    %v4722 = vpack.c.b16 %v3266, %v3262
    %v4723 = vpack.c.b16 %v3267, %v3263
    %v4724 = vpack.c.b16 %v3268, %v3264
    %v4725 = vpack.c.b16 %v3269, %v3265
    %v4726 = vpack.c.b16 %v3274, %v3270
    %v4727 = vpack.c.b16 %v3275, %v3271
    %v4728 = vpack.c.b16 %v3276, %v3272
    %v4729 = vpack.c.b16 %v3277, %v3273
    %v4730 = vpack.c.b16 %v3282, %v3278
    %v4731 = vpack.c.b16 %v3283, %v3279
    %v4732 = vpack.c.b16 %v3284, %v3280
    %v4733 = vpack.c.b16 %v3285, %v3281
    %v4734 = vpack.c.b16 %v3290, %v3286
    %v4735 = vpack.c.b16 %v3291, %v3287
    %v4736 = vpack.c.b16 %v3292, %v3288
    %v4737 = vpack.c.b16 %v3293, %v3289
    %v4738 = vpack.c.b16 %v3298, %v3294
    %v4739 = vpack.c.b16 %v3299, %v3295
    %v4740 = vpack.c.b16 %v3300, %v3296
    %v4741 = vpack.c.b16 %v3301, %v3297
    %v4742 = vpack.c.b16 %v3306, %v3302
    %v4743 = vpack.c.b16 %v3307, %v3303
    %v4744 = vpack.c.b16 %v3308, %v3304
    %v4745 = vpack.c.b16 %v3309, %v3305
    %v4746 = vpack.c.b16 %v3314, %v3310
    %v4747 = vpack.c.b16 %v3315, %v3311
    %v4748 = vpack.c.b16 %v3316, %v3312
    %v4749 = vpack.c.b16 %v3317, %v3313
    %v4750 = vpack.c.b16 %v3322, %v3318
    %v4751 = vpack.c.b16 %v3323, %v3319
    %v4752 = vpack.c.b16 %v3324, %v3320
    %v4753 = vpack.c.b16 %v3325, %v3321
    %v4754 = vpack.c.b16 %v3330, %v3326
    %v4755 = vpack.c.b16 %v3331, %v3327
    %v4756 = vpack.c.b16 %v3332, %v3328
    %v4757 = vpack.c.b16 %v3333, %v3329
    %v4758 = vpack.c.b16 %v3338, %v3334
    %v4759 = vpack.c.b16 %v3339, %v3335
    %v4760 = vpack.c.b16 %v3340, %v3336
    %v4761 = vpack.c.b16 %v3341, %v3337
    %v4762 = vpack.c.b16 %v3346, %v3342
    %v4763 = vpack.c.b16 %v3347, %v3343
    %v4764 = vpack.c.b16 %v3348, %v3344
    %v4765 = vpack.c.b16 %v3349, %v3345
    %v4766 = vpack.c.b16 %v3354, %v3350
    %v4767 = vpack.c.b16 %v3355, %v3351
    %v4768 = vpack.c.b16 %v3356, %v3352
    %v4769 = vpack.c.b16 %v3357, %v3353
    %v4770 = vpack.c.b16 %v3362, %v3358
    %v4771 = vpack.c.b16 %v3363, %v3359
    %v4772 = vpack.c.b16 %v3364, %v3360
    %v4773 = vpack.c.b16 %v3365, %v3361
    %v4774 = vpack.c.b16 %v3370, %v3366
    %v4775 = vpack.c.b16 %v3371, %v3367
    %v4776 = vpack.c.b16 %v3372, %v3368
    %v4777 = vpack.c.b16 %v3373, %v3369
    %v4778 = vpack.c.b16 %v3378, %v3374
    %v4779 = vpack.c.b16 %v3379, %v3375
    %v4780 = vpack.c.b16 %v3380, %v3376
    %v4781 = vpack.c.b16 %v3381, %v3377
    %v4782 = vpack.c.b16 %v3386, %v3382
    %v4783 = vpack.c.b16 %v3387, %v3383
    %v4784 = vpack.c.b16 %v3388, %v3384
    %v4785 = vpack.c.b16 %v3389, %v3385
    %v4786 = vpack.c.b16 %v3394, %v3390
    %v4787 = vpack.c.b16 %v3395, %v3391
    %v4788 = vpack.c.b16 %v3396, %v3392
    %v4789 = vpack.c.b16 %v3397, %v3393
    %v4790 = vpack.c.b16 %v3402, %v3398
    %v4791 = vpack.c.b16 %v3403, %v3399
    %v4792 = vpack.c.b16 %v3404, %v3400
    %v4793 = vpack.c.b16 %v3405, %v3401
    %v4794 = vpack.c.b16 %v3410, %v3406
    %v4795 = vpack.c.b16 %v3411, %v3407
    %v4796 = vpack.c.b16 %v3412, %v3408
    %v4797 = vpack.c.b16 %v3413, %v3409
    %v4798 = vpack.c.b16 %v3418, %v3414
    %v4799 = vpack.c.b16 %v3419, %v3415
    %v4800 = vpack.c.b16 %v3420, %v3416
    %v4801 = vpack.c.b16 %v3421, %v3417
    %v4802 = vpack.c.b16 %v3426, %v3422
    %v4803 = vpack.c.b16 %v3427, %v3423
    %v4804 = vpack.c.b16 %v3428, %v3424
    %v4805 = vpack.c.b16 %v3429, %v3425
    %v4806 = vpack.c.b16 %v3434, %v3430
    %v4807 = vpack.c.b16 %v3435, %v3431
    %v4808 = vpack.c.b16 %v3436, %v3432
    %v4809 = vpack.c.b16 %v3437, %v3433
    %v4810 = vpack.c.b16 %v3442, %v3438
    %v4811 = vpack.c.b16 %v3443, %v3439
    %v4812 = vpack.c.b16 %v3444, %v3440
    %v4813 = vpack.c.b16 %v3445, %v3441
    %v4814 = vpack.c.b16 %v3450, %v3446
    %v4815 = vpack.c.b16 %v3451, %v3447
    %v4816 = vpack.c.b16 %v3452, %v3448
    %v4817 = vpack.c.b16 %v3453, %v3449
    %v4818 = vpack.c.b16 %v3458, %v3454
    %v4819 = vpack.c.b16 %v3459, %v3455
    %v4820 = vpack.c.b16 %v3460, %v3456
    %v4821 = vpack.c.b16 %v3461, %v3457
    %v4822 = vpack.c.b16 %v3466, %v3462
    %v4823 = vpack.c.b16 %v3467, %v3463
    %v4824 = vpack.c.b16 %v3468, %v3464
    %v4825 = vpack.c.b16 %v3469, %v3465
    %v4826 = vpack.c.b16 %v3474, %v3470
    %v4827 = vpack.c.b16 %v3475, %v3471
    %v4828 = vpack.c.b16 %v3476, %v3472
    %v4829 = vpack.c.b16 %v3477, %v3473
    %v4830 = vpack.c.b16 %v3482, %v3478
    %v4831 = vpack.c.b16 %v3483, %v3479
    %v4832 = vpack.c.b16 %v3484, %v3480
    %v4833 = vpack.c.b16 %v3485, %v3481
    %v4834 = vpack.c.b16 %v3490, %v3486
    %v4835 = vpack.c.b16 %v3491, %v3487
    %v4836 = vpack.c.b16 %v3492, %v3488
    %v4837 = vpack.c.b16 %v3493, %v3489
    %v4838 = vpack.c.b16 %v3498, %v3494
    %v4839 = vpack.c.b16 %v3499, %v3495
    %v4840 = vpack.c.b16 %v3500, %v3496
    %v4841 = vpack.c.b16 %v3501, %v3497
    %v4842 = vpack.c.b16 %v3506, %v3502
    %v4843 = vpack.c.b16 %v3507, %v3503
    %v4844 = vpack.c.b16 %v3508, %v3504
    %v4845 = vpack.c.b16 %v3509, %v3505
    %v4846 = vpack.c.b16 %v3514, %v3510
    %v4847 = vpack.c.b16 %v3515, %v3511
    %v4848 = vpack.c.b16 %v3516, %v3512
    %v4849 = vpack.c.b16 %v3517, %v3513
    %v4850 = vpack.c.b16 %v3522, %v3518
    %v4851 = vpack.c.b16 %v3523, %v3519
    %v4852 = vpack.c.b16 %v3524, %v3520
    %v4853 = vpack.c.b16 %v3525, %v3521
    %v4854 = vpack.c.b16 %v3530, %v3526
    %v4855 = vpack.c.b16 %v3531, %v3527
    %v4856 = vpack.c.b16 %v3532, %v3528
    %v4857 = vpack.c.b16 %v3533, %v3529
    %v4858 = vpack.c.b16 %v3538, %v3534
    %v4859 = vpack.c.b16 %v3539, %v3535
    %v4860 = vpack.c.b16 %v3540, %v3536
    %v4861 = vpack.c.b16 %v3541, %v3537
    %v4862 = vpack.c.b16 %v3546, %v3542
    %v4863 = vpack.c.b16 %v3547, %v3543
    %v4864 = vpack.c.b16 %v3548, %v3544
    %v4865 = vpack.c.b16 %v3549, %v3545
    %v4866 = vpack.c.b16 %v3554, %v3550
    %v4867 = vpack.c.b16 %v3555, %v3551
    %v4868 = vpack.c.b16 %v3556, %v3552
    %v4869 = vpack.c.b16 %v3557, %v3553
    %v4870 = vpack.c.b16 %v3562, %v3558
    %v4871 = vpack.c.b16 %v3563, %v3559
    %v4872 = vpack.c.b16 %v3564, %v3560
    %v4873 = vpack.c.b16 %v3565, %v3561
    %v4874 = vpack.c.b16 %v3570, %v3566
    %v4875 = vpack.c.b16 %v3571, %v3567
    %v4876 = vpack.c.b16 %v3572, %v3568
    %v4877 = vpack.c.b16 %v3573, %v3569
    %v4878 = vpack.c.b16 %v3578, %v3574
    %v4879 = vpack.c.b16 %v3579, %v3575
    %v4880 = vpack.c.b16 %v3580, %v3576
    %v4881 = vpack.c.b16 %v3581, %v3577
    %v4882 = vpack.c.b16 %v3586, %v3582
    %v4883 = vpack.c.b16 %v3587, %v3583
    %v4884 = vpack.c.b16 %v3588, %v3584
    %v4885 = vpack.c.b16 %v3589, %v3585
    %v4886 = vpack.c.b16 %v3594, %v3590
    %v4887 = vpack.c.b16 %v3595, %v3591
    %v4888 = vpack.c.b16 %v3596, %v3592
    %v4889 = vpack.c.b16 %v3597, %v3593
    %v4890 = vpack.c.b16 %v3602, %v3598
    %v4891 = vpack.c.b16 %v3603, %v3599
    %v4892 = vpack.c.b16 %v3604, %v3600
    %v4893 = vpack.c.b16 %v3605, %v3601
    %v4894 = vpack.c.b16 %v3610, %v3606
    %v4895 = vpack.c.b16 %v3611, %v3607
    %v4896 = vpack.c.b16 %v3612, %v3608
    %v4897 = vpack.c.b16 %v3613, %v3609
    %v4898 = vpack.c.b16 %v3618, %v3614
    %v4899 = vpack.c.b16 %v3619, %v3615
    %v4900 = vpack.c.b16 %v3620, %v3616
    %v4901 = vpack.c.b16 %v3621, %v3617
    %v4902 = vpack.c.b16 %v3626, %v3622
    %v4903 = vpack.c.b16 %v3627, %v3623
    %v4904 = vpack.c.b16 %v3628, %v3624
    %v4905 = vpack.c.b16 %v3629, %v3625
    %v4906 = vpack.c.b16 %v3634, %v3630
    %v4907 = vpack.c.b16 %v3635, %v3631
    %v4908 = vpack.c.b16 %v3636, %v3632
    %v4909 = vpack.c.b16 %v3637, %v3633
    %v4910 = vpack.c.b16 %v3642, %v3638
    %v4911 = vpack.c.b16 %v3643, %v3639
    %v4912 = vpack.c.b16 %v3644, %v3640
    %v4913 = vpack.c.b16 %v3645, %v3641
    %v4914 = vpack.c.b16 %v3650, %v3646
    %v4915 = vpack.c.b16 %v3651, %v3647
    %v4916 = vpack.c.b16 %v3652, %v3648
    %v4917 = vpack.c.b16 %v3653, %v3649
    %v4918 = vpack.c.b16 %v3658, %v3654
    %v4919 = vpack.c.b16 %v3659, %v3655
    %v4920 = vpack.c.b16 %v3660, %v3656
    %v4921 = vpack.c.b16 %v3661, %v3657
    %v4922 = vpack.c.b16 %v3666, %v3662
    %v4923 = vpack.c.b16 %v3667, %v3663
    %v4924 = vpack.c.b16 %v3668, %v3664
    %v4925 = vpack.c.b16 %v3669, %v3665
    %v4926 = vpack.c.b16 %v3674, %v3670
    %v4927 = vpack.c.b16 %v3675, %v3671
    %v4928 = vpack.c.b16 %v3676, %v3672
    %v4929 = vpack.c.b16 %v3677, %v3673
    %v4930 = vpack.c.b16 %v3682, %v3678
    %v4931 = vpack.c.b16 %v3683, %v3679
    %v4932 = vpack.c.b16 %v3684, %v3680
    %v4933 = vpack.c.b16 %v3685, %v3681
    %v4934 = vpack.c.b16 %v3690, %v3686
    %v4935 = vpack.c.b16 %v3691, %v3687
    %v4936 = vpack.c.b16 %v3692, %v3688
    %v4937 = vpack.c.b16 %v3693, %v3689
    %v4938 = vpack.c.b16 %v3698, %v3694
    %v4939 = vpack.c.b16 %v3699, %v3695
    %v4940 = vpack.c.b16 %v3700, %v3696
    %v4941 = vpack.c.b16 %v3701, %v3697
    %v4942 = vpack.c.b16 %v3706, %v3702
    %v4943 = vpack.c.b16 %v3707, %v3703
    %v4944 = vpack.c.b16 %v3708, %v3704
    %v4945 = vpack.c.b16 %v3709, %v3705
    %v4946 = vpack.c.b16 %v3714, %v3710
    %v4947 = vpack.c.b16 %v3715, %v3711
    %v4948 = vpack.c.b16 %v3716, %v3712
    %v4949 = vpack.c.b16 %v3717, %v3713
    %v4950 = vpack.c.b16 %v3722, %v3718
    %v4951 = vpack.c.b16 %v3723, %v3719
    %v4952 = vpack.c.b16 %v3724, %v3720
    %v4953 = vpack.c.b16 %v3725, %v3721
    %v4954 = vpack.c.b16 %v3730, %v3726
    %v4955 = vpack.c.b16 %v3731, %v3727
    %v4956 = vpack.c.b16 %v3732, %v3728
    %v4957 = vpack.c.b16 %v3733, %v3729
    %v4958 = vpack.c.b16 %v3738, %v3734
    %v4959 = vpack.c.b16 %v3739, %v3735
    %v4960 = vpack.c.b16 %v3740, %v3736
    %v4961 = vpack.c.b16 %v3741, %v3737
    %v4962 = vpack.c.b16 %v3746, %v3742
    %v4963 = vpack.c.b16 %v3747, %v3743
    %v4964 = vpack.c.b16 %v3748, %v3744
    %v4965 = vpack.c.b16 %v3749, %v3745
    %v4966 = vpack.c.b16 %v3754, %v3750
    %v4967 = vpack.c.b16 %v3755, %v3751
    %v4968 = vpack.c.b16 %v3756, %v3752
    %v4969 = vpack.c.b16 %v3757, %v3753
    %v4970 = vpack.c.b16 %v3762, %v3758
    %v4971 = vpack.c.b16 %v3763, %v3759
    %v4972 = vpack.c.b16 %v3764, %v3760
    %v4973 = vpack.c.b16 %v3765, %v3761
    %v4974 = vpack.c.b16 %v3770, %v3766
    %v4975 = vpack.c.b16 %v3771, %v3767
    %v4976 = vpack.c.b16 %v3772, %v3768
    %v4977 = vpack.c.b16 %v3773, %v3769
    %v4978 = vpack.c.b16 %v3778, %v3774
    %v4979 = vpack.c.b16 %v3779, %v3775
    %v4980 = vpack.c.b16 %v3780, %v3776
    %v4981 = vpack.c.b16 %v3781, %v3777
    %v4982 = vpack.c.b16 %v3786, %v3782
    %v4983 = vpack.c.b16 %v3787, %v3783
    %v4984 = vpack.c.b16 %v3788, %v3784
    %v4985 = vpack.c.b16 %v3789, %v3785
    %v4986 = vpack.c.b16 %v3794, %v3790
    %v4987 = vpack.c.b16 %v3795, %v3791
    %v4988 = vpack.c.b16 %v3796, %v3792
    %v4989 = vpack.c.b16 %v3797, %v3793
    %v4990 = vpack.c.b16 %v3802, %v3798
    %v4991 = vpack.c.b16 %v3803, %v3799
    %v4992 = vpack.c.b16 %v3804, %v3800
    %v4993 = vpack.c.b16 %v3805, %v3801
    %v4994 = vpack.c.b16 %v3810, %v3806
    %v4995 = vpack.c.b16 %v3811, %v3807
    %v4996 = vpack.c.b16 %v3812, %v3808
    %v4997 = vpack.c.b16 %v3813, %v3809
    %v4998 = vpack.c.b16 %v3818, %v3814
    %v4999 = vpack.c.b16 %v3819, %v3815
    %v5000 = vpack.c.b16 %v3820, %v3816
    %v5001 = vpack.c.b16 %v3821, %v3817
    %v5002 = vpack.c.b16 %v3826, %v3822
    %v5003 = vpack.c.b16 %v3827, %v3823
    %v5004 = vpack.c.b16 %v3828, %v3824
    %v5005 = vpack.c.b16 %v3829, %v3825
    %v5006 = vpack.c.b16 %v3834, %v3830
    %v5007 = vpack.c.b16 %v3835, %v3831
    %v5008 = vpack.c.b16 %v3836, %v3832
    %v5009 = vpack.c.b16 %v3837, %v3833
    %v5010 = vpack.c.b16 %v3842, %v3838
    %v5011 = vpack.c.b16 %v3843, %v3839
    %v5012 = vpack.c.b16 %v3844, %v3840
    %v5013 = vpack.c.b16 %v3845, %v3841
    %v5014 = vpack.c.b16 %v3850, %v3846
    %v5015 = vpack.c.b16 %v3851, %v3847
    %v5016 = vpack.c.b16 %v3852, %v3848
    %v5017 = vpack.c.b16 %v3853, %v3849
    %v5018 = vpack.c.b16 %v3858, %v3854
    %v5019 = vpack.c.b16 %v3859, %v3855
    %v5020 = vpack.c.b16 %v3860, %v3856
    %v5021 = vpack.c.b16 %v3861, %v3857
    %v5022 = vpack.c.b16 %v3866, %v3862
    %v5023 = vpack.c.b16 %v3867, %v3863
    %v5024 = vpack.c.b16 %v3868, %v3864
    %v5025 = vpack.c.b16 %v3869, %v3865
    %v5026 = vpack.c.b16 %v3874, %v3870
    %v5027 = vpack.c.b16 %v3875, %v3871
    %v5028 = vpack.c.b16 %v3876, %v3872
    %v5029 = vpack.c.b16 %v3877, %v3873
    %v5030 = vpack.c.b16 %v3882, %v3878
    %v5031 = vpack.c.b16 %v3883, %v3879
    %v5032 = vpack.c.b16 %v3884, %v3880
    %v5033 = vpack.c.b16 %v3885, %v3881
    %v5034 = vpack.c.b16 %v3890, %v3886
    %v5035 = vpack.c.b16 %v3891, %v3887
    %v5036 = vpack.c.b16 %v3892, %v3888
    %v5037 = vpack.c.b16 %v3893, %v3889
    %v5038 = vpack.c.b16 %v3898, %v3894
    %v5039 = vpack.c.b16 %v3899, %v3895
    %v5040 = vpack.c.b16 %v3900, %v3896
    %v5041 = vpack.c.b16 %v3901, %v3897
    %v5042 = vpack.c.b16 %v3906, %v3902
    %v5043 = vpack.c.b16 %v3907, %v3903
    %v5044 = vpack.c.b16 %v3908, %v3904
    %v5045 = vpack.c.b16 %v3909, %v3905
    %v5046 = vpack.c.b16 %v3914, %v3910
    %v5047 = vpack.c.b16 %v3915, %v3911
    %v5048 = vpack.c.b16 %v3916, %v3912
    %v5049 = vpack.c.b16 %v3917, %v3913
    %v5050 = vpack.c.b16 %v3922, %v3918
    %v5051 = vpack.c.b16 %v3923, %v3919
    %v5052 = vpack.c.b16 %v3924, %v3920
    %v5053 = vpack.c.b16 %v3925, %v3921
    %v5054 = vpack.c.b16 %v3930, %v3926
    %v5055 = vpack.c.b16 %v3931, %v3927
    %v5056 = vpack.c.b16 %v3932, %v3928
    %v5057 = vpack.c.b16 %v3933, %v3929
    %v5058 = vpack.c.b16 %v3938, %v3934
    %v5059 = vpack.c.b16 %v3939, %v3935
    %v5060 = vpack.c.b16 %v3940, %v3936
    %v5061 = vpack.c.b16 %v3941, %v3937
    %v5062 = vpack.c.b16 %v3946, %v3942
    %v5063 = vpack.c.b16 %v3947, %v3943
    %v5064 = vpack.c.b16 %v3948, %v3944
    %v5065 = vpack.c.b16 %v3949, %v3945
    %v5066 = vpack.c.b16 %v3954, %v3950
    %v5067 = vpack.c.b16 %v3955, %v3951
    %v5068 = vpack.c.b16 %v3956, %v3952
    %v5069 = vpack.c.b16 %v3957, %v3953
    %v5070 = vpack.c.b16 %v3962, %v3958
    %v5071 = vpack.c.b16 %v3963, %v3959
    %v5072 = vpack.c.b16 %v3964, %v3960
    %v5073 = vpack.c.b16 %v3965, %v3961
    %v5074 = vpack.c.b16 %v3970, %v3966
    %v5075 = vpack.c.b16 %v3971, %v3967
    %v5076 = vpack.c.b16 %v3972, %v3968
    %v5077 = vpack.c.b16 %v3973, %v3969
    %v5078 = vpack.c.b16 %v3978, %v3974
    %v5079 = vpack.c.b16 %v3979, %v3975
    %v5080 = vpack.c.b16 %v3980, %v3976
    %v5081 = vpack.c.b16 %v3981, %v3977
    %v5082 = vpack.c.b16 %v3986, %v3982
    %v5083 = vpack.c.b16 %v3987, %v3983
    %v5084 = vpack.c.b16 %v3988, %v3984
    %v5085 = vpack.c.b16 %v3989, %v3985
    %v5086 = vpack.c.b16 %v3994, %v3990
    %v5087 = vpack.c.b16 %v3995, %v3991
    %v5088 = vpack.c.b16 %v3996, %v3992
    %v5089 = vpack.c.b16 %v3997, %v3993
    %v5090 = vpack.c.b16 %v4002, %v3998
    %v5091 = vpack.c.b16 %v4003, %v3999
    %v5092 = vpack.c.b16 %v4004, %v4000
    %v5093 = vpack.c.b16 %v4005, %v4001
    %v5094 = vpack.c.b16 %v4010, %v4006
    %v5095 = vpack.c.b16 %v4011, %v4007
    %v5096 = vpack.c.b16 %v4012, %v4008
    %v5097 = vpack.c.b16 %v4013, %v4009
    %v5098 = vpack.c.b16 %v4018, %v4014
    %v5099 = vpack.c.b16 %v4019, %v4015
    %v5100 = vpack.c.b16 %v4020, %v4016
    %v5101 = vpack.c.b16 %v4021, %v4017
    %v5102 = vpack.c.b16 %v4026, %v4022
    %v5103 = vpack.c.b16 %v4027, %v4023
    %v5104 = vpack.c.b16 %v4028, %v4024
    %v5105 = vpack.c.b16 %v4029, %v4025
    %v5106 = vpack.c.b16 %v4034, %v4030
    %v5107 = vpack.c.b16 %v4035, %v4031
    %v5108 = vpack.c.b16 %v4036, %v4032
    %v5109 = vpack.c.b16 %v4037, %v4033
    %v5110 = vpack.c.b16 %v4042, %v4038
    %v5111 = vpack.c.b16 %v4043, %v4039
    %v5112 = vpack.c.b16 %v4044, %v4040
    %v5113 = vpack.c.b16 %v4045, %v4041
    %v5114 = vpack.c.b16 %v4050, %v4046
    %v5115 = vpack.c.b16 %v4051, %v4047
    %v5116 = vpack.c.b16 %v4052, %v4048
    %v5117 = vpack.c.b16 %v4053, %v4049
    %v5118 = vpack.c.b16 %v4058, %v4054
    %v5119 = vpack.c.b16 %v4059, %v4055
    %v5120 = vpack.c.b16 %v4060, %v4056
    %v5121 = vpack.c.b16 %v4061, %v4057
    %v5122 = vpack.c.b16 %v4066, %v4062
    %v5123 = vpack.c.b16 %v4067, %v4063
    %v5124 = vpack.c.b16 %v4068, %v4064
    %v5125 = vpack.c.b16 %v4069, %v4065
    %v5126 = vpack.c.b16 %v4074, %v4070
    %v5127 = vpack.c.b16 %v4075, %v4071
    %v5128 = vpack.c.b16 %v4076, %v4072
    %v5129 = vpack.c.b16 %v4077, %v4073
    %v5130 = vpack.c.b16 %v4082, %v4078
    %v5131 = vpack.c.b16 %v4083, %v4079
    %v5132 = vpack.c.b16 %v4084, %v4080
    %v5133 = vpack.c.b16 %v4085, %v4081
    %v5134 = vpack.c.b16 %v4090, %v4086
    %v5135 = vpack.c.b16 %v4091, %v4087
    %v5136 = vpack.c.b16 %v4092, %v4088
    %v5137 = vpack.c.b16 %v4093, %v4089
    %v5138 = vpack.c.b16 %v4098, %v4094
    %v5139 = vpack.c.b16 %v4099, %v4095
    %v5140 = vpack.c.b16 %v4100, %v4096
    %v5141 = vpack.c.b16 %v4101, %v4097
    %v5142 = vpack.c.b16 %v4106, %v4102
    %v5143 = vpack.c.b16 %v4107, %v4103
    %v5144 = vpack.c.b16 %v4108, %v4104
    %v5145 = vpack.c.b16 %v4109, %v4105
    %v5146 = vpack.c.b16 %v4114, %v4110
    %v5147 = vpack.c.b16 %v4115, %v4111
    %v5148 = vpack.c.b16 %v4116, %v4112
    %v5149 = vpack.c.b16 %v4117, %v4113
    %v5150 = vpack.c.b16 %v4122, %v4118
    %v5151 = vpack.c.b16 %v4123, %v4119
    %v5152 = vpack.c.b16 %v4124, %v4120
    %v5153 = vpack.c.b16 %v4125, %v4121
    %v5154 = vpack.c.b16 %v4130, %v4126
    %v5155 = vpack.c.b16 %v4131, %v4127
    %v5156 = vpack.c.b16 %v4132, %v4128
    %v5157 = vpack.c.b16 %v4133, %v4129
    %v5158 = vpack.c.b16 %v4138, %v4134
    %v5159 = vpack.c.b16 %v4139, %v4135
    %v5160 = vpack.c.b16 %v4140, %v4136
    %v5161 = vpack.c.b16 %v4141, %v4137
    %v5162 = vpack.c.b16 %v4146, %v4142
    %v5163 = vpack.c.b16 %v4147, %v4143
    %v5164 = vpack.c.b16 %v4148, %v4144
    %v5165 = vpack.c.b16 %v4149, %v4145
    %v5166 = vpack.c.b16 %v4154, %v4150
    %v5167 = vpack.c.b16 %v4155, %v4151
    %v5168 = vpack.c.b16 %v4156, %v4152
    %v5169 = vpack.c.b16 %v4157, %v4153
    %v5170 = vpack.c.b16 %v4162, %v4158
    %v5171 = vpack.c.b16 %v4163, %v4159
    %v5172 = vpack.c.b16 %v4164, %v4160
    %v5173 = vpack.c.b16 %v4165, %v4161
    %v5174 = vpack.c.b16 %v4170, %v4166
    %v5175 = vpack.c.b16 %v4171, %v4167
    %v5176 = vpack.c.b16 %v4172, %v4168
    %v5177 = vpack.c.b16 %v4173, %v4169
    %v5178 = vpack.c.b16 %v4178, %v4174
    %v5179 = vpack.c.b16 %v4179, %v4175
    %v5180 = vpack.c.b16 %v4180, %v4176
    %v5181 = vpack.c.b16 %v4181, %v4177
    %v5182 = vpack.c.b16 %v4186, %v4182
    %v5183 = vpack.c.b16 %v4187, %v4183
    %v5184 = vpack.c.b16 %v4188, %v4184
    %v5185 = vpack.c.b16 %v4189, %v4185
    %v5186 = vpack.c.b16 %v4194, %v4190
    %v5187 = vpack.c.b16 %v4195, %v4191
    %v5188 = vpack.c.b16 %v4196, %v4192
    %v5189 = vpack.c.b16 %v4197, %v4193
    %v5190 = vpack.c.b16 %v4202, %v4198
    %v5191 = vpack.c.b16 %v4203, %v4199
    %v5192 = vpack.c.b16 %v4204, %v4200
    %v5193 = vpack.c.b16 %v4205, %v4201
    %v5194 = vpack.c.b16 %v4210, %v4206
    %v5195 = vpack.c.b16 %v4211, %v4207
    %v5196 = vpack.c.b16 %v4212, %v4208
    %v5197 = vpack.c.b16 %v4213, %v4209
    %v5198 = vpack.c.b16 %v4218, %v4214
    %v5199 = vpack.c.b16 %v4219, %v4215
    %v5200 = vpack.c.b16 %v4220, %v4216
    %v5201 = vpack.c.b16 %v4221, %v4217
    %v5202 = vpack.c.b16 %v4226, %v4222
    %v5203 = vpack.c.b16 %v4227, %v4223
    %v5204 = vpack.c.b16 %v4228, %v4224
    %v5205 = vpack.c.b16 %v4229, %v4225
    %v5206 = vpack.c.b16 %v4234, %v4230
    %v5207 = vpack.c.b16 %v4235, %v4231
    %v5208 = vpack.c.b16 %v4236, %v4232
    %v5209 = vpack.c.b16 %v4237, %v4233
    %v5210 = vpack.c.b16 %v4242, %v4238
    %v5211 = vpack.c.b16 %v4243, %v4239
    %v5212 = vpack.c.b16 %v4244, %v4240
    %v5213 = vpack.c.b16 %v4245, %v4241
    %v5214 = vpack.c.b16 %v4250, %v4246
    %v5215 = vpack.c.b16 %v4251, %v4247
    %v5216 = vpack.c.b16 %v4252, %v4248
    %v5217 = vpack.c.b16 %v4253, %v4249
    %v5218 = vpack.c.b16 %v4258, %v4254
    %v5219 = vpack.c.b16 %v4259, %v4255
    %v5220 = vpack.c.b16 %v4260, %v4256
    %v5221 = vpack.c.b16 %v4261, %v4257
    %v5222 = vpack.c.b16 %v4266, %v4262
    %v5223 = vpack.c.b16 %v4267, %v4263
    %v5224 = vpack.c.b16 %v4268, %v4264
    %v5225 = vpack.c.b16 %v4269, %v4265
    %v5226 = vpack.c.b16 %v4274, %v4270
    %v5227 = vpack.c.b16 %v4275, %v4271
    %v5228 = vpack.c.b16 %v4276, %v4272
    %v5229 = vpack.c.b16 %v4277, %v4273
    %v5230 = vpack.c.b16 %v4282, %v4278
    %v5231 = vpack.c.b16 %v4283, %v4279
    %v5232 = vpack.c.b16 %v4284, %v4280
    %v5233 = vpack.c.b16 %v4285, %v4281
    %v5234 = vpack.c.b16 %v4290, %v4286
    %v5235 = vpack.c.b16 %v4291, %v4287
    %v5236 = vpack.c.b16 %v4292, %v4288
    %v5237 = vpack.c.b16 %v4293, %v4289
    %v5238 = vpack.c.b16 %v4298, %v4294
    %v5239 = vpack.c.b16 %v4299, %v4295
    %v5240 = vpack.c.b16 %v4300, %v4296
    %v5241 = vpack.c.b16 %v4301, %v4297
    %v5242 = vpack.c.b16 %v4306, %v4302
    %v5243 = vpack.c.b16 %v4307, %v4303
    %v5244 = vpack.c.b16 %v4308, %v4304
    %v5245 = vpack.c.b16 %v4309, %v4305
    %v5246 = vpack.c.b16 %v4314, %v4310
    %v5247 = vpack.c.b16 %v4315, %v4311
    %v5248 = vpack.c.b16 %v4316, %v4312
    %v5249 = vpack.c.b16 %v4317, %v4313
    %v5250 = vpack.c.b16 %v4322, %v4318
    %v5251 = vpack.c.b16 %v4323, %v4319
    %v5252 = vpack.c.b16 %v4324, %v4320
    %v5253 = vpack.c.b16 %v4325, %v4321
    %v5254 = vpack.c.b16 %v4330, %v4326
    %v5255 = vpack.c.b16 %v4331, %v4327
    %v5256 = vpack.c.b16 %v4332, %v4328
    %v5257 = vpack.c.b16 %v4333, %v4329
    %v5258 = vpack.c.b16 %v4338, %v4334
    %v5259 = vpack.c.b16 %v4339, %v4335
    %v5260 = vpack.c.b16 %v4340, %v4336
    %v5261 = vpack.c.b16 %v4341, %v4337
    %v5262 = vpack.c.b16 %v4346, %v4342
    %v5263 = vpack.c.b16 %v4347, %v4343
    %v5264 = vpack.c.b16 %v4348, %v4344
    %v5265 = vpack.c.b16 %v4349, %v4345
    %v5266 = vpack.c.b16 %v4354, %v4350
    %v5267 = vpack.c.b16 %v4355, %v4351
    %v5268 = vpack.c.b16 %v4356, %v4352
    %v5269 = vpack.c.b16 %v4357, %v4353
    %v5270 = vpack.c.b16 %v4362, %v4358
    %v5271 = vpack.c.b16 %v4363, %v4359
    %v5272 = vpack.c.b16 %v4364, %v4360
    %v5273 = vpack.c.b16 %v4365, %v4361
    %v5274 = vpack.c.b16 %v4370, %v4366
    %v5275 = vpack.c.b16 %v4371, %v4367
    %v5276 = vpack.c.b16 %v4372, %v4368
    %v5277 = vpack.c.b16 %v4373, %v4369
    %v5278 = vpack.c.b16 %v4378, %v4374
    %v5279 = vpack.c.b16 %v4379, %v4375
    %v5280 = vpack.c.b16 %v4380, %v4376
    %v5281 = vpack.c.b16 %v4381, %v4377
    %v5282 = vpack.c.b16 %v4386, %v4382
    %v5283 = vpack.c.b16 %v4387, %v4383
    %v5284 = vpack.c.b16 %v4388, %v4384
    %v5285 = vpack.c.b16 %v4389, %v4385
    %v5286 = vpack.c.b16 %v4394, %v4390
    %v5287 = vpack.c.b16 %v4395, %v4391
    %v5288 = vpack.c.b16 %v4396, %v4392
    %v5289 = vpack.c.b16 %v4397, %v4393
    %v5290 = vpack.c.b16 %v4402, %v4398
    %v5291 = vpack.c.b16 %v4403, %v4399
    %v5292 = vpack.c.b16 %v4404, %v4400
    %v5293 = vpack.c.b16 %v4405, %v4401
    %v5294 = vpack.c.b16 %v4410, %v4406
    %v5295 = vpack.c.b16 %v4411, %v4407
    %v5296 = vpack.c.b16 %v4412, %v4408
    %v5297 = vpack.c.b16 %v4413, %v4409
    %v5298 = vpack.c.b16 %v4418, %v4414
    %v5299 = vpack.c.b16 %v4419, %v4415
    %v5300 = vpack.c.b16 %v4420, %v4416
    %v5301 = vpack.c.b16 %v4421, %v4417
    %v5302 = vpack.c.b16 %v4426, %v4422
    %v5303 = vpack.c.b16 %v4427, %v4423
    %v5304 = vpack.c.b16 %v4428, %v4424
    %v5305 = vpack.c.b16 %v4429, %v4425
    %v5306 = vpack.c.b16 %v4434, %v4430
    %v5307 = vpack.c.b16 %v4435, %v4431
    %v5308 = vpack.c.b16 %v4436, %v4432
    %v5309 = vpack.c.b16 %v4437, %v4433
    %v5310 = vpack.c.b16 %v4442, %v4438
    %v5311 = vpack.c.b16 %v4443, %v4439
    %v5312 = vpack.c.b16 %v4444, %v4440
    %v5313 = vpack.c.b16 %v4445, %v4441
    %v5314 = vpack.c.b16 %v4450, %v4446
    %v5315 = vpack.c.b16 %v4451, %v4447
    %v5316 = vpack.c.b16 %v4452, %v4448
    %v5317 = vpack.c.b16 %v4453, %v4449
    %6182 = vmatprep.subr.bf16.mxu0 %v4455
    %6183 = vmatpush1.bf16.msra.mxu0 %v4454
    %6184 = vmatprep.subr.bf16.mxu0 %v4459
    %6185 = vmatpush1.bf16.msra.mxu0 %v4458
    %6186 = vmatprep.subr.bf16.mxu0 %v4463
    %6187 = vmatpush1.bf16.msra.mxu0 %v4462
    %6188 = vmatprep.subr.bf16.mxu0 %v4467
    %6189 = vmatpush1.bf16.msra.mxu0 %v4466
    %6190 = vmatprep.subr.bf16.mxu0 %v4471
    %6191 = vmatpush1.bf16.msra.mxu0 %v4470
    %6192 = vmatprep.subr.bf16.mxu0 %v4475
    %6193 = vmatpush1.bf16.msra.mxu0 %v4474
    %6194 = vmatprep.subr.bf16.mxu0 %v4479
    %6195 = vmatpush1.bf16.msra.mxu0 %v4478
    %6196 = vmatprep.subr.bf16.mxu0 %v4483
    %6197 = vmatpush1.bf16.msra.mxu0 %v4482
    %6198 = vmatprep.subr.bf16.mxu0 %v4487
    %6199 = vmatpush1.bf16.msra.mxu0 %v4486
    %6200 = vmatprep.subr.bf16.mxu0 %v4491
    %6201 = vmatpush1.bf16.msra.mxu0 %v4490
    %6202 = vmatprep.subr.bf16.mxu0 %v4495
    %6203 = vmatpush1.bf16.msra.mxu0 %v4494
    %6204 = vmatprep.subr.bf16.mxu0 %v4499
    %6205 = vmatpush1.bf16.msra.mxu0 %v4498
    %6206 = vmatprep.subr.bf16.mxu0 %v4503
    %6207 = vmatpush1.bf16.msra.mxu0 %v4502
    %6208 = vmatprep.subr.bf16.mxu0 %v4507
    %6209 = vmatpush1.bf16.msra.mxu0 %v4506
    %6210 = vmatprep.subr.bf16.mxu0 %v4511
    %6211 = vmatpush1.bf16.msra.mxu0 %v4510
    %6212 = vmatprep.subr.bf16.mxu0 %v4515
    %6213 = vmatpush1.bf16.msra.mxu0 %v4514
    %6214 = vmatprep.mubr.bf16.mxu0 %v964
    %6215 = vmatmul.mubr.bf16.gmra.mrb[0].mxu0 %v963
    %v6216 = vpop.f32.mrb[0].mxu0
    %v6217 = vadd.f32 %v1854, %v6216
    %v6218 = vpop.f32.mrb[0].mxu0
    %v6219 = vadd.f32 %v1855, %v6218
    %v6220 = vpop.f32.mrb[0].mxu0
    %v6221 = vadd.f32 %v1858, %v6220
    %v6222 = vpop.f32.mrb[0].mxu0
    %v6223 = vadd.f32 %v1859, %v6222
    %6224 = vdwg.mxu0
    %6225 = vmatprep.subr.bf16.mxu0 %v4519
    %6226 = vmatpush1.bf16.msra.mxu0 %v4518
    %6227 = vmatprep.subr.bf16.mxu0 %v4523
    %6228 = vmatpush1.bf16.msra.mxu0 %v4522
    %6229 = vmatprep.subr.bf16.mxu0 %v4527
    %6230 = vmatpush1.bf16.msra.mxu0 %v4526
    %6231 = vmatprep.subr.bf16.mxu0 %v4531
    %6232 = vmatpush1.bf16.msra.mxu0 %v4530
    %6233 = vmatprep.subr.bf16.mxu0 %v4535
    %6234 = vmatpush1.bf16.msra.mxu0 %v4534
    %6235 = vmatprep.subr.bf16.mxu0 %v4539
    %6236 = vmatpush1.bf16.msra.mxu0 %v4538
    %6237 = vmatprep.subr.bf16.mxu0 %v4543
    %6238 = vmatpush1.bf16.msra.mxu0 %v4542
    %6239 = vmatprep.subr.bf16.mxu0 %v4547
    %6240 = vmatpush1.bf16.msra.mxu0 %v4546
    %6241 = vmatprep.subr.bf16.mxu0 %v4551
    %6242 = vmatpush1.bf16.msra.mxu0 %v4550
    %6243 = vmatprep.subr.bf16.mxu0 %v4555
    %6244 = vmatpush1.bf16.msra.mxu0 %v4554
    %6245 = vmatprep.subr.bf16.mxu0 %v4559
    %6246 = vmatpush1.bf16.msra.mxu0 %v4558
    %6247 = vmatprep.subr.bf16.mxu0 %v4563
    %6248 = vmatpush1.bf16.msra.mxu0 %v4562
    %6249 = vmatprep.subr.bf16.mxu0 %v4567
    %6250 = vmatpush1.bf16.msra.mxu0 %v4566
    %6251 = vmatprep.subr.bf16.mxu0 %v4571
    %6252 = vmatpush1.bf16.msra.mxu0 %v4570
    %6253 = vmatprep.subr.bf16.mxu0 %v4575
    %6254 = vmatpush1.bf16.msra.mxu0 %v4574
    %6255 = vmatprep.subr.bf16.mxu0 %v4579
    %6256 = vmatpush1.bf16.msra.mxu0 %v4578
    %6257 = vmatprep.mubr.bf16.mxu0 %v966
    %6258 = vmatmul.mubr.bf16.gmra.mrb[0].mxu0 %v965
    %v6259 = vpop.f32.mrb[0].mxu0
    %v6260 = vadd.f32 %v6217, %v6259
    %v6261 = vpop.f32.mrb[0].mxu0
    %v6262 = vadd.f32 %v6219, %v6261
    %v6263 = vpop.f32.mrb[0].mxu0
    %v6264 = vadd.f32 %v6221, %v6263
    %v6265 = vpop.f32.mrb[0].mxu0
    %v6266 = vadd.f32 %v6223, %v6265
    %6267 = vdwg.mxu0
    %6268 = vmatprep.subr.bf16.mxu0 %v4583
    %6269 = vmatpush1.bf16.msra.mxu0 %v4582
    %6270 = vmatprep.subr.bf16.mxu0 %v4587
    %6271 = vmatpush1.bf16.msra.mxu0 %v4586
    %6272 = vmatprep.subr.bf16.mxu0 %v4591
    %6273 = vmatpush1.bf16.msra.mxu0 %v4590
    %6274 = vmatprep.subr.bf16.mxu0 %v4595
    %6275 = vmatpush1.bf16.msra.mxu0 %v4594
    %6276 = vmatprep.subr.bf16.mxu0 %v4599
    %6277 = vmatpush1.bf16.msra.mxu0 %v4598
    %6278 = vmatprep.subr.bf16.mxu0 %v4603
    %6279 = vmatpush1.bf16.msra.mxu0 %v4602
    %6280 = vmatprep.subr.bf16.mxu0 %v4607
    %6281 = vmatpush1.bf16.msra.mxu0 %v4606
    %6282 = vmatprep.subr.bf16.mxu0 %v4611
    %6283 = vmatpush1.bf16.msra.mxu0 %v4610
    %6284 = vmatprep.subr.bf16.mxu0 %v4615
    %6285 = vmatpush1.bf16.msra.mxu0 %v4614
    %6286 = vmatprep.subr.bf16.mxu0 %v4619
    %6287 = vmatpush1.bf16.msra.mxu0 %v4618
    %6288 = vmatprep.subr.bf16.mxu0 %v4623
    %6289 = vmatpush1.bf16.msra.mxu0 %v4622
    %6290 = vmatprep.subr.bf16.mxu0 %v4627
    %6291 = vmatpush1.bf16.msra.mxu0 %v4626
    %6292 = vmatprep.subr.bf16.mxu0 %v4631
    %6293 = vmatpush1.bf16.msra.mxu0 %v4630
    %6294 = vmatprep.subr.bf16.mxu0 %v4635
    %6295 = vmatpush1.bf16.msra.mxu0 %v4634
    %6296 = vmatprep.subr.bf16.mxu0 %v4639
    %6297 = vmatpush1.bf16.msra.mxu0 %v4638
    %6298 = vmatprep.subr.bf16.mxu0 %v4643
    %6299 = vmatpush1.bf16.msra.mxu0 %v4642
    %6300 = vmatprep.mubr.bf16.mxu0 %v968
    %6301 = vmatmul.mubr.bf16.gmra.mrb[0].mxu0 %v967
    %v6302 = vpop.f32.mrb[0].mxu0
    %v6303 = vadd.f32 %v6260, %v6302
    %v6304 = vpop.f32.mrb[0].mxu0
    %v6305 = vadd.f32 %v6262, %v6304
    %v6306 = vpop.f32.mrb[0].mxu0
    %v6307 = vadd.f32 %v6264, %v6306
    %v6308 = vpop.f32.mrb[0].mxu0
    %v6309 = vadd.f32 %v6266, %v6308
    %6310 = vdwg.mxu0
    %6311 = vmatprep.subr.bf16.mxu0 %v4647
    %6312 = vmatpush1.bf16.msra.mxu0 %v4646
    %6313 = vmatprep.subr.bf16.mxu0 %v4651
    %6314 = vmatpush1.bf16.msra.mxu0 %v4650
    %6315 = vmatprep.subr.bf16.mxu0 %v4655
    %6316 = vmatpush1.bf16.msra.mxu0 %v4654
    %6317 = vmatprep.subr.bf16.mxu0 %v4659
    %6318 = vmatpush1.bf16.msra.mxu0 %v4658
    %6319 = vmatprep.subr.bf16.mxu0 %v4663
    %6320 = vmatpush1.bf16.msra.mxu0 %v4662
    %6321 = vmatprep.subr.bf16.mxu0 %v4667
    %6322 = vmatpush1.bf16.msra.mxu0 %v4666
    %6323 = vmatprep.subr.bf16.mxu0 %v4671
    %6324 = vmatpush1.bf16.msra.mxu0 %v4670
    %6325 = vmatprep.subr.bf16.mxu0 %v4675
    %6326 = vmatpush1.bf16.msra.mxu0 %v4674
    %6327 = vmatprep.subr.bf16.mxu0 %v4679
    %6328 = vmatpush1.bf16.msra.mxu0 %v4678
    %6329 = vmatprep.subr.bf16.mxu0 %v4683
    %6330 = vmatpush1.bf16.msra.mxu0 %v4682
    %6331 = vmatprep.subr.bf16.mxu0 %v4687
    %6332 = vmatpush1.bf16.msra.mxu0 %v4686
    %6333 = vmatprep.subr.bf16.mxu0 %v4691
    %6334 = vmatpush1.bf16.msra.mxu0 %v4690
    %6335 = vmatprep.subr.bf16.mxu0 %v4695
    %6336 = vmatpush1.bf16.msra.mxu0 %v4694
    %6337 = vmatprep.subr.bf16.mxu0 %v4699
    %6338 = vmatpush1.bf16.msra.mxu0 %v4698
    %6339 = vmatprep.subr.bf16.mxu0 %v4703
    %6340 = vmatpush1.bf16.msra.mxu0 %v4702
    %6341 = vmatprep.subr.bf16.mxu0 %v4707
    %6342 = vmatpush1.bf16.msra.mxu0 %v4706
    %6343 = vmatprep.mubr.bf16.mxu0 %v970
    %6344 = vmatmul.mubr.bf16.gmra.mrb[0].mxu0 %v969
    %v6345 = vpop.f32.mrb[0].mxu0
    %v6346 = vadd.f32 %v6303, %v6345
    %v6347 = vpop.f32.mrb[0].mxu0
    %v6348 = vadd.f32 %v6305, %v6347
    %v6349 = vpop.f32.mrb[0].mxu0
    %v6350 = vadd.f32 %v6307, %v6349
    %v6351 = vpop.f32.mrb[0].mxu0
    %v6352 = vadd.f32 %v6309, %v6351
    %6353 = vdwg.mxu0
    %6354 = vmatprep.subr.bf16.mxu0 %v4711
    %6355 = vmatpush1.bf16.msra.mxu0 %v4710
    %6356 = vmatprep.subr.bf16.mxu0 %v4715
    %6357 = vmatpush1.bf16.msra.mxu0 %v4714
    %6358 = vmatprep.subr.bf16.mxu0 %v4719
    %6359 = vmatpush1.bf16.msra.mxu0 %v4718
    %6360 = vmatprep.subr.bf16.mxu0 %v4723
    %6361 = vmatpush1.bf16.msra.mxu0 %v4722
    %6362 = vmatprep.subr.bf16.mxu0 %v4727
    %6363 = vmatpush1.bf16.msra.mxu0 %v4726
    %6364 = vmatprep.subr.bf16.mxu0 %v4731
    %6365 = vmatpush1.bf16.msra.mxu0 %v4730
    %6366 = vmatprep.subr.bf16.mxu0 %v4735
    %6367 = vmatpush1.bf16.msra.mxu0 %v4734
    %6368 = vmatprep.subr.bf16.mxu0 %v4739
    %6369 = vmatpush1.bf16.msra.mxu0 %v4738
    %6370 = vmatprep.subr.bf16.mxu0 %v4743
    %6371 = vmatpush1.bf16.msra.mxu0 %v4742
    %6372 = vmatprep.subr.bf16.mxu0 %v4747
    %6373 = vmatpush1.bf16.msra.mxu0 %v4746
    %6374 = vmatprep.subr.bf16.mxu0 %v4751
    %6375 = vmatpush1.bf16.msra.mxu0 %v4750
    %6376 = vmatprep.subr.bf16.mxu0 %v4755
    %6377 = vmatpush1.bf16.msra.mxu0 %v4754
    %6378 = vmatprep.subr.bf16.mxu0 %v4759
    %6379 = vmatpush1.bf16.msra.mxu0 %v4758
    %6380 = vmatprep.subr.bf16.mxu0 %v4763
    %6381 = vmatpush1.bf16.msra.mxu0 %v4762
    %6382 = vmatprep.subr.bf16.mxu0 %v4767
    %6383 = vmatpush1.bf16.msra.mxu0 %v4766
    %6384 = vmatprep.subr.bf16.mxu0 %v4771
    %6385 = vmatpush1.bf16.msra.mxu0 %v4770
    %6386 = vmatprep.mubr.bf16.mxu0 %v972
    %6387 = vmatmul.mubr.bf16.gmra.mrb[0].mxu0 %v971
    %v6388 = vpop.f32.mrb[0].mxu0
    %v6389 = vadd.f32 %v6346, %v6388
    %v6390 = vpop.f32.mrb[0].mxu0
    %v6391 = vadd.f32 %v6348, %v6390
    %v6392 = vpop.f32.mrb[0].mxu0
    %v6393 = vadd.f32 %v6350, %v6392
    %v6394 = vpop.f32.mrb[0].mxu0
    %v6395 = vadd.f32 %v6352, %v6394
    %6396 = vdwg.mxu0
    %6397 = vmatprep.subr.bf16.mxu0 %v4775
    %6398 = vmatpush1.bf16.msra.mxu0 %v4774
    %6399 = vmatprep.subr.bf16.mxu0 %v4779
    %6400 = vmatpush1.bf16.msra.mxu0 %v4778
    %6401 = vmatprep.subr.bf16.mxu0 %v4783
    %6402 = vmatpush1.bf16.msra.mxu0 %v4782
    %6403 = vmatprep.subr.bf16.mxu0 %v4787
    %6404 = vmatpush1.bf16.msra.mxu0 %v4786
    %6405 = vmatprep.subr.bf16.mxu0 %v4791
    %6406 = vmatpush1.bf16.msra.mxu0 %v4790
    %6407 = vmatprep.subr.bf16.mxu0 %v4795
    %6408 = vmatpush1.bf16.msra.mxu0 %v4794
    %6409 = vmatprep.subr.bf16.mxu0 %v4799
    %6410 = vmatpush1.bf16.msra.mxu0 %v4798
    %6411 = vmatprep.subr.bf16.mxu0 %v4803
    %6412 = vmatpush1.bf16.msra.mxu0 %v4802
    %6413 = vmatprep.subr.bf16.mxu0 %v4807
    %6414 = vmatpush1.bf16.msra.mxu0 %v4806
    %6415 = vmatprep.subr.bf16.mxu0 %v4811
    %6416 = vmatpush1.bf16.msra.mxu0 %v4810
    %6417 = vmatprep.subr.bf16.mxu0 %v4815
    %6418 = vmatpush1.bf16.msra.mxu0 %v4814
    %6419 = vmatprep.subr.bf16.mxu0 %v4819
    %6420 = vmatpush1.bf16.msra.mxu0 %v4818
    %6421 = vmatprep.subr.bf16.mxu0 %v4823
    %6422 = vmatpush1.bf16.msra.mxu0 %v4822
    %6423 = vmatprep.subr.bf16.mxu0 %v4827
    %6424 = vmatpush1.bf16.msra.mxu0 %v4826
    %6425 = vmatprep.subr.bf16.mxu0 %v4831
    %6426 = vmatpush1.bf16.msra.mxu0 %v4830
    %6427 = vmatprep.subr.bf16.mxu0 %v4835
    %6428 = vmatpush1.bf16.msra.mxu0 %v4834
    %6429 = vmatprep.mubr.bf16.mxu0 %v974
    %6430 = vmatmul.mubr.bf16.gmra.mrb[0].mxu0 %v973
    %v6431 = vpop.f32.mrb[0].mxu0
    %v6432 = vadd.f32 %v6389, %v6431
    %v6433 = vpop.f32.mrb[0].mxu0
    %v6434 = vadd.f32 %v6391, %v6433
    %v6435 = vpop.f32.mrb[0].mxu0
    %v6436 = vadd.f32 %v6393, %v6435
    %v6437 = vpop.f32.mrb[0].mxu0
    %v6438 = vadd.f32 %v6395, %v6437
    %6439 = vdwg.mxu0
    %6440 = vmatprep.subr.bf16.mxu0 %v4839
    %6441 = vmatpush1.bf16.msra.mxu0 %v4838
    %6442 = vmatprep.subr.bf16.mxu0 %v4843
    %6443 = vmatpush1.bf16.msra.mxu0 %v4842
    %6444 = vmatprep.subr.bf16.mxu0 %v4847
    %6445 = vmatpush1.bf16.msra.mxu0 %v4846
    %6446 = vmatprep.subr.bf16.mxu0 %v4851
    %6447 = vmatpush1.bf16.msra.mxu0 %v4850
    %6448 = vmatprep.subr.bf16.mxu0 %v4855
    %6449 = vmatpush1.bf16.msra.mxu0 %v4854
    %6450 = vmatprep.subr.bf16.mxu0 %v4859
    %6451 = vmatpush1.bf16.msra.mxu0 %v4858
    %6452 = vmatprep.subr.bf16.mxu0 %v4863
    %6453 = vmatpush1.bf16.msra.mxu0 %v4862
    %6454 = vmatprep.subr.bf16.mxu0 %v4867
    %6455 = vmatpush1.bf16.msra.mxu0 %v4866
    %6456 = vmatprep.subr.bf16.mxu0 %v4871
    %6457 = vmatpush1.bf16.msra.mxu0 %v4870
    %6458 = vmatprep.subr.bf16.mxu0 %v4875
    %6459 = vmatpush1.bf16.msra.mxu0 %v4874
    %6460 = vmatprep.subr.bf16.mxu0 %v4879
    %6461 = vmatpush1.bf16.msra.mxu0 %v4878
    %6462 = vmatprep.subr.bf16.mxu0 %v4883
    %6463 = vmatpush1.bf16.msra.mxu0 %v4882
    %6464 = vmatprep.subr.bf16.mxu0 %v4887
    %6465 = vmatpush1.bf16.msra.mxu0 %v4886
    %6466 = vmatprep.subr.bf16.mxu0 %v4891
    %6467 = vmatpush1.bf16.msra.mxu0 %v4890
    %6468 = vmatprep.subr.bf16.mxu0 %v4895
    %6469 = vmatpush1.bf16.msra.mxu0 %v4894
    %6470 = vmatprep.subr.bf16.mxu0 %v4899
    %6471 = vmatpush1.bf16.msra.mxu0 %v4898
    %6472 = vmatprep.mubr.bf16.mxu0 %v976
    %6473 = vmatmul.mubr.bf16.gmra.mrb[0].mxu0 %v975
    %v6474 = vpop.f32.mrb[0].mxu0
    %v6475 = vadd.f32 %v6432, %v6474
    %v6476 = vpop.f32.mrb[0].mxu0
    %v6477 = vadd.f32 %v6434, %v6476
    %v6478 = vpop.f32.mrb[0].mxu0
    %v6479 = vadd.f32 %v6436, %v6478
    %v6480 = vpop.f32.mrb[0].mxu0
    %v6481 = vadd.f32 %v6438, %v6480
    %6482 = vdwg.mxu0
    %6483 = vmatprep.subr.bf16.mxu0 %v4903
    %6484 = vmatpush1.bf16.msra.mxu0 %v4902
    %6485 = vmatprep.subr.bf16.mxu0 %v4907
    %6486 = vmatpush1.bf16.msra.mxu0 %v4906
    %6487 = vmatprep.subr.bf16.mxu0 %v4911
    %6488 = vmatpush1.bf16.msra.mxu0 %v4910
    %6489 = vmatprep.subr.bf16.mxu0 %v4915
    %6490 = vmatpush1.bf16.msra.mxu0 %v4914
    %6491 = vmatprep.subr.bf16.mxu0 %v4919
    %6492 = vmatpush1.bf16.msra.mxu0 %v4918
    %6493 = vmatprep.subr.bf16.mxu0 %v4923
    %6494 = vmatpush1.bf16.msra.mxu0 %v4922
    %6495 = vmatprep.subr.bf16.mxu0 %v4927
    %6496 = vmatpush1.bf16.msra.mxu0 %v4926
    %6497 = vmatprep.subr.bf16.mxu0 %v4931
    %6498 = vmatpush1.bf16.msra.mxu0 %v4930
    %6499 = vmatprep.subr.bf16.mxu0 %v4935
    %6500 = vmatpush1.bf16.msra.mxu0 %v4934
    %6501 = vmatprep.subr.bf16.mxu0 %v4939
    %6502 = vmatpush1.bf16.msra.mxu0 %v4938
    %6503 = vmatprep.subr.bf16.mxu0 %v4943
    %6504 = vmatpush1.bf16.msra.mxu0 %v4942
    %6505 = vmatprep.subr.bf16.mxu0 %v4947
    %6506 = vmatpush1.bf16.msra.mxu0 %v4946
    %6507 = vmatprep.subr.bf16.mxu0 %v4951
    %6508 = vmatpush1.bf16.msra.mxu0 %v4950
    %6509 = vmatprep.subr.bf16.mxu0 %v4955
    %6510 = vmatpush1.bf16.msra.mxu0 %v4954
    %6511 = vmatprep.subr.bf16.mxu0 %v4959
    %6512 = vmatpush1.bf16.msra.mxu0 %v4958
    %6513 = vmatprep.subr.bf16.mxu0 %v4963
    %6514 = vmatpush1.bf16.msra.mxu0 %v4962
    %6515 = vmatprep.mubr.bf16.mxu0 %v978
    %6516 = vmatmul.mubr.bf16.gmra.mrb[0].mxu0 %v977
    %v6517 = vpop.f32.mrb[0].mxu0
    %v6518 = vadd.f32 %v6475, %v6517
    %v6519 = vpop.f32.mrb[0].mxu0
    %v6520 = vadd.f32 %v6477, %v6519
    %v6521 = vpop.f32.mrb[0].mxu0
    %v6522 = vadd.f32 %v6479, %v6521
    %v6523 = vpop.f32.mrb[0].mxu0
    %v6524 = vadd.f32 %v6481, %v6523
    %6525 = vdwg.mxu0
    %6526 = vmatprep.subr.bf16.mxu0 %v4967
    %6527 = vmatpush1.bf16.msra.mxu0 %v4966
    %6528 = vmatprep.subr.bf16.mxu0 %v4971
    %6529 = vmatpush1.bf16.msra.mxu0 %v4970
    %6530 = vmatprep.subr.bf16.mxu0 %v4975
    %6531 = vmatpush1.bf16.msra.mxu0 %v4974
    %6532 = vmatprep.subr.bf16.mxu0 %v4979
    %6533 = vmatpush1.bf16.msra.mxu0 %v4978
    %6534 = vmatprep.subr.bf16.mxu0 %v4983
    %6535 = vmatpush1.bf16.msra.mxu0 %v4982
    %6536 = vmatprep.subr.bf16.mxu0 %v4987
    %6537 = vmatpush1.bf16.msra.mxu0 %v4986
    %6538 = vmatprep.subr.bf16.mxu0 %v4991
    %6539 = vmatpush1.bf16.msra.mxu0 %v4990
    %6540 = vmatprep.subr.bf16.mxu0 %v4995
    %6541 = vmatpush1.bf16.msra.mxu0 %v4994
    %6542 = vmatprep.subr.bf16.mxu0 %v4999
    %6543 = vmatpush1.bf16.msra.mxu0 %v4998
    %6544 = vmatprep.subr.bf16.mxu0 %v5003
    %6545 = vmatpush1.bf16.msra.mxu0 %v5002
    %6546 = vmatprep.subr.bf16.mxu0 %v5007
    %6547 = vmatpush1.bf16.msra.mxu0 %v5006
    %6548 = vmatprep.subr.bf16.mxu0 %v5011
    %6549 = vmatpush1.bf16.msra.mxu0 %v5010
    %6550 = vmatprep.subr.bf16.mxu0 %v5015
    %6551 = vmatpush1.bf16.msra.mxu0 %v5014
    %6552 = vmatprep.subr.bf16.mxu0 %v5019
    %6553 = vmatpush1.bf16.msra.mxu0 %v5018
    %6554 = vmatprep.subr.bf16.mxu0 %v5023
    %6555 = vmatpush1.bf16.msra.mxu0 %v5022
    %6556 = vmatprep.subr.bf16.mxu0 %v5027
    %6557 = vmatpush1.bf16.msra.mxu0 %v5026
    %6558 = vmatprep.mubr.bf16.mxu0 %v980
    %6559 = vmatmul.mubr.bf16.gmra.mrb[0].mxu0 %v979
    %v6560 = vpop.f32.mrb[0].mxu0
    %v6561 = vadd.f32 %v6518, %v6560
    %v6562 = vpop.f32.mrb[0].mxu0
    %v6563 = vadd.f32 %v6520, %v6562
    %v6564 = vpop.f32.mrb[0].mxu0
    %v6565 = vadd.f32 %v6522, %v6564
    %v6566 = vpop.f32.mrb[0].mxu0
    %v6567 = vadd.f32 %v6524, %v6566
    %6568 = vdwg.mxu0
    %6569 = vmatprep.subr.bf16.mxu0 %v5031
    %6570 = vmatpush1.bf16.msra.mxu0 %v5030
    %6571 = vmatprep.subr.bf16.mxu0 %v5035
    %6572 = vmatpush1.bf16.msra.mxu0 %v5034
    %6573 = vmatprep.subr.bf16.mxu0 %v5039
    %6574 = vmatpush1.bf16.msra.mxu0 %v5038
    %6575 = vmatprep.subr.bf16.mxu0 %v5043
    %6576 = vmatpush1.bf16.msra.mxu0 %v5042
    %6577 = vmatprep.subr.bf16.mxu0 %v5047
    %6578 = vmatpush1.bf16.msra.mxu0 %v5046
    %6579 = vmatprep.subr.bf16.mxu0 %v5051
    %6580 = vmatpush1.bf16.msra.mxu0 %v5050
    %6581 = vmatprep.subr.bf16.mxu0 %v5055
    %6582 = vmatpush1.bf16.msra.mxu0 %v5054
    %6583 = vmatprep.subr.bf16.mxu0 %v5059
    %6584 = vmatpush1.bf16.msra.mxu0 %v5058
    %6585 = vmatprep.subr.bf16.mxu0 %v5063
    %6586 = vmatpush1.bf16.msra.mxu0 %v5062
    %6587 = vmatprep.subr.bf16.mxu0 %v5067
    %6588 = vmatpush1.bf16.msra.mxu0 %v5066
    %6589 = vmatprep.subr.bf16.mxu0 %v5071
    %6590 = vmatpush1.bf16.msra.mxu0 %v5070
    %6591 = vmatprep.subr.bf16.mxu0 %v5075
    %6592 = vmatpush1.bf16.msra.mxu0 %v5074
    %6593 = vmatprep.subr.bf16.mxu0 %v5079
    %6594 = vmatpush1.bf16.msra.mxu0 %v5078
    %6595 = vmatprep.subr.bf16.mxu0 %v5083
    %6596 = vmatpush1.bf16.msra.mxu0 %v5082
    %6597 = vmatprep.subr.bf16.mxu0 %v5087
    %6598 = vmatpush1.bf16.msra.mxu0 %v5086
    %6599 = vmatprep.subr.bf16.mxu0 %v5091
    %6600 = vmatpush1.bf16.msra.mxu0 %v5090
    %6601 = vmatprep.mubr.bf16.mxu0 %v982
    %6602 = vmatmul.mubr.bf16.gmra.mrb[0].mxu0 %v981
    %v6603 = vpop.f32.mrb[0].mxu0
    %v6604 = vadd.f32 %v6561, %v6603
    %v6605 = vpop.f32.mrb[0].mxu0
    %v6606 = vadd.f32 %v6563, %v6605
    %v6607 = vpop.f32.mrb[0].mxu0
    %v6608 = vadd.f32 %v6565, %v6607
    %v6609 = vpop.f32.mrb[0].mxu0
    %v6610 = vadd.f32 %v6567, %v6609
    %6611 = vdwg.mxu0
    %6612 = vmatprep.subr.bf16.mxu0 %v5095
    %6613 = vmatpush1.bf16.msra.mxu0 %v5094
    %6614 = vmatprep.subr.bf16.mxu0 %v5099
    %6615 = vmatpush1.bf16.msra.mxu0 %v5098
    %6616 = vmatprep.subr.bf16.mxu0 %v5103
    %6617 = vmatpush1.bf16.msra.mxu0 %v5102
    %6618 = vmatprep.subr.bf16.mxu0 %v5107
    %6619 = vmatpush1.bf16.msra.mxu0 %v5106
    %6620 = vmatprep.subr.bf16.mxu0 %v5111
    %6621 = vmatpush1.bf16.msra.mxu0 %v5110
    %6622 = vmatprep.subr.bf16.mxu0 %v5115
    %6623 = vmatpush1.bf16.msra.mxu0 %v5114
    %6624 = vmatprep.subr.bf16.mxu0 %v5119
    %6625 = vmatpush1.bf16.msra.mxu0 %v5118
    %6626 = vmatprep.subr.bf16.mxu0 %v5123
    %6627 = vmatpush1.bf16.msra.mxu0 %v5122
    %6628 = vmatprep.subr.bf16.mxu0 %v5127
    %6629 = vmatpush1.bf16.msra.mxu0 %v5126
    %6630 = vmatprep.subr.bf16.mxu0 %v5131
    %6631 = vmatpush1.bf16.msra.mxu0 %v5130
    %6632 = vmatprep.subr.bf16.mxu0 %v5135
    %6633 = vmatpush1.bf16.msra.mxu0 %v5134
    %6634 = vmatprep.subr.bf16.mxu0 %v5139
    %6635 = vmatpush1.bf16.msra.mxu0 %v5138
    %6636 = vmatprep.subr.bf16.mxu0 %v5143
    %6637 = vmatpush1.bf16.msra.mxu0 %v5142
    %6638 = vmatprep.subr.bf16.mxu0 %v5147
    %6639 = vmatpush1.bf16.msra.mxu0 %v5146
    %6640 = vmatprep.subr.bf16.mxu0 %v5151
    %6641 = vmatpush1.bf16.msra.mxu0 %v5150
    %6642 = vmatprep.subr.bf16.mxu0 %v5155
    %6643 = vmatpush1.bf16.msra.mxu0 %v5154
    %6644 = vmatprep.mubr.bf16.mxu0 %v984
    %6645 = vmatmul.mubr.bf16.gmra.mrb[0].mxu0 %v983
    %v6646 = vpop.f32.mrb[0].mxu0
    %v6647 = vadd.f32 %v6604, %v6646
    %v6648 = vpop.f32.mrb[0].mxu0
    %v6649 = vadd.f32 %v6606, %v6648
    %v6650 = vpop.f32.mrb[0].mxu0
    %v6651 = vadd.f32 %v6608, %v6650
    %v6652 = vpop.f32.mrb[0].mxu0
    %v6653 = vadd.f32 %v6610, %v6652
    %6654 = vdwg.mxu0
    %6655 = vmatprep.subr.bf16.mxu0 %v5159
    %6656 = vmatpush1.bf16.msra.mxu0 %v5158
    %6657 = vmatprep.subr.bf16.mxu0 %v5163
    %6658 = vmatpush1.bf16.msra.mxu0 %v5162
    %6659 = vmatprep.subr.bf16.mxu0 %v5167
    %6660 = vmatpush1.bf16.msra.mxu0 %v5166
    %6661 = vmatprep.subr.bf16.mxu0 %v5171
    %6662 = vmatpush1.bf16.msra.mxu0 %v5170
    %6663 = vmatprep.subr.bf16.mxu0 %v5175
    %6664 = vmatpush1.bf16.msra.mxu0 %v5174
    %6665 = vmatprep.subr.bf16.mxu0 %v5179
    %6666 = vmatpush1.bf16.msra.mxu0 %v5178
    %6667 = vmatprep.subr.bf16.mxu0 %v5183
    %6668 = vmatpush1.bf16.msra.mxu0 %v5182
    %6669 = vmatprep.subr.bf16.mxu0 %v5187
    %6670 = vmatpush1.bf16.msra.mxu0 %v5186
    %6671 = vmatprep.subr.bf16.mxu0 %v5191
    %6672 = vmatpush1.bf16.msra.mxu0 %v5190
    %6673 = vmatprep.subr.bf16.mxu0 %v5195
    %6674 = vmatpush1.bf16.msra.mxu0 %v5194
    %6675 = vmatprep.subr.bf16.mxu0 %v5199
    %6676 = vmatpush1.bf16.msra.mxu0 %v5198
    %6677 = vmatprep.subr.bf16.mxu0 %v5203
    %6678 = vmatpush1.bf16.msra.mxu0 %v5202
    %6679 = vmatprep.subr.bf16.mxu0 %v5207
    %6680 = vmatpush1.bf16.msra.mxu0 %v5206
    %6681 = vmatprep.subr.bf16.mxu0 %v5211
    %6682 = vmatpush1.bf16.msra.mxu0 %v5210
    %6683 = vmatprep.subr.bf16.mxu0 %v5215
    %6684 = vmatpush1.bf16.msra.mxu0 %v5214
    %6685 = vmatprep.subr.bf16.mxu0 %v5219
    %6686 = vmatpush1.bf16.msra.mxu0 %v5218
    %6687 = vmatprep.mubr.bf16.mxu0 %v986
    %6688 = vmatmul.mubr.bf16.gmra.mrb[0].mxu0 %v985
    %v6689 = vpop.f32.mrb[0].mxu0
    %v6690 = vadd.f32 %v6647, %v6689
    %v6691 = vpop.f32.mrb[0].mxu0
    %v6692 = vadd.f32 %v6649, %v6691
    %v6693 = vpop.f32.mrb[0].mxu0
    %v6694 = vadd.f32 %v6651, %v6693
    %v6695 = vpop.f32.mrb[0].mxu0
    %v6696 = vadd.f32 %v6653, %v6695
    %6697 = vdwg.mxu0
    %6698 = vmatprep.subr.bf16.mxu0 %v5223
    %6699 = vmatpush1.bf16.msra.mxu0 %v5222
    %6700 = vmatprep.subr.bf16.mxu0 %v5227
    %6701 = vmatpush1.bf16.msra.mxu0 %v5226
    %6702 = vmatprep.subr.bf16.mxu0 %v5231
    %6703 = vmatpush1.bf16.msra.mxu0 %v5230
    %6704 = vmatprep.subr.bf16.mxu0 %v5235
    %6705 = vmatpush1.bf16.msra.mxu0 %v5234
    %6706 = vmatprep.subr.bf16.mxu0 %v5239
    %6707 = vmatpush1.bf16.msra.mxu0 %v5238
    %6708 = vmatprep.subr.bf16.mxu0 %v5243
    %6709 = vmatpush1.bf16.msra.mxu0 %v5242
    %6710 = vmatprep.subr.bf16.mxu0 %v5247
    %6711 = vmatpush1.bf16.msra.mxu0 %v5246
    %6712 = vmatprep.subr.bf16.mxu0 %v5251
    %6713 = vmatpush1.bf16.msra.mxu0 %v5250
    %6714 = vmatprep.subr.bf16.mxu0 %v5255
    %6715 = vmatpush1.bf16.msra.mxu0 %v5254
    %6716 = vmatprep.subr.bf16.mxu0 %v5259
    %6717 = vmatpush1.bf16.msra.mxu0 %v5258
    %6718 = vmatprep.subr.bf16.mxu0 %v5263
    %6719 = vmatpush1.bf16.msra.mxu0 %v5262
    %6720 = vmatprep.subr.bf16.mxu0 %v5267
    %6721 = vmatpush1.bf16.msra.mxu0 %v5266
    %6722 = vmatprep.subr.bf16.mxu0 %v5271
    %6723 = vmatpush1.bf16.msra.mxu0 %v5270
    %6724 = vmatprep.subr.bf16.mxu0 %v5275
    %6725 = vmatpush1.bf16.msra.mxu0 %v5274
    %6726 = vmatprep.subr.bf16.mxu0 %v5279
    %6727 = vmatpush1.bf16.msra.mxu0 %v5278
    %6728 = vmatprep.subr.bf16.mxu0 %v5283
    %6729 = vmatpush1.bf16.msra.mxu0 %v5282
    %6730 = vmatprep.mubr.bf16.mxu0 %v988
    %6731 = vmatmul.mubr.bf16.gmra.mrb[0].mxu0 %v987
    %v6732 = vpop.f32.mrb[0].mxu0
    %v6733 = vadd.f32 %v6690, %v6732
    %v6734 = vpop.f32.mrb[0].mxu0
    %v6735 = vadd.f32 %v6692, %v6734
    %v6736 = vpop.f32.mrb[0].mxu0
    %v6737 = vadd.f32 %v6694, %v6736
    %v6738 = vpop.f32.mrb[0].mxu0
    %v6739 = vadd.f32 %v6696, %v6738
    %6740 = vdwg.mxu0
    %6741 = vmatprep.subr.bf16.mxu0 %v5287
    %6742 = vmatpush1.bf16.msra.mxu0 %v5286
    %6743 = vmatprep.subr.bf16.mxu0 %v5291
    %6744 = vmatpush1.bf16.msra.mxu0 %v5290
    %6745 = vmatprep.subr.bf16.mxu0 %v5295
    %6746 = vmatpush1.bf16.msra.mxu0 %v5294
    %6747 = vmatprep.subr.bf16.mxu0 %v5299
    %6748 = vmatpush1.bf16.msra.mxu0 %v5298
    %6749 = vmatprep.subr.bf16.mxu0 %v5303
    %6750 = vmatpush1.bf16.msra.mxu0 %v5302
    %6751 = vmatprep.subr.bf16.mxu0 %v5307
    %6752 = vmatpush1.bf16.msra.mxu0 %v5306
    %6753 = vmatprep.subr.bf16.mxu0 %v5311
    %6754 = vmatpush1.bf16.msra.mxu0 %v5310
    %6755 = vmatprep.subr.bf16.mxu0 %v5315
    %6756 = vmatpush1.bf16.msra.mxu0 %v5314
    %6757 = vmatprep.subr.bf16.mxu0 0
    %6758 = vmatpush1.bf16.msra.mxu0 0
    %6759 = vmatprep.subr.bf16.mxu0 0
    %6760 = vmatpush1.bf16.msra.mxu0 0
    %6761 = vmatprep.subr.bf16.mxu0 0
    %6762 = vmatpush1.bf16.msra.mxu0 0
    %6763 = vmatprep.subr.bf16.mxu0 0
    %6764 = vmatpush1.bf16.msra.mxu0 0
    %6765 = vmatprep.subr.bf16.mxu0 0
    %6766 = vmatpush1.bf16.msra.mxu0 0
    %6767 = vmatprep.subr.bf16.mxu0 0
    %6768 = vmatpush1.bf16.msra.mxu0 0
    %6769 = vmatprep.subr.bf16.mxu0 0
    %6770 = vmatpush1.bf16.msra.mxu0 0
    %6771 = vmatprep.subr.bf16.mxu0 0
    %6772 = vmatpush1.bf16.msra.mxu0 0
    %6773 = vmatprep.mubr.bf16.mxu0 0
    %6774 = vmatmul.mubr.bf16.gmra.mrb[0].mxu0 %v989
    %v6775 = vpop.f32.mrb[0].mxu0
    %v6776 = vadd.f32 %v6733, %v6775
    %v6777 = vpop.f32.mrb[0].mxu0
    %v6778 = vadd.f32 %v6735, %v6777
    %v6779 = vpop.f32.mrb[0].mxu0
    %v6780 = vadd.f32 %v6737, %v6779
    %v6781 = vpop.f32.mrb[0].mxu0
    %v6782 = vadd.f32 %v6739, %v6781
    %6783 = vdwg.mxu0
    %6784 = vmatprep.subr.bf16.mxu0 %v4457
    %6785 = vmatpush1.bf16.msra.mxu0 %v4456
    %6786 = vmatprep.subr.bf16.mxu0 %v4461
    %6787 = vmatpush1.bf16.msra.mxu0 %v4460
    %6788 = vmatprep.subr.bf16.mxu0 %v4465
    %6789 = vmatpush1.bf16.msra.mxu0 %v4464
    %6790 = vmatprep.subr.bf16.mxu0 %v4469
    %6791 = vmatpush1.bf16.msra.mxu0 %v4468
    %6792 = vmatprep.subr.bf16.mxu0 %v4473
    %6793 = vmatpush1.bf16.msra.mxu0 %v4472
    %6794 = vmatprep.subr.bf16.mxu0 %v4477
    %6795 = vmatpush1.bf16.msra.mxu0 %v4476
    %6796 = vmatprep.subr.bf16.mxu0 %v4481
    %6797 = vmatpush1.bf16.msra.mxu0 %v4480
    %6798 = vmatprep.subr.bf16.mxu0 %v4485
    %6799 = vmatpush1.bf16.msra.mxu0 %v4484
    %6800 = vmatprep.subr.bf16.mxu0 %v4489
    %6801 = vmatpush1.bf16.msra.mxu0 %v4488
    %6802 = vmatprep.subr.bf16.mxu0 %v4493
    %6803 = vmatpush1.bf16.msra.mxu0 %v4492
    %6804 = vmatprep.subr.bf16.mxu0 %v4497
    %6805 = vmatpush1.bf16.msra.mxu0 %v4496
    %6806 = vmatprep.subr.bf16.mxu0 %v4501
    %6807 = vmatpush1.bf16.msra.mxu0 %v4500
    %6808 = vmatprep.subr.bf16.mxu0 %v4505
    %6809 = vmatpush1.bf16.msra.mxu0 %v4504
    %6810 = vmatprep.subr.bf16.mxu0 %v4509
    %6811 = vmatpush1.bf16.msra.mxu0 %v4508
    %6812 = vmatprep.subr.bf16.mxu0 %v4513
    %6813 = vmatpush1.bf16.msra.mxu0 %v4512
    %6814 = vmatprep.subr.bf16.mxu0 %v4517
    %6815 = vmatpush1.bf16.msra.mxu0 %v4516
    %6816 = vmatprep.mubr.bf16.mxu0 %v964
    %6817 = vmatmul.mubr.bf16.gmra.mrb[0].mxu0 %v963
    %v6818 = vpop.f32.mrb[0].mxu0
    %v6819 = vadd.f32 %v1856, %v6818
    %v6820 = vpop.f32.mrb[0].mxu0
    %v6821 = vadd.f32 %v1857, %v6820
    %v6822 = vpop.f32.mrb[0].mxu0
    %v6823 = vadd.f32 %v1860, %v6822
    %v6824 = vpop.f32.mrb[0].mxu0
    %v6825 = vadd.f32 %v1861, %v6824
    %6826 = vdwg.mxu0
    %6827 = vmatprep.subr.bf16.mxu0 %v4521
    %6828 = vmatpush1.bf16.msra.mxu0 %v4520
    %6829 = vmatprep.subr.bf16.mxu0 %v4525
    %6830 = vmatpush1.bf16.msra.mxu0 %v4524
    %6831 = vmatprep.subr.bf16.mxu0 %v4529
    %6832 = vmatpush1.bf16.msra.mxu0 %v4528
    %6833 = vmatprep.subr.bf16.mxu0 %v4533
    %6834 = vmatpush1.bf16.msra.mxu0 %v4532
    %6835 = vmatprep.subr.bf16.mxu0 %v4537
    %6836 = vmatpush1.bf16.msra.mxu0 %v4536
    %6837 = vmatprep.subr.bf16.mxu0 %v4541
    %6838 = vmatpush1.bf16.msra.mxu0 %v4540
    %6839 = vmatprep.subr.bf16.mxu0 %v4545
    %6840 = vmatpush1.bf16.msra.mxu0 %v4544
    %6841 = vmatprep.subr.bf16.mxu0 %v4549
    %6842 = vmatpush1.bf16.msra.mxu0 %v4548
    %6843 = vmatprep.subr.bf16.mxu0 %v4553
    %6844 = vmatpush1.bf16.msra.mxu0 %v4552
    %6845 = vmatprep.subr.bf16.mxu0 %v4557
    %6846 = vmatpush1.bf16.msra.mxu0 %v4556
    %6847 = vmatprep.subr.bf16.mxu0 %v4561
    %6848 = vmatpush1.bf16.msra.mxu0 %v4560
    %6849 = vmatprep.subr.bf16.mxu0 %v4565
    %6850 = vmatpush1.bf16.msra.mxu0 %v4564
    %6851 = vmatprep.subr.bf16.mxu0 %v4569
    %6852 = vmatpush1.bf16.msra.mxu0 %v4568
    %6853 = vmatprep.subr.bf16.mxu0 %v4573
    %6854 = vmatpush1.bf16.msra.mxu0 %v4572
    %6855 = vmatprep.subr.bf16.mxu0 %v4577
    %6856 = vmatpush1.bf16.msra.mxu0 %v4576
    %6857 = vmatprep.subr.bf16.mxu0 %v4581
    %6858 = vmatpush1.bf16.msra.mxu0 %v4580
    %6859 = vmatprep.mubr.bf16.mxu0 %v966
    %6860 = vmatmul.mubr.bf16.gmra.mrb[0].mxu0 %v965
    %v6861 = vpop.f32.mrb[0].mxu0
    %v6862 = vadd.f32 %v6819, %v6861
    %v6863 = vpop.f32.mrb[0].mxu0
    %v6864 = vadd.f32 %v6821, %v6863
    %v6865 = vpop.f32.mrb[0].mxu0
    %v6866 = vadd.f32 %v6823, %v6865
    %v6867 = vpop.f32.mrb[0].mxu0
    %v6868 = vadd.f32 %v6825, %v6867
    %6869 = vdwg.mxu0
    %6870 = vmatprep.subr.bf16.mxu0 %v4585
    %6871 = vmatpush1.bf16.msra.mxu0 %v4584
    %6872 = vmatprep.subr.bf16.mxu0 %v4589
    %6873 = vmatpush1.bf16.msra.mxu0 %v4588
    %6874 = vmatprep.subr.bf16.mxu0 %v4593
    %6875 = vmatpush1.bf16.msra.mxu0 %v4592
    %6876 = vmatprep.subr.bf16.mxu0 %v4597
    %6877 = vmatpush1.bf16.msra.mxu0 %v4596
    %6878 = vmatprep.subr.bf16.mxu0 %v4601
    %6879 = vmatpush1.bf16.msra.mxu0 %v4600
    %6880 = vmatprep.subr.bf16.mxu0 %v4605
    %6881 = vmatpush1.bf16.msra.mxu0 %v4604
    %6882 = vmatprep.subr.bf16.mxu0 %v4609
    %6883 = vmatpush1.bf16.msra.mxu0 %v4608
    %6884 = vmatprep.subr.bf16.mxu0 %v4613
    %6885 = vmatpush1.bf16.msra.mxu0 %v4612
    %6886 = vmatprep.subr.bf16.mxu0 %v4617
    %6887 = vmatpush1.bf16.msra.mxu0 %v4616
    %6888 = vmatprep.subr.bf16.mxu0 %v4621
    %6889 = vmatpush1.bf16.msra.mxu0 %v4620
    %6890 = vmatprep.subr.bf16.mxu0 %v4625
    %6891 = vmatpush1.bf16.msra.mxu0 %v4624
    %6892 = vmatprep.subr.bf16.mxu0 %v4629
    %6893 = vmatpush1.bf16.msra.mxu0 %v4628
    %6894 = vmatprep.subr.bf16.mxu0 %v4633
    %6895 = vmatpush1.bf16.msra.mxu0 %v4632
    %6896 = vmatprep.subr.bf16.mxu0 %v4637
    %6897 = vmatpush1.bf16.msra.mxu0 %v4636
    %6898 = vmatprep.subr.bf16.mxu0 %v4641
    %6899 = vmatpush1.bf16.msra.mxu0 %v4640
    %6900 = vmatprep.subr.bf16.mxu0 %v4645
    %6901 = vmatpush1.bf16.msra.mxu0 %v4644
    %6902 = vmatprep.mubr.bf16.mxu0 %v968
    %6903 = vmatmul.mubr.bf16.gmra.mrb[0].mxu0 %v967
    %v6904 = vpop.f32.mrb[0].mxu0
    %v6905 = vadd.f32 %v6862, %v6904
    %v6906 = vpop.f32.mrb[0].mxu0
    %v6907 = vadd.f32 %v6864, %v6906
    %v6908 = vpop.f32.mrb[0].mxu0
    %v6909 = vadd.f32 %v6866, %v6908
    %v6910 = vpop.f32.mrb[0].mxu0
    %v6911 = vadd.f32 %v6868, %v6910
    %6912 = vdwg.mxu0
    %6913 = vmatprep.subr.bf16.mxu0 %v4649
    %6914 = vmatpush1.bf16.msra.mxu0 %v4648
    %6915 = vmatprep.subr.bf16.mxu0 %v4653
    %6916 = vmatpush1.bf16.msra.mxu0 %v4652
    %6917 = vmatprep.subr.bf16.mxu0 %v4657
    %6918 = vmatpush1.bf16.msra.mxu0 %v4656
    %6919 = vmatprep.subr.bf16.mxu0 %v4661
    %6920 = vmatpush1.bf16.msra.mxu0 %v4660
    %6921 = vmatprep.subr.bf16.mxu0 %v4665
    %6922 = vmatpush1.bf16.msra.mxu0 %v4664
    %6923 = vmatprep.subr.bf16.mxu0 %v4669
    %6924 = vmatpush1.bf16.msra.mxu0 %v4668
    %6925 = vmatprep.subr.bf16.mxu0 %v4673
    %6926 = vmatpush1.bf16.msra.mxu0 %v4672
    %6927 = vmatprep.subr.bf16.mxu0 %v4677
    %6928 = vmatpush1.bf16.msra.mxu0 %v4676
    %6929 = vmatprep.subr.bf16.mxu0 %v4681
    %6930 = vmatpush1.bf16.msra.mxu0 %v4680
    %6931 = vmatprep.subr.bf16.mxu0 %v4685
    %6932 = vmatpush1.bf16.msra.mxu0 %v4684
    %6933 = vmatprep.subr.bf16.mxu0 %v4689
    %6934 = vmatpush1.bf16.msra.mxu0 %v4688
    %6935 = vmatprep.subr.bf16.mxu0 %v4693
    %6936 = vmatpush1.bf16.msra.mxu0 %v4692
    %6937 = vmatprep.subr.bf16.mxu0 %v4697
    %6938 = vmatpush1.bf16.msra.mxu0 %v4696
    %6939 = vmatprep.subr.bf16.mxu0 %v4701
    %6940 = vmatpush1.bf16.msra.mxu0 %v4700
    %6941 = vmatprep.subr.bf16.mxu0 %v4705
    %6942 = vmatpush1.bf16.msra.mxu0 %v4704
    %6943 = vmatprep.subr.bf16.mxu0 %v4709
    %6944 = vmatpush1.bf16.msra.mxu0 %v4708
    %6945 = vmatprep.mubr.bf16.mxu0 %v970
    %6946 = vmatmul.mubr.bf16.gmra.mrb[0].mxu0 %v969
    %v6947 = vpop.f32.mrb[0].mxu0
    %v6948 = vadd.f32 %v6905, %v6947
    %v6949 = vpop.f32.mrb[0].mxu0
    %v6950 = vadd.f32 %v6907, %v6949
    %v6951 = vpop.f32.mrb[0].mxu0
    %v6952 = vadd.f32 %v6909, %v6951
    %v6953 = vpop.f32.mrb[0].mxu0
    %v6954 = vadd.f32 %v6911, %v6953
    %6955 = vdwg.mxu0
    %6956 = vmatprep.subr.bf16.mxu0 %v4713
    %6957 = vmatpush1.bf16.msra.mxu0 %v4712
    %6958 = vmatprep.subr.bf16.mxu0 %v4717
    %6959 = vmatpush1.bf16.msra.mxu0 %v4716
    %6960 = vmatprep.subr.bf16.mxu0 %v4721
    %6961 = vmatpush1.bf16.msra.mxu0 %v4720
    %6962 = vmatprep.subr.bf16.mxu0 %v4725
    %6963 = vmatpush1.bf16.msra.mxu0 %v4724
    %6964 = vmatprep.subr.bf16.mxu0 %v4729
    %6965 = vmatpush1.bf16.msra.mxu0 %v4728
    %6966 = vmatprep.subr.bf16.mxu0 %v4733
    %6967 = vmatpush1.bf16.msra.mxu0 %v4732
    %6968 = vmatprep.subr.bf16.mxu0 %v4737
    %6969 = vmatpush1.bf16.msra.mxu0 %v4736
    %6970 = vmatprep.subr.bf16.mxu0 %v4741
    %6971 = vmatpush1.bf16.msra.mxu0 %v4740
    %6972 = vmatprep.subr.bf16.mxu0 %v4745
    %6973 = vmatpush1.bf16.msra.mxu0 %v4744
    %6974 = vmatprep.subr.bf16.mxu0 %v4749
    %6975 = vmatpush1.bf16.msra.mxu0 %v4748
    %6976 = vmatprep.subr.bf16.mxu0 %v4753
    %6977 = vmatpush1.bf16.msra.mxu0 %v4752
    %6978 = vmatprep.subr.bf16.mxu0 %v4757
    %6979 = vmatpush1.bf16.msra.mxu0 %v4756
    %6980 = vmatprep.subr.bf16.mxu0 %v4761
    %6981 = vmatpush1.bf16.msra.mxu0 %v4760
    %6982 = vmatprep.subr.bf16.mxu0 %v4765
    %6983 = vmatpush1.bf16.msra.mxu0 %v4764
    %6984 = vmatprep.subr.bf16.mxu0 %v4769
    %6985 = vmatpush1.bf16.msra.mxu0 %v4768
    %6986 = vmatprep.subr.bf16.mxu0 %v4773
    %6987 = vmatpush1.bf16.msra.mxu0 %v4772
    %6988 = vmatprep.mubr.bf16.mxu0 %v972
    %6989 = vmatmul.mubr.bf16.gmra.mrb[0].mxu0 %v971
    %v6990 = vpop.f32.mrb[0].mxu0
    %v6991 = vadd.f32 %v6948, %v6990
    %v6992 = vpop.f32.mrb[0].mxu0
    %v6993 = vadd.f32 %v6950, %v6992
    %v6994 = vpop.f32.mrb[0].mxu0
    %v6995 = vadd.f32 %v6952, %v6994
    %v6996 = vpop.f32.mrb[0].mxu0
    %v6997 = vadd.f32 %v6954, %v6996
    %6998 = vdwg.mxu0
    %6999 = vmatprep.subr.bf16.mxu0 %v4777
    %7000 = vmatpush1.bf16.msra.mxu0 %v4776
    %7001 = vmatprep.subr.bf16.mxu0 %v4781
    %7002 = vmatpush1.bf16.msra.mxu0 %v4780
    %7003 = vmatprep.subr.bf16.mxu0 %v4785
    %7004 = vmatpush1.bf16.msra.mxu0 %v4784
    %7005 = vmatprep.subr.bf16.mxu0 %v4789
    %7006 = vmatpush1.bf16.msra.mxu0 %v4788
    %7007 = vmatprep.subr.bf16.mxu0 %v4793
    %7008 = vmatpush1.bf16.msra.mxu0 %v4792
    %7009 = vmatprep.subr.bf16.mxu0 %v4797
    %7010 = vmatpush1.bf16.msra.mxu0 %v4796
    %7011 = vmatprep.subr.bf16.mxu0 %v4801
    %7012 = vmatpush1.bf16.msra.mxu0 %v4800
    %7013 = vmatprep.subr.bf16.mxu0 %v4805
    %7014 = vmatpush1.bf16.msra.mxu0 %v4804
    %7015 = vmatprep.subr.bf16.mxu0 %v4809
    %7016 = vmatpush1.bf16.msra.mxu0 %v4808
    %7017 = vmatprep.subr.bf16.mxu0 %v4813
    %7018 = vmatpush1.bf16.msra.mxu0 %v4812
    %7019 = vmatprep.subr.bf16.mxu0 %v4817
    %7020 = vmatpush1.bf16.msra.mxu0 %v4816
    %7021 = vmatprep.subr.bf16.mxu0 %v4821
    %7022 = vmatpush1.bf16.msra.mxu0 %v4820
    %7023 = vmatprep.subr.bf16.mxu0 %v4825
    %7024 = vmatpush1.bf16.msra.mxu0 %v4824
    %7025 = vmatprep.subr.bf16.mxu0 %v4829
    %7026 = vmatpush1.bf16.msra.mxu0 %v4828
    %7027 = vmatprep.subr.bf16.mxu0 %v4833
    %7028 = vmatpush1.bf16.msra.mxu0 %v4832
    %7029 = vmatprep.subr.bf16.mxu0 %v4837
    %7030 = vmatpush1.bf16.msra.mxu0 %v4836
    %7031 = vmatprep.mubr.bf16.mxu0 %v974
    %7032 = vmatmul.mubr.bf16.gmra.mrb[0].mxu0 %v973
    %v7033 = vpop.f32.mrb[0].mxu0
    %v7034 = vadd.f32 %v6991, %v7033
    %v7035 = vpop.f32.mrb[0].mxu0
    %v7036 = vadd.f32 %v6993, %v7035
    %v7037 = vpop.f32.mrb[0].mxu0
    %v7038 = vadd.f32 %v6995, %v7037
    %v7039 = vpop.f32.mrb[0].mxu0
    %v7040 = vadd.f32 %v6997, %v7039
    %7041 = vdwg.mxu0
    %7042 = vmatprep.subr.bf16.mxu0 %v4841
    %7043 = vmatpush1.bf16.msra.mxu0 %v4840
    %7044 = vmatprep.subr.bf16.mxu0 %v4845
    %7045 = vmatpush1.bf16.msra.mxu0 %v4844
    %7046 = vmatprep.subr.bf16.mxu0 %v4849
    %7047 = vmatpush1.bf16.msra.mxu0 %v4848
    %7048 = vmatprep.subr.bf16.mxu0 %v4853
    %7049 = vmatpush1.bf16.msra.mxu0 %v4852
    %7050 = vmatprep.subr.bf16.mxu0 %v4857
    %7051 = vmatpush1.bf16.msra.mxu0 %v4856
    %7052 = vmatprep.subr.bf16.mxu0 %v4861
    %7053 = vmatpush1.bf16.msra.mxu0 %v4860
    %7054 = vmatprep.subr.bf16.mxu0 %v4865
    %7055 = vmatpush1.bf16.msra.mxu0 %v4864
    %7056 = vmatprep.subr.bf16.mxu0 %v4869
    %7057 = vmatpush1.bf16.msra.mxu0 %v4868
    %7058 = vmatprep.subr.bf16.mxu0 %v4873
    %7059 = vmatpush1.bf16.msra.mxu0 %v4872
    %7060 = vmatprep.subr.bf16.mxu0 %v4877
    %7061 = vmatpush1.bf16.msra.mxu0 %v4876
    %7062 = vmatprep.subr.bf16.mxu0 %v4881
    %7063 = vmatpush1.bf16.msra.mxu0 %v4880
    %7064 = vmatprep.subr.bf16.mxu0 %v4885
    %7065 = vmatpush1.bf16.msra.mxu0 %v4884
    %7066 = vmatprep.subr.bf16.mxu0 %v4889
    %7067 = vmatpush1.bf16.msra.mxu0 %v4888
    %7068 = vmatprep.subr.bf16.mxu0 %v4893
    %7069 = vmatpush1.bf16.msra.mxu0 %v4892
    %7070 = vmatprep.subr.bf16.mxu0 %v4897
    %7071 = vmatpush1.bf16.msra.mxu0 %v4896
    %7072 = vmatprep.subr.bf16.mxu0 %v4901
    %7073 = vmatpush1.bf16.msra.mxu0 %v4900
    %7074 = vmatprep.mubr.bf16.mxu0 %v976
    %7075 = vmatmul.mubr.bf16.gmra.mrb[0].mxu0 %v975
    %v7076 = vpop.f32.mrb[0].mxu0
    %v7077 = vadd.f32 %v7034, %v7076
    %v7078 = vpop.f32.mrb[0].mxu0
    %v7079 = vadd.f32 %v7036, %v7078
    %v7080 = vpop.f32.mrb[0].mxu0
    %v7081 = vadd.f32 %v7038, %v7080
    %v7082 = vpop.f32.mrb[0].mxu0
    %v7083 = vadd.f32 %v7040, %v7082
    %7084 = vdwg.mxu0
    %7085 = vmatprep.subr.bf16.mxu0 %v4905
    %7086 = vmatpush1.bf16.msra.mxu0 %v4904
    %7087 = vmatprep.subr.bf16.mxu0 %v4909
    %7088 = vmatpush1.bf16.msra.mxu0 %v4908
    %7089 = vmatprep.subr.bf16.mxu0 %v4913
    %7090 = vmatpush1.bf16.msra.mxu0 %v4912
    %7091 = vmatprep.subr.bf16.mxu0 %v4917
    %7092 = vmatpush1.bf16.msra.mxu0 %v4916
    %7093 = vmatprep.subr.bf16.mxu0 %v4921
    %7094 = vmatpush1.bf16.msra.mxu0 %v4920
    %7095 = vmatprep.subr.bf16.mxu0 %v4925
    %7096 = vmatpush1.bf16.msra.mxu0 %v4924
    %7097 = vmatprep.subr.bf16.mxu0 %v4929
    %7098 = vmatpush1.bf16.msra.mxu0 %v4928
    %7099 = vmatprep.subr.bf16.mxu0 %v4933
    %7100 = vmatpush1.bf16.msra.mxu0 %v4932
    %7101 = vmatprep.subr.bf16.mxu0 %v4937
    %7102 = vmatpush1.bf16.msra.mxu0 %v4936
    %7103 = vmatprep.subr.bf16.mxu0 %v4941
    %7104 = vmatpush1.bf16.msra.mxu0 %v4940
    %7105 = vmatprep.subr.bf16.mxu0 %v4945
    %7106 = vmatpush1.bf16.msra.mxu0 %v4944
    %7107 = vmatprep.subr.bf16.mxu0 %v4949
    %7108 = vmatpush1.bf16.msra.mxu0 %v4948
    %7109 = vmatprep.subr.bf16.mxu0 %v4953
    %7110 = vmatpush1.bf16.msra.mxu0 %v4952
    %7111 = vmatprep.subr.bf16.mxu0 %v4957
    %7112 = vmatpush1.bf16.msra.mxu0 %v4956
    %7113 = vmatprep.subr.bf16.mxu0 %v4961
    %7114 = vmatpush1.bf16.msra.mxu0 %v4960
    %7115 = vmatprep.subr.bf16.mxu0 %v4965
    %7116 = vmatpush1.bf16.msra.mxu0 %v4964
    %7117 = vmatprep.mubr.bf16.mxu0 %v978
    %7118 = vmatmul.mubr.bf16.gmra.mrb[0].mxu0 %v977
    %v7119 = vpop.f32.mrb[0].mxu0
    %v7120 = vadd.f32 %v7077, %v7119
    %v7121 = vpop.f32.mrb[0].mxu0
    %v7122 = vadd.f32 %v7079, %v7121
    %v7123 = vpop.f32.mrb[0].mxu0
    %v7124 = vadd.f32 %v7081, %v7123
    %v7125 = vpop.f32.mrb[0].mxu0
    %v7126 = vadd.f32 %v7083, %v7125
    %7127 = vdwg.mxu0
    %7128 = vmatprep.subr.bf16.mxu0 %v4969
    %7129 = vmatpush1.bf16.msra.mxu0 %v4968
    %7130 = vmatprep.subr.bf16.mxu0 %v4973
    %7131 = vmatpush1.bf16.msra.mxu0 %v4972
    %7132 = vmatprep.subr.bf16.mxu0 %v4977
    %7133 = vmatpush1.bf16.msra.mxu0 %v4976
    %7134 = vmatprep.subr.bf16.mxu0 %v4981
    %7135 = vmatpush1.bf16.msra.mxu0 %v4980
    %7136 = vmatprep.subr.bf16.mxu0 %v4985
    %7137 = vmatpush1.bf16.msra.mxu0 %v4984
    %7138 = vmatprep.subr.bf16.mxu0 %v4989
    %7139 = vmatpush1.bf16.msra.mxu0 %v4988
    %7140 = vmatprep.subr.bf16.mxu0 %v4993
    %7141 = vmatpush1.bf16.msra.mxu0 %v4992
    %7142 = vmatprep.subr.bf16.mxu0 %v4997
    %7143 = vmatpush1.bf16.msra.mxu0 %v4996
    %7144 = vmatprep.subr.bf16.mxu0 %v5001
    %7145 = vmatpush1.bf16.msra.mxu0 %v5000
    %7146 = vmatprep.subr.bf16.mxu0 %v5005
    %7147 = vmatpush1.bf16.msra.mxu0 %v5004
    %7148 = vmatprep.subr.bf16.mxu0 %v5009
    %7149 = vmatpush1.bf16.msra.mxu0 %v5008
    %7150 = vmatprep.subr.bf16.mxu0 %v5013
    %7151 = vmatpush1.bf16.msra.mxu0 %v5012
    %7152 = vmatprep.subr.bf16.mxu0 %v5017
    %7153 = vmatpush1.bf16.msra.mxu0 %v5016
    %7154 = vmatprep.subr.bf16.mxu0 %v5021
    %7155 = vmatpush1.bf16.msra.mxu0 %v5020
    %7156 = vmatprep.subr.bf16.mxu0 %v5025
    %7157 = vmatpush1.bf16.msra.mxu0 %v5024
    %7158 = vmatprep.subr.bf16.mxu0 %v5029
    %7159 = vmatpush1.bf16.msra.mxu0 %v5028
    %7160 = vmatprep.mubr.bf16.mxu0 %v980
    %7161 = vmatmul.mubr.bf16.gmra.mrb[0].mxu0 %v979
    %v7162 = vpop.f32.mrb[0].mxu0
    %v7163 = vadd.f32 %v7120, %v7162
    %v7164 = vpop.f32.mrb[0].mxu0
    %v7165 = vadd.f32 %v7122, %v7164
    %v7166 = vpop.f32.mrb[0].mxu0
    %v7167 = vadd.f32 %v7124, %v7166
    %v7168 = vpop.f32.mrb[0].mxu0
    %v7169 = vadd.f32 %v7126, %v7168
    %7170 = vdwg.mxu0
    %7171 = vmatprep.subr.bf16.mxu0 %v5033
    %7172 = vmatpush1.bf16.msra.mxu0 %v5032
    %7173 = vmatprep.subr.bf16.mxu0 %v5037
    %7174 = vmatpush1.bf16.msra.mxu0 %v5036
    %7175 = vmatprep.subr.bf16.mxu0 %v5041
    %7176 = vmatpush1.bf16.msra.mxu0 %v5040
    %7177 = vmatprep.subr.bf16.mxu0 %v5045
    %7178 = vmatpush1.bf16.msra.mxu0 %v5044
    %7179 = vmatprep.subr.bf16.mxu0 %v5049
    %7180 = vmatpush1.bf16.msra.mxu0 %v5048
    %7181 = vmatprep.subr.bf16.mxu0 %v5053
    %7182 = vmatpush1.bf16.msra.mxu0 %v5052
    %7183 = vmatprep.subr.bf16.mxu0 %v5057
    %7184 = vmatpush1.bf16.msra.mxu0 %v5056
    %7185 = vmatprep.subr.bf16.mxu0 %v5061
    %7186 = vmatpush1.bf16.msra.mxu0 %v5060
    %7187 = vmatprep.subr.bf16.mxu0 %v5065
    %7188 = vmatpush1.bf16.msra.mxu0 %v5064
    %7189 = vmatprep.subr.bf16.mxu0 %v5069
    %7190 = vmatpush1.bf16.msra.mxu0 %v5068
    %7191 = vmatprep.subr.bf16.mxu0 %v5073
    %7192 = vmatpush1.bf16.msra.mxu0 %v5072
    %7193 = vmatprep.subr.bf16.mxu0 %v5077
    %7194 = vmatpush1.bf16.msra.mxu0 %v5076
    %7195 = vmatprep.subr.bf16.mxu0 %v5081
    %7196 = vmatpush1.bf16.msra.mxu0 %v5080
    %7197 = vmatprep.subr.bf16.mxu0 %v5085
    %7198 = vmatpush1.bf16.msra.mxu0 %v5084
    %7199 = vmatprep.subr.bf16.mxu0 %v5089
    %7200 = vmatpush1.bf16.msra.mxu0 %v5088
    %7201 = vmatprep.subr.bf16.mxu0 %v5093
    %7202 = vmatpush1.bf16.msra.mxu0 %v5092
    %7203 = vmatprep.mubr.bf16.mxu0 %v982
    %7204 = vmatmul.mubr.bf16.gmra.mrb[0].mxu0 %v981
    %v7205 = vpop.f32.mrb[0].mxu0
    %v7206 = vadd.f32 %v7163, %v7205
    %v7207 = vpop.f32.mrb[0].mxu0
    %v7208 = vadd.f32 %v7165, %v7207
    %v7209 = vpop.f32.mrb[0].mxu0
    %v7210 = vadd.f32 %v7167, %v7209
    %v7211 = vpop.f32.mrb[0].mxu0
    %v7212 = vadd.f32 %v7169, %v7211
    %7213 = vdwg.mxu0
    %7214 = vmatprep.subr.bf16.mxu0 %v5097
    %7215 = vmatpush1.bf16.msra.mxu0 %v5096
    %7216 = vmatprep.subr.bf16.mxu0 %v5101
    %7217 = vmatpush1.bf16.msra.mxu0 %v5100
    %7218 = vmatprep.subr.bf16.mxu0 %v5105
    %7219 = vmatpush1.bf16.msra.mxu0 %v5104
    %7220 = vmatprep.subr.bf16.mxu0 %v5109
    %7221 = vmatpush1.bf16.msra.mxu0 %v5108
    %7222 = vmatprep.subr.bf16.mxu0 %v5113
    %7223 = vmatpush1.bf16.msra.mxu0 %v5112
    %7224 = vmatprep.subr.bf16.mxu0 %v5117
    %7225 = vmatpush1.bf16.msra.mxu0 %v5116
    %7226 = vmatprep.subr.bf16.mxu0 %v5121
    %7227 = vmatpush1.bf16.msra.mxu0 %v5120
    %7228 = vmatprep.subr.bf16.mxu0 %v5125
    %7229 = vmatpush1.bf16.msra.mxu0 %v5124
    %7230 = vmatprep.subr.bf16.mxu0 %v5129
    %7231 = vmatpush1.bf16.msra.mxu0 %v5128
    %7232 = vmatprep.subr.bf16.mxu0 %v5133
    %7233 = vmatpush1.bf16.msra.mxu0 %v5132
    %7234 = vmatprep.subr.bf16.mxu0 %v5137
    %7235 = vmatpush1.bf16.msra.mxu0 %v5136
    %7236 = vmatprep.subr.bf16.mxu0 %v5141
    %7237 = vmatpush1.bf16.msra.mxu0 %v5140
    %7238 = vmatprep.subr.bf16.mxu0 %v5145
    %7239 = vmatpush1.bf16.msra.mxu0 %v5144
    %7240 = vmatprep.subr.bf16.mxu0 %v5149
    %7241 = vmatpush1.bf16.msra.mxu0 %v5148
    %7242 = vmatprep.subr.bf16.mxu0 %v5153
    %7243 = vmatpush1.bf16.msra.mxu0 %v5152
    %7244 = vmatprep.subr.bf16.mxu0 %v5157
    %7245 = vmatpush1.bf16.msra.mxu0 %v5156
    %7246 = vmatprep.mubr.bf16.mxu0 %v984
    %7247 = vmatmul.mubr.bf16.gmra.mrb[0].mxu0 %v983
    %v7248 = vpop.f32.mrb[0].mxu0
    %v7249 = vadd.f32 %v7206, %v7248
    %v7250 = vpop.f32.mrb[0].mxu0
    %v7251 = vadd.f32 %v7208, %v7250
    %v7252 = vpop.f32.mrb[0].mxu0
    %v7253 = vadd.f32 %v7210, %v7252
    %v7254 = vpop.f32.mrb[0].mxu0
    %v7255 = vadd.f32 %v7212, %v7254
    %7256 = vdwg.mxu0
    %7257 = vmatprep.subr.bf16.mxu0 %v5161
    %7258 = vmatpush1.bf16.msra.mxu0 %v5160
    %7259 = vmatprep.subr.bf16.mxu0 %v5165
    %7260 = vmatpush1.bf16.msra.mxu0 %v5164
    %7261 = vmatprep.subr.bf16.mxu0 %v5169
    %7262 = vmatpush1.bf16.msra.mxu0 %v5168
    %7263 = vmatprep.subr.bf16.mxu0 %v5173
    %7264 = vmatpush1.bf16.msra.mxu0 %v5172
    %7265 = vmatprep.subr.bf16.mxu0 %v5177
    %7266 = vmatpush1.bf16.msra.mxu0 %v5176
    %7267 = vmatprep.subr.bf16.mxu0 %v5181
    %7268 = vmatpush1.bf16.msra.mxu0 %v5180
    %7269 = vmatprep.subr.bf16.mxu0 %v5185
    %7270 = vmatpush1.bf16.msra.mxu0 %v5184
    %7271 = vmatprep.subr.bf16.mxu0 %v5189
    %7272 = vmatpush1.bf16.msra.mxu0 %v5188
    %7273 = vmatprep.subr.bf16.mxu0 %v5193
    %7274 = vmatpush1.bf16.msra.mxu0 %v5192
    %7275 = vmatprep.subr.bf16.mxu0 %v5197
    %7276 = vmatpush1.bf16.msra.mxu0 %v5196
    %7277 = vmatprep.subr.bf16.mxu0 %v5201
    %7278 = vmatpush1.bf16.msra.mxu0 %v5200
    %7279 = vmatprep.subr.bf16.mxu0 %v5205
    %7280 = vmatpush1.bf16.msra.mxu0 %v5204
    %7281 = vmatprep.subr.bf16.mxu0 %v5209
    %7282 = vmatpush1.bf16.msra.mxu0 %v5208
    %7283 = vmatprep.subr.bf16.mxu0 %v5213
    %7284 = vmatpush1.bf16.msra.mxu0 %v5212
    %7285 = vmatprep.subr.bf16.mxu0 %v5217
    %7286 = vmatpush1.bf16.msra.mxu0 %v5216
    %7287 = vmatprep.subr.bf16.mxu0 %v5221
    %7288 = vmatpush1.bf16.msra.mxu0 %v5220
    %7289 = vmatprep.mubr.bf16.mxu0 %v986
    %7290 = vmatmul.mubr.bf16.gmra.mrb[0].mxu0 %v985
    %v7291 = vpop.f32.mrb[0].mxu0
    %v7292 = vadd.f32 %v7249, %v7291
    %v7293 = vpop.f32.mrb[0].mxu0
    %v7294 = vadd.f32 %v7251, %v7293
    %v7295 = vpop.f32.mrb[0].mxu0
    %v7296 = vadd.f32 %v7253, %v7295
    %v7297 = vpop.f32.mrb[0].mxu0
    %v7298 = vadd.f32 %v7255, %v7297
    %7299 = vdwg.mxu0
    %7300 = vmatprep.subr.bf16.mxu0 %v5225
    %7301 = vmatpush1.bf16.msra.mxu0 %v5224
    %7302 = vmatprep.subr.bf16.mxu0 %v5229
    %7303 = vmatpush1.bf16.msra.mxu0 %v5228
    %7304 = vmatprep.subr.bf16.mxu0 %v5233
    %7305 = vmatpush1.bf16.msra.mxu0 %v5232
    %7306 = vmatprep.subr.bf16.mxu0 %v5237
    %7307 = vmatpush1.bf16.msra.mxu0 %v5236
    %7308 = vmatprep.subr.bf16.mxu0 %v5241
    %7309 = vmatpush1.bf16.msra.mxu0 %v5240
    %7310 = vmatprep.subr.bf16.mxu0 %v5245
    %7311 = vmatpush1.bf16.msra.mxu0 %v5244
    %7312 = vmatprep.subr.bf16.mxu0 %v5249
    %7313 = vmatpush1.bf16.msra.mxu0 %v5248
    %7314 = vmatprep.subr.bf16.mxu0 %v5253
    %7315 = vmatpush1.bf16.msra.mxu0 %v5252
    %7316 = vmatprep.subr.bf16.mxu0 %v5257
    %7317 = vmatpush1.bf16.msra.mxu0 %v5256
    %7318 = vmatprep.subr.bf16.mxu0 %v5261
    %7319 = vmatpush1.bf16.msra.mxu0 %v5260
    %7320 = vmatprep.subr.bf16.mxu0 %v5265
    %7321 = vmatpush1.bf16.msra.mxu0 %v5264
    %7322 = vmatprep.subr.bf16.mxu0 %v5269
    %7323 = vmatpush1.bf16.msra.mxu0 %v5268
    %7324 = vmatprep.subr.bf16.mxu0 %v5273
    %7325 = vmatpush1.bf16.msra.mxu0 %v5272
    %7326 = vmatprep.subr.bf16.mxu0 %v5277
    %7327 = vmatpush1.bf16.msra.mxu0 %v5276
    %7328 = vmatprep.subr.bf16.mxu0 %v5281
    %7329 = vmatpush1.bf16.msra.mxu0 %v5280
    %7330 = vmatprep.subr.bf16.mxu0 %v5285
    %7331 = vmatpush1.bf16.msra.mxu0 %v5284
    %7332 = vmatprep.mubr.bf16.mxu0 %v988
    %7333 = vmatmul.mubr.bf16.gmra.mrb[0].mxu0 %v987
    %v7334 = vpop.f32.mrb[0].mxu0
    %v7335 = vadd.f32 %v7292, %v7334
    %v7336 = vpop.f32.mrb[0].mxu0
    %v7337 = vadd.f32 %v7294, %v7336
    %v7338 = vpop.f32.mrb[0].mxu0
    %v7339 = vadd.f32 %v7296, %v7338
    %v7340 = vpop.f32.mrb[0].mxu0
    %v7341 = vadd.f32 %v7298, %v7340
    %7342 = vdwg.mxu0
    %7343 = vmatprep.subr.bf16.mxu0 %v5289
    %7344 = vmatpush1.bf16.msra.mxu0 %v5288
    %7345 = vmatprep.subr.bf16.mxu0 %v5293
    %7346 = vmatpush1.bf16.msra.mxu0 %v5292
    %7347 = vmatprep.subr.bf16.mxu0 %v5297
    %7348 = vmatpush1.bf16.msra.mxu0 %v5296
    %7349 = vmatprep.subr.bf16.mxu0 %v5301
    %7350 = vmatpush1.bf16.msra.mxu0 %v5300
    %7351 = vmatprep.subr.bf16.mxu0 %v5305
    %7352 = vmatpush1.bf16.msra.mxu0 %v5304
    %7353 = vmatprep.subr.bf16.mxu0 %v5309
    %7354 = vmatpush1.bf16.msra.mxu0 %v5308
    %7355 = vmatprep.subr.bf16.mxu0 %v5313
    %7356 = vmatpush1.bf16.msra.mxu0 %v5312
    %7357 = vmatprep.subr.bf16.mxu0 %v5317
    %7358 = vmatpush1.bf16.msra.mxu0 %v5316
    %7359 = vmatprep.subr.bf16.mxu0 0
    %7360 = vmatpush1.bf16.msra.mxu0 0
    %7361 = vmatprep.subr.bf16.mxu0 0
    %7362 = vmatpush1.bf16.msra.mxu0 0
    %7363 = vmatprep.subr.bf16.mxu0 0
    %7364 = vmatpush1.bf16.msra.mxu0 0
    %7365 = vmatprep.subr.bf16.mxu0 0
    %7366 = vmatpush1.bf16.msra.mxu0 0
    %7367 = vmatprep.subr.bf16.mxu0 0
    %7368 = vmatpush1.bf16.msra.mxu0 0
    %7369 = vmatprep.subr.bf16.mxu0 0
    %7370 = vmatpush1.bf16.msra.mxu0 0
    %7371 = vmatprep.subr.bf16.mxu0 0
    %7372 = vmatpush1.bf16.msra.mxu0 0
    %7373 = vmatprep.subr.bf16.mxu0 0
    %7374 = vmatpush1.bf16.msra.mxu0 0
    %7375 = vmatprep.mubr.bf16.mxu0 0
    %7376 = vmatmul.mubr.bf16.gmra.mrb[0].mxu0 %v989
    %v7377 = vpop.f32.mrb[0].mxu0
    %v7378 = vadd.f32 %v7335, %v7377
    %v7379 = vpop.f32.mrb[0].mxu0
    %v7380 = vadd.f32 %v7337, %v7379
    %v7381 = vpop.f32.mrb[0].mxu0
    %v7382 = vadd.f32 %v7339, %v7381
    %v7383 = vpop.f32.mrb[0].mxu0
    %v7384 = vadd.f32 %v7341, %v7383
    %7385 = vdwg.mxu0
    %v7386 = vld [vmem:[#allocation15] sm:$0xff]
    %v7387 = vld [vmem:[#allocation15 + $0x8] sm:$0xff]
    %s7388 = smul.u32 4, 1
    %s7389 = smul.u32 %s7388, 64
    %s7390 = smul.u32 %s7389, 12
    %s7391 = sshll.u32 %s7390, 4
    %7392 = dma.done [#allocation8], %s7391
    %s7393 = smul.u32 %s7389, 4
    %s7394 = sshll.u32 %s7393, 4
    %7395 = dma.done %s272, %s7394
    %s7396 = smul.u32 %s7389, 1
    %s7397 = sshll.u32 %s7396, 4
    %7398 = dma.done %s307, %s7397
    %s7399 = smul.u32 %s7388, 16
    %s7400 = smul.u32 %s7399, 4
    %s7401 = sshll.u32 %s7400, 4
    %7402 = dma.done %s319, %s7401
    %v7403 = vld [vmem:[#allocation18] sm:$0xf]
    %v7404 = vld [vmem:[#allocation20] sm:$0xf]
    %v7405 = vadd.f32 %v6776, %v6778
    %v7406 = vadd.f32 %v7405, %v7378
    %v7407 = vadd.f32 %v7406, %v7380
    %7408 = vadd.xlane.f32.xlu0 %v7407
    %v7409 = vpop.xlane.xlu0 %7408
    %v7410 = vadd.f32 %v6780, %v6782
    %v7411 = vadd.f32 %v7410, %v7382
    %v7412 = vadd.f32 %v7411, %v7384
    %7413 = vadd.xlane.f32.xlu0 %v7412
    %v7414 = vpop.xlane.xlu0 %7413
    %v7415 = vrcp.pop 512.0
    %v7416 = vmul.f32 %v7409, %v7415
    %v7417 = vmul.f32 %v7414, %v7415
    %v7418 = vsub.f32 %v6776, %v7416
    %v7419 = vsub.f32 %v6778, %v7416
    %v7420 = vsub.f32 %v7378, %v7416
    %v7421 = vsub.f32 %v7380, %v7416
    %v7422 = vsub.f32 %v6780, %v7417
    %v7423 = vsub.f32 %v6782, %v7417
    %v7424 = vsub.f32 %v7382, %v7417
    %v7425 = vsub.f32 %v7384, %v7417
    %v7426 = vmul.f32 %v7418, %v7418
    %v7427 = vmul.f32 %v7419, %v7419
    %v7428 = vmul.f32 %v7420, %v7420
    %v7429 = vmul.f32 %v7421, %v7421
    %v7430 = vmul.f32 %v7422, %v7422
    %v7431 = vmul.f32 %v7423, %v7423
    %v7432 = vmul.f32 %v7424, %v7424
    %v7433 = vmul.f32 %v7425, %v7425
    %v7434 = vadd.f32 %v7426, %v7427
    %v7435 = vadd.f32 %v7434, %v7428
    %v7436 = vadd.f32 %v7435, %v7429
    %7437 = vadd.xlane.f32.xlu0 %v7436
    %v7438 = vpop.xlane.xlu0 %7437
    %v7439 = vadd.f32 %v7430, %v7431
    %v7440 = vadd.f32 %v7439, %v7432
    %v7441 = vadd.f32 %v7440, %v7433
    %7442 = vadd.xlane.f32.xlu0 %v7441
    %v7443 = vpop.xlane.xlu0 %7442
    %v7444 = vmul.f32 %v7438, %v7415
    %v7445 = vmul.f32 %v7443, %v7415
    %v7446 = vadd.f32 %v7444, 1e-05
    %v7447 = vadd.f32 %v7445, 1e-05
    %v7448 = vrsqrt.pop %v7446
    %v7449 = vrsqrt.pop %v7447
    %v7450 = vmul.f32 %v7418, %v7448
    %v7451 = vmul.f32 %v7419, %v7448
    %v7452 = vmul.f32 %v7420, %v7448
    %v7453 = vmul.f32 %v7421, %v7448
    %v7454 = vmul.f32 %v7422, %v7449
    %v7455 = vmul.f32 %v7423, %v7449
    %v7456 = vmul.f32 %v7424, %v7449
    %v7457 = vmul.f32 %v7425, %v7449
    %v7459 = vlaneseq
    %v7460 = vshrl.u32 %v7459, 7
    %v7461 = vsub.s32 0, %v7460
    %v7462 = vrot.slane %v7403, %v7461
    %v7463 = vlaneseq
    %v7464 = vshrl.u32 %v7463, 7
    %v7465 = vsub.s32 1, %v7464
    %v7466 = vrot.slane %v7403, %v7465
    %v7467 = vlaneseq
    %v7468 = vshrl.u32 %v7467, 7
    %v7469 = vsub.s32 2, %v7468
    %v7470 = vrot.slane %v7403, %v7469
    %v7471 = vlaneseq
    %v7472 = vshrl.u32 %v7471, 7
    %v7473 = vsub.s32 3, %v7472
    %v7474 = vrot.slane %v7403, %v7473
    %v7479 = vmul.f32 %v7450, %v7462
    %v7480 = vmul.f32 %v7451, %v7466
    %v7481 = vmul.f32 %v7452, %v7470
    %v7482 = vmul.f32 %v7453, %v7474
    %v7483 = vmul.f32 %v7454, %v7462
    %v7484 = vmul.f32 %v7455, %v7466
    %v7485 = vmul.f32 %v7456, %v7470
    %v7486 = vmul.f32 %v7457, %v7474
    %v7488 = vlaneseq
    %v7489 = vshrl.u32 %v7488, 7
    %v7490 = vsub.s32 0, %v7489
    %v7491 = vrot.slane %v7404, %v7490
    %v7492 = vlaneseq
    %v7493 = vshrl.u32 %v7492, 7
    %v7494 = vsub.s32 1, %v7493
    %v7495 = vrot.slane %v7404, %v7494
    %v7496 = vlaneseq
    %v7497 = vshrl.u32 %v7496, 7
    %v7498 = vsub.s32 2, %v7497
    %v7499 = vrot.slane %v7404, %v7498
    %v7500 = vlaneseq
    %v7501 = vshrl.u32 %v7500, 7
    %v7502 = vsub.s32 3, %v7501
    %v7503 = vrot.slane %v7404, %v7502
    %v7508 = vadd.f32 %v7479, %v7491
    %v7509 = vadd.f32 %v7480, %v7495
    %v7510 = vadd.f32 %v7481, %v7499
    %v7511 = vadd.f32 %v7482, %v7503
    %v7512 = vadd.f32 %v7483, %v7491
    %v7513 = vadd.f32 %v7484, %v7495
    %v7514 = vadd.f32 %v7485, %v7499
    %v7515 = vadd.f32 %v7486, %v7503
    %v7516 = vpack.c.bf16 %v7512, %v7508
    %v7517 = vpack.c.bf16 %v7513, %v7509
    %v7518 = vpack.c.bf16 %v7514, %v7510
    %v7519 = vpack.c.bf16 %v7515, %v7511
    %v7520 = vld [vmem:[#allocation3] sm:$0xff]
    %v7521 = vld [vmem:[#allocation3 + $0x8] sm:$0xff]
    %v7522 = vld [vmem:[#allocation3 + $0x10] sm:$0xff]
    %v7523 = vld [vmem:[#allocation3 + $0x18] sm:$0xff]
    %v7524 = vld [vmem:[#allocation3 + $0x20] sm:$0xff]
    %v7525 = vld [vmem:[#allocation3 + $0x28] sm:$0xff]
    %v7526 = vld [vmem:[#allocation3 + $0x30] sm:$0xff]
    %v7527 = vld [vmem:[#allocation3 + $0x38] sm:$0xff]
    %v7528 = vld [vmem:[#allocation3 + $0x40] sm:$0xff]
    %v7529 = vld [vmem:[#allocation3 + $0x48] sm:$0xff]
    %v7530 = vld [vmem:[#allocation3 + $0x50] sm:$0xff]
    %v7531 = vld [vmem:[#allocation3 + $0x58] sm:$0xff]
    %v7532 = vld [vmem:[#allocation3 + $0x60] sm:$0xff]
    %v7533 = vld [vmem:[#allocation3 + $0x68] sm:$0xff]
    %v7534 = vld [vmem:[#allocation3 + $0x70] sm:$0xff]
    %v7535 = vld [vmem:[#allocation3 + $0x78] sm:$0xff]
    %v7536 = vld [vmem:[#allocation3 + $0x80] sm:$0xff]
    %v7537 = vld [vmem:[#allocation3 + $0x88] sm:$0xff]
    %v7538 = vld [vmem:[#allocation3 + $0x90] sm:$0xff]
    %v7539 = vld [vmem:[#allocation3 + $0x98] sm:$0xff]
    %v7540 = vld [vmem:[#allocation3 + $0xa0] sm:$0xff]
    %v7541 = vld [vmem:[#allocation3 + $0xa8] sm:$0xff]
    %v7542 = vld [vmem:[#allocation3 + $0xb0] sm:$0xff]
    %v7543 = vld [vmem:[#allocation3 + $0xb8] sm:$0xff]
    %v7544 = vld [vmem:[#allocation3 + $0xc0] sm:$0xff]
    %v7545 = vld [vmem:[#allocation3 + $0xc8] sm:$0xff]
    %v7546 = vld [vmem:[#allocation3 + $0xd0] sm:$0xff]
    %v7547 = vld [vmem:[#allocation3 + $0xd8] sm:$0xff]
    %v7548 = vld [vmem:[#allocation3 + $0xe0] sm:$0xff]
    %v7549 = vld [vmem:[#allocation3 + $0xe8] sm:$0xff]
    %v7550 = vld [vmem:[#allocation3 + $0xf0] sm:$0xff]
    %v7551 = vld [vmem:[#allocation3 + $0xf8] sm:$0xff]
    %v7552 = vld [vmem:[#allocation3 + $0x100] sm:$0xff]
    %v7553 = vld [vmem:[#allocation3 + $0x108] sm:$0xff]
    %v7554 = vld [vmem:[#allocation3 + $0x110] sm:$0xff]
    %v7555 = vld [vmem:[#allocation3 + $0x118] sm:$0xff]
    %v7556 = vld [vmem:[#allocation3 + $0x120] sm:$0xff]
    %v7557 = vld [vmem:[#allocation3 + $0x128] sm:$0xff]
    %v7558 = vld [vmem:[#allocation3 + $0x130] sm:$0xff]
    %v7559 = vld [vmem:[#allocation3 + $0x138] sm:$0xff]
    %v7560 = vld [vmem:[#allocation3 + $0x140] sm:$0xff]
    %v7561 = vld [vmem:[#allocation3 + $0x148] sm:$0xff]
    %v7562 = vld [vmem:[#allocation3 + $0x150] sm:$0xff]
    %v7563 = vld [vmem:[#allocation3 + $0x158] sm:$0xff]
    %v7564 = vld [vmem:[#allocation3 + $0x160] sm:$0xff]
    %v7565 = vld [vmem:[#allocation3 + $0x168] sm:$0xff]
    %v7566 = vld [vmem:[#allocation3 + $0x170] sm:$0xff]
    %v7567 = vld [vmem:[#allocation3 + $0x178] sm:$0xff]
    %v7568 = vld [vmem:[#allocation3 + $0x180] sm:$0xff]
    %v7569 = vld [vmem:[#allocation3 + $0x188] sm:$0xff]
    %v7570 = vld [vmem:[#allocation3 + $0x190] sm:$0xff]
    %v7571 = vld [vmem:[#allocation3 + $0x198] sm:$0xff]
    %v7572 = vld [vmem:[#allocation3 + $0x1a0] sm:$0xff]
    %v7573 = vld [vmem:[#allocation3 + $0x1a8] sm:$0xff]
    %v7574 = vld [vmem:[#allocation3 + $0x1b0] sm:$0xff]
    %v7575 = vld [vmem:[#allocation3 + $0x1b8] sm:$0xff]
    %v7576 = vld [vmem:[#allocation3 + $0x1c0] sm:$0xff]
    %v7577 = vld [vmem:[#allocation3 + $0x1c8] sm:$0xff]
    %v7578 = vld [vmem:[#allocation3 + $0x1d0] sm:$0xff]
    %v7579 = vld [vmem:[#allocation3 + $0x1d8] sm:$0xff]
    %v7580 = vld [vmem:[#allocation3 + $0x1e0] sm:$0xff]
    %v7581 = vld [vmem:[#allocation3 + $0x1e8] sm:$0xff]
    %v7582 = vld [vmem:[#allocation3 + $0x1f0] sm:$0xff]
    %v7583 = vld [vmem:[#allocation3 + $0x1f8] sm:$0xff]
    %v7584 = vld [vmem:[#allocation3 + $0x200] sm:$0xff]
    %v7585 = vld [vmem:[#allocation3 + $0x208] sm:$0xff]
    %v7586 = vld [vmem:[#allocation3 + $0x210] sm:$0xff]
    %v7587 = vld [vmem:[#allocation3 + $0x218] sm:$0xff]
    %v7588 = vld [vmem:[#allocation3 + $0x220] sm:$0xff]
    %v7589 = vld [vmem:[#allocation3 + $0x228] sm:$0xff]
    %v7590 = vld [vmem:[#allocation3 + $0x230] sm:$0xff]
    %v7591 = vld [vmem:[#allocation3 + $0x238] sm:$0xff]
    %v7592 = vld [vmem:[#allocation3 + $0x240] sm:$0xff]
    %v7593 = vld [vmem:[#allocation3 + $0x248] sm:$0xff]
    %v7594 = vld [vmem:[#allocation3 + $0x250] sm:$0xff]
    %v7595 = vld [vmem:[#allocation3 + $0x258] sm:$0xff]
    %v7596 = vld [vmem:[#allocation3 + $0x260] sm:$0xff]
    %v7597 = vld [vmem:[#allocation3 + $0x268] sm:$0xff]
    %v7598 = vld [vmem:[#allocation3 + $0x270] sm:$0xff]
    %v7599 = vld [vmem:[#allocation3 + $0x278] sm:$0xff]
    %v7600 = vld [vmem:[#allocation3 + $0x280] sm:$0xff]
    %v7601 = vld [vmem:[#allocation3 + $0x288] sm:$0xff]
    %v7602 = vld [vmem:[#allocation3 + $0x290] sm:$0xff]
    %v7603 = vld [vmem:[#allocation3 + $0x298] sm:$0xff]
    %v7604 = vld [vmem:[#allocation3 + $0x2a0] sm:$0xff]
    %v7605 = vld [vmem:[#allocation3 + $0x2a8] sm:$0xff]
    %v7606 = vld [vmem:[#allocation3 + $0x2b0] sm:$0xff]
    %v7607 = vld [vmem:[#allocation3 + $0x2b8] sm:$0xff]
    %v7608 = vld [vmem:[#allocation3 + $0x2c0] sm:$0xff]
    %v7609 = vld [vmem:[#allocation3 + $0x2c8] sm:$0xff]
    %v7610 = vld [vmem:[#allocation3 + $0x2d0] sm:$0xff]
    %v7611 = vld [vmem:[#allocation3 + $0x2d8] sm:$0xff]
    %v7612 = vld [vmem:[#allocation3 + $0x2e0] sm:$0xff]
    %v7613 = vld [vmem:[#allocation3 + $0x2e8] sm:$0xff]
    %v7614 = vld [vmem:[#allocation3 + $0x2f0] sm:$0xff]
    %v7615 = vld [vmem:[#allocation3 + $0x2f8] sm:$0xff]
    %v7616 = vld [vmem:[#allocation3 + $0x300] sm:$0xff]
    %v7617 = vld [vmem:[#allocation3 + $0x308] sm:$0xff]
    %v7618 = vld [vmem:[#allocation3 + $0x310] sm:$0xff]
    %v7619 = vld [vmem:[#allocation3 + $0x318] sm:$0xff]
    %v7620 = vld [vmem:[#allocation3 + $0x320] sm:$0xff]
    %v7621 = vld [vmem:[#allocation3 + $0x328] sm:$0xff]
    %v7622 = vld [vmem:[#allocation3 + $0x330] sm:$0xff]
    %v7623 = vld [vmem:[#allocation3 + $0x338] sm:$0xff]
    %v7624 = vld [vmem:[#allocation3 + $0x340] sm:$0xff]
    %v7625 = vld [vmem:[#allocation3 + $0x348] sm:$0xff]
    %v7626 = vld [vmem:[#allocation3 + $0x350] sm:$0xff]
    %v7627 = vld [vmem:[#allocation3 + $0x358] sm:$0xff]
    %v7628 = vld [vmem:[#allocation3 + $0x360] sm:$0xff]
    %v7629 = vld [vmem:[#allocation3 + $0x368] sm:$0xff]
    %v7630 = vld [vmem:[#allocation3 + $0x370] sm:$0xff]
    %v7631 = vld [vmem:[#allocation3 + $0x378] sm:$0xff]
    %v7632 = vld [vmem:[#allocation3 + $0x380] sm:$0xff]
    %v7633 = vld [vmem:[#allocation3 + $0x388] sm:$0xff]
    %v7634 = vld [vmem:[#allocation3 + $0x390] sm:$0xff]
    %v7635 = vld [vmem:[#allocation3 + $0x398] sm:$0xff]
    %v7636 = vld [vmem:[#allocation3 + $0x3a0] sm:$0xff]
    %v7637 = vld [vmem:[#allocation3 + $0x3a8] sm:$0xff]
    %v7638 = vld [vmem:[#allocation3 + $0x3b0] sm:$0xff]
    %v7639 = vld [vmem:[#allocation3 + $0x3b8] sm:$0xff]
    %v7640 = vld [vmem:[#allocation3 + $0x3c0] sm:$0xff]
    %v7641 = vld [vmem:[#allocation3 + $0x3c8] sm:$0xff]
    %v7642 = vld [vmem:[#allocation3 + $0x3d0] sm:$0xff]
    %v7643 = vld [vmem:[#allocation3 + $0x3d8] sm:$0xff]
    %v7644 = vld [vmem:[#allocation3 + $0x3e0] sm:$0xff]
    %v7645 = vld [vmem:[#allocation3 + $0x3e8] sm:$0xff]
    %v7646 = vld [vmem:[#allocation3 + $0x3f0] sm:$0xff]
    %v7647 = vld [vmem:[#allocation3 + $0x3f8] sm:$0xff]
    %v7648 = vld [vmem:[#allocation3 + $0x400] sm:$0xff]
    %v7649 = vld [vmem:[#allocation3 + $0x408] sm:$0xff]
    %v7650 = vld [vmem:[#allocation3 + $0x410] sm:$0xff]
    %v7651 = vld [vmem:[#allocation3 + $0x418] sm:$0xff]
    %v7652 = vld [vmem:[#allocation3 + $0x420] sm:$0xff]
    %v7653 = vld [vmem:[#allocation3 + $0x428] sm:$0xff]
    %v7654 = vld [vmem:[#allocation3 + $0x430] sm:$0xff]
    %v7655 = vld [vmem:[#allocation3 + $0x438] sm:$0xff]
    %v7656 = vld [vmem:[#allocation3 + $0x440] sm:$0xff]
    %v7657 = vld [vmem:[#allocation3 + $0x448] sm:$0xff]
    %v7658 = vld [vmem:[#allocation3 + $0x450] sm:$0xff]
    %v7659 = vld [vmem:[#allocation3 + $0x458] sm:$0xff]
    %v7660 = vld [vmem:[#allocation3 + $0x460] sm:$0xff]
    %v7661 = vld [vmem:[#allocation3 + $0x468] sm:$0xff]
    %v7662 = vld [vmem:[#allocation3 + $0x470] sm:$0xff]
    %v7663 = vld [vmem:[#allocation3 + $0x478] sm:$0xff]
    %v7664 = vld [vmem:[#allocation3 + $0x480] sm:$0xff]
    %v7665 = vld [vmem:[#allocation3 + $0x488] sm:$0xff]
    %v7666 = vld [vmem:[#allocation3 + $0x490] sm:$0xff]
    %v7667 = vld [vmem:[#allocation3 + $0x498] sm:$0xff]
    %v7668 = vld [vmem:[#allocation3 + $0x4a0] sm:$0xff]
    %v7669 = vld [vmem:[#allocation3 + $0x4a8] sm:$0xff]
    %v7670 = vld [vmem:[#allocation3 + $0x4b0] sm:$0xff]
    %v7671 = vld [vmem:[#allocation3 + $0x4b8] sm:$0xff]
    %v7672 = vld [vmem:[#allocation3 + $0x4c0] sm:$0xff]
    %v7673 = vld [vmem:[#allocation3 + $0x4c8] sm:$0xff]
    %v7674 = vld [vmem:[#allocation3 + $0x4d0] sm:$0xff]
    %v7675 = vld [vmem:[#allocation3 + $0x4d8] sm:$0xff]
    %v7676 = vld [vmem:[#allocation3 + $0x4e0] sm:$0xff]
    %v7677 = vld [vmem:[#allocation3 + $0x4e8] sm:$0xff]
    %v7678 = vld [vmem:[#allocation3 + $0x4f0] sm:$0xff]
    %v7679 = vld [vmem:[#allocation3 + $0x4f8] sm:$0xff]
    %v7680 = vld [vmem:[#allocation3 + $0x500] sm:$0xff]
    %v7681 = vld [vmem:[#allocation3 + $0x508] sm:$0xff]
    %v7682 = vld [vmem:[#allocation3 + $0x510] sm:$0xff]
    %v7683 = vld [vmem:[#allocation3 + $0x518] sm:$0xff]
    %v7684 = vld [vmem:[#allocation3 + $0x520] sm:$0xff]
    %v7685 = vld [vmem:[#allocation3 + $0x528] sm:$0xff]
    %v7686 = vld [vmem:[#allocation3 + $0x530] sm:$0xff]
    %v7687 = vld [vmem:[#allocation3 + $0x538] sm:$0xff]
    %v7688 = vld [vmem:[#allocation3 + $0x540] sm:$0xff]
    %v7689 = vld [vmem:[#allocation3 + $0x548] sm:$0xff]
    %v7690 = vld [vmem:[#allocation3 + $0x550] sm:$0xff]
    %v7691 = vld [vmem:[#allocation3 + $0x558] sm:$0xff]
    %v7692 = vld [vmem:[#allocation3 + $0x560] sm:$0xff]
    %v7693 = vld [vmem:[#allocation3 + $0x568] sm:$0xff]
    %v7694 = vld [vmem:[#allocation3 + $0x570] sm:$0xff]
    %v7695 = vld [vmem:[#allocation3 + $0x578] sm:$0xff]
    %v7696 = vld [vmem:[#allocation3 + $0x580] sm:$0xff]
    %v7697 = vld [vmem:[#allocation3 + $0x588] sm:$0xff]
    %v7698 = vld [vmem:[#allocation3 + $0x590] sm:$0xff]
    %v7699 = vld [vmem:[#allocation3 + $0x598] sm:$0xff]
    %v7700 = vld [vmem:[#allocation3 + $0x5a0] sm:$0xff]
    %v7701 = vld [vmem:[#allocation3 + $0x5a8] sm:$0xff]
    %v7702 = vld [vmem:[#allocation3 + $0x5b0] sm:$0xff]
    %v7703 = vld [vmem:[#allocation3 + $0x5b8] sm:$0xff]
    %v7704 = vld [vmem:[#allocation3 + $0x5c0] sm:$0xff]
    %v7705 = vld [vmem:[#allocation3 + $0x5c8] sm:$0xff]
    %v7706 = vld [vmem:[#allocation3 + $0x5d0] sm:$0xff]
    %v7707 = vld [vmem:[#allocation3 + $0x5d8] sm:$0xff]
    %v7708 = vld [vmem:[#allocation3 + $0x5e0] sm:$0xff]
    %v7709 = vld [vmem:[#allocation3 + $0x5e8] sm:$0xff]
    %v7710 = vld [vmem:[#allocation3 + $0x5f0] sm:$0xff]
    %v7711 = vld [vmem:[#allocation3 + $0x5f8] sm:$0xff]
    %v7712 = vld [vmem:[#allocation3 + $0x600] sm:$0xff]
    %v7713 = vld [vmem:[#allocation3 + $0x608] sm:$0xff]
    %v7714 = vld [vmem:[#allocation3 + $0x610] sm:$0xff]
    %v7715 = vld [vmem:[#allocation3 + $0x618] sm:$0xff]
    %v7716 = vld [vmem:[#allocation3 + $0x620] sm:$0xff]
    %v7717 = vld [vmem:[#allocation3 + $0x628] sm:$0xff]
    %v7718 = vld [vmem:[#allocation3 + $0x630] sm:$0xff]
    %v7719 = vld [vmem:[#allocation3 + $0x638] sm:$0xff]
    %v7720 = vld [vmem:[#allocation3 + $0x640] sm:$0xff]
    %v7721 = vld [vmem:[#allocation3 + $0x648] sm:$0xff]
    %v7722 = vld [vmem:[#allocation3 + $0x650] sm:$0xff]
    %v7723 = vld [vmem:[#allocation3 + $0x658] sm:$0xff]
    %v7724 = vld [vmem:[#allocation3 + $0x660] sm:$0xff]
    %v7725 = vld [vmem:[#allocation3 + $0x668] sm:$0xff]
    %v7726 = vld [vmem:[#allocation3 + $0x670] sm:$0xff]
    %v7727 = vld [vmem:[#allocation3 + $0x678] sm:$0xff]
    %v7728 = vld [vmem:[#allocation3 + $0x680] sm:$0xff]
    %v7729 = vld [vmem:[#allocation3 + $0x688] sm:$0xff]
    %v7730 = vld [vmem:[#allocation3 + $0x690] sm:$0xff]
    %v7731 = vld [vmem:[#allocation3 + $0x698] sm:$0xff]
    %v7732 = vld [vmem:[#allocation3 + $0x6a0] sm:$0xff]
    %v7733 = vld [vmem:[#allocation3 + $0x6a8] sm:$0xff]
    %v7734 = vld [vmem:[#allocation3 + $0x6b0] sm:$0xff]
    %v7735 = vld [vmem:[#allocation3 + $0x6b8] sm:$0xff]
    %v7736 = vld [vmem:[#allocation3 + $0x6c0] sm:$0xff]
    %v7737 = vld [vmem:[#allocation3 + $0x6c8] sm:$0xff]
    %v7738 = vld [vmem:[#allocation3 + $0x6d0] sm:$0xff]
    %v7739 = vld [vmem:[#allocation3 + $0x6d8] sm:$0xff]
    %v7740 = vld [vmem:[#allocation3 + $0x6e0] sm:$0xff]
    %v7741 = vld [vmem:[#allocation3 + $0x6e8] sm:$0xff]
    %v7742 = vld [vmem:[#allocation3 + $0x6f0] sm:$0xff]
    %v7743 = vld [vmem:[#allocation3 + $0x6f8] sm:$0xff]
    %v7744 = vld [vmem:[#allocation3 + $0x700] sm:$0xff]
    %v7745 = vld [vmem:[#allocation3 + $0x708] sm:$0xff]
    %v7746 = vld [vmem:[#allocation3 + $0x710] sm:$0xff]
    %v7747 = vld [vmem:[#allocation3 + $0x718] sm:$0xff]
    %v7748 = vld [vmem:[#allocation3 + $0x720] sm:$0xff]
    %v7749 = vld [vmem:[#allocation3 + $0x728] sm:$0xff]
    %v7750 = vld [vmem:[#allocation3 + $0x730] sm:$0xff]
    %v7751 = vld [vmem:[#allocation3 + $0x738] sm:$0xff]
    %v7752 = vld [vmem:[#allocation3 + $0x740] sm:$0xff]
    %v7753 = vld [vmem:[#allocation3 + $0x748] sm:$0xff]
    %v7754 = vld [vmem:[#allocation3 + $0x750] sm:$0xff]
    %v7755 = vld [vmem:[#allocation3 + $0x758] sm:$0xff]
    %v7756 = vld [vmem:[#allocation3 + $0x760] sm:$0xff]
    %v7757 = vld [vmem:[#allocation3 + $0x768] sm:$0xff]
    %v7758 = vld [vmem:[#allocation3 + $0x770] sm:$0xff]
    %v7759 = vld [vmem:[#allocation3 + $0x778] sm:$0xff]
    %v7760 = vld [vmem:[#allocation3 + $0x780] sm:$0xff]
    %v7761 = vld [vmem:[#allocation3 + $0x788] sm:$0xff]
    %v7762 = vld [vmem:[#allocation3 + $0x790] sm:$0xff]
    %v7763 = vld [vmem:[#allocation3 + $0x798] sm:$0xff]
    %v7764 = vld [vmem:[#allocation3 + $0x7a0] sm:$0xff]
    %v7765 = vld [vmem:[#allocation3 + $0x7a8] sm:$0xff]
    %v7766 = vld [vmem:[#allocation3 + $0x7b0] sm:$0xff]
    %v7767 = vld [vmem:[#allocation3 + $0x7b8] sm:$0xff]
    %v7768 = vld [vmem:[#allocation3 + $0x7c0] sm:$0xff]
    %v7769 = vld [vmem:[#allocation3 + $0x7c8] sm:$0xff]
    %v7770 = vld [vmem:[#allocation3 + $0x7d0] sm:$0xff]
    %v7771 = vld [vmem:[#allocation3 + $0x7d8] sm:$0xff]
    %v7772 = vld [vmem:[#allocation3 + $0x7e0] sm:$0xff]
    %v7773 = vld [vmem:[#allocation3 + $0x7e8] sm:$0xff]
    %v7774 = vld [vmem:[#allocation3 + $0x7f0] sm:$0xff]
    %v7775 = vld [vmem:[#allocation3 + $0x7f8] sm:$0xff]
    %v7776 = vld [vmem:[#allocation3 + $0x800] sm:$0xff]
    %v7777 = vld [vmem:[#allocation3 + $0x808] sm:$0xff]
    %v7778 = vld [vmem:[#allocation3 + $0x810] sm:$0xff]
    %v7779 = vld [vmem:[#allocation3 + $0x818] sm:$0xff]
    %v7780 = vld [vmem:[#allocation3 + $0x820] sm:$0xff]
    %v7781 = vld [vmem:[#allocation3 + $0x828] sm:$0xff]
    %v7782 = vld [vmem:[#allocation3 + $0x830] sm:$0xff]
    %v7783 = vld [vmem:[#allocation3 + $0x838] sm:$0xff]
    %v7784 = vld [vmem:[#allocation3 + $0x840] sm:$0xff]
    %v7785 = vld [vmem:[#allocation3 + $0x848] sm:$0xff]
    %v7786 = vld [vmem:[#allocation3 + $0x850] sm:$0xff]
    %v7787 = vld [vmem:[#allocation3 + $0x858] sm:$0xff]
    %v7788 = vld [vmem:[#allocation3 + $0x860] sm:$0xff]
    %v7789 = vld [vmem:[#allocation3 + $0x868] sm:$0xff]
    %v7790 = vld [vmem:[#allocation3 + $0x870] sm:$0xff]
    %v7791 = vld [vmem:[#allocation3 + $0x878] sm:$0xff]
    %v7792 = vld [vmem:[#allocation3 + $0x880] sm:$0xff]
    %v7793 = vld [vmem:[#allocation3 + $0x888] sm:$0xff]
    %v7794 = vld [vmem:[#allocation3 + $0x890] sm:$0xff]
    %v7795 = vld [vmem:[#allocation3 + $0x898] sm:$0xff]
    %v7796 = vld [vmem:[#allocation3 + $0x8a0] sm:$0xff]
    %v7797 = vld [vmem:[#allocation3 + $0x8a8] sm:$0xff]
    %v7798 = vld [vmem:[#allocation3 + $0x8b0] sm:$0xff]
    %v7799 = vld [vmem:[#allocation3 + $0x8b8] sm:$0xff]
    %v7800 = vld [vmem:[#allocation3 + $0x8c0] sm:$0xff]
    %v7801 = vld [vmem:[#allocation3 + $0x8c8] sm:$0xff]
    %v7802 = vld [vmem:[#allocation3 + $0x8d0] sm:$0xff]
    %v7803 = vld [vmem:[#allocation3 + $0x8d8] sm:$0xff]
    %v7804 = vld [vmem:[#allocation3 + $0x8e0] sm:$0xff]
    %v7805 = vld [vmem:[#allocation3 + $0x8e8] sm:$0xff]
    %v7806 = vld [vmem:[#allocation3 + $0x8f0] sm:$0xff]
    %v7807 = vld [vmem:[#allocation3 + $0x8f8] sm:$0xff]
    %v7808 = vld [vmem:[#allocation3 + $0x900] sm:$0xff]
    %v7809 = vld [vmem:[#allocation3 + $0x908] sm:$0xff]
    %v7810 = vld [vmem:[#allocation3 + $0x910] sm:$0xff]
    %v7811 = vld [vmem:[#allocation3 + $0x918] sm:$0xff]
    %v7812 = vld [vmem:[#allocation3 + $0x920] sm:$0xff]
    %v7813 = vld [vmem:[#allocation3 + $0x928] sm:$0xff]
    %v7814 = vld [vmem:[#allocation3 + $0x930] sm:$0xff]
    %v7815 = vld [vmem:[#allocation3 + $0x938] sm:$0xff]
    %v7816 = vld [vmem:[#allocation3 + $0x940] sm:$0xff]
    %v7817 = vld [vmem:[#allocation3 + $0x948] sm:$0xff]
    %v7818 = vld [vmem:[#allocation3 + $0x950] sm:$0xff]
    %v7819 = vld [vmem:[#allocation3 + $0x958] sm:$0xff]
    %v7820 = vld [vmem:[#allocation3 + $0x960] sm:$0xff]
    %v7821 = vld [vmem:[#allocation3 + $0x968] sm:$0xff]
    %v7822 = vld [vmem:[#allocation3 + $0x970] sm:$0xff]
    %v7823 = vld [vmem:[#allocation3 + $0x978] sm:$0xff]
    %v7824 = vld [vmem:[#allocation3 + $0x980] sm:$0xff]
    %v7825 = vld [vmem:[#allocation3 + $0x988] sm:$0xff]
    %v7826 = vld [vmem:[#allocation3 + $0x990] sm:$0xff]
    %v7827 = vld [vmem:[#allocation3 + $0x998] sm:$0xff]
    %v7828 = vld [vmem:[#allocation3 + $0x9a0] sm:$0xff]
    %v7829 = vld [vmem:[#allocation3 + $0x9a8] sm:$0xff]
    %v7830 = vld [vmem:[#allocation3 + $0x9b0] sm:$0xff]
    %v7831 = vld [vmem:[#allocation3 + $0x9b8] sm:$0xff]
    %v7832 = vld [vmem:[#allocation3 + $0x9c0] sm:$0xff]
    %v7833 = vld [vmem:[#allocation3 + $0x9c8] sm:$0xff]
    %v7834 = vld [vmem:[#allocation3 + $0x9d0] sm:$0xff]
    %v7835 = vld [vmem:[#allocation3 + $0x9d8] sm:$0xff]
    %v7836 = vld [vmem:[#allocation3 + $0x9e0] sm:$0xff]
    %v7837 = vld [vmem:[#allocation3 + $0x9e8] sm:$0xff]
    %v7838 = vld [vmem:[#allocation3 + $0x9f0] sm:$0xff]
    %v7839 = vld [vmem:[#allocation3 + $0x9f8] sm:$0xff]
    %v7840 = vld [vmem:[#allocation3 + $0xa00] sm:$0xff]
    %v7841 = vld [vmem:[#allocation3 + $0xa08] sm:$0xff]
    %v7842 = vld [vmem:[#allocation3 + $0xa10] sm:$0xff]
    %v7843 = vld [vmem:[#allocation3 + $0xa18] sm:$0xff]
    %v7844 = vld [vmem:[#allocation3 + $0xa20] sm:$0xff]
    %v7845 = vld [vmem:[#allocation3 + $0xa28] sm:$0xff]
    %v7846 = vld [vmem:[#allocation3 + $0xa30] sm:$0xff]
    %v7847 = vld [vmem:[#allocation3 + $0xa38] sm:$0xff]
    %v7848 = vld [vmem:[#allocation3 + $0xa40] sm:$0xff]
    %v7849 = vld [vmem:[#allocation3 + $0xa48] sm:$0xff]
    %v7850 = vld [vmem:[#allocation3 + $0xa50] sm:$0xff]
    %v7851 = vld [vmem:[#allocation3 + $0xa58] sm:$0xff]
    %v7852 = vld [vmem:[#allocation3 + $0xa60] sm:$0xff]
    %v7853 = vld [vmem:[#allocation3 + $0xa68] sm:$0xff]
    %v7854 = vld [vmem:[#allocation3 + $0xa70] sm:$0xff]
    %v7855 = vld [vmem:[#allocation3 + $0xa78] sm:$0xff]
    %v7856 = vld [vmem:[#allocation3 + $0xa80] sm:$0xff]
    %v7857 = vld [vmem:[#allocation3 + $0xa88] sm:$0xff]
    %v7858 = vld [vmem:[#allocation3 + $0xa90] sm:$0xff]
    %v7859 = vld [vmem:[#allocation3 + $0xa98] sm:$0xff]
    %v7860 = vld [vmem:[#allocation3 + $0xaa0] sm:$0xff]
    %v7861 = vld [vmem:[#allocation3 + $0xaa8] sm:$0xff]
    %v7862 = vld [vmem:[#allocation3 + $0xab0] sm:$0xff]
    %v7863 = vld [vmem:[#allocation3 + $0xab8] sm:$0xff]
    %v7864 = vld [vmem:[#allocation3 + $0xac0] sm:$0xff]
    %v7865 = vld [vmem:[#allocation3 + $0xac8] sm:$0xff]
    %v7866 = vld [vmem:[#allocation3 + $0xad0] sm:$0xff]
    %v7867 = vld [vmem:[#allocation3 + $0xad8] sm:$0xff]
    %v7868 = vld [vmem:[#allocation3 + $0xae0] sm:$0xff]
    %v7869 = vld [vmem:[#allocation3 + $0xae8] sm:$0xff]
    %v7870 = vld [vmem:[#allocation3 + $0xaf0] sm:$0xff]
    %v7871 = vld [vmem:[#allocation3 + $0xaf8] sm:$0xff]
    %v7872 = vld [vmem:[#allocation3 + $0xb00] sm:$0xff]
    %v7873 = vld [vmem:[#allocation3 + $0xb08] sm:$0xff]
    %v7874 = vld [vmem:[#allocation3 + $0xb10] sm:$0xff]
    %v7875 = vld [vmem:[#allocation3 + $0xb18] sm:$0xff]
    %v7876 = vld [vmem:[#allocation3 + $0xb20] sm:$0xff]
    %v7877 = vld [vmem:[#allocation3 + $0xb28] sm:$0xff]
    %v7878 = vld [vmem:[#allocation3 + $0xb30] sm:$0xff]
    %v7879 = vld [vmem:[#allocation3 + $0xb38] sm:$0xff]
    %v7880 = vld [vmem:[#allocation3 + $0xb40] sm:$0xff]
    %v7881 = vld [vmem:[#allocation3 + $0xb48] sm:$0xff]
    %v7882 = vld [vmem:[#allocation3 + $0xb50] sm:$0xff]
    %v7883 = vld [vmem:[#allocation3 + $0xb58] sm:$0xff]
    %v7884 = vld [vmem:[#allocation3 + $0xb60] sm:$0xff]
    %v7885 = vld [vmem:[#allocation3 + $0xb68] sm:$0xff]
    %v7886 = vld [vmem:[#allocation3 + $0xb70] sm:$0xff]
    %v7887 = vld [vmem:[#allocation3 + $0xb78] sm:$0xff]
    %v7888 = vld [vmem:[#allocation3 + $0xb80] sm:$0xff]
    %v7889 = vld [vmem:[#allocation3 + $0xb88] sm:$0xff]
    %v7890 = vld [vmem:[#allocation3 + $0xb90] sm:$0xff]
    %v7891 = vld [vmem:[#allocation3 + $0xb98] sm:$0xff]
    %v7892 = vld [vmem:[#allocation3 + $0xba0] sm:$0xff]
    %v7893 = vld [vmem:[#allocation3 + $0xba8] sm:$0xff]
    %v7894 = vld [vmem:[#allocation3 + $0xbb0] sm:$0xff]
    %v7895 = vld [vmem:[#allocation3 + $0xbb8] sm:$0xff]
    %v7896 = vld [vmem:[#allocation3 + $0xbc0] sm:$0xff]
    %v7897 = vld [vmem:[#allocation3 + $0xbc8] sm:$0xff]
    %v7898 = vld [vmem:[#allocation3 + $0xbd0] sm:$0xff]
    %v7899 = vld [vmem:[#allocation3 + $0xbd8] sm:$0xff]
    %v7900 = vld [vmem:[#allocation3 + $0xbe0] sm:$0xff]
    %v7901 = vld [vmem:[#allocation3 + $0xbe8] sm:$0xff]
    %v7902 = vld [vmem:[#allocation3 + $0xbf0] sm:$0xff]
    %v7903 = vld [vmem:[#allocation3 + $0xbf8] sm:$0xff]
    %v7904 = vld [vmem:[#allocation21] sm:$0xff]
    %v7905 = vld [vmem:[#allocation21 + $0x8] sm:$0xf]
    %v7908 = vlaneseq
    %v7909 = vshrl.u32 %v7908, 7
    %v7910 = vsub.s32 0, %v7909
    %v7911 = vrot.slane %v7904, %v7910
    %v7912 = vlaneseq
    %v7913 = vshrl.u32 %v7912, 7
    %v7914 = vsub.s32 1, %v7913
    %v7915 = vrot.slane %v7904, %v7914
    %v7916 = vlaneseq
    %v7917 = vshrl.u32 %v7916, 7
    %v7918 = vsub.s32 2, %v7917
    %v7919 = vrot.slane %v7904, %v7918
    %v7920 = vlaneseq
    %v7921 = vshrl.u32 %v7920, 7
    %v7922 = vsub.s32 3, %v7921
    %v7923 = vrot.slane %v7904, %v7922
    %v7924 = vlaneseq
    %v7925 = vshrl.u32 %v7924, 7
    %v7926 = vsub.s32 4, %v7925
    %v7927 = vrot.slane %v7904, %v7926
    %v7928 = vlaneseq
    %v7929 = vshrl.u32 %v7928, 7
    %v7930 = vsub.s32 5, %v7929
    %v7931 = vrot.slane %v7904, %v7930
    %v7932 = vlaneseq
    %v7933 = vshrl.u32 %v7932, 7
    %v7934 = vsub.s32 6, %v7933
    %v7935 = vrot.slane %v7904, %v7934
    %v7936 = vlaneseq
    %v7937 = vshrl.u32 %v7936, 7
    %v7938 = vsub.s32 7, %v7937
    %v7939 = vrot.slane %v7904, %v7938
    %v7940 = vlaneseq
    %v7941 = vshrl.u32 %v7940, 7
    %v7942 = vsub.s32 0, %v7941
    %v7943 = vrot.slane %v7905, %v7942
    %v7944 = vlaneseq
    %v7945 = vshrl.u32 %v7944, 7
    %v7946 = vsub.s32 1, %v7945
    %v7947 = vrot.slane %v7905, %v7946
    %v7948 = vlaneseq
    %v7949 = vshrl.u32 %v7948, 7
    %v7950 = vsub.s32 2, %v7949
    %v7951 = vrot.slane %v7905, %v7950
    %v7952 = vlaneseq
    %v7953 = vshrl.u32 %v7952, 7
    %v7954 = vsub.s32 3, %v7953
    %v7955 = vrot.slane %v7905, %v7954
    %7968 = vmatprep.subr.bf16.mxu0 %v7521
    %7969 = vmatpush1.bf16.msra.mxu0 %v7520
    %7970 = vmatprep.subr.bf16.mxu0 %v7533
    %7971 = vmatpush1.bf16.msra.mxu0 %v7532
    %7972 = vmatprep.subr.bf16.mxu0 %v7545
    %7973 = vmatpush1.bf16.msra.mxu0 %v7544
    %7974 = vmatprep.subr.bf16.mxu0 %v7557
    %7975 = vmatpush1.bf16.msra.mxu0 %v7556
    %7976 = vmatprep.subr.bf16.mxu0 %v7569
    %7977 = vmatpush1.bf16.msra.mxu0 %v7568
    %7978 = vmatprep.subr.bf16.mxu0 %v7581
    %7979 = vmatpush1.bf16.msra.mxu0 %v7580
    %7980 = vmatprep.subr.bf16.mxu0 %v7593
    %7981 = vmatpush1.bf16.msra.mxu0 %v7592
    %7982 = vmatprep.subr.bf16.mxu0 %v7605
    %7983 = vmatpush1.bf16.msra.mxu0 %v7604
    %7984 = vmatprep.subr.bf16.mxu0 %v7617
    %7985 = vmatpush1.bf16.msra.mxu0 %v7616
    %7986 = vmatprep.subr.bf16.mxu0 %v7629
    %7987 = vmatpush1.bf16.msra.mxu0 %v7628
    %7988 = vmatprep.subr.bf16.mxu0 %v7641
    %7989 = vmatpush1.bf16.msra.mxu0 %v7640
    %7990 = vmatprep.subr.bf16.mxu0 %v7653
    %7991 = vmatpush1.bf16.msra.mxu0 %v7652
    %7992 = vmatprep.subr.bf16.mxu0 %v7665
    %7993 = vmatpush1.bf16.msra.mxu0 %v7664
    %7994 = vmatprep.subr.bf16.mxu0 %v7677
    %7995 = vmatpush1.bf16.msra.mxu0 %v7676
    %7996 = vmatprep.subr.bf16.mxu0 %v7689
    %7997 = vmatpush1.bf16.msra.mxu0 %v7688
    %7998 = vmatprep.subr.bf16.mxu0 %v7701
    %7999 = vmatpush1.bf16.msra.mxu0 %v7700
    %8000 = vmatprep.mubr.bf16.mxu0 %v7517
    %8001 = vmatmul.mubr.bf16.gmra.mrb[0].mxu0 %v7516
    %v8002 = vpop.f32.mrb[0].mxu0
    %v8003 = vadd.f32 %v7911, %v8002
    %v8004 = vpop.f32.mrb[0].mxu0
    %v8005 = vadd.f32 %v7915, %v8004
    %v8006 = vpop.f32.mrb[0].mxu0
    %v8007 = vadd.f32 %v7911, %v8006
    %v8008 = vpop.f32.mrb[0].mxu0
    %v8009 = vadd.f32 %v7915, %v8008
    %8010 = vdwg.mxu0
    %8011 = vmatprep.subr.bf16.mxu0 %v7713
    %8012 = vmatpush1.bf16.msra.mxu0 %v7712
    %8013 = vmatprep.subr.bf16.mxu0 %v7725
    %8014 = vmatpush1.bf16.msra.mxu0 %v7724
    %8015 = vmatprep.subr.bf16.mxu0 %v7737
    %8016 = vmatpush1.bf16.msra.mxu0 %v7736
    %8017 = vmatprep.subr.bf16.mxu0 %v7749
    %8018 = vmatpush1.bf16.msra.mxu0 %v7748
    %8019 = vmatprep.subr.bf16.mxu0 %v7761
    %8020 = vmatpush1.bf16.msra.mxu0 %v7760
    %8021 = vmatprep.subr.bf16.mxu0 %v7773
    %8022 = vmatpush1.bf16.msra.mxu0 %v7772
    %8023 = vmatprep.subr.bf16.mxu0 %v7785
    %8024 = vmatpush1.bf16.msra.mxu0 %v7784
    %8025 = vmatprep.subr.bf16.mxu0 %v7797
    %8026 = vmatpush1.bf16.msra.mxu0 %v7796
    %8027 = vmatprep.subr.bf16.mxu0 %v7809
    %8028 = vmatpush1.bf16.msra.mxu0 %v7808
    %8029 = vmatprep.subr.bf16.mxu0 %v7821
    %8030 = vmatpush1.bf16.msra.mxu0 %v7820
    %8031 = vmatprep.subr.bf16.mxu0 %v7833
    %8032 = vmatpush1.bf16.msra.mxu0 %v7832
    %8033 = vmatprep.subr.bf16.mxu0 %v7845
    %8034 = vmatpush1.bf16.msra.mxu0 %v7844
    %8035 = vmatprep.subr.bf16.mxu0 %v7857
    %8036 = vmatpush1.bf16.msra.mxu0 %v7856
    %8037 = vmatprep.subr.bf16.mxu0 %v7869
    %8038 = vmatpush1.bf16.msra.mxu0 %v7868
    %8039 = vmatprep.subr.bf16.mxu0 %v7881
    %8040 = vmatpush1.bf16.msra.mxu0 %v7880
    %8041 = vmatprep.subr.bf16.mxu0 %v7893
    %8042 = vmatpush1.bf16.msra.mxu0 %v7892
    %8043 = vmatprep.mubr.bf16.mxu0 %v7519
    %8044 = vmatmul.mubr.bf16.gmra.mrb[0].mxu0 %v7518
    %v8045 = vpop.f32.mrb[0].mxu0
    %v8046 = vadd.f32 %v8003, %v8045
    %v8047 = vpop.f32.mrb[0].mxu0
    %v8048 = vadd.f32 %v8005, %v8047
    %v8049 = vpop.f32.mrb[0].mxu0
    %v8050 = vadd.f32 %v8007, %v8049
    %v8051 = vpop.f32.mrb[0].mxu0
    %v8052 = vadd.f32 %v8009, %v8051
    %8053 = vdwg.mxu0
    %8054 = vmatprep.subr.bf16.mxu0 %v7523
    %8055 = vmatpush1.bf16.msra.mxu0 %v7522
    %8056 = vmatprep.subr.bf16.mxu0 %v7535
    %8057 = vmatpush1.bf16.msra.mxu0 %v7534
    %8058 = vmatprep.subr.bf16.mxu0 %v7547
    %8059 = vmatpush1.bf16.msra.mxu0 %v7546
    %8060 = vmatprep.subr.bf16.mxu0 %v7559
    %8061 = vmatpush1.bf16.msra.mxu0 %v7558
    %8062 = vmatprep.subr.bf16.mxu0 %v7571
    %8063 = vmatpush1.bf16.msra.mxu0 %v7570
    %8064 = vmatprep.subr.bf16.mxu0 %v7583
    %8065 = vmatpush1.bf16.msra.mxu0 %v7582
    %8066 = vmatprep.subr.bf16.mxu0 %v7595
    %8067 = vmatpush1.bf16.msra.mxu0 %v7594
    %8068 = vmatprep.subr.bf16.mxu0 %v7607
    %8069 = vmatpush1.bf16.msra.mxu0 %v7606
    %8070 = vmatprep.subr.bf16.mxu0 %v7619
    %8071 = vmatpush1.bf16.msra.mxu0 %v7618
    %8072 = vmatprep.subr.bf16.mxu0 %v7631
    %8073 = vmatpush1.bf16.msra.mxu0 %v7630
    %8074 = vmatprep.subr.bf16.mxu0 %v7643
    %8075 = vmatpush1.bf16.msra.mxu0 %v7642
    %8076 = vmatprep.subr.bf16.mxu0 %v7655
    %8077 = vmatpush1.bf16.msra.mxu0 %v7654
    %8078 = vmatprep.subr.bf16.mxu0 %v7667
    %8079 = vmatpush1.bf16.msra.mxu0 %v7666
    %8080 = vmatprep.subr.bf16.mxu0 %v7679
    %8081 = vmatpush1.bf16.msra.mxu0 %v7678
    %8082 = vmatprep.subr.bf16.mxu0 %v7691
    %8083 = vmatpush1.bf16.msra.mxu0 %v7690
    %8084 = vmatprep.subr.bf16.mxu0 %v7703
    %8085 = vmatpush1.bf16.msra.mxu0 %v7702
    %8086 = vmatprep.mubr.bf16.mxu0 %v7517
    %8087 = vmatmul.mubr.bf16.gmra.mrb[0].mxu0 %v7516
    %v8088 = vpop.f32.mrb[0].mxu0
    %v8089 = vadd.f32 %v7919, %v8088
    %v8090 = vpop.f32.mrb[0].mxu0
    %v8091 = vadd.f32 %v7923, %v8090
    %v8092 = vpop.f32.mrb[0].mxu0
    %v8093 = vadd.f32 %v7919, %v8092
    %v8094 = vpop.f32.mrb[0].mxu0
    %v8095 = vadd.f32 %v7923, %v8094
    %8096 = vdwg.mxu0
    %8097 = vmatprep.subr.bf16.mxu0 %v7715
    %8098 = vmatpush1.bf16.msra.mxu0 %v7714
    %8099 = vmatprep.subr.bf16.mxu0 %v7727
    %8100 = vmatpush1.bf16.msra.mxu0 %v7726
    %8101 = vmatprep.subr.bf16.mxu0 %v7739
    %8102 = vmatpush1.bf16.msra.mxu0 %v7738
    %8103 = vmatprep.subr.bf16.mxu0 %v7751
    %8104 = vmatpush1.bf16.msra.mxu0 %v7750
    %8105 = vmatprep.subr.bf16.mxu0 %v7763
    %8106 = vmatpush1.bf16.msra.mxu0 %v7762
    %8107 = vmatprep.subr.bf16.mxu0 %v7775
    %8108 = vmatpush1.bf16.msra.mxu0 %v7774
    %8109 = vmatprep.subr.bf16.mxu0 %v7787
    %8110 = vmatpush1.bf16.msra.mxu0 %v7786
    %8111 = vmatprep.subr.bf16.mxu0 %v7799
    %8112 = vmatpush1.bf16.msra.mxu0 %v7798
    %8113 = vmatprep.subr.bf16.mxu0 %v7811
    %8114 = vmatpush1.bf16.msra.mxu0 %v7810
    %8115 = vmatprep.subr.bf16.mxu0 %v7823
    %8116 = vmatpush1.bf16.msra.mxu0 %v7822
    %8117 = vmatprep.subr.bf16.mxu0 %v7835
    %8118 = vmatpush1.bf16.msra.mxu0 %v7834
    %8119 = vmatprep.subr.bf16.mxu0 %v7847
    %8120 = vmatpush1.bf16.msra.mxu0 %v7846
    %8121 = vmatprep.subr.bf16.mxu0 %v7859
    %8122 = vmatpush1.bf16.msra.mxu0 %v7858
    %8123 = vmatprep.subr.bf16.mxu0 %v7871
    %8124 = vmatpush1.bf16.msra.mxu0 %v7870
    %8125 = vmatprep.subr.bf16.mxu0 %v7883
    %8126 = vmatpush1.bf16.msra.mxu0 %v7882
    %8127 = vmatprep.subr.bf16.mxu0 %v7895
    %8128 = vmatpush1.bf16.msra.mxu0 %v7894
    %8129 = vmatprep.mubr.bf16.mxu0 %v7519
    %8130 = vmatmul.mubr.bf16.gmra.mrb[0].mxu0 %v7518
    %v8131 = vpop.f32.mrb[0].mxu0
    %v8132 = vadd.f32 %v8089, %v8131
    %v8133 = vpop.f32.mrb[0].mxu0
    %v8134 = vadd.f32 %v8091, %v8133
    %v8135 = vpop.f32.mrb[0].mxu0
    %v8136 = vadd.f32 %v8093, %v8135
    %v8137 = vpop.f32.mrb[0].mxu0
    %v8138 = vadd.f32 %v8095, %v8137
    %8139 = vdwg.mxu0
    %8140 = vmatprep.subr.bf16.mxu0 %v7525
    %8141 = vmatpush1.bf16.msra.mxu0 %v7524
    %8142 = vmatprep.subr.bf16.mxu0 %v7537
    %8143 = vmatpush1.bf16.msra.mxu0 %v7536
    %8144 = vmatprep.subr.bf16.mxu0 %v7549
    %8145 = vmatpush1.bf16.msra.mxu0 %v7548
    %8146 = vmatprep.subr.bf16.mxu0 %v7561
    %8147 = vmatpush1.bf16.msra.mxu0 %v7560
    %8148 = vmatprep.subr.bf16.mxu0 %v7573
    %8149 = vmatpush1.bf16.msra.mxu0 %v7572
    %8150 = vmatprep.subr.bf16.mxu0 %v7585
    %8151 = vmatpush1.bf16.msra.mxu0 %v7584
    %8152 = vmatprep.subr.bf16.mxu0 %v7597
    %8153 = vmatpush1.bf16.msra.mxu0 %v7596
    %8154 = vmatprep.subr.bf16.mxu0 %v7609
    %8155 = vmatpush1.bf16.msra.mxu0 %v7608
    %8156 = vmatprep.subr.bf16.mxu0 %v7621
    %8157 = vmatpush1.bf16.msra.mxu0 %v7620
    %8158 = vmatprep.subr.bf16.mxu0 %v7633
    %8159 = vmatpush1.bf16.msra.mxu0 %v7632
    %8160 = vmatprep.subr.bf16.mxu0 %v7645
    %8161 = vmatpush1.bf16.msra.mxu0 %v7644
    %8162 = vmatprep.subr.bf16.mxu0 %v7657
    %8163 = vmatpush1.bf16.msra.mxu0 %v7656
    %8164 = vmatprep.subr.bf16.mxu0 %v7669
    %8165 = vmatpush1.bf16.msra.mxu0 %v7668
    %8166 = vmatprep.subr.bf16.mxu0 %v7681
    %8167 = vmatpush1.bf16.msra.mxu0 %v7680
    %8168 = vmatprep.subr.bf16.mxu0 %v7693
    %8169 = vmatpush1.bf16.msra.mxu0 %v7692
    %8170 = vmatprep.subr.bf16.mxu0 %v7705
    %8171 = vmatpush1.bf16.msra.mxu0 %v7704
    %8172 = vmatprep.mubr.bf16.mxu0 %v7517
    %8173 = vmatmul.mubr.bf16.gmra.mrb[0].mxu0 %v7516
    %v8174 = vpop.f32.mrb[0].mxu0
    %v8175 = vadd.f32 %v7927, %v8174
    %v8176 = vpop.f32.mrb[0].mxu0
    %v8177 = vadd.f32 %v7931, %v8176
    %v8178 = vpop.f32.mrb[0].mxu0
    %v8179 = vadd.f32 %v7927, %v8178
    %v8180 = vpop.f32.mrb[0].mxu0
    %v8181 = vadd.f32 %v7931, %v8180
    %8182 = vdwg.mxu0
    %8183 = vmatprep.subr.bf16.mxu0 %v7717
    %8184 = vmatpush1.bf16.msra.mxu0 %v7716
    %8185 = vmatprep.subr.bf16.mxu0 %v7729
    %8186 = vmatpush1.bf16.msra.mxu0 %v7728
    %8187 = vmatprep.subr.bf16.mxu0 %v7741
    %8188 = vmatpush1.bf16.msra.mxu0 %v7740
    %8189 = vmatprep.subr.bf16.mxu0 %v7753
    %8190 = vmatpush1.bf16.msra.mxu0 %v7752
    %8191 = vmatprep.subr.bf16.mxu0 %v7765
    %8192 = vmatpush1.bf16.msra.mxu0 %v7764
    %8193 = vmatprep.subr.bf16.mxu0 %v7777
    %8194 = vmatpush1.bf16.msra.mxu0 %v7776
    %8195 = vmatprep.subr.bf16.mxu0 %v7789
    %8196 = vmatpush1.bf16.msra.mxu0 %v7788
    %8197 = vmatprep.subr.bf16.mxu0 %v7801
    %8198 = vmatpush1.bf16.msra.mxu0 %v7800
    %8199 = vmatprep.subr.bf16.mxu0 %v7813
    %8200 = vmatpush1.bf16.msra.mxu0 %v7812
    %8201 = vmatprep.subr.bf16.mxu0 %v7825
    %8202 = vmatpush1.bf16.msra.mxu0 %v7824
    %8203 = vmatprep.subr.bf16.mxu0 %v7837
    %8204 = vmatpush1.bf16.msra.mxu0 %v7836
    %8205 = vmatprep.subr.bf16.mxu0 %v7849
    %8206 = vmatpush1.bf16.msra.mxu0 %v7848
    %8207 = vmatprep.subr.bf16.mxu0 %v7861
    %8208 = vmatpush1.bf16.msra.mxu0 %v7860
    %8209 = vmatprep.subr.bf16.mxu0 %v7873
    %8210 = vmatpush1.bf16.msra.mxu0 %v7872
    %8211 = vmatprep.subr.bf16.mxu0 %v7885
    %8212 = vmatpush1.bf16.msra.mxu0 %v7884
    %8213 = vmatprep.subr.bf16.mxu0 %v7897
    %8214 = vmatpush1.bf16.msra.mxu0 %v7896
    %8215 = vmatprep.mubr.bf16.mxu0 %v7519
    %8216 = vmatmul.mubr.bf16.gmra.mrb[0].mxu0 %v7518
    %v8217 = vpop.f32.mrb[0].mxu0
    %v8218 = vadd.f32 %v8175, %v8217
    %v8219 = vpop.f32.mrb[0].mxu0
    %v8220 = vadd.f32 %v8177, %v8219
    %v8221 = vpop.f32.mrb[0].mxu0
    %v8222 = vadd.f32 %v8179, %v8221
    %v8223 = vpop.f32.mrb[0].mxu0
    %v8224 = vadd.f32 %v8181, %v8223
    %8225 = vdwg.mxu0
    %8226 = vmatprep.subr.bf16.mxu0 %v7527
    %8227 = vmatpush1.bf16.msra.mxu0 %v7526
    %8228 = vmatprep.subr.bf16.mxu0 %v7539
    %8229 = vmatpush1.bf16.msra.mxu0 %v7538
    %8230 = vmatprep.subr.bf16.mxu0 %v7551
    %8231 = vmatpush1.bf16.msra.mxu0 %v7550
    %8232 = vmatprep.subr.bf16.mxu0 %v7563
    %8233 = vmatpush1.bf16.msra.mxu0 %v7562
    %8234 = vmatprep.subr.bf16.mxu0 %v7575
    %8235 = vmatpush1.bf16.msra.mxu0 %v7574
    %8236 = vmatprep.subr.bf16.mxu0 %v7587
    %8237 = vmatpush1.bf16.msra.mxu0 %v7586
    %8238 = vmatprep.subr.bf16.mxu0 %v7599
    %8239 = vmatpush1.bf16.msra.mxu0 %v7598
    %8240 = vmatprep.subr.bf16.mxu0 %v7611
    %8241 = vmatpush1.bf16.msra.mxu0 %v7610
    %8242 = vmatprep.subr.bf16.mxu0 %v7623
    %8243 = vmatpush1.bf16.msra.mxu0 %v7622
    %8244 = vmatprep.subr.bf16.mxu0 %v7635
    %8245 = vmatpush1.bf16.msra.mxu0 %v7634
    %8246 = vmatprep.subr.bf16.mxu0 %v7647
    %8247 = vmatpush1.bf16.msra.mxu0 %v7646
    %8248 = vmatprep.subr.bf16.mxu0 %v7659
    %8249 = vmatpush1.bf16.msra.mxu0 %v7658
    %8250 = vmatprep.subr.bf16.mxu0 %v7671
    %8251 = vmatpush1.bf16.msra.mxu0 %v7670
    %8252 = vmatprep.subr.bf16.mxu0 %v7683
    %8253 = vmatpush1.bf16.msra.mxu0 %v7682
    %8254 = vmatprep.subr.bf16.mxu0 %v7695
    %8255 = vmatpush1.bf16.msra.mxu0 %v7694
    %8256 = vmatprep.subr.bf16.mxu0 %v7707
    %8257 = vmatpush1.bf16.msra.mxu0 %v7706
    %8258 = vmatprep.mubr.bf16.mxu0 %v7517
    %8259 = vmatmul.mubr.bf16.gmra.mrb[0].mxu0 %v7516
    %v8260 = vpop.f32.mrb[0].mxu0
    %v8261 = vadd.f32 %v7935, %v8260
    %v8262 = vpop.f32.mrb[0].mxu0
    %v8263 = vadd.f32 %v7939, %v8262
    %v8264 = vpop.f32.mrb[0].mxu0
    %v8265 = vadd.f32 %v7935, %v8264
    %v8266 = vpop.f32.mrb[0].mxu0
    %v8267 = vadd.f32 %v7939, %v8266
    %8268 = vdwg.mxu0
    %8269 = vmatprep.subr.bf16.mxu0 %v7719
    %8270 = vmatpush1.bf16.msra.mxu0 %v7718
    %8271 = vmatprep.subr.bf16.mxu0 %v7731
    %8272 = vmatpush1.bf16.msra.mxu0 %v7730
    %8273 = vmatprep.subr.bf16.mxu0 %v7743
    %8274 = vmatpush1.bf16.msra.mxu0 %v7742
    %8275 = vmatprep.subr.bf16.mxu0 %v7755
    %8276 = vmatpush1.bf16.msra.mxu0 %v7754
    %8277 = vmatprep.subr.bf16.mxu0 %v7767
    %8278 = vmatpush1.bf16.msra.mxu0 %v7766
    %8279 = vmatprep.subr.bf16.mxu0 %v7779
    %8280 = vmatpush1.bf16.msra.mxu0 %v7778
    %8281 = vmatprep.subr.bf16.mxu0 %v7791
    %8282 = vmatpush1.bf16.msra.mxu0 %v7790
    %8283 = vmatprep.subr.bf16.mxu0 %v7803
    %8284 = vmatpush1.bf16.msra.mxu0 %v7802
    %8285 = vmatprep.subr.bf16.mxu0 %v7815
    %8286 = vmatpush1.bf16.msra.mxu0 %v7814
    %8287 = vmatprep.subr.bf16.mxu0 %v7827
    %8288 = vmatpush1.bf16.msra.mxu0 %v7826
    %8289 = vmatprep.subr.bf16.mxu0 %v7839
    %8290 = vmatpush1.bf16.msra.mxu0 %v7838
    %8291 = vmatprep.subr.bf16.mxu0 %v7851
    %8292 = vmatpush1.bf16.msra.mxu0 %v7850
    %8293 = vmatprep.subr.bf16.mxu0 %v7863
    %8294 = vmatpush1.bf16.msra.mxu0 %v7862
    %8295 = vmatprep.subr.bf16.mxu0 %v7875
    %8296 = vmatpush1.bf16.msra.mxu0 %v7874
    %8297 = vmatprep.subr.bf16.mxu0 %v7887
    %8298 = vmatpush1.bf16.msra.mxu0 %v7886
    %8299 = vmatprep.subr.bf16.mxu0 %v7899
    %8300 = vmatpush1.bf16.msra.mxu0 %v7898
    %8301 = vmatprep.mubr.bf16.mxu0 %v7519
    %8302 = vmatmul.mubr.bf16.gmra.mrb[0].mxu0 %v7518
    %v8303 = vpop.f32.mrb[0].mxu0
    %v8304 = vadd.f32 %v8261, %v8303
    %v8305 = vpop.f32.mrb[0].mxu0
    %v8306 = vadd.f32 %v8263, %v8305
    %v8307 = vpop.f32.mrb[0].mxu0
    %v8308 = vadd.f32 %v8265, %v8307
    %v8309 = vpop.f32.mrb[0].mxu0
    %v8310 = vadd.f32 %v8267, %v8309
    %8311 = vdwg.mxu0
    %8312 = vmatprep.subr.bf16.mxu0 %v7529
    %8313 = vmatpush1.bf16.msra.mxu0 %v7528
    %8314 = vmatprep.subr.bf16.mxu0 %v7541
    %8315 = vmatpush1.bf16.msra.mxu0 %v7540
    %8316 = vmatprep.subr.bf16.mxu0 %v7553
    %8317 = vmatpush1.bf16.msra.mxu0 %v7552
    %8318 = vmatprep.subr.bf16.mxu0 %v7565
    %8319 = vmatpush1.bf16.msra.mxu0 %v7564
    %8320 = vmatprep.subr.bf16.mxu0 %v7577
    %8321 = vmatpush1.bf16.msra.mxu0 %v7576
    %8322 = vmatprep.subr.bf16.mxu0 %v7589
    %8323 = vmatpush1.bf16.msra.mxu0 %v7588
    %8324 = vmatprep.subr.bf16.mxu0 %v7601
    %8325 = vmatpush1.bf16.msra.mxu0 %v7600
    %8326 = vmatprep.subr.bf16.mxu0 %v7613
    %8327 = vmatpush1.bf16.msra.mxu0 %v7612
    %8328 = vmatprep.subr.bf16.mxu0 %v7625
    %8329 = vmatpush1.bf16.msra.mxu0 %v7624
    %8330 = vmatprep.subr.bf16.mxu0 %v7637
    %8331 = vmatpush1.bf16.msra.mxu0 %v7636
    %8332 = vmatprep.subr.bf16.mxu0 %v7649
    %8333 = vmatpush1.bf16.msra.mxu0 %v7648
    %8334 = vmatprep.subr.bf16.mxu0 %v7661
    %8335 = vmatpush1.bf16.msra.mxu0 %v7660
    %8336 = vmatprep.subr.bf16.mxu0 %v7673
    %8337 = vmatpush1.bf16.msra.mxu0 %v7672
    %8338 = vmatprep.subr.bf16.mxu0 %v7685
    %8339 = vmatpush1.bf16.msra.mxu0 %v7684
    %8340 = vmatprep.subr.bf16.mxu0 %v7697
    %8341 = vmatpush1.bf16.msra.mxu0 %v7696
    %8342 = vmatprep.subr.bf16.mxu0 %v7709
    %8343 = vmatpush1.bf16.msra.mxu0 %v7708
    %8344 = vmatprep.mubr.bf16.mxu0 %v7517
    %8345 = vmatmul.mubr.bf16.gmra.mrb[0].mxu0 %v7516
    %v8346 = vpop.f32.mrb[0].mxu0
    %v8347 = vadd.f32 %v7943, %v8346
    %v8348 = vpop.f32.mrb[0].mxu0
    %v8349 = vadd.f32 %v7947, %v8348
    %v8350 = vpop.f32.mrb[0].mxu0
    %v8351 = vadd.f32 %v7943, %v8350
    %v8352 = vpop.f32.mrb[0].mxu0
    %v8353 = vadd.f32 %v7947, %v8352
    %8354 = vdwg.mxu0
    %8355 = vmatprep.subr.bf16.mxu0 %v7721
    %8356 = vmatpush1.bf16.msra.mxu0 %v7720
    %8357 = vmatprep.subr.bf16.mxu0 %v7733
    %8358 = vmatpush1.bf16.msra.mxu0 %v7732
    %8359 = vmatprep.subr.bf16.mxu0 %v7745
    %8360 = vmatpush1.bf16.msra.mxu0 %v7744
    %8361 = vmatprep.subr.bf16.mxu0 %v7757
    %8362 = vmatpush1.bf16.msra.mxu0 %v7756
    %8363 = vmatprep.subr.bf16.mxu0 %v7769
    %8364 = vmatpush1.bf16.msra.mxu0 %v7768
    %8365 = vmatprep.subr.bf16.mxu0 %v7781
    %8366 = vmatpush1.bf16.msra.mxu0 %v7780
    %8367 = vmatprep.subr.bf16.mxu0 %v7793
    %8368 = vmatpush1.bf16.msra.mxu0 %v7792
    %8369 = vmatprep.subr.bf16.mxu0 %v7805
    %8370 = vmatpush1.bf16.msra.mxu0 %v7804
    %8371 = vmatprep.subr.bf16.mxu0 %v7817
    %8372 = vmatpush1.bf16.msra.mxu0 %v7816
    %8373 = vmatprep.subr.bf16.mxu0 %v7829
    %8374 = vmatpush1.bf16.msra.mxu0 %v7828
    %8375 = vmatprep.subr.bf16.mxu0 %v7841
    %8376 = vmatpush1.bf16.msra.mxu0 %v7840
    %8377 = vmatprep.subr.bf16.mxu0 %v7853
    %8378 = vmatpush1.bf16.msra.mxu0 %v7852
    %8379 = vmatprep.subr.bf16.mxu0 %v7865
    %8380 = vmatpush1.bf16.msra.mxu0 %v7864
    %8381 = vmatprep.subr.bf16.mxu0 %v7877
    %8382 = vmatpush1.bf16.msra.mxu0 %v7876
    %8383 = vmatprep.subr.bf16.mxu0 %v7889
    %8384 = vmatpush1.bf16.msra.mxu0 %v7888
    %8385 = vmatprep.subr.bf16.mxu0 %v7901
    %8386 = vmatpush1.bf16.msra.mxu0 %v7900
    %8387 = vmatprep.mubr.bf16.mxu0 %v7519
    %8388 = vmatmul.mubr.bf16.gmra.mrb[0].mxu0 %v7518
    %v8389 = vpop.f32.mrb[0].mxu0
    %v8390 = vadd.f32 %v8347, %v8389
    %v8391 = vpop.f32.mrb[0].mxu0
    %v8392 = vadd.f32 %v8349, %v8391
    %v8393 = vpop.f32.mrb[0].mxu0
    %v8394 = vadd.f32 %v8351, %v8393
    %v8395 = vpop.f32.mrb[0].mxu0
    %v8396 = vadd.f32 %v8353, %v8395
    %8397 = vdwg.mxu0
    %8398 = vmatprep.subr.bf16.mxu0 %v7531
    %8399 = vmatpush1.bf16.msra.mxu0 %v7530
    %8400 = vmatprep.subr.bf16.mxu0 %v7543
    %8401 = vmatpush1.bf16.msra.mxu0 %v7542
    %8402 = vmatprep.subr.bf16.mxu0 %v7555
    %8403 = vmatpush1.bf16.msra.mxu0 %v7554
    %8404 = vmatprep.subr.bf16.mxu0 %v7567
    %8405 = vmatpush1.bf16.msra.mxu0 %v7566
    %8406 = vmatprep.subr.bf16.mxu0 %v7579
    %8407 = vmatpush1.bf16.msra.mxu0 %v7578
    %8408 = vmatprep.subr.bf16.mxu0 %v7591
    %8409 = vmatpush1.bf16.msra.mxu0 %v7590
    %8410 = vmatprep.subr.bf16.mxu0 %v7603
    %8411 = vmatpush1.bf16.msra.mxu0 %v7602
    %8412 = vmatprep.subr.bf16.mxu0 %v7615
    %8413 = vmatpush1.bf16.msra.mxu0 %v7614
    %8414 = vmatprep.subr.bf16.mxu0 %v7627
    %8415 = vmatpush1.bf16.msra.mxu0 %v7626
    %8416 = vmatprep.subr.bf16.mxu0 %v7639
    %8417 = vmatpush1.bf16.msra.mxu0 %v7638
    %8418 = vmatprep.subr.bf16.mxu0 %v7651
    %8419 = vmatpush1.bf16.msra.mxu0 %v7650
    %8420 = vmatprep.subr.bf16.mxu0 %v7663
    %8421 = vmatpush1.bf16.msra.mxu0 %v7662
    %8422 = vmatprep.subr.bf16.mxu0 %v7675
    %8423 = vmatpush1.bf16.msra.mxu0 %v7674
    %8424 = vmatprep.subr.bf16.mxu0 %v7687
    %8425 = vmatpush1.bf16.msra.mxu0 %v7686
    %8426 = vmatprep.subr.bf16.mxu0 %v7699
    %8427 = vmatpush1.bf16.msra.mxu0 %v7698
    %8428 = vmatprep.subr.bf16.mxu0 %v7711
    %8429 = vmatpush1.bf16.msra.mxu0 %v7710
    %8430 = vmatprep.mubr.bf16.mxu0 %v7517
    %8431 = vmatmul.mubr.bf16.gmra.mrb[0].mxu0 %v7516
    %v8432 = vpop.f32.mrb[0].mxu0
    %v8433 = vadd.f32 %v7951, %v8432
    %v8434 = vpop.f32.mrb[0].mxu0
    %v8435 = vadd.f32 %v7955, %v8434
    %v8436 = vpop.f32.mrb[0].mxu0
    %v8437 = vadd.f32 %v7951, %v8436
    %v8438 = vpop.f32.mrb[0].mxu0
    %v8439 = vadd.f32 %v7955, %v8438
    %8440 = vdwg.mxu0
    %8441 = vmatprep.subr.bf16.mxu0 %v7723
    %8442 = vmatpush1.bf16.msra.mxu0 %v7722
    %8443 = vmatprep.subr.bf16.mxu0 %v7735
    %8444 = vmatpush1.bf16.msra.mxu0 %v7734
    %8445 = vmatprep.subr.bf16.mxu0 %v7747
    %8446 = vmatpush1.bf16.msra.mxu0 %v7746
    %8447 = vmatprep.subr.bf16.mxu0 %v7759
    %8448 = vmatpush1.bf16.msra.mxu0 %v7758
    %8449 = vmatprep.subr.bf16.mxu0 %v7771
    %8450 = vmatpush1.bf16.msra.mxu0 %v7770
    %8451 = vmatprep.subr.bf16.mxu0 %v7783
    %8452 = vmatpush1.bf16.msra.mxu0 %v7782
    %8453 = vmatprep.subr.bf16.mxu0 %v7795
    %8454 = vmatpush1.bf16.msra.mxu0 %v7794
    %8455 = vmatprep.subr.bf16.mxu0 %v7807
    %8456 = vmatpush1.bf16.msra.mxu0 %v7806
    %8457 = vmatprep.subr.bf16.mxu0 %v7819
    %8458 = vmatpush1.bf16.msra.mxu0 %v7818
    %8459 = vmatprep.subr.bf16.mxu0 %v7831
    %8460 = vmatpush1.bf16.msra.mxu0 %v7830
    %8461 = vmatprep.subr.bf16.mxu0 %v7843
    %8462 = vmatpush1.bf16.msra.mxu0 %v7842
    %8463 = vmatprep.subr.bf16.mxu0 %v7855
    %8464 = vmatpush1.bf16.msra.mxu0 %v7854
    %8465 = vmatprep.subr.bf16.mxu0 %v7867
    %8466 = vmatpush1.bf16.msra.mxu0 %v7866
    %8467 = vmatprep.subr.bf16.mxu0 %v7879
    %8468 = vmatpush1.bf16.msra.mxu0 %v7878
    %8469 = vmatprep.subr.bf16.mxu0 %v7891
    %8470 = vmatpush1.bf16.msra.mxu0 %v7890
    %8471 = vmatprep.subr.bf16.mxu0 %v7903
    %8472 = vmatpush1.bf16.msra.mxu0 %v7902
    %8473 = vmatprep.mubr.bf16.mxu0 %v7519
    %8474 = vmatmul.mubr.bf16.gmra.mrb[0].mxu0 %v7518
    %v8475 = vpop.f32.mrb[0].mxu0
    %v8476 = vadd.f32 %v8433, %v8475
    %v8477 = vpop.f32.mrb[0].mxu0
    %v8478 = vadd.f32 %v8435, %v8477
    %v8479 = vpop.f32.mrb[0].mxu0
    %v8480 = vadd.f32 %v8437, %v8479
    %v8481 = vpop.f32.mrb[0].mxu0
    %v8482 = vadd.f32 %v8439, %v8481
    %8483 = vdwg.mxu0
    %v8484 = vpack.c.bf16 %v8050, %v8046
    %v8485 = vpack.c.bf16 %v8222, %v8218
    %vm8486 = vcmask 523264
    %v8488 = vsel %vm8486, %v8484, 0
    %v8491 = vsel %vm8486, %v8485, 0
    %8493 = vmatprep.subr.bf16.mxu0 0
    %8494 = vmatpush1.bf16.xpose.msra.mxu0 %v8491
    %8495 = vmatprep.subr.bf16.mxu0 0
    %8496 = vmatpush1.bf16.xpose.msra.mxu0 0
    %8497 = vmatprep.subr.bf16.mxu0 0
    %8498 = vmatpush1.bf16.xpose.msra.mxu0 0
    %8499 = vmatprep.subr.bf16.mxu0 0
    %8500 = vmatpush1.bf16.xpose.msra.mxu0 0
    %8501 = vmatprep.subr.bf16.mxu0 0
    %8502 = vmatpush1.bf16.xpose.msra.mxu0 0
    %8503 = vmatprep.subr.bf16.mxu0 0
    %8504 = vmatpush1.bf16.xpose.msra.mxu0 0
    %8505 = vmatprep.subr.bf16.mxu0 0
    %8506 = vmatpush1.bf16.xpose.msra.mxu0 0
    %8507 = vmatprep.subr.bf16.mxu0 0
    %8508 = vmatpush1.bf16.xpose.msra.mxu0 0
    %8509 = vmatprep.subr.bf16.mxu0 0
    %8510 = vmatpush1.bf16.xpose.msra.mxu0 0
    %8511 = vmatprep.subr.bf16.mxu0 0
    %8512 = vmatpush1.bf16.xpose.msra.mxu0 0
    %8513 = vmatprep.subr.bf16.mxu0 0
    %8514 = vmatpush1.bf16.xpose.msra.mxu0 0
    %8515 = vmatprep.subr.bf16.mxu0 0
    %8516 = vmatpush1.bf16.xpose.msra.mxu0 0
    %8517 = vmatprep.subr.bf16.mxu0 0
    %8518 = vmatpush1.bf16.xpose.msra.mxu0 0
    %8519 = vmatprep.subr.bf16.mxu0 0
    %8520 = vmatpush1.bf16.xpose.msra.mxu0 0
    %8521 = vmatprep.subr.bf16.mxu0 0
    %8522 = vmatpush1.bf16.xpose.msra.mxu0 0
    %8523 = vmatprep.subr.bf16.mxu0 0
    %8524 = vmatpush1.bf16.xpose.msra.mxu0 0
    %8525 = vmatprep.mubr.bf16.mxu0 0
    %8526 = vmatmul.mubr.bf16.gmra.mrb[0].mxu0 %v8488
    %v8527 = vpop.f32.mrb[0].mxu0
    %v8528 = vadd.f32 %v7386, %v8527
    %v8529 = vpop.f32.mrb[0].mxu0
    %v8530 = vpop.f32.mrb[0].mxu0
    %v8531 = vadd.f32 %v7387, %v8530
    %v8532 = vpop.f32.mrb[0].mxu0
    %8533 = vdwg.mxu0
    %v8534 = vsel %vm578, %v8528, -inf
    %8535 = vmax.xlane.f32.xlu0 %v8534
    %v8536 = vpop.xlane.xlu0 %8535
    %v8537 = vsel %vm578, %v8531, -inf
    %8538 = vmax.xlane.f32.xlu0 %v8537
    %v8539 = vpop.xlane.xlu0 %8538
    %v8540 = vsub.f32 %v8528, %v8536
    %v8541 = vsub.f32 %v8531, %v8539
    %v8542 = vmul.f32 %v8540, 1.442695
    %v8543 = vpow.pop %v8542
    %v8544 = vmul.f32 %v8541, 1.442695
    %v8545 = vpow.pop %v8544
    %v8546 = vsel %vm578, %v8543, 0.0
    %8547 = vadd.xlane.f32.xlu0 %v8546
    %v8548 = vpop.xlane.xlu0 %8547
    %v8549 = vsel %vm578, %v8545, 0.0
    %8550 = vadd.xlane.f32.xlu0 %v8549
    %v8551 = vpop.xlane.xlu0 %8550
    %v8552 = vrcp.pop %v8548
    %v8553 = vrcp.pop %v8551
    %v8554 = vmul.f32 %v8543, %v8552
    %v8555 = vmul.f32 %v8545, %v8553
    %v8556 = vpack.c.bf16 %v8555, %v8554
    %v8557 = vpack.c.bf16 %v8394, %v8390
    %v8559 = vsel %vm578, %v8556, 0
    %8561 = vmatprep.subr.bf16.mxu0 0
    %8562 = vmatpush1.bf16.msra.mxu0 %v8557
    %8563 = vmatprep.subr.bf16.mxu0 0
    %8564 = vmatpush1.bf16.msra.mxu0 0
    %8565 = vmatprep.subr.bf16.mxu0 0
    %8566 = vmatpush1.bf16.msra.mxu0 0
    %8567 = vmatprep.subr.bf16.mxu0 0
    %8568 = vmatpush1.bf16.msra.mxu0 0
    %8569 = vmatprep.subr.bf16.mxu0 0
    %8570 = vmatpush1.bf16.msra.mxu0 0
    %8571 = vmatprep.subr.bf16.mxu0 0
    %8572 = vmatpush1.bf16.msra.mxu0 0
    %8573 = vmatprep.subr.bf16.mxu0 0
    %8574 = vmatpush1.bf16.msra.mxu0 0
    %8575 = vmatprep.subr.bf16.mxu0 0
    %8576 = vmatpush1.bf16.msra.mxu0 0
    %8577 = vmatprep.subr.bf16.mxu0 0
    %8578 = vmatpush1.bf16.msra.mxu0 0
    %8579 = vmatprep.subr.bf16.mxu0 0
    %8580 = vmatpush1.bf16.msra.mxu0 0
    %8581 = vmatprep.subr.bf16.mxu0 0
    %8582 = vmatpush1.bf16.msra.mxu0 0
    %8583 = vmatprep.subr.bf16.mxu0 0
    %8584 = vmatpush1.bf16.msra.mxu0 0
    %8585 = vmatprep.subr.bf16.mxu0 0
    %8586 = vmatpush1.bf16.msra.mxu0 0
    %8587 = vmatprep.subr.bf16.mxu0 0
    %8588 = vmatpush1.bf16.msra.mxu0 0
    %8589 = vmatprep.subr.bf16.mxu0 0
    %8590 = vmatpush1.bf16.msra.mxu0 0
    %8591 = vmatprep.subr.bf16.mxu0 0
    %8592 = vmatpush1.bf16.msra.mxu0 0
    %8593 = vmatprep.mubr.bf16.mxu0 0
    %8594 = vmatmul.mubr.bf16.gmra.mrb[0].mxu0 %v8559
    %v8595 = vpop.f32.mrb[0].mxu0
    %v8596 = vadd.f32 0.0, %v8595
    %v8597 = vpop.f32.mrb[0].mxu0
    %v8598 = vpop.f32.mrb[0].mxu0
    %v8599 = vadd.f32 0.0, %v8598
    %v8600 = vpop.f32.mrb[0].mxu0
    %8601 = vdwg.mxu0
    %8603 = vrot.lane.b32.xlu0 %v8484, 64
    %v8604 = vpop.permute.xlu0 %8603
    %8606 = vrot.lane.b32.xlu0 %v8485, 64
    %v8607 = vpop.permute.xlu0 %8606
    %v8609 = vsel %vm8486, %v8604, 0
    %v8612 = vsel %vm8486, %v8607, 0
    %8614 = vmatprep.subr.bf16.mxu0 0
    %8615 = vmatpush1.bf16.xpose.msra.mxu0 %v8612
    %8616 = vmatprep.subr.bf16.mxu0 0
    %8617 = vmatpush1.bf16.xpose.msra.mxu0 0
    %8618 = vmatprep.subr.bf16.mxu0 0
    %8619 = vmatpush1.bf16.xpose.msra.mxu0 0
    %8620 = vmatprep.subr.bf16.mxu0 0
    %8621 = vmatpush1.bf16.xpose.msra.mxu0 0
    %8622 = vmatprep.subr.bf16.mxu0 0
    %8623 = vmatpush1.bf16.xpose.msra.mxu0 0
    %8624 = vmatprep.subr.bf16.mxu0 0
    %8625 = vmatpush1.bf16.xpose.msra.mxu0 0
    %8626 = vmatprep.subr.bf16.mxu0 0
    %8627 = vmatpush1.bf16.xpose.msra.mxu0 0
    %8628 = vmatprep.subr.bf16.mxu0 0
    %8629 = vmatpush1.bf16.xpose.msra.mxu0 0
    %8630 = vmatprep.subr.bf16.mxu0 0
    %8631 = vmatpush1.bf16.xpose.msra.mxu0 0
    %8632 = vmatprep.subr.bf16.mxu0 0
    %8633 = vmatpush1.bf16.xpose.msra.mxu0 0
    %8634 = vmatprep.subr.bf16.mxu0 0
    %8635 = vmatpush1.bf16.xpose.msra.mxu0 0
    %8636 = vmatprep.subr.bf16.mxu0 0
    %8637 = vmatpush1.bf16.xpose.msra.mxu0 0
    %8638 = vmatprep.subr.bf16.mxu0 0
    %8639 = vmatpush1.bf16.xpose.msra.mxu0 0
    %8640 = vmatprep.subr.bf16.mxu0 0
    %8641 = vmatpush1.bf16.xpose.msra.mxu0 0
    %8642 = vmatprep.subr.bf16.mxu0 0
    %8643 = vmatpush1.bf16.xpose.msra.mxu0 0
    %8644 = vmatprep.subr.bf16.mxu0 0
    %8645 = vmatpush1.bf16.xpose.msra.mxu0 0
    %8646 = vmatprep.mubr.bf16.mxu0 0
    %8647 = vmatmul.mubr.bf16.gmra.mrb[0].mxu0 %v8609
    %v8648 = vpop.f32.mrb[0].mxu0
    %v8649 = vadd.f32 %v7386, %v8648
    %v8650 = vpop.f32.mrb[0].mxu0
    %v8651 = vpop.f32.mrb[0].mxu0
    %v8652 = vadd.f32 %v7387, %v8651
    %v8653 = vpop.f32.mrb[0].mxu0
    %8654 = vdwg.mxu0
    %v8655 = vsel %vm578, %v8649, -inf
    %8656 = vmax.xlane.f32.xlu0 %v8655
    %v8657 = vpop.xlane.xlu0 %8656
    %v8658 = vsel %vm578, %v8652, -inf
    %8659 = vmax.xlane.f32.xlu0 %v8658
    %v8660 = vpop.xlane.xlu0 %8659
    %v8661 = vsub.f32 %v8649, %v8657
    %v8662 = vsub.f32 %v8652, %v8660
    %v8663 = vmul.f32 %v8661, 1.442695
    %v8664 = vpow.pop %v8663
    %v8665 = vmul.f32 %v8662, 1.442695
    %v8666 = vpow.pop %v8665
    %v8667 = vsel %vm578, %v8664, 0.0
    %8668 = vadd.xlane.f32.xlu0 %v8667
    %v8669 = vpop.xlane.xlu0 %8668
    %v8670 = vsel %vm578, %v8666, 0.0
    %8671 = vadd.xlane.f32.xlu0 %v8670
    %v8672 = vpop.xlane.xlu0 %8671
    %v8673 = vrcp.pop %v8669
    %v8674 = vrcp.pop %v8672
    %v8675 = vmul.f32 %v8664, %v8673
    %v8676 = vmul.f32 %v8666, %v8674
    %v8677 = vpack.c.bf16 %v8676, %v8675
    %8679 = vrot.lane.b32.xlu0 %v8557, 64
    %v8680 = vpop.permute.xlu0 %8679
    %v8683 = vsel %vm578, %v8677, 0
    %8685 = vmatprep.subr.bf16.mxu0 0
    %8686 = vmatpush1.bf16.msra.mxu0 %v8680
    %8687 = vmatprep.subr.bf16.mxu0 0
    %8688 = vmatpush1.bf16.msra.mxu0 0
    %8689 = vmatprep.subr.bf16.mxu0 0
    %8690 = vmatpush1.bf16.msra.mxu0 0
    %8691 = vmatprep.subr.bf16.mxu0 0
    %8692 = vmatpush1.bf16.msra.mxu0 0
    %8693 = vmatprep.subr.bf16.mxu0 0
    %8694 = vmatpush1.bf16.msra.mxu0 0
    %8695 = vmatprep.subr.bf16.mxu0 0
    %8696 = vmatpush1.bf16.msra.mxu0 0
    %8697 = vmatprep.subr.bf16.mxu0 0
    %8698 = vmatpush1.bf16.msra.mxu0 0
    %8699 = vmatprep.subr.bf16.mxu0 0
    %8700 = vmatpush1.bf16.msra.mxu0 0
    %8701 = vmatprep.subr.bf16.mxu0 0
    %8702 = vmatpush1.bf16.msra.mxu0 0
    %8703 = vmatprep.subr.bf16.mxu0 0
    %8704 = vmatpush1.bf16.msra.mxu0 0
    %8705 = vmatprep.subr.bf16.mxu0 0
    %8706 = vmatpush1.bf16.msra.mxu0 0
    %8707 = vmatprep.subr.bf16.mxu0 0
    %8708 = vmatpush1.bf16.msra.mxu0 0
    %8709 = vmatprep.subr.bf16.mxu0 0
    %8710 = vmatpush1.bf16.msra.mxu0 0
    %8711 = vmatprep.subr.bf16.mxu0 0
    %8712 = vmatpush1.bf16.msra.mxu0 0
    %8713 = vmatprep.subr.bf16.mxu0 0
    %8714 = vmatpush1.bf16.msra.mxu0 0
    %8715 = vmatprep.subr.bf16.mxu0 0
    %8716 = vmatpush1.bf16.msra.mxu0 0
    %8717 = vmatprep.mubr.bf16.mxu0 0
    %8718 = vmatmul.mubr.bf16.gmra.mrb[0].mxu0 %v8683
    %v8719 = vpop.f32.mrb[0].mxu0
    %v8720 = vadd.f32 0.0, %v8719
    %v8721 = vpop.f32.mrb[0].mxu0
    %v8722 = vpop.f32.mrb[0].mxu0
    %v8723 = vadd.f32 0.0, %v8722
    %v8724 = vpop.f32.mrb[0].mxu0
    %8725 = vdwg.mxu0
    %v8726 = vpack.c.bf16 %v8052, %v8048
    %v8727 = vpack.c.bf16 %v8224, %v8220
    %v8729 = vsel %vm8486, %v8726, 0
    %v8732 = vsel %vm8486, %v8727, 0
    %8734 = vmatprep.subr.bf16.mxu0 0
    %8735 = vmatpush1.bf16.xpose.msra.mxu0 %v8732
    %8736 = vmatprep.subr.bf16.mxu0 0
    %8737 = vmatpush1.bf16.xpose.msra.mxu0 0
    %8738 = vmatprep.subr.bf16.mxu0 0
    %8739 = vmatpush1.bf16.xpose.msra.mxu0 0
    %8740 = vmatprep.subr.bf16.mxu0 0
    %8741 = vmatpush1.bf16.xpose.msra.mxu0 0
    %8742 = vmatprep.subr.bf16.mxu0 0
    %8743 = vmatpush1.bf16.xpose.msra.mxu0 0
    %8744 = vmatprep.subr.bf16.mxu0 0
    %8745 = vmatpush1.bf16.xpose.msra.mxu0 0
    %8746 = vmatprep.subr.bf16.mxu0 0
    %8747 = vmatpush1.bf16.xpose.msra.mxu0 0
    %8748 = vmatprep.subr.bf16.mxu0 0
    %8749 = vmatpush1.bf16.xpose.msra.mxu0 0
    %8750 = vmatprep.subr.bf16.mxu0 0
    %8751 = vmatpush1.bf16.xpose.msra.mxu0 0
    %8752 = vmatprep.subr.bf16.mxu0 0
    %8753 = vmatpush1.bf16.xpose.msra.mxu0 0
    %8754 = vmatprep.subr.bf16.mxu0 0
    %8755 = vmatpush1.bf16.xpose.msra.mxu0 0
    %8756 = vmatprep.subr.bf16.mxu0 0
    %8757 = vmatpush1.bf16.xpose.msra.mxu0 0
    %8758 = vmatprep.subr.bf16.mxu0 0
    %8759 = vmatpush1.bf16.xpose.msra.mxu0 0
    %8760 = vmatprep.subr.bf16.mxu0 0
    %8761 = vmatpush1.bf16.xpose.msra.mxu0 0
    %8762 = vmatprep.subr.bf16.mxu0 0
    %8763 = vmatpush1.bf16.xpose.msra.mxu0 0
    %8764 = vmatprep.subr.bf16.mxu0 0
    %8765 = vmatpush1.bf16.xpose.msra.mxu0 0
    %8766 = vmatprep.mubr.bf16.mxu0 0
    %8767 = vmatmul.mubr.bf16.gmra.mrb[0].mxu0 %v8729
    %v8768 = vpop.f32.mrb[0].mxu0
    %v8769 = vadd.f32 %v7386, %v8768
    %v8770 = vpop.f32.mrb[0].mxu0
    %v8771 = vpop.f32.mrb[0].mxu0
    %v8772 = vadd.f32 %v7387, %v8771
    %v8773 = vpop.f32.mrb[0].mxu0
    %8774 = vdwg.mxu0
    %v8775 = vsel %vm578, %v8769, -inf
    %8776 = vmax.xlane.f32.xlu0 %v8775
    %v8777 = vpop.xlane.xlu0 %8776
    %v8778 = vsel %vm578, %v8772, -inf
    %8779 = vmax.xlane.f32.xlu0 %v8778
    %v8780 = vpop.xlane.xlu0 %8779
    %v8781 = vsub.f32 %v8769, %v8777
    %v8782 = vsub.f32 %v8772, %v8780
    %v8783 = vmul.f32 %v8781, 1.442695
    %v8784 = vpow.pop %v8783
    %v8785 = vmul.f32 %v8782, 1.442695
    %v8786 = vpow.pop %v8785
    %v8787 = vsel %vm578, %v8784, 0.0
    %8788 = vadd.xlane.f32.xlu0 %v8787
    %v8789 = vpop.xlane.xlu0 %8788
    %v8790 = vsel %vm578, %v8786, 0.0
    %8791 = vadd.xlane.f32.xlu0 %v8790
    %v8792 = vpop.xlane.xlu0 %8791
    %v8793 = vrcp.pop %v8789
    %v8794 = vrcp.pop %v8792
    %v8795 = vmul.f32 %v8784, %v8793
    %v8796 = vmul.f32 %v8786, %v8794
    %v8797 = vpack.c.bf16 %v8796, %v8795
    %v8798 = vpack.c.bf16 %v8396, %v8392
    %v8800 = vsel %vm578, %v8797, 0
    %8802 = vmatprep.subr.bf16.mxu0 0
    %8803 = vmatpush1.bf16.msra.mxu0 %v8798
    %8804 = vmatprep.subr.bf16.mxu0 0
    %8805 = vmatpush1.bf16.msra.mxu0 0
    %8806 = vmatprep.subr.bf16.mxu0 0
    %8807 = vmatpush1.bf16.msra.mxu0 0
    %8808 = vmatprep.subr.bf16.mxu0 0
    %8809 = vmatpush1.bf16.msra.mxu0 0
    %8810 = vmatprep.subr.bf16.mxu0 0
    %8811 = vmatpush1.bf16.msra.mxu0 0
    %8812 = vmatprep.subr.bf16.mxu0 0
    %8813 = vmatpush1.bf16.msra.mxu0 0
    %8814 = vmatprep.subr.bf16.mxu0 0
    %8815 = vmatpush1.bf16.msra.mxu0 0
    %8816 = vmatprep.subr.bf16.mxu0 0
    %8817 = vmatpush1.bf16.msra.mxu0 0
    %8818 = vmatprep.subr.bf16.mxu0 0
    %8819 = vmatpush1.bf16.msra.mxu0 0
    %8820 = vmatprep.subr.bf16.mxu0 0
    %8821 = vmatpush1.bf16.msra.mxu0 0
    %8822 = vmatprep.subr.bf16.mxu0 0
    %8823 = vmatpush1.bf16.msra.mxu0 0
    %8824 = vmatprep.subr.bf16.mxu0 0
    %8825 = vmatpush1.bf16.msra.mxu0 0
    %8826 = vmatprep.subr.bf16.mxu0 0
    %8827 = vmatpush1.bf16.msra.mxu0 0
    %8828 = vmatprep.subr.bf16.mxu0 0
    %8829 = vmatpush1.bf16.msra.mxu0 0
    %8830 = vmatprep.subr.bf16.mxu0 0
    %8831 = vmatpush1.bf16.msra.mxu0 0
    %8832 = vmatprep.subr.bf16.mxu0 0
    %8833 = vmatpush1.bf16.msra.mxu0 0
    %8834 = vmatprep.mubr.bf16.mxu0 0
    %8835 = vmatmul.mubr.bf16.gmra.mrb[0].mxu0 %v8800
    %v8836 = vpop.f32.mrb[0].mxu0
    %v8837 = vadd.f32 0.0, %v8836
    %v8838 = vpop.f32.mrb[0].mxu0
    %v8839 = vpop.f32.mrb[0].mxu0
    %v8840 = vadd.f32 0.0, %v8839
    %v8841 = vpop.f32.mrb[0].mxu0
    %8842 = vdwg.mxu0
    %8844 = vrot.lane.b32.xlu0 %v8726, 64
    %v8845 = vpop.permute.xlu0 %8844
    %8847 = vrot.lane.b32.xlu0 %v8727, 64
    %v8848 = vpop.permute.xlu0 %8847
    %v8850 = vsel %vm8486, %v8845, 0
    %v8853 = vsel %vm8486, %v8848, 0
    %8855 = vmatprep.subr.bf16.mxu0 0
    %8856 = vmatpush1.bf16.xpose.msra.mxu0 %v8853
    %8857 = vmatprep.subr.bf16.mxu0 0
    %8858 = vmatpush1.bf16.xpose.msra.mxu0 0
    %8859 = vmatprep.subr.bf16.mxu0 0
    %8860 = vmatpush1.bf16.xpose.msra.mxu0 0
    %8861 = vmatprep.subr.bf16.mxu0 0
    %8862 = vmatpush1.bf16.xpose.msra.mxu0 0
    %8863 = vmatprep.subr.bf16.mxu0 0
    %8864 = vmatpush1.bf16.xpose.msra.mxu0 0
    %8865 = vmatprep.subr.bf16.mxu0 0
    %8866 = vmatpush1.bf16.xpose.msra.mxu0 0
    %8867 = vmatprep.subr.bf16.mxu0 0
    %8868 = vmatpush1.bf16.xpose.msra.mxu0 0
    %8869 = vmatprep.subr.bf16.mxu0 0
    %8870 = vmatpush1.bf16.xpose.msra.mxu0 0
    %8871 = vmatprep.subr.bf16.mxu0 0
    %8872 = vmatpush1.bf16.xpose.msra.mxu0 0
    %8873 = vmatprep.subr.bf16.mxu0 0
    %8874 = vmatpush1.bf16.xpose.msra.mxu0 0
    %8875 = vmatprep.subr.bf16.mxu0 0
    %8876 = vmatpush1.bf16.xpose.msra.mxu0 0
    %8877 = vmatprep.subr.bf16.mxu0 0
    %8878 = vmatpush1.bf16.xpose.msra.mxu0 0
    %8879 = vmatprep.subr.bf16.mxu0 0
    %8880 = vmatpush1.bf16.xpose.msra.mxu0 0
    %8881 = vmatprep.subr.bf16.mxu0 0
    %8882 = vmatpush1.bf16.xpose.msra.mxu0 0
    %8883 = vmatprep.subr.bf16.mxu0 0
    %8884 = vmatpush1.bf16.xpose.msra.mxu0 0
    %8885 = vmatprep.subr.bf16.mxu0 0
    %8886 = vmatpush1.bf16.xpose.msra.mxu0 0
    %8887 = vmatprep.mubr.bf16.mxu0 0
    %8888 = vmatmul.mubr.bf16.gmra.mrb[0].mxu0 %v8850
    %v8889 = vpop.f32.mrb[0].mxu0
    %v8890 = vadd.f32 %v7386, %v8889
    %v8891 = vpop.f32.mrb[0].mxu0
    %v8892 = vpop.f32.mrb[0].mxu0
    %v8893 = vadd.f32 %v7387, %v8892
    %v8894 = vpop.f32.mrb[0].mxu0
    %8895 = vdwg.mxu0
    %v8896 = vsel %vm578, %v8890, -inf
    %8897 = vmax.xlane.f32.xlu0 %v8896
    %v8898 = vpop.xlane.xlu0 %8897
    %v8899 = vsel %vm578, %v8893, -inf
    %8900 = vmax.xlane.f32.xlu0 %v8899
    %v8901 = vpop.xlane.xlu0 %8900
    %v8902 = vsub.f32 %v8890, %v8898
    %v8903 = vsub.f32 %v8893, %v8901
    %v8904 = vmul.f32 %v8902, 1.442695
    %v8905 = vpow.pop %v8904
    %v8906 = vmul.f32 %v8903, 1.442695
    %v8907 = vpow.pop %v8906
    %v8908 = vsel %vm578, %v8905, 0.0
    %8909 = vadd.xlane.f32.xlu0 %v8908
    %v8910 = vpop.xlane.xlu0 %8909
    %v8911 = vsel %vm578, %v8907, 0.0
    %8912 = vadd.xlane.f32.xlu0 %v8911
    %v8913 = vpop.xlane.xlu0 %8912
    %v8914 = vrcp.pop %v8910
    %v8915 = vrcp.pop %v8913
    %v8916 = vmul.f32 %v8905, %v8914
    %v8917 = vmul.f32 %v8907, %v8915
    %v8918 = vpack.c.bf16 %v8917, %v8916
    %8920 = vrot.lane.b32.xlu0 %v8798, 64
    %v8921 = vpop.permute.xlu0 %8920
    %v8924 = vsel %vm578, %v8918, 0
    %8926 = vmatprep.subr.bf16.mxu0 0
    %8927 = vmatpush1.bf16.msra.mxu0 %v8921
    %8928 = vmatprep.subr.bf16.mxu0 0
    %8929 = vmatpush1.bf16.msra.mxu0 0
    %8930 = vmatprep.subr.bf16.mxu0 0
    %8931 = vmatpush1.bf16.msra.mxu0 0
    %8932 = vmatprep.subr.bf16.mxu0 0
    %8933 = vmatpush1.bf16.msra.mxu0 0
    %8934 = vmatprep.subr.bf16.mxu0 0
    %8935 = vmatpush1.bf16.msra.mxu0 0
    %8936 = vmatprep.subr.bf16.mxu0 0
    %8937 = vmatpush1.bf16.msra.mxu0 0
    %8938 = vmatprep.subr.bf16.mxu0 0
    %8939 = vmatpush1.bf16.msra.mxu0 0
    %8940 = vmatprep.subr.bf16.mxu0 0
    %8941 = vmatpush1.bf16.msra.mxu0 0
    %8942 = vmatprep.subr.bf16.mxu0 0
    %8943 = vmatpush1.bf16.msra.mxu0 0
    %8944 = vmatprep.subr.bf16.mxu0 0
    %8945 = vmatpush1.bf16.msra.mxu0 0
    %8946 = vmatprep.subr.bf16.mxu0 0
    %8947 = vmatpush1.bf16.msra.mxu0 0
    %8948 = vmatprep.subr.bf16.mxu0 0
    %8949 = vmatpush1.bf16.msra.mxu0 0
    %8950 = vmatprep.subr.bf16.mxu0 0
    %8951 = vmatpush1.bf16.msra.mxu0 0
    %8952 = vmatprep.subr.bf16.mxu0 0
    %8953 = vmatpush1.bf16.msra.mxu0 0
    %8954 = vmatprep.subr.bf16.mxu0 0
    %8955 = vmatpush1.bf16.msra.mxu0 0
    %8956 = vmatprep.subr.bf16.mxu0 0
    %8957 = vmatpush1.bf16.msra.mxu0 0
    %8958 = vmatprep.mubr.bf16.mxu0 0
    %8959 = vmatmul.mubr.bf16.gmra.mrb[0].mxu0 %v8924
    %v8960 = vpop.f32.mrb[0].mxu0
    %v8961 = vadd.f32 0.0, %v8960
    %v8962 = vpop.f32.mrb[0].mxu0
    %v8963 = vpop.f32.mrb[0].mxu0
    %v8964 = vadd.f32 0.0, %v8963
    %v8965 = vpop.f32.mrb[0].mxu0
    %8966 = vdwg.mxu0
    %v8967 = vpack.c.bf16 %v8136, %v8132
    %v8968 = vpack.c.bf16 %v8308, %v8304
    %v8970 = vsel %vm8486, %v8967, 0
    %v8973 = vsel %vm8486, %v8968, 0
    %8975 = vmatprep.subr.bf16.mxu0 0
    %8976 = vmatpush1.bf16.xpose.msra.mxu0 %v8973
    %8977 = vmatprep.subr.bf16.mxu0 0
    %8978 = vmatpush1.bf16.xpose.msra.mxu0 0
    %8979 = vmatprep.subr.bf16.mxu0 0
    %8980 = vmatpush1.bf16.xpose.msra.mxu0 0
    %8981 = vmatprep.subr.bf16.mxu0 0
    %8982 = vmatpush1.bf16.xpose.msra.mxu0 0
    %8983 = vmatprep.subr.bf16.mxu0 0
    %8984 = vmatpush1.bf16.xpose.msra.mxu0 0
    %8985 = vmatprep.subr.bf16.mxu0 0
    %8986 = vmatpush1.bf16.xpose.msra.mxu0 0
    %8987 = vmatprep.subr.bf16.mxu0 0
    %8988 = vmatpush1.bf16.xpose.msra.mxu0 0
    %8989 = vmatprep.subr.bf16.mxu0 0
    %8990 = vmatpush1.bf16.xpose.msra.mxu0 0
    %8991 = vmatprep.subr.bf16.mxu0 0
    %8992 = vmatpush1.bf16.xpose.msra.mxu0 0
    %8993 = vmatprep.subr.bf16.mxu0 0
    %8994 = vmatpush1.bf16.xpose.msra.mxu0 0
    %8995 = vmatprep.subr.bf16.mxu0 0
    %8996 = vmatpush1.bf16.xpose.msra.mxu0 0
    %8997 = vmatprep.subr.bf16.mxu0 0
    %8998 = vmatpush1.bf16.xpose.msra.mxu0 0
    %8999 = vmatprep.subr.bf16.mxu0 0
    %9000 = vmatpush1.bf16.xpose.msra.mxu0 0
    %9001 = vmatprep.subr.bf16.mxu0 0
    %9002 = vmatpush1.bf16.xpose.msra.mxu0 0
    %9003 = vmatprep.subr.bf16.mxu0 0
    %9004 = vmatpush1.bf16.xpose.msra.mxu0 0
    %9005 = vmatprep.subr.bf16.mxu0 0
    %9006 = vmatpush1.bf16.xpose.msra.mxu0 0
    %9007 = vmatprep.mubr.bf16.mxu0 0
    %9008 = vmatmul.mubr.bf16.gmra.mrb[0].mxu0 %v8970
    %v9009 = vpop.f32.mrb[0].mxu0
    %v9010 = vadd.f32 %v7386, %v9009
    %v9011 = vpop.f32.mrb[0].mxu0
    %v9012 = vpop.f32.mrb[0].mxu0
    %v9013 = vadd.f32 %v7387, %v9012
    %v9014 = vpop.f32.mrb[0].mxu0
    %9015 = vdwg.mxu0
    %v9016 = vsel %vm578, %v9010, -inf
    %9017 = vmax.xlane.f32.xlu0 %v9016
    %v9018 = vpop.xlane.xlu0 %9017
    %v9019 = vsel %vm578, %v9013, -inf
    %9020 = vmax.xlane.f32.xlu0 %v9019
    %v9021 = vpop.xlane.xlu0 %9020
    %v9022 = vsub.f32 %v9010, %v9018
    %v9023 = vsub.f32 %v9013, %v9021
    %v9024 = vmul.f32 %v9022, 1.442695
    %v9025 = vpow.pop %v9024
    %v9026 = vmul.f32 %v9023, 1.442695
    %v9027 = vpow.pop %v9026
    %v9028 = vsel %vm578, %v9025, 0.0
    %9029 = vadd.xlane.f32.xlu0 %v9028
    %v9030 = vpop.xlane.xlu0 %9029
    %v9031 = vsel %vm578, %v9027, 0.0
    %9032 = vadd.xlane.f32.xlu0 %v9031
    %v9033 = vpop.xlane.xlu0 %9032
    %v9034 = vrcp.pop %v9030
    %v9035 = vrcp.pop %v9033
    %v9036 = vmul.f32 %v9025, %v9034
    %v9037 = vmul.f32 %v9027, %v9035
    %v9038 = vpack.c.bf16 %v9037, %v9036
    %v9039 = vpack.c.bf16 %v8480, %v8476
    %v9041 = vsel %vm578, %v9038, 0
    %9043 = vmatprep.subr.bf16.mxu0 0
    %9044 = vmatpush1.bf16.msra.mxu0 %v9039
    %9045 = vmatprep.subr.bf16.mxu0 0
    %9046 = vmatpush1.bf16.msra.mxu0 0
    %9047 = vmatprep.subr.bf16.mxu0 0
    %9048 = vmatpush1.bf16.msra.mxu0 0
    %9049 = vmatprep.subr.bf16.mxu0 0
    %9050 = vmatpush1.bf16.msra.mxu0 0
    %9051 = vmatprep.subr.bf16.mxu0 0
    %9052 = vmatpush1.bf16.msra.mxu0 0
    %9053 = vmatprep.subr.bf16.mxu0 0
    %9054 = vmatpush1.bf16.msra.mxu0 0
    %9055 = vmatprep.subr.bf16.mxu0 0
    %9056 = vmatpush1.bf16.msra.mxu0 0
    %9057 = vmatprep.subr.bf16.mxu0 0
    %9058 = vmatpush1.bf16.msra.mxu0 0
    %9059 = vmatprep.subr.bf16.mxu0 0
    %9060 = vmatpush1.bf16.msra.mxu0 0
    %9061 = vmatprep.subr.bf16.mxu0 0
    %9062 = vmatpush1.bf16.msra.mxu0 0
    %9063 = vmatprep.subr.bf16.mxu0 0
    %9064 = vmatpush1.bf16.msra.mxu0 0
    %9065 = vmatprep.subr.bf16.mxu0 0
    %9066 = vmatpush1.bf16.msra.mxu0 0
    %9067 = vmatprep.subr.bf16.mxu0 0
    %9068 = vmatpush1.bf16.msra.mxu0 0
    %9069 = vmatprep.subr.bf16.mxu0 0
    %9070 = vmatpush1.bf16.msra.mxu0 0
    %9071 = vmatprep.subr.bf16.mxu0 0
    %9072 = vmatpush1.bf16.msra.mxu0 0
    %9073 = vmatprep.subr.bf16.mxu0 0
    %9074 = vmatpush1.bf16.msra.mxu0 0
    %9075 = vmatprep.mubr.bf16.mxu0 0
    %9076 = vmatmul.mubr.bf16.gmra.mrb[0].mxu0 %v9041
    %v9077 = vpop.f32.mrb[0].mxu0
    %v9078 = vadd.f32 0.0, %v9077
    %v9079 = vpop.f32.mrb[0].mxu0
    %v9080 = vpop.f32.mrb[0].mxu0
    %v9081 = vadd.f32 0.0, %v9080
    %v9082 = vpop.f32.mrb[0].mxu0
    %9083 = vdwg.mxu0
    %9085 = vrot.lane.b32.xlu0 %v8967, 64
    %v9086 = vpop.permute.xlu0 %9085
    %9088 = vrot.lane.b32.xlu0 %v8968, 64
    %v9089 = vpop.permute.xlu0 %9088
    %v9091 = vsel %vm8486, %v9086, 0
    %v9094 = vsel %vm8486, %v9089, 0
    %9096 = vmatprep.subr.bf16.mxu0 0
    %9097 = vmatpush1.bf16.xpose.msra.mxu0 %v9094
    %9098 = vmatprep.subr.bf16.mxu0 0
    %9099 = vmatpush1.bf16.xpose.msra.mxu0 0
    %9100 = vmatprep.subr.bf16.mxu0 0
    %9101 = vmatpush1.bf16.xpose.msra.mxu0 0
    %9102 = vmatprep.subr.bf16.mxu0 0
    %9103 = vmatpush1.bf16.xpose.msra.mxu0 0
    %9104 = vmatprep.subr.bf16.mxu0 0
    %9105 = vmatpush1.bf16.xpose.msra.mxu0 0
    %9106 = vmatprep.subr.bf16.mxu0 0
    %9107 = vmatpush1.bf16.xpose.msra.mxu0 0
    %9108 = vmatprep.subr.bf16.mxu0 0
    %9109 = vmatpush1.bf16.xpose.msra.mxu0 0
    %9110 = vmatprep.subr.bf16.mxu0 0
    %9111 = vmatpush1.bf16.xpose.msra.mxu0 0
    %9112 = vmatprep.subr.bf16.mxu0 0
    %9113 = vmatpush1.bf16.xpose.msra.mxu0 0
    %9114 = vmatprep.subr.bf16.mxu0 0
    %9115 = vmatpush1.bf16.xpose.msra.mxu0 0
    %9116 = vmatprep.subr.bf16.mxu0 0
    %9117 = vmatpush1.bf16.xpose.msra.mxu0 0
    %9118 = vmatprep.subr.bf16.mxu0 0
    %9119 = vmatpush1.bf16.xpose.msra.mxu0 0
    %9120 = vmatprep.subr.bf16.mxu0 0
    %9121 = vmatpush1.bf16.xpose.msra.mxu0 0
    %9122 = vmatprep.subr.bf16.mxu0 0
    %9123 = vmatpush1.bf16.xpose.msra.mxu0 0
    %9124 = vmatprep.subr.bf16.mxu0 0
    %9125 = vmatpush1.bf16.xpose.msra.mxu0 0
    %9126 = vmatprep.subr.bf16.mxu0 0
    %9127 = vmatpush1.bf16.xpose.msra.mxu0 0
    %9128 = vmatprep.mubr.bf16.mxu0 0
    %9129 = vmatmul.mubr.bf16.gmra.mrb[0].mxu0 %v9091
    %v9130 = vpop.f32.mrb[0].mxu0
    %v9131 = vadd.f32 %v7386, %v9130
    %v9132 = vpop.f32.mrb[0].mxu0
    %v9133 = vpop.f32.mrb[0].mxu0
    %v9134 = vadd.f32 %v7387, %v9133
    %v9135 = vpop.f32.mrb[0].mxu0
    %9136 = vdwg.mxu0
    %v9137 = vsel %vm578, %v9131, -inf
    %9138 = vmax.xlane.f32.xlu0 %v9137
    %v9139 = vpop.xlane.xlu0 %9138
    %v9140 = vsel %vm578, %v9134, -inf
    %9141 = vmax.xlane.f32.xlu0 %v9140
    %v9142 = vpop.xlane.xlu0 %9141
    %v9143 = vsub.f32 %v9131, %v9139
    %v9144 = vsub.f32 %v9134, %v9142
    %v9145 = vmul.f32 %v9143, 1.442695
    %v9146 = vpow.pop %v9145
    %v9147 = vmul.f32 %v9144, 1.442695
    %v9148 = vpow.pop %v9147
    %v9149 = vsel %vm578, %v9146, 0.0
    %9150 = vadd.xlane.f32.xlu0 %v9149
    %v9151 = vpop.xlane.xlu0 %9150
    %v9152 = vsel %vm578, %v9148, 0.0
    %9153 = vadd.xlane.f32.xlu0 %v9152
    %v9154 = vpop.xlane.xlu0 %9153
    %v9155 = vrcp.pop %v9151
    %v9156 = vrcp.pop %v9154
    %v9157 = vmul.f32 %v9146, %v9155
    %v9158 = vmul.f32 %v9148, %v9156
    %v9159 = vpack.c.bf16 %v9158, %v9157
    %9161 = vrot.lane.b32.xlu0 %v9039, 64
    %v9162 = vpop.permute.xlu0 %9161
    %v9165 = vsel %vm578, %v9159, 0
    %9167 = vmatprep.subr.bf16.mxu0 0
    %9168 = vmatpush1.bf16.msra.mxu0 %v9162
    %9169 = vmatprep.subr.bf16.mxu0 0
    %9170 = vmatpush1.bf16.msra.mxu0 0
    %9171 = vmatprep.subr.bf16.mxu0 0
    %9172 = vmatpush1.bf16.msra.mxu0 0
    %9173 = vmatprep.subr.bf16.mxu0 0
    %9174 = vmatpush1.bf16.msra.mxu0 0
    %9175 = vmatprep.subr.bf16.mxu0 0
    %9176 = vmatpush1.bf16.msra.mxu0 0
    %9177 = vmatprep.subr.bf16.mxu0 0
    %9178 = vmatpush1.bf16.msra.mxu0 0
    %9179 = vmatprep.subr.bf16.mxu0 0
    %9180 = vmatpush1.bf16.msra.mxu0 0
    %9181 = vmatprep.subr.bf16.mxu0 0
    %9182 = vmatpush1.bf16.msra.mxu0 0
    %9183 = vmatprep.subr.bf16.mxu0 0
    %9184 = vmatpush1.bf16.msra.mxu0 0
    %9185 = vmatprep.subr.bf16.mxu0 0
    %9186 = vmatpush1.bf16.msra.mxu0 0
    %9187 = vmatprep.subr.bf16.mxu0 0
    %9188 = vmatpush1.bf16.msra.mxu0 0
    %9189 = vmatprep.subr.bf16.mxu0 0
    %9190 = vmatpush1.bf16.msra.mxu0 0
    %9191 = vmatprep.subr.bf16.mxu0 0
    %9192 = vmatpush1.bf16.msra.mxu0 0
    %9193 = vmatprep.subr.bf16.mxu0 0
    %9194 = vmatpush1.bf16.msra.mxu0 0
    %9195 = vmatprep.subr.bf16.mxu0 0
    %9196 = vmatpush1.bf16.msra.mxu0 0
    %9197 = vmatprep.subr.bf16.mxu0 0
    %9198 = vmatpush1.bf16.msra.mxu0 0
    %9199 = vmatprep.mubr.bf16.mxu0 0
    %9200 = vmatmul.mubr.bf16.gmra.mrb[0].mxu0 %v9165
    %v9201 = vpop.f32.mrb[0].mxu0
    %v9202 = vadd.f32 0.0, %v9201
    %v9203 = vpop.f32.mrb[0].mxu0
    %v9204 = vpop.f32.mrb[0].mxu0
    %v9205 = vadd.f32 0.0, %v9204
    %v9206 = vpop.f32.mrb[0].mxu0
    %9207 = vdwg.mxu0
    %v9208 = vpack.c.bf16 %v8138, %v8134
    %v9209 = vpack.c.bf16 %v8310, %v8306
    %v9211 = vsel %vm8486, %v9208, 0
    %v9214 = vsel %vm8486, %v9209, 0
    %9216 = vmatprep.subr.bf16.mxu0 0
    %9217 = vmatpush1.bf16.xpose.msra.mxu0 %v9214
    %9218 = vmatprep.subr.bf16.mxu0 0
    %9219 = vmatpush1.bf16.xpose.msra.mxu0 0
    %9220 = vmatprep.subr.bf16.mxu0 0
    %9221 = vmatpush1.bf16.xpose.msra.mxu0 0
    %9222 = vmatprep.subr.bf16.mxu0 0
    %9223 = vmatpush1.bf16.xpose.msra.mxu0 0
    %9224 = vmatprep.subr.bf16.mxu0 0
    %9225 = vmatpush1.bf16.xpose.msra.mxu0 0
    %9226 = vmatprep.subr.bf16.mxu0 0
    %9227 = vmatpush1.bf16.xpose.msra.mxu0 0
    %9228 = vmatprep.subr.bf16.mxu0 0
    %9229 = vmatpush1.bf16.xpose.msra.mxu0 0
    %9230 = vmatprep.subr.bf16.mxu0 0
    %9231 = vmatpush1.bf16.xpose.msra.mxu0 0
    %9232 = vmatprep.subr.bf16.mxu0 0
    %9233 = vmatpush1.bf16.xpose.msra.mxu0 0
    %9234 = vmatprep.subr.bf16.mxu0 0
    %9235 = vmatpush1.bf16.xpose.msra.mxu0 0
    %9236 = vmatprep.subr.bf16.mxu0 0
    %9237 = vmatpush1.bf16.xpose.msra.mxu0 0
    %9238 = vmatprep.subr.bf16.mxu0 0
    %9239 = vmatpush1.bf16.xpose.msra.mxu0 0
    %9240 = vmatprep.subr.bf16.mxu0 0
    %9241 = vmatpush1.bf16.xpose.msra.mxu0 0
    %9242 = vmatprep.subr.bf16.mxu0 0
    %9243 = vmatpush1.bf16.xpose.msra.mxu0 0
    %9244 = vmatprep.subr.bf16.mxu0 0
    %9245 = vmatpush1.bf16.xpose.msra.mxu0 0
    %9246 = vmatprep.subr.bf16.mxu0 0
    %9247 = vmatpush1.bf16.xpose.msra.mxu0 0
    %9248 = vmatprep.mubr.bf16.mxu0 0
    %9249 = vmatmul.mubr.bf16.gmra.mrb[0].mxu0 %v9211
    %v9250 = vpop.f32.mrb[0].mxu0
    %v9251 = vadd.f32 %v7386, %v9250
    %v9252 = vpop.f32.mrb[0].mxu0
    %v9253 = vpop.f32.mrb[0].mxu0
    %v9254 = vadd.f32 %v7387, %v9253
    %v9255 = vpop.f32.mrb[0].mxu0
    %9256 = vdwg.mxu0
    %v9257 = vsel %vm578, %v9251, -inf
    %9258 = vmax.xlane.f32.xlu0 %v9257
    %v9259 = vpop.xlane.xlu0 %9258
    %v9260 = vsel %vm578, %v9254, -inf
    %9261 = vmax.xlane.f32.xlu0 %v9260
    %v9262 = vpop.xlane.xlu0 %9261
    %v9263 = vsub.f32 %v9251, %v9259
    %v9264 = vsub.f32 %v9254, %v9262
    %v9265 = vmul.f32 %v9263, 1.442695
    %v9266 = vpow.pop %v9265
    %v9267 = vmul.f32 %v9264, 1.442695
    %v9268 = vpow.pop %v9267
    %v9269 = vsel %vm578, %v9266, 0.0
    %9270 = vadd.xlane.f32.xlu0 %v9269
    %v9271 = vpop.xlane.xlu0 %9270
    %v9272 = vsel %vm578, %v9268, 0.0
    %9273 = vadd.xlane.f32.xlu0 %v9272
    %v9274 = vpop.xlane.xlu0 %9273
    %v9275 = vrcp.pop %v9271
    %v9276 = vrcp.pop %v9274
    %v9277 = vmul.f32 %v9266, %v9275
    %v9278 = vmul.f32 %v9268, %v9276
    %v9279 = vpack.c.bf16 %v9278, %v9277
    %v9280 = vpack.c.bf16 %v8482, %v8478
    %v9282 = vsel %vm578, %v9279, 0
    %9284 = vmatprep.subr.bf16.mxu0 0
    %9285 = vmatpush1.bf16.msra.mxu0 %v9280
    %9286 = vmatprep.subr.bf16.mxu0 0
    %9287 = vmatpush1.bf16.msra.mxu0 0
    %9288 = vmatprep.subr.bf16.mxu0 0
    %9289 = vmatpush1.bf16.msra.mxu0 0
    %9290 = vmatprep.subr.bf16.mxu0 0
    %9291 = vmatpush1.bf16.msra.mxu0 0
    %9292 = vmatprep.subr.bf16.mxu0 0
    %9293 = vmatpush1.bf16.msra.mxu0 0
    %9294 = vmatprep.subr.bf16.mxu0 0
    %9295 = vmatpush1.bf16.msra.mxu0 0
    %9296 = vmatprep.subr.bf16.mxu0 0
    %9297 = vmatpush1.bf16.msra.mxu0 0
    %9298 = vmatprep.subr.bf16.mxu0 0
    %9299 = vmatpush1.bf16.msra.mxu0 0
    %9300 = vmatprep.subr.bf16.mxu0 0
    %9301 = vmatpush1.bf16.msra.mxu0 0
    %9302 = vmatprep.subr.bf16.mxu0 0
    %9303 = vmatpush1.bf16.msra.mxu0 0
    %9304 = vmatprep.subr.bf16.mxu0 0
    %9305 = vmatpush1.bf16.msra.mxu0 0
    %9306 = vmatprep.subr.bf16.mxu0 0
    %9307 = vmatpush1.bf16.msra.mxu0 0
    %9308 = vmatprep.subr.bf16.mxu0 0
    %9309 = vmatpush1.bf16.msra.mxu0 0
    %9310 = vmatprep.subr.bf16.mxu0 0
    %9311 = vmatpush1.bf16.msra.mxu0 0
    %9312 = vmatprep.subr.bf16.mxu0 0
    %9313 = vmatpush1.bf16.msra.mxu0 0
    %9314 = vmatprep.subr.bf16.mxu0 0
    %9315 = vmatpush1.bf16.msra.mxu0 0
    %9316 = vmatprep.mubr.bf16.mxu0 0
    %9317 = vmatmul.mubr.bf16.gmra.mrb[0].mxu0 %v9282
    %v9318 = vpop.f32.mrb[0].mxu0
    %v9319 = vadd.f32 0.0, %v9318
    %v9320 = vpop.f32.mrb[0].mxu0
    %v9321 = vpop.f32.mrb[0].mxu0
    %v9322 = vadd.f32 0.0, %v9321
    %v9323 = vpop.f32.mrb[0].mxu0
    %9324 = vdwg.mxu0
    %9326 = vrot.lane.b32.xlu0 %v9208, 64
    %v9327 = vpop.permute.xlu0 %9326
    %9329 = vrot.lane.b32.xlu0 %v9209, 64
    %v9330 = vpop.permute.xlu0 %9329
    %v9332 = vsel %vm8486, %v9327, 0
    %v9335 = vsel %vm8486, %v9330, 0
    %9337 = vmatprep.subr.bf16.mxu0 0
    %9338 = vmatpush1.bf16.xpose.msra.mxu0 %v9335
    %9339 = vmatprep.subr.bf16.mxu0 0
    %9340 = vmatpush1.bf16.xpose.msra.mxu0 0
    %9341 = vmatprep.subr.bf16.mxu0 0
    %9342 = vmatpush1.bf16.xpose.msra.mxu0 0
    %9343 = vmatprep.subr.bf16.mxu0 0
    %9344 = vmatpush1.bf16.xpose.msra.mxu0 0
    %9345 = vmatprep.subr.bf16.mxu0 0
    %9346 = vmatpush1.bf16.xpose.msra.mxu0 0
    %9347 = vmatprep.subr.bf16.mxu0 0
    %9348 = vmatpush1.bf16.xpose.msra.mxu0 0
    %9349 = vmatprep.subr.bf16.mxu0 0
    %9350 = vmatpush1.bf16.xpose.msra.mxu0 0
    %9351 = vmatprep.subr.bf16.mxu0 0
    %9352 = vmatpush1.bf16.xpose.msra.mxu0 0
    %9353 = vmatprep.subr.bf16.mxu0 0
    %9354 = vmatpush1.bf16.xpose.msra.mxu0 0
    %9355 = vmatprep.subr.bf16.mxu0 0
    %9356 = vmatpush1.bf16.xpose.msra.mxu0 0
    %9357 = vmatprep.subr.bf16.mxu0 0
    %9358 = vmatpush1.bf16.xpose.msra.mxu0 0
    %9359 = vmatprep.subr.bf16.mxu0 0
    %9360 = vmatpush1.bf16.xpose.msra.mxu0 0
    %9361 = vmatprep.subr.bf16.mxu0 0
    %9362 = vmatpush1.bf16.xpose.msra.mxu0 0
    %9363 = vmatprep.subr.bf16.mxu0 0
    %9364 = vmatpush1.bf16.xpose.msra.mxu0 0
    %9365 = vmatprep.subr.bf16.mxu0 0
    %9366 = vmatpush1.bf16.xpose.msra.mxu0 0
    %9367 = vmatprep.subr.bf16.mxu0 0
    %9368 = vmatpush1.bf16.xpose.msra.mxu0 0
    %9369 = vmatprep.mubr.bf16.mxu0 0
    %9370 = vmatmul.mubr.bf16.gmra.mrb[0].mxu0 %v9332
    %v9371 = vpop.f32.mrb[0].mxu0
    %v9372 = vadd.f32 %v7386, %v9371
    %v9373 = vpop.f32.mrb[0].mxu0
    %v9374 = vpop.f32.mrb[0].mxu0
    %v9375 = vadd.f32 %v7387, %v9374
    %v9376 = vpop.f32.mrb[0].mxu0
    %9377 = vdwg.mxu0
    %v9378 = vsel %vm578, %v9372, -inf
    %9379 = vmax.xlane.f32.xlu0 %v9378
    %v9380 = vpop.xlane.xlu0 %9379
    %v9381 = vsel %vm578, %v9375, -inf
    %9382 = vmax.xlane.f32.xlu0 %v9381
    %v9383 = vpop.xlane.xlu0 %9382
    %v9384 = vsub.f32 %v9372, %v9380
    %v9385 = vsub.f32 %v9375, %v9383
    %v9386 = vmul.f32 %v9384, 1.442695
    %v9387 = vpow.pop %v9386
    %v9388 = vmul.f32 %v9385, 1.442695
    %v9389 = vpow.pop %v9388
    %v9390 = vsel %vm578, %v9387, 0.0
    %9391 = vadd.xlane.f32.xlu0 %v9390
    %v9392 = vpop.xlane.xlu0 %9391
    %v9393 = vsel %vm578, %v9389, 0.0
    %9394 = vadd.xlane.f32.xlu0 %v9393
    %v9395 = vpop.xlane.xlu0 %9394
    %v9396 = vrcp.pop %v9392
    %v9397 = vrcp.pop %v9395
    %v9398 = vmul.f32 %v9387, %v9396
    %v9399 = vmul.f32 %v9389, %v9397
    %v9400 = vpack.c.bf16 %v9399, %v9398
    %9402 = vrot.lane.b32.xlu0 %v9280, 64
    %v9403 = vpop.permute.xlu0 %9402
    %v9406 = vsel %vm578, %v9400, 0
    %9408 = vmatprep.subr.bf16.mxu0 0
    %9409 = vmatpush1.bf16.msra.mxu0 %v9403
    %9410 = vmatprep.subr.bf16.mxu0 0
    %9411 = vmatpush1.bf16.msra.mxu0 0
    %9412 = vmatprep.subr.bf16.mxu0 0
    %9413 = vmatpush1.bf16.msra.mxu0 0
    %9414 = vmatprep.subr.bf16.mxu0 0
    %9415 = vmatpush1.bf16.msra.mxu0 0
    %9416 = vmatprep.subr.bf16.mxu0 0
    %9417 = vmatpush1.bf16.msra.mxu0 0
    %9418 = vmatprep.subr.bf16.mxu0 0
    %9419 = vmatpush1.bf16.msra.mxu0 0
    %9420 = vmatprep.subr.bf16.mxu0 0
    %9421 = vmatpush1.bf16.msra.mxu0 0
    %9422 = vmatprep.subr.bf16.mxu0 0
    %9423 = vmatpush1.bf16.msra.mxu0 0
    %9424 = vmatprep.subr.bf16.mxu0 0
    %9425 = vmatpush1.bf16.msra.mxu0 0
    %9426 = vmatprep.subr.bf16.mxu0 0
    %9427 = vmatpush1.bf16.msra.mxu0 0
    %9428 = vmatprep.subr.bf16.mxu0 0
    %9429 = vmatpush1.bf16.msra.mxu0 0
    %9430 = vmatprep.subr.bf16.mxu0 0
    %9431 = vmatpush1.bf16.msra.mxu0 0
    %9432 = vmatprep.subr.bf16.mxu0 0
    %9433 = vmatpush1.bf16.msra.mxu0 0
    %9434 = vmatprep.subr.bf16.mxu0 0
    %9435 = vmatpush1.bf16.msra.mxu0 0
    %9436 = vmatprep.subr.bf16.mxu0 0
    %9437 = vmatpush1.bf16.msra.mxu0 0
    %9438 = vmatprep.subr.bf16.mxu0 0
    %9439 = vmatpush1.bf16.msra.mxu0 0
    %9440 = vmatprep.mubr.bf16.mxu0 0
    %9441 = vmatmul.mubr.bf16.gmra.mrb[0].mxu0 %v9406
    %v9442 = vpop.f32.mrb[0].mxu0
    %v9443 = vadd.f32 0.0, %v9442
    %v9444 = vpop.f32.mrb[0].mxu0
    %v9445 = vpop.f32.mrb[0].mxu0
    %v9446 = vadd.f32 0.0, %v9445
    %v9447 = vpop.f32.mrb[0].mxu0
    %9448 = vdwg.mxu0
    %9451 = vrot.lane.b32.xlu0 %v8720, 64
    %v9452 = vpop.permute.xlu0 %9451
    %9453 = vrot.lane.b32.xlu0 %v8723, 64
    %v9454 = vpop.permute.xlu0 %9453
    %9459 = vrot.lane.b32.xlu0 %v8961, 64
    %v9460 = vpop.permute.xlu0 %9459
    %9461 = vrot.lane.b32.xlu0 %v8964, 64
    %v9462 = vpop.permute.xlu0 %9461
    %9467 = vrot.lane.b32.xlu0 %v9202, 64
    %v9468 = vpop.permute.xlu0 %9467
    %9469 = vrot.lane.b32.xlu0 %v9205, 64
    %v9470 = vpop.permute.xlu0 %9469
    %9475 = vrot.lane.b32.xlu0 %v9443, 64
    %v9476 = vpop.permute.xlu0 %9475
    %9477 = vrot.lane.b32.xlu0 %v9446, 64
    %v9478 = vpop.permute.xlu0 %9477
    %v9481 = vsel %vm8486, %v8596, %v9452
    %v9482 = vsel %vm8486, %v8599, %v9454
    %v9483 = vsel %vm8486, %v8837, %v9460
    %v9484 = vsel %vm8486, %v8840, %v9462
    %v9485 = vsel %vm8486, %v9078, %v9468
    %v9486 = vsel %vm8486, %v9081, %v9470
    %v9487 = vsel %vm8486, %v9319, %v9476
    %v9488 = vsel %vm8486, %v9322, %v9478
    %v9489 = vpack.c.bf16 %v9482, %v9481
    %v9490 = vpack.c.bf16 %v9484, %v9483
    %v9491 = vpack.c.bf16 %v9486, %v9485
    %v9492 = vpack.c.bf16 %v9488, %v9487
    %v9493 = vld [vmem:[#allocation4] sm:$0xff]
    %v9494 = vld [vmem:[#allocation4 + $0x8] sm:$0xff]
    %v9495 = vld [vmem:[#allocation4 + $0x10] sm:$0xff]
    %v9496 = vld [vmem:[#allocation4 + $0x18] sm:$0xff]
    %v9497 = vld [vmem:[#allocation4 + $0x20] sm:$0xff]
    %v9498 = vld [vmem:[#allocation4 + $0x28] sm:$0xff]
    %v9499 = vld [vmem:[#allocation4 + $0x30] sm:$0xff]
    %v9500 = vld [vmem:[#allocation4 + $0x38] sm:$0xff]
    %v9501 = vld [vmem:[#allocation4 + $0x40] sm:$0xff]
    %v9502 = vld [vmem:[#allocation4 + $0x48] sm:$0xff]
    %v9503 = vld [vmem:[#allocation4 + $0x50] sm:$0xff]
    %v9504 = vld [vmem:[#allocation4 + $0x58] sm:$0xff]
    %v9505 = vld [vmem:[#allocation4 + $0x60] sm:$0xff]
    %v9506 = vld [vmem:[#allocation4 + $0x68] sm:$0xff]
    %v9507 = vld [vmem:[#allocation4 + $0x70] sm:$0xff]
    %v9508 = vld [vmem:[#allocation4 + $0x78] sm:$0xff]
    %v9509 = vld [vmem:[#allocation4 + $0x80] sm:$0xff]
    %v9510 = vld [vmem:[#allocation4 + $0x88] sm:$0xff]
    %v9511 = vld [vmem:[#allocation4 + $0x90] sm:$0xff]
    %v9512 = vld [vmem:[#allocation4 + $0x98] sm:$0xff]
    %v9513 = vld [vmem:[#allocation4 + $0xa0] sm:$0xff]
    %v9514 = vld [vmem:[#allocation4 + $0xa8] sm:$0xff]
    %v9515 = vld [vmem:[#allocation4 + $0xb0] sm:$0xff]
    %v9516 = vld [vmem:[#allocation4 + $0xb8] sm:$0xff]
    %v9517 = vld [vmem:[#allocation4 + $0xc0] sm:$0xff]
    %v9518 = vld [vmem:[#allocation4 + $0xc8] sm:$0xff]
    %v9519 = vld [vmem:[#allocation4 + $0xd0] sm:$0xff]
    %v9520 = vld [vmem:[#allocation4 + $0xd8] sm:$0xff]
    %v9521 = vld [vmem:[#allocation4 + $0xe0] sm:$0xff]
    %v9522 = vld [vmem:[#allocation4 + $0xe8] sm:$0xff]
    %v9523 = vld [vmem:[#allocation4 + $0xf0] sm:$0xff]
    %v9524 = vld [vmem:[#allocation4 + $0xf8] sm:$0xff]
    %v9525 = vld [vmem:[#allocation4 + $0x100] sm:$0xff]
    %v9526 = vld [vmem:[#allocation4 + $0x108] sm:$0xff]
    %v9527 = vld [vmem:[#allocation4 + $0x110] sm:$0xff]
    %v9528 = vld [vmem:[#allocation4 + $0x118] sm:$0xff]
    %v9529 = vld [vmem:[#allocation4 + $0x120] sm:$0xff]
    %v9530 = vld [vmem:[#allocation4 + $0x128] sm:$0xff]
    %v9531 = vld [vmem:[#allocation4 + $0x130] sm:$0xff]
    %v9532 = vld [vmem:[#allocation4 + $0x138] sm:$0xff]
    %v9533 = vld [vmem:[#allocation4 + $0x140] sm:$0xff]
    %v9534 = vld [vmem:[#allocation4 + $0x148] sm:$0xff]
    %v9535 = vld [vmem:[#allocation4 + $0x150] sm:$0xff]
    %v9536 = vld [vmem:[#allocation4 + $0x158] sm:$0xff]
    %v9537 = vld [vmem:[#allocation4 + $0x160] sm:$0xff]
    %v9538 = vld [vmem:[#allocation4 + $0x168] sm:$0xff]
    %v9539 = vld [vmem:[#allocation4 + $0x170] sm:$0xff]
    %v9540 = vld [vmem:[#allocation4 + $0x178] sm:$0xff]
    %v9541 = vld [vmem:[#allocation4 + $0x180] sm:$0xff]
    %v9542 = vld [vmem:[#allocation4 + $0x188] sm:$0xff]
    %v9543 = vld [vmem:[#allocation4 + $0x190] sm:$0xff]
    %v9544 = vld [vmem:[#allocation4 + $0x198] sm:$0xff]
    %v9545 = vld [vmem:[#allocation4 + $0x1a0] sm:$0xff]
    %v9546 = vld [vmem:[#allocation4 + $0x1a8] sm:$0xff]
    %v9547 = vld [vmem:[#allocation4 + $0x1b0] sm:$0xff]
    %v9548 = vld [vmem:[#allocation4 + $0x1b8] sm:$0xff]
    %v9549 = vld [vmem:[#allocation4 + $0x1c0] sm:$0xff]
    %v9550 = vld [vmem:[#allocation4 + $0x1c8] sm:$0xff]
    %v9551 = vld [vmem:[#allocation4 + $0x1d0] sm:$0xff]
    %v9552 = vld [vmem:[#allocation4 + $0x1d8] sm:$0xff]
    %v9553 = vld [vmem:[#allocation4 + $0x1e0] sm:$0xff]
    %v9554 = vld [vmem:[#allocation4 + $0x1e8] sm:$0xff]
    %v9555 = vld [vmem:[#allocation4 + $0x1f0] sm:$0xff]
    %v9556 = vld [vmem:[#allocation4 + $0x1f8] sm:$0xff]
    %v9557 = vld [vmem:[#allocation4 + $0x200] sm:$0xff]
    %v9558 = vld [vmem:[#allocation4 + $0x208] sm:$0xff]
    %v9559 = vld [vmem:[#allocation4 + $0x210] sm:$0xff]
    %v9560 = vld [vmem:[#allocation4 + $0x218] sm:$0xff]
    %v9561 = vld [vmem:[#allocation4 + $0x220] sm:$0xff]
    %v9562 = vld [vmem:[#allocation4 + $0x228] sm:$0xff]
    %v9563 = vld [vmem:[#allocation4 + $0x230] sm:$0xff]
    %v9564 = vld [vmem:[#allocation4 + $0x238] sm:$0xff]
    %v9565 = vld [vmem:[#allocation4 + $0x240] sm:$0xff]
    %v9566 = vld [vmem:[#allocation4 + $0x248] sm:$0xff]
    %v9567 = vld [vmem:[#allocation4 + $0x250] sm:$0xff]
    %v9568 = vld [vmem:[#allocation4 + $0x258] sm:$0xff]
    %v9569 = vld [vmem:[#allocation4 + $0x260] sm:$0xff]
    %v9570 = vld [vmem:[#allocation4 + $0x268] sm:$0xff]
    %v9571 = vld [vmem:[#allocation4 + $0x270] sm:$0xff]
    %v9572 = vld [vmem:[#allocation4 + $0x278] sm:$0xff]
    %v9573 = vld [vmem:[#allocation4 + $0x280] sm:$0xff]
    %v9574 = vld [vmem:[#allocation4 + $0x288] sm:$0xff]
    %v9575 = vld [vmem:[#allocation4 + $0x290] sm:$0xff]
    %v9576 = vld [vmem:[#allocation4 + $0x298] sm:$0xff]
    %v9577 = vld [vmem:[#allocation4 + $0x2a0] sm:$0xff]
    %v9578 = vld [vmem:[#allocation4 + $0x2a8] sm:$0xff]
    %v9579 = vld [vmem:[#allocation4 + $0x2b0] sm:$0xff]
    %v9580 = vld [vmem:[#allocation4 + $0x2b8] sm:$0xff]
    %v9581 = vld [vmem:[#allocation4 + $0x2c0] sm:$0xff]
    %v9582 = vld [vmem:[#allocation4 + $0x2c8] sm:$0xff]
    %v9583 = vld [vmem:[#allocation4 + $0x2d0] sm:$0xff]
    %v9584 = vld [vmem:[#allocation4 + $0x2d8] sm:$0xff]
    %v9585 = vld [vmem:[#allocation4 + $0x2e0] sm:$0xff]
    %v9586 = vld [vmem:[#allocation4 + $0x2e8] sm:$0xff]
    %v9587 = vld [vmem:[#allocation4 + $0x2f0] sm:$0xff]
    %v9588 = vld [vmem:[#allocation4 + $0x2f8] sm:$0xff]
    %v9589 = vld [vmem:[#allocation4 + $0x300] sm:$0xff]
    %v9590 = vld [vmem:[#allocation4 + $0x308] sm:$0xff]
    %v9591 = vld [vmem:[#allocation4 + $0x310] sm:$0xff]
    %v9592 = vld [vmem:[#allocation4 + $0x318] sm:$0xff]
    %v9593 = vld [vmem:[#allocation4 + $0x320] sm:$0xff]
    %v9594 = vld [vmem:[#allocation4 + $0x328] sm:$0xff]
    %v9595 = vld [vmem:[#allocation4 + $0x330] sm:$0xff]
    %v9596 = vld [vmem:[#allocation4 + $0x338] sm:$0xff]
    %v9597 = vld [vmem:[#allocation4 + $0x340] sm:$0xff]
    %v9598 = vld [vmem:[#allocation4 + $0x348] sm:$0xff]
    %v9599 = vld [vmem:[#allocation4 + $0x350] sm:$0xff]
    %v9600 = vld [vmem:[#allocation4 + $0x358] sm:$0xff]
    %v9601 = vld [vmem:[#allocation4 + $0x360] sm:$0xff]
    %v9602 = vld [vmem:[#allocation4 + $0x368] sm:$0xff]
    %v9603 = vld [vmem:[#allocation4 + $0x370] sm:$0xff]
    %v9604 = vld [vmem:[#allocation4 + $0x378] sm:$0xff]
    %v9605 = vld [vmem:[#allocation4 + $0x380] sm:$0xff]
    %v9606 = vld [vmem:[#allocation4 + $0x388] sm:$0xff]
    %v9607 = vld [vmem:[#allocation4 + $0x390] sm:$0xff]
    %v9608 = vld [vmem:[#allocation4 + $0x398] sm:$0xff]
    %v9609 = vld [vmem:[#allocation4 + $0x3a0] sm:$0xff]
    %v9610 = vld [vmem:[#allocation4 + $0x3a8] sm:$0xff]
    %v9611 = vld [vmem:[#allocation4 + $0x3b0] sm:$0xff]
    %v9612 = vld [vmem:[#allocation4 + $0x3b8] sm:$0xff]
    %v9613 = vld [vmem:[#allocation4 + $0x3c0] sm:$0xff]
    %v9614 = vld [vmem:[#allocation4 + $0x3c8] sm:$0xff]
    %v9615 = vld [vmem:[#allocation4 + $0x3d0] sm:$0xff]
    %v9616 = vld [vmem:[#allocation4 + $0x3d8] sm:$0xff]
    %v9617 = vld [vmem:[#allocation4 + $0x3e0] sm:$0xff]
    %v9618 = vld [vmem:[#allocation4 + $0x3e8] sm:$0xff]
    %v9619 = vld [vmem:[#allocation4 + $0x3f0] sm:$0xff]
    %v9620 = vld [vmem:[#allocation4 + $0x3f8] sm:$0xff]
    %9621 = vmatprep.subr.bf16.mxu0 %v9494
    %9622 = vmatpush1.bf16.msra.mxu0 %v9493
    %9623 = vmatprep.subr.bf16.mxu0 %v9498
    %9624 = vmatpush1.bf16.msra.mxu0 %v9497
    %9625 = vmatprep.subr.bf16.mxu0 %v9502
    %9626 = vmatpush1.bf16.msra.mxu0 %v9501
    %9627 = vmatprep.subr.bf16.mxu0 %v9506
    %9628 = vmatpush1.bf16.msra.mxu0 %v9505
    %9629 = vmatprep.subr.bf16.mxu0 %v9510
    %9630 = vmatpush1.bf16.msra.mxu0 %v9509
    %9631 = vmatprep.subr.bf16.mxu0 %v9514
    %9632 = vmatpush1.bf16.msra.mxu0 %v9513
    %9633 = vmatprep.subr.bf16.mxu0 %v9518
    %9634 = vmatpush1.bf16.msra.mxu0 %v9517
    %9635 = vmatprep.subr.bf16.mxu0 %v9522
    %9636 = vmatpush1.bf16.msra.mxu0 %v9521
    %9637 = vmatprep.subr.bf16.mxu0 %v9526
    %9638 = vmatpush1.bf16.msra.mxu0 %v9525
    %9639 = vmatprep.subr.bf16.mxu0 %v9530
    %9640 = vmatpush1.bf16.msra.mxu0 %v9529
    %9641 = vmatprep.subr.bf16.mxu0 %v9534
    %9642 = vmatpush1.bf16.msra.mxu0 %v9533
    %9643 = vmatprep.subr.bf16.mxu0 %v9538
    %9644 = vmatpush1.bf16.msra.mxu0 %v9537
    %9645 = vmatprep.subr.bf16.mxu0 %v9542
    %9646 = vmatpush1.bf16.msra.mxu0 %v9541
    %9647 = vmatprep.subr.bf16.mxu0 %v9546
    %9648 = vmatpush1.bf16.msra.mxu0 %v9545
    %9649 = vmatprep.subr.bf16.mxu0 %v9550
    %9650 = vmatpush1.bf16.msra.mxu0 %v9549
    %9651 = vmatprep.subr.bf16.mxu0 %v9554
    %9652 = vmatpush1.bf16.msra.mxu0 %v9553
    %9653 = vmatprep.mubr.bf16.mxu0 %v9490
    %9654 = vmatmul.mubr.bf16.gmra.mrb[0].mxu0 %v9489
    %v9655 = vpop.f32.mrb[0].mxu0
    %v9656 = vadd.f32 0.0, %v9655
    %v9657 = vpop.f32.mrb[0].mxu0
    %v9658 = vadd.f32 0.0, %v9657
    %v9659 = vpop.f32.mrb[0].mxu0
    %v9660 = vadd.f32 0.0, %v9659
    %v9661 = vpop.f32.mrb[0].mxu0
    %v9662 = vadd.f32 0.0, %v9661
    %9663 = vdwg.mxu0
    %9664 = vmatprep.subr.bf16.mxu0 %v9558
    %9665 = vmatpush1.bf16.msra.mxu0 %v9557
    %9666 = vmatprep.subr.bf16.mxu0 %v9562
    %9667 = vmatpush1.bf16.msra.mxu0 %v9561
    %9668 = vmatprep.subr.bf16.mxu0 %v9566
    %9669 = vmatpush1.bf16.msra.mxu0 %v9565
    %9670 = vmatprep.subr.bf16.mxu0 %v9570
    %9671 = vmatpush1.bf16.msra.mxu0 %v9569
    %9672 = vmatprep.subr.bf16.mxu0 %v9574
    %9673 = vmatpush1.bf16.msra.mxu0 %v9573
    %9674 = vmatprep.subr.bf16.mxu0 %v9578
    %9675 = vmatpush1.bf16.msra.mxu0 %v9577
    %9676 = vmatprep.subr.bf16.mxu0 %v9582
    %9677 = vmatpush1.bf16.msra.mxu0 %v9581
    %9678 = vmatprep.subr.bf16.mxu0 %v9586
    %9679 = vmatpush1.bf16.msra.mxu0 %v9585
    %9680 = vmatprep.subr.bf16.mxu0 %v9590
    %9681 = vmatpush1.bf16.msra.mxu0 %v9589
    %9682 = vmatprep.subr.bf16.mxu0 %v9594
    %9683 = vmatpush1.bf16.msra.mxu0 %v9593
    %9684 = vmatprep.subr.bf16.mxu0 %v9598
    %9685 = vmatpush1.bf16.msra.mxu0 %v9597
    %9686 = vmatprep.subr.bf16.mxu0 %v9602
    %9687 = vmatpush1.bf16.msra.mxu0 %v9601
    %9688 = vmatprep.subr.bf16.mxu0 %v9606
    %9689 = vmatpush1.bf16.msra.mxu0 %v9605
    %9690 = vmatprep.subr.bf16.mxu0 %v9610
    %9691 = vmatpush1.bf16.msra.mxu0 %v9609
    %9692 = vmatprep.subr.bf16.mxu0 %v9614
    %9693 = vmatpush1.bf16.msra.mxu0 %v9613
    %9694 = vmatprep.subr.bf16.mxu0 %v9618
    %9695 = vmatpush1.bf16.msra.mxu0 %v9617
    %9696 = vmatprep.mubr.bf16.mxu0 %v9492
    %9697 = vmatmul.mubr.bf16.gmra.mrb[0].mxu0 %v9491
    %v9698 = vpop.f32.mrb[0].mxu0
    %v9699 = vadd.f32 %v9656, %v9698
    %v9700 = vpop.f32.mrb[0].mxu0
    %v9701 = vadd.f32 %v9658, %v9700
    %v9702 = vpop.f32.mrb[0].mxu0
    %v9703 = vadd.f32 %v9660, %v9702
    %v9704 = vpop.f32.mrb[0].mxu0
    %v9705 = vadd.f32 %v9662, %v9704
    %9706 = vdwg.mxu0
    %9707 = vmatprep.subr.bf16.mxu0 %v9496
    %9708 = vmatpush1.bf16.msra.mxu0 %v9495
    %9709 = vmatprep.subr.bf16.mxu0 %v9500
    %9710 = vmatpush1.bf16.msra.mxu0 %v9499
    %9711 = vmatprep.subr.bf16.mxu0 %v9504
    %9712 = vmatpush1.bf16.msra.mxu0 %v9503
    %9713 = vmatprep.subr.bf16.mxu0 %v9508
    %9714 = vmatpush1.bf16.msra.mxu0 %v9507
    %9715 = vmatprep.subr.bf16.mxu0 %v9512
    %9716 = vmatpush1.bf16.msra.mxu0 %v9511
    %9717 = vmatprep.subr.bf16.mxu0 %v9516
    %9718 = vmatpush1.bf16.msra.mxu0 %v9515
    %9719 = vmatprep.subr.bf16.mxu0 %v9520
    %9720 = vmatpush1.bf16.msra.mxu0 %v9519
    %9721 = vmatprep.subr.bf16.mxu0 %v9524
    %9722 = vmatpush1.bf16.msra.mxu0 %v9523
    %9723 = vmatprep.subr.bf16.mxu0 %v9528
    %9724 = vmatpush1.bf16.msra.mxu0 %v9527
    %9725 = vmatprep.subr.bf16.mxu0 %v9532
    %9726 = vmatpush1.bf16.msra.mxu0 %v9531
    %9727 = vmatprep.subr.bf16.mxu0 %v9536
    %9728 = vmatpush1.bf16.msra.mxu0 %v9535
    %9729 = vmatprep.subr.bf16.mxu0 %v9540
    %9730 = vmatpush1.bf16.msra.mxu0 %v9539
    %9731 = vmatprep.subr.bf16.mxu0 %v9544
    %9732 = vmatpush1.bf16.msra.mxu0 %v9543
    %9733 = vmatprep.subr.bf16.mxu0 %v9548
    %9734 = vmatpush1.bf16.msra.mxu0 %v9547
    %9735 = vmatprep.subr.bf16.mxu0 %v9552
    %9736 = vmatpush1.bf16.msra.mxu0 %v9551
    %9737 = vmatprep.subr.bf16.mxu0 %v9556
    %9738 = vmatpush1.bf16.msra.mxu0 %v9555
    %9739 = vmatprep.mubr.bf16.mxu0 %v9490
    %9740 = vmatmul.mubr.bf16.gmra.mrb[0].mxu0 %v9489
    %v9741 = vpop.f32.mrb[0].mxu0
    %v9742 = vadd.f32 0.0, %v9741
    %v9743 = vpop.f32.mrb[0].mxu0
    %v9744 = vadd.f32 0.0, %v9743
    %v9745 = vpop.f32.mrb[0].mxu0
    %v9746 = vadd.f32 0.0, %v9745
    %v9747 = vpop.f32.mrb[0].mxu0
    %v9748 = vadd.f32 0.0, %v9747
    %9749 = vdwg.mxu0
    %9750 = vmatprep.subr.bf16.mxu0 %v9560
    %9751 = vmatpush1.bf16.msra.mxu0 %v9559
    %9752 = vmatprep.subr.bf16.mxu0 %v9564
    %9753 = vmatpush1.bf16.msra.mxu0 %v9563
    %9754 = vmatprep.subr.bf16.mxu0 %v9568
    %9755 = vmatpush1.bf16.msra.mxu0 %v9567
    %9756 = vmatprep.subr.bf16.mxu0 %v9572
    %9757 = vmatpush1.bf16.msra.mxu0 %v9571
    %9758 = vmatprep.subr.bf16.mxu0 %v9576
    %9759 = vmatpush1.bf16.msra.mxu0 %v9575
    %9760 = vmatprep.subr.bf16.mxu0 %v9580
    %9761 = vmatpush1.bf16.msra.mxu0 %v9579
    %9762 = vmatprep.subr.bf16.mxu0 %v9584
    %9763 = vmatpush1.bf16.msra.mxu0 %v9583
    %9764 = vmatprep.subr.bf16.mxu0 %v9588
    %9765 = vmatpush1.bf16.msra.mxu0 %v9587
    %9766 = vmatprep.subr.bf16.mxu0 %v9592
    %9767 = vmatpush1.bf16.msra.mxu0 %v9591
    %9768 = vmatprep.subr.bf16.mxu0 %v9596
    %9769 = vmatpush1.bf16.msra.mxu0 %v9595
    %9770 = vmatprep.subr.bf16.mxu0 %v9600
    %9771 = vmatpush1.bf16.msra.mxu0 %v9599
    %9772 = vmatprep.subr.bf16.mxu0 %v9604
    %9773 = vmatpush1.bf16.msra.mxu0 %v9603
    %9774 = vmatprep.subr.bf16.mxu0 %v9608
    %9775 = vmatpush1.bf16.msra.mxu0 %v9607
    %9776 = vmatprep.subr.bf16.mxu0 %v9612
    %9777 = vmatpush1.bf16.msra.mxu0 %v9611
    %9778 = vmatprep.subr.bf16.mxu0 %v9616
    %9779 = vmatpush1.bf16.msra.mxu0 %v9615
    %9780 = vmatprep.subr.bf16.mxu0 %v9620
    %9781 = vmatpush1.bf16.msra.mxu0 %v9619
    %9782 = vmatprep.mubr.bf16.mxu0 %v9492
    %9783 = vmatmul.mubr.bf16.gmra.mrb[0].mxu0 %v9491
    %v9784 = vpop.f32.mrb[0].mxu0
    %v9785 = vadd.f32 %v9742, %v9784
    %v9786 = vpop.f32.mrb[0].mxu0
    %v9787 = vadd.f32 %v9744, %v9786
    %v9788 = vpop.f32.mrb[0].mxu0
    %v9789 = vadd.f32 %v9746, %v9788
    %v9790 = vpop.f32.mrb[0].mxu0
    %v9791 = vadd.f32 %v9748, %v9790
    %9792 = vdwg.mxu0
    %v9793 = vadd.f32 %v6776, %v9699
    %v9794 = vadd.f32 %v6778, %v9701
    %v9795 = vadd.f32 %v7378, %v9785
    %v9796 = vadd.f32 %v7380, %v9787
    %v9797 = vadd.f32 %v6780, %v9703
    %v9798 = vadd.f32 %v6782, %v9705
    %v9799 = vadd.f32 %v7382, %v9789
    %v9800 = vadd.f32 %v7384, %v9791
    %v9801 = vld [vmem:[#allocation23] sm:$0xf]
    %v9803 = vlaneseq
    %v9804 = vshrl.u32 %v9803, 7
    %v9805 = vsub.s32 0, %v9804
    %v9806 = vrot.slane %v9801, %v9805
    %v9807 = vlaneseq
    %v9808 = vshrl.u32 %v9807, 7
    %v9809 = vsub.s32 1, %v9808
    %v9810 = vrot.slane %v9801, %v9809
    %v9811 = vlaneseq
    %v9812 = vshrl.u32 %v9811, 7
    %v9813 = vsub.s32 2, %v9812
    %v9814 = vrot.slane %v9801, %v9813
    %v9815 = vlaneseq
    %v9816 = vshrl.u32 %v9815, 7
    %v9817 = vsub.s32 3, %v9816
    %v9818 = vrot.slane %v9801, %v9817
    %v9823 = vadd.f32 %v9793, %v9806
    %v9824 = vadd.f32 %v9794, %v9810
    %v9825 = vadd.f32 %v9795, %v9814
    %v9826 = vadd.f32 %v9796, %v9818
    %v9827 = vadd.f32 %v9797, %v9806
    %v9828 = vadd.f32 %v9798, %v9810
    %v9829 = vadd.f32 %v9799, %v9814
    %v9830 = vadd.f32 %v9800, %v9818
    %v9831 = vld [vmem:[#allocation24] sm:$0xf]
    %v9832 = vld [vmem:[#allocation26] sm:$0xf]
    %v9833 = vadd.f32 %v9823, %v9824
    %v9834 = vadd.f32 %v9833, %v9825
    %v9835 = vadd.f32 %v9834, %v9826
    %9836 = vadd.xlane.f32.xlu0 %v9835
    %v9837 = vpop.xlane.xlu0 %9836
    %v9838 = vadd.f32 %v9827, %v9828
    %v9839 = vadd.f32 %v9838, %v9829
    %v9840 = vadd.f32 %v9839, %v9830
    %9841 = vadd.xlane.f32.xlu0 %v9840
    %v9842 = vpop.xlane.xlu0 %9841
    %v9843 = vmul.f32 %v9837, %v7415
    %v9844 = vmul.f32 %v9842, %v7415
    %v9845 = vsub.f32 %v9823, %v9843
    %v9846 = vsub.f32 %v9824, %v9843
    %v9847 = vsub.f32 %v9825, %v9843
    %v9848 = vsub.f32 %v9826, %v9843
    %v9849 = vsub.f32 %v9827, %v9844
    %v9850 = vsub.f32 %v9828, %v9844
    %v9851 = vsub.f32 %v9829, %v9844
    %v9852 = vsub.f32 %v9830, %v9844
    %v9853 = vmul.f32 %v9845, %v9845
    %v9854 = vmul.f32 %v9846, %v9846
    %v9855 = vmul.f32 %v9847, %v9847
    %v9856 = vmul.f32 %v9848, %v9848
    %v9857 = vmul.f32 %v9849, %v9849
    %v9858 = vmul.f32 %v9850, %v9850
    %v9859 = vmul.f32 %v9851, %v9851
    %v9860 = vmul.f32 %v9852, %v9852
    %v9861 = vadd.f32 %v9853, %v9854
    %v9862 = vadd.f32 %v9861, %v9855
    %v9863 = vadd.f32 %v9862, %v9856
    %9864 = vadd.xlane.f32.xlu0 %v9863
    %v9865 = vpop.xlane.xlu0 %9864
    %v9866 = vadd.f32 %v9857, %v9858
    %v9867 = vadd.f32 %v9866, %v9859
    %v9868 = vadd.f32 %v9867, %v9860
    %9869 = vadd.xlane.f32.xlu0 %v9868
    %v9870 = vpop.xlane.xlu0 %9869
    %v9871 = vmul.f32 %v9865, %v7415
    %v9872 = vmul.f32 %v9870, %v7415
    %v9873 = vadd.f32 %v9871, 1e-05
    %v9874 = vadd.f32 %v9872, 1e-05
    %v9875 = vrsqrt.pop %v9873
    %v9876 = vrsqrt.pop %v9874
    %v9877 = vmul.f32 %v9845, %v9875
    %v9878 = vmul.f32 %v9846, %v9875
    %v9879 = vmul.f32 %v9847, %v9875
    %v9880 = vmul.f32 %v9848, %v9875
    %v9881 = vmul.f32 %v9849, %v9876
    %v9882 = vmul.f32 %v9850, %v9876
    %v9883 = vmul.f32 %v9851, %v9876
    %v9884 = vmul.f32 %v9852, %v9876
    %v9886 = vlaneseq
    %v9887 = vshrl.u32 %v9886, 7
    %v9888 = vsub.s32 0, %v9887
    %v9889 = vrot.slane %v9831, %v9888
    %v9890 = vlaneseq
    %v9891 = vshrl.u32 %v9890, 7
    %v9892 = vsub.s32 1, %v9891
    %v9893 = vrot.slane %v9831, %v9892
    %v9894 = vlaneseq
    %v9895 = vshrl.u32 %v9894, 7
    %v9896 = vsub.s32 2, %v9895
    %v9897 = vrot.slane %v9831, %v9896
    %v9898 = vlaneseq
    %v9899 = vshrl.u32 %v9898, 7
    %v9900 = vsub.s32 3, %v9899
    %v9901 = vrot.slane %v9831, %v9900
    %v9906 = vmul.f32 %v9877, %v9889
    %v9907 = vmul.f32 %v9878, %v9893
    %v9908 = vmul.f32 %v9879, %v9897
    %v9909 = vmul.f32 %v9880, %v9901
    %v9910 = vmul.f32 %v9881, %v9889
    %v9911 = vmul.f32 %v9882, %v9893
    %v9912 = vmul.f32 %v9883, %v9897
    %v9913 = vmul.f32 %v9884, %v9901
    %v9915 = vlaneseq
    %v9916 = vshrl.u32 %v9915, 7
    %v9917 = vsub.s32 0, %v9916
    %v9918 = vrot.slane %v9832, %v9917
    %v9919 = vlaneseq
    %v9920 = vshrl.u32 %v9919, 7
    %v9921 = vsub.s32 1, %v9920
    %v9922 = vrot.slane %v9832, %v9921
    %v9923 = vlaneseq
    %v9924 = vshrl.u32 %v9923, 7
    %v9925 = vsub.s32 2, %v9924
    %v9926 = vrot.slane %v9832, %v9925
    %v9927 = vlaneseq
    %v9928 = vshrl.u32 %v9927, 7
    %v9929 = vsub.s32 3, %v9928
    %v9930 = vrot.slane %v9832, %v9929
    %v9935 = vadd.f32 %v9906, %v9918
    %v9936 = vadd.f32 %v9907, %v9922
    %v9937 = vadd.f32 %v9908, %v9926
    %v9938 = vadd.f32 %v9909, %v9930
    %v9939 = vadd.f32 %v9910, %v9918
    %v9940 = vadd.f32 %v9911, %v9922
    %v9941 = vadd.f32 %v9912, %v9926
    %v9942 = vadd.f32 %v9913, %v9930
    %v9943 = vpack.c.bf16 %v9939, %v9935
    %v9944 = vpack.c.bf16 %v9940, %v9936
    %v9945 = vpack.c.bf16 %v9941, %v9937
    %v9946 = vpack.c.bf16 %v9942, %v9938
    %v9947 = vld [vmem:[#allocation5] sm:$0xff]
    %v9948 = vld [vmem:[#allocation5 + $0x8] sm:$0xff]
    %v9949 = vld [vmem:[#allocation5 + $0x10] sm:$0xff]
    %v9950 = vld [vmem:[#allocation5 + $0x18] sm:$0xff]
    %v9951 = vld [vmem:[#allocation5 + $0x20] sm:$0xff]
    %v9952 = vld [vmem:[#allocation5 + $0x28] sm:$0xff]
    %v9953 = vld [vmem:[#allocation5 + $0x30] sm:$0xff]
    %v9954 = vld [vmem:[#allocation5 + $0x38] sm:$0xff]
    %v9955 = vld [vmem:[#allocation5 + $0x40] sm:$0xff]
    %v9956 = vld [vmem:[#allocation5 + $0x48] sm:$0xff]
    %v9957 = vld [vmem:[#allocation5 + $0x50] sm:$0xff]
    %v9958 = vld [vmem:[#allocation5 + $0x58] sm:$0xff]
    %v9959 = vld [vmem:[#allocation5 + $0x60] sm:$0xff]
    %v9960 = vld [vmem:[#allocation5 + $0x68] sm:$0xff]
    %v9961 = vld [vmem:[#allocation5 + $0x70] sm:$0xff]
    %v9962 = vld [vmem:[#allocation5 + $0x78] sm:$0xff]
    %v9963 = vld [vmem:[#allocation5 + $0x80] sm:$0xff]
    %v9964 = vld [vmem:[#allocation5 + $0x88] sm:$0xff]
    %v9965 = vld [vmem:[#allocation5 + $0x90] sm:$0xff]
    %v9966 = vld [vmem:[#allocation5 + $0x98] sm:$0xff]
    %v9967 = vld [vmem:[#allocation5 + $0xa0] sm:$0xff]
    %v9968 = vld [vmem:[#allocation5 + $0xa8] sm:$0xff]
    %v9969 = vld [vmem:[#allocation5 + $0xb0] sm:$0xff]
    %v9970 = vld [vmem:[#allocation5 + $0xb8] sm:$0xff]
    %v9971 = vld [vmem:[#allocation5 + $0xc0] sm:$0xff]
    %v9972 = vld [vmem:[#allocation5 + $0xc8] sm:$0xff]
    %v9973 = vld [vmem:[#allocation5 + $0xd0] sm:$0xff]
    %v9974 = vld [vmem:[#allocation5 + $0xd8] sm:$0xff]
    %v9975 = vld [vmem:[#allocation5 + $0xe0] sm:$0xff]
    %v9976 = vld [vmem:[#allocation5 + $0xe8] sm:$0xff]
    %v9977 = vld [vmem:[#allocation5 + $0xf0] sm:$0xff]
    %v9978 = vld [vmem:[#allocation5 + $0xf8] sm:$0xff]
    %v9979 = vld [vmem:[#allocation27] sm:$0x1]
    %v9981 = vlaneseq
    %v9982 = vshrl.u32 %v9981, 7
    %v9983 = vsub.s32 0, %v9982
    %v9984 = vrot.slane %v9979, %v9983
    %9986 = vmatprep.subr.bf16.mxu0 0
    %9987 = vmatpush1.bf16.msra.mxu0 %v9947
    %9988 = vmatprep.subr.bf16.mxu0 0
    %9989 = vmatpush1.bf16.msra.mxu0 %v9948
    %9990 = vmatprep.subr.bf16.mxu0 0
    %9991 = vmatpush1.bf16.msra.mxu0 %v9949
    %9992 = vmatprep.subr.bf16.mxu0 0
    %9993 = vmatpush1.bf16.msra.mxu0 %v9950
    %9994 = vmatprep.subr.bf16.mxu0 0
    %9995 = vmatpush1.bf16.msra.mxu0 %v9951
    %9996 = vmatprep.subr.bf16.mxu0 0
    %9997 = vmatpush1.bf16.msra.mxu0 %v9952
    %9998 = vmatprep.subr.bf16.mxu0 0
    %9999 = vmatpush1.bf16.msra.mxu0 %v9953
    %10000 = vmatprep.subr.bf16.mxu0 0
    %10001 = vmatpush1.bf16.msra.mxu0 %v9954
    %10002 = vmatprep.subr.bf16.mxu0 0
    %10003 = vmatpush1.bf16.msra.mxu0 %v9955
    %10004 = vmatprep.subr.bf16.mxu0 0
    %10005 = vmatpush1.bf16.msra.mxu0 %v9956
    %10006 = vmatprep.subr.bf16.mxu0 0
    %10007 = vmatpush1.bf16.msra.mxu0 %v9957
    %10008 = vmatprep.subr.bf16.mxu0 0
    %10009 = vmatpush1.bf16.msra.mxu0 %v9958
    %10010 = vmatprep.subr.bf16.mxu0 0
    %10011 = vmatpush1.bf16.msra.mxu0 %v9959
    %10012 = vmatprep.subr.bf16.mxu0 0
    %10013 = vmatpush1.bf16.msra.mxu0 %v9960
    %10014 = vmatprep.subr.bf16.mxu0 0
    %10015 = vmatpush1.bf16.msra.mxu0 %v9961
    %10016 = vmatprep.subr.bf16.mxu0 0
    %10017 = vmatpush1.bf16.msra.mxu0 %v9962
    %10018 = vmatprep.mubr.bf16.mxu0 %v9944
    %10019 = vmatmul.mubr.bf16.gmra.mrb[0].mxu0 %v9943
    %v10020 = vpop.f32.mrb[0].mxu0
    %v10021 = vadd.f32 %v9984, %v10020
    %v10022 = vpop.f32.mrb[0].mxu0
    %v10023 = vpop.f32.mrb[0].mxu0
    %v10024 = vadd.f32 %v9984, %v10023
    %v10025 = vpop.f32.mrb[0].mxu0
    %10026 = vdwg.mxu0
    %10027 = vmatprep.subr.bf16.mxu0 0
    %10028 = vmatpush1.bf16.msra.mxu0 %v9963
    %10029 = vmatprep.subr.bf16.mxu0 0
    %10030 = vmatpush1.bf16.msra.mxu0 %v9964
    %10031 = vmatprep.subr.bf16.mxu0 0
    %10032 = vmatpush1.bf16.msra.mxu0 %v9965
    %10033 = vmatprep.subr.bf16.mxu0 0
    %10034 = vmatpush1.bf16.msra.mxu0 %v9966
    %10035 = vmatprep.subr.bf16.mxu0 0
    %10036 = vmatpush1.bf16.msra.mxu0 %v9967
    %10037 = vmatprep.subr.bf16.mxu0 0
    %10038 = vmatpush1.bf16.msra.mxu0 %v9968
    %10039 = vmatprep.subr.bf16.mxu0 0
    %10040 = vmatpush1.bf16.msra.mxu0 %v9969
    %10041 = vmatprep.subr.bf16.mxu0 0
    %10042 = vmatpush1.bf16.msra.mxu0 %v9970
    %10043 = vmatprep.subr.bf16.mxu0 0
    %10044 = vmatpush1.bf16.msra.mxu0 %v9971
    %10045 = vmatprep.subr.bf16.mxu0 0
    %10046 = vmatpush1.bf16.msra.mxu0 %v9972
    %10047 = vmatprep.subr.bf16.mxu0 0
    %10048 = vmatpush1.bf16.msra.mxu0 %v9973
    %10049 = vmatprep.subr.bf16.mxu0 0
    %10050 = vmatpush1.bf16.msra.mxu0 %v9974
    %10051 = vmatprep.subr.bf16.mxu0 0
    %10052 = vmatpush1.bf16.msra.mxu0 %v9975
    %10053 = vmatprep.subr.bf16.mxu0 0
    %10054 = vmatpush1.bf16.msra.mxu0 %v9976
    %10055 = vmatprep.subr.bf16.mxu0 0
    %10056 = vmatpush1.bf16.msra.mxu0 %v9977
    %10057 = vmatprep.subr.bf16.mxu0 0
    %10058 = vmatpush1.bf16.msra.mxu0 %v9978
    %10059 = vmatprep.mubr.bf16.mxu0 %v9946
    %10060 = vmatmul.mubr.bf16.gmra.mrb[0].mxu0 %v9945
    %v10061 = vpop.f32.mrb[0].mxu0
    %v10062 = vadd.f32 %v10021, %v10061
    %v10063 = vpop.f32.mrb[0].mxu0
    %v10064 = vpop.f32.mrb[0].mxu0
    %v10065 = vadd.f32 %v10024, %v10064
    %v10066 = vpop.f32.mrb[0].mxu0
    %10067 = vdwg.mxu0
    %v10068 = vmul.f32 %v10062, %v10062
    %v10069 = vmul.f32 %v10065, %v10065
    %v10070 = vmul.f32 %v10062, %v10068
    %v10071 = vmul.f32 %v10065, %v10069
    %v10072 = vmul.f32 %v10070, 0.044715
    %v10073 = vmul.f32 %v10071, 0.044715
    %v10074 = vadd.f32 %v10062, %v10072
    %v10075 = vadd.f32 %v10065, %v10073
    %v10076 = vmul.f32 %v10074, 0.7978846
    %v10077 = vmul.f32 %v10075, 0.7978846
    %v10078 = vtanh.pop %v10076
    %v10079 = vtanh.pop %v10077
    %v10080 = vadd.f32 %v10078, 1.0
    %v10081 = vadd.f32 %v10079, 1.0
    %v10082 = vmul.f32 %v10080, 0.5
    %v10083 = vmul.f32 %v10081, 0.5
    %v10084 = vmul.f32 %v10062, %v10082
    %v10085 = vmul.f32 %v10065, %v10083
    %v10086 = vpack.c.bf16 %v10085, %v10084
    %v10087 = vld [vmem:[#allocation6] sm:$0xff]
    %v10088 = vld [vmem:[#allocation6 + $0x8] sm:$0xff]
    %v10089 = vld [vmem:[#allocation6 + $0x10] sm:$0xff]
    %v10090 = vld [vmem:[#allocation6 + $0x18] sm:$0xff]
    %v10091 = vld [vmem:[#allocation6 + $0x20] sm:$0xff]
    %v10092 = vld [vmem:[#allocation6 + $0x28] sm:$0xff]
    %v10093 = vld [vmem:[#allocation6 + $0x30] sm:$0xff]
    %v10094 = vld [vmem:[#allocation6 + $0x38] sm:$0xff]
    %v10095 = vld [vmem:[#allocation6 + $0x40] sm:$0xff]
    %v10096 = vld [vmem:[#allocation6 + $0x48] sm:$0xff]
    %v10097 = vld [vmem:[#allocation6 + $0x50] sm:$0xff]
    %v10098 = vld [vmem:[#allocation6 + $0x58] sm:$0xff]
    %v10099 = vld [vmem:[#allocation6 + $0x60] sm:$0xff]
    %v10100 = vld [vmem:[#allocation6 + $0x68] sm:$0xff]
    %v10101 = vld [vmem:[#allocation6 + $0x70] sm:$0xff]
    %v10102 = vld [vmem:[#allocation6 + $0x78] sm:$0xff]
    %v10103 = vld [vmem:[#allocation6 + $0x80] sm:$0xff]
    %v10104 = vld [vmem:[#allocation6 + $0x88] sm:$0xff]
    %v10105 = vld [vmem:[#allocation6 + $0x90] sm:$0xff]
    %v10106 = vld [vmem:[#allocation6 + $0x98] sm:$0xff]
    %v10107 = vld [vmem:[#allocation6 + $0xa0] sm:$0xff]
    %v10108 = vld [vmem:[#allocation6 + $0xa8] sm:$0xff]
    %v10109 = vld [vmem:[#allocation6 + $0xb0] sm:$0xff]
    %v10110 = vld [vmem:[#allocation6 + $0xb8] sm:$0xff]
    %v10111 = vld [vmem:[#allocation6 + $0xc0] sm:$0xff]
    %v10112 = vld [vmem:[#allocation6 + $0xc8] sm:$0xff]
    %v10113 = vld [vmem:[#allocation6 + $0xd0] sm:$0xff]
    %v10114 = vld [vmem:[#allocation6 + $0xd8] sm:$0xff]
    %v10115 = vld [vmem:[#allocation6 + $0xe0] sm:$0xff]
    %v10116 = vld [vmem:[#allocation6 + $0xe8] sm:$0xff]
    %v10117 = vld [vmem:[#allocation6 + $0xf0] sm:$0xff]
    %v10118 = vld [vmem:[#allocation6 + $0xf8] sm:$0xff]
    %v10119 = vld [vmem:[#allocation29] sm:$0xf]
    %v10121 = vlaneseq
    %v10122 = vshrl.u32 %v10121, 7
    %v10123 = vsub.s32 0, %v10122
    %v10124 = vrot.slane %v10119, %v10123
    %v10125 = vlaneseq
    %v10126 = vshrl.u32 %v10125, 7
    %v10127 = vsub.s32 1, %v10126
    %v10128 = vrot.slane %v10119, %v10127
    %v10129 = vlaneseq
    %v10130 = vshrl.u32 %v10129, 7
    %v10131 = vsub.s32 2, %v10130
    %v10132 = vrot.slane %v10119, %v10131
    %v10133 = vlaneseq
    %v10134 = vshrl.u32 %v10133, 7
    %v10135 = vsub.s32 3, %v10134
    %v10136 = vrot.slane %v10119, %v10135
    %10141 = vmatprep.subr.bf16.mxu0 %v10088
    %10142 = vmatpush1.bf16.msra.mxu0 %v10087
    %10143 = vmatprep.subr.bf16.mxu0 %v10092
    %10144 = vmatpush1.bf16.msra.mxu0 %v10091
    %10145 = vmatprep.subr.bf16.mxu0 %v10096
    %10146 = vmatpush1.bf16.msra.mxu0 %v10095
    %10147 = vmatprep.subr.bf16.mxu0 %v10100
    %10148 = vmatpush1.bf16.msra.mxu0 %v10099
    %10149 = vmatprep.subr.bf16.mxu0 %v10104
    %10150 = vmatpush1.bf16.msra.mxu0 %v10103
    %10151 = vmatprep.subr.bf16.mxu0 %v10108
    %10152 = vmatpush1.bf16.msra.mxu0 %v10107
    %10153 = vmatprep.subr.bf16.mxu0 %v10112
    %10154 = vmatpush1.bf16.msra.mxu0 %v10111
    %10155 = vmatprep.subr.bf16.mxu0 %v10116
    %10156 = vmatpush1.bf16.msra.mxu0 %v10115
    %10157 = vmatprep.subr.bf16.mxu0 0
    %10158 = vmatpush1.bf16.msra.mxu0 0
    %10159 = vmatprep.subr.bf16.mxu0 0
    %10160 = vmatpush1.bf16.msra.mxu0 0
    %10161 = vmatprep.subr.bf16.mxu0 0
    %10162 = vmatpush1.bf16.msra.mxu0 0
    %10163 = vmatprep.subr.bf16.mxu0 0
    %10164 = vmatpush1.bf16.msra.mxu0 0
    %10165 = vmatprep.subr.bf16.mxu0 0
    %10166 = vmatpush1.bf16.msra.mxu0 0
    %10167 = vmatprep.subr.bf16.mxu0 0
    %10168 = vmatpush1.bf16.msra.mxu0 0
    %10169 = vmatprep.subr.bf16.mxu0 0
    %10170 = vmatpush1.bf16.msra.mxu0 0
    %10171 = vmatprep.subr.bf16.mxu0 0
    %10172 = vmatpush1.bf16.msra.mxu0 0
    %10173 = vmatprep.mubr.bf16.mxu0 0
    %10174 = vmatmul.mubr.bf16.gmra.mrb[0].mxu0 %v10086
    %v10175 = vpop.f32.mrb[0].mxu0
    %v10176 = vadd.f32 %v10124, %v10175
    %v10177 = vpop.f32.mrb[0].mxu0
    %v10178 = vadd.f32 %v10128, %v10177
    %v10179 = vpop.f32.mrb[0].mxu0
    %v10180 = vadd.f32 %v10124, %v10179
    %v10181 = vpop.f32.mrb[0].mxu0
    %v10182 = vadd.f32 %v10128, %v10181
    %10183 = vdwg.mxu0
    %10184 = vmatprep.subr.bf16.mxu0 %v10090
    %10185 = vmatpush1.bf16.msra.mxu0 %v10089
    %10186 = vmatprep.subr.bf16.mxu0 %v10094
    %10187 = vmatpush1.bf16.msra.mxu0 %v10093
    %10188 = vmatprep.subr.bf16.mxu0 %v10098
    %10189 = vmatpush1.bf16.msra.mxu0 %v10097
    %10190 = vmatprep.subr.bf16.mxu0 %v10102
    %10191 = vmatpush1.bf16.msra.mxu0 %v10101
    %10192 = vmatprep.subr.bf16.mxu0 %v10106
    %10193 = vmatpush1.bf16.msra.mxu0 %v10105
    %10194 = vmatprep.subr.bf16.mxu0 %v10110
    %10195 = vmatpush1.bf16.msra.mxu0 %v10109
    %10196 = vmatprep.subr.bf16.mxu0 %v10114
    %10197 = vmatpush1.bf16.msra.mxu0 %v10113
    %10198 = vmatprep.subr.bf16.mxu0 %v10118
    %10199 = vmatpush1.bf16.msra.mxu0 %v10117
    %10200 = vmatprep.subr.bf16.mxu0 0
    %10201 = vmatpush1.bf16.msra.mxu0 0
    %10202 = vmatprep.subr.bf16.mxu0 0
    %10203 = vmatpush1.bf16.msra.mxu0 0
    %10204 = vmatprep.subr.bf16.mxu0 0
    %10205 = vmatpush1.bf16.msra.mxu0 0
    %10206 = vmatprep.subr.bf16.mxu0 0
    %10207 = vmatpush1.bf16.msra.mxu0 0
    %10208 = vmatprep.subr.bf16.mxu0 0
    %10209 = vmatpush1.bf16.msra.mxu0 0
    %10210 = vmatprep.subr.bf16.mxu0 0
    %10211 = vmatpush1.bf16.msra.mxu0 0
    %10212 = vmatprep.subr.bf16.mxu0 0
    %10213 = vmatpush1.bf16.msra.mxu0 0
    %10214 = vmatprep.subr.bf16.mxu0 0
    %10215 = vmatpush1.bf16.msra.mxu0 0
    %10216 = vmatprep.mubr.bf16.mxu0 0
    %10217 = vmatmul.mubr.bf16.gmra.mrb[0].mxu0 %v10086
    %v10218 = vpop.f32.mrb[0].mxu0
    %v10219 = vadd.f32 %v10132, %v10218
    %v10220 = vpop.f32.mrb[0].mxu0
    %v10221 = vadd.f32 %v10136, %v10220
    %v10222 = vpop.f32.mrb[0].mxu0
    %v10223 = vadd.f32 %v10132, %v10222
    %v10224 = vpop.f32.mrb[0].mxu0
    %v10225 = vadd.f32 %v10136, %v10224
    %10226 = vdwg.mxu0
    %v10227 = vadd.f32 %v9823, %v10176
    %v10228 = vadd.f32 %v9824, %v10178
    %v10229 = vadd.f32 %v9825, %v10219
    %v10230 = vadd.f32 %v9826, %v10221
    %v10231 = vadd.f32 %v9827, %v10180
    %v10232 = vadd.f32 %v9828, %v10182
    %v10233 = vadd.f32 %v9829, %v10223
    %v10234 = vadd.f32 %v9830, %v10225
    %10235 = vst [vmem:[#allocation32] sm:$0xff] %v10227
    %10236 = vst [vmem:[#allocation32 + $0x8] sm:$0xff] %v10228
    %10237 = vst [vmem:[#allocation32 + $0x10] sm:$0xff] %v10229
    %10238 = vst [vmem:[#allocation32 + $0x18] sm:$0xff] %v10230
    %10239 = vst [vmem:[#allocation32 + $0x20] sm:$0xff] %v10231
    %10240 = vst [vmem:[#allocation32 + $0x28] sm:$0xff] %v10232
    %10241 = vst [vmem:[#allocation32 + $0x30] sm:$0xff] %v10233
    %10242 = vst [vmem:[#allocation32 + $0x38] sm:$0xff] %v10234
    %s10243 = smul.u32 4, 64
    %s10244 = smul.u32 %s10243, 1
    %s10245 = sshll.u32 %s10244, 4
    %10246 = dma.done %s354, %s10245
    %v10247 = vpack.c.bf16 %v10231, %v10227
    %v10248 = vpack.c.bf16 %v10232, %v10228
    %v10249 = vpack.c.bf16 %v10233, %v10229
    %v10250 = vpack.c.bf16 %v10234, %v10230
    %v10251 = vld [vmem:[#allocation7] sm:$0xff]
    %v10252 = vld [vmem:[#allocation7 + $0x8] sm:$0xff]
    %v10253 = vld [vmem:[#allocation7 + $0x10] sm:$0xff]
    %v10254 = vld [vmem:[#allocation7 + $0x18] sm:$0xff]
    %v10255 = vld [vmem:[#allocation7 + $0x20] sm:$0xff]
    %v10256 = vld [vmem:[#allocation7 + $0x28] sm:$0xff]
    %v10257 = vld [vmem:[#allocation7 + $0x30] sm:$0xff]
    %v10258 = vld [vmem:[#allocation7 + $0x38] sm:$0xff]
    %v10259 = vld [vmem:[#allocation7 + $0x40] sm:$0xff]
    %v10260 = vld [vmem:[#allocation7 + $0x48] sm:$0xff]
    %v10261 = vld [vmem:[#allocation7 + $0x50] sm:$0xff]
    %v10262 = vld [vmem:[#allocation7 + $0x58] sm:$0xff]
    %v10263 = vld [vmem:[#allocation7 + $0x60] sm:$0xff]
    %v10264 = vld [vmem:[#allocation7 + $0x68] sm:$0xff]
    %v10265 = vld [vmem:[#allocation7 + $0x70] sm:$0xff]
    %v10266 = vld [vmem:[#allocation7 + $0x78] sm:$0xff]
    %v10267 = vld [vmem:[#allocation7 + $0x80] sm:$0xff]
    %v10268 = vld [vmem:[#allocation7 + $0x88] sm:$0xff]
    %v10269 = vld [vmem:[#allocation7 + $0x90] sm:$0xff]
    %v10270 = vld [vmem:[#allocation7 + $0x98] sm:$0xff]
    %v10271 = vld [vmem:[#allocation7 + $0xa0] sm:$0xff]
    %v10272 = vld [vmem:[#allocation7 + $0xa8] sm:$0xff]
    %v10273 = vld [vmem:[#allocation7 + $0xb0] sm:$0xff]
    %v10274 = vld [vmem:[#allocation7 + $0xb8] sm:$0xff]
    %v10275 = vld [vmem:[#allocation7 + $0xc0] sm:$0xff]
    %v10276 = vld [vmem:[#allocation7 + $0xc8] sm:$0xff]
    %v10277 = vld [vmem:[#allocation7 + $0xd0] sm:$0xff]
    %v10278 = vld [vmem:[#allocation7 + $0xd8] sm:$0xff]
    %v10279 = vld [vmem:[#allocation7 + $0xe0] sm:$0xff]
    %v10280 = vld [vmem:[#allocation7 + $0xe8] sm:$0xff]
    %v10281 = vld [vmem:[#allocation7 + $0xf0] sm:$0xff]
    %v10282 = vld [vmem:[#allocation7 + $0xf8] sm:$0xff]
    %10283 = vmatprep.subr.bf16.mxu0 0
    %10284 = vmatpush1.bf16.msra.mxu0 %v10251
    %10285 = vmatprep.subr.bf16.mxu0 0
    %10286 = vmatpush1.bf16.msra.mxu0 %v10252
    %10287 = vmatprep.subr.bf16.mxu0 0
    %10288 = vmatpush1.bf16.msra.mxu0 %v10253
    %10289 = vmatprep.subr.bf16.mxu0 0
    %10290 = vmatpush1.bf16.msra.mxu0 %v10254
    %10291 = vmatprep.subr.bf16.mxu0 0
    %10292 = vmatpush1.bf16.msra.mxu0 %v10255
    %10293 = vmatprep.subr.bf16.mxu0 0
    %10294 = vmatpush1.bf16.msra.mxu0 %v10256
    %10295 = vmatprep.subr.bf16.mxu0 0
    %10296 = vmatpush1.bf16.msra.mxu0 %v10257
    %10297 = vmatprep.subr.bf16.mxu0 0
    %10298 = vmatpush1.bf16.msra.mxu0 %v10258
    %10299 = vmatprep.subr.bf16.mxu0 0
    %10300 = vmatpush1.bf16.msra.mxu0 %v10259
    %10301 = vmatprep.subr.bf16.mxu0 0
    %10302 = vmatpush1.bf16.msra.mxu0 %v10260
    %10303 = vmatprep.subr.bf16.mxu0 0
    %10304 = vmatpush1.bf16.msra.mxu0 %v10261
    %10305 = vmatprep.subr.bf16.mxu0 0
    %10306 = vmatpush1.bf16.msra.mxu0 %v10262
    %10307 = vmatprep.subr.bf16.mxu0 0
    %10308 = vmatpush1.bf16.msra.mxu0 %v10263
    %10309 = vmatprep.subr.bf16.mxu0 0
    %10310 = vmatpush1.bf16.msra.mxu0 %v10264
    %10311 = vmatprep.subr.bf16.mxu0 0
    %10312 = vmatpush1.bf16.msra.mxu0 %v10265
    %10313 = vmatprep.subr.bf16.mxu0 0
    %10314 = vmatpush1.bf16.msra.mxu0 %v10266
    %10315 = vmatprep.mubr.bf16.mxu0 %v10248
    %10316 = vmatmul.mubr.bf16.gmra.mrb[0].mxu0 %v10247
    %v10317 = vpop.f32.mrb[0].mxu0
    %v10318 = vadd.f32 0.0, %v10317
    %v10319 = vpop.f32.mrb[0].mxu0
    %v10320 = vpop.f32.mrb[0].mxu0
    %v10321 = vadd.f32 0.0, %v10320
    %v10322 = vpop.f32.mrb[0].mxu0
    %10323 = vdwg.mxu0
    %10324 = vmatprep.subr.bf16.mxu0 0
    %10325 = vmatpush1.bf16.msra.mxu0 %v10267
    %10326 = vmatprep.subr.bf16.mxu0 0
    %10327 = vmatpush1.bf16.msra.mxu0 %v10268
    %10328 = vmatprep.subr.bf16.mxu0 0
    %10329 = vmatpush1.bf16.msra.mxu0 %v10269
    %10330 = vmatprep.subr.bf16.mxu0 0
    %10331 = vmatpush1.bf16.msra.mxu0 %v10270
    %10332 = vmatprep.subr.bf16.mxu0 0
    %10333 = vmatpush1.bf16.msra.mxu0 %v10271
    %10334 = vmatprep.subr.bf16.mxu0 0
    %10335 = vmatpush1.bf16.msra.mxu0 %v10272
    %10336 = vmatprep.subr.bf16.mxu0 0
    %10337 = vmatpush1.bf16.msra.mxu0 %v10273
    %10338 = vmatprep.subr.bf16.mxu0 0
    %10339 = vmatpush1.bf16.msra.mxu0 %v10274
    %10340 = vmatprep.subr.bf16.mxu0 0
    %10341 = vmatpush1.bf16.msra.mxu0 %v10275
    %10342 = vmatprep.subr.bf16.mxu0 0
    %10343 = vmatpush1.bf16.msra.mxu0 %v10276
    %10344 = vmatprep.subr.bf16.mxu0 0
    %10345 = vmatpush1.bf16.msra.mxu0 %v10277
    %10346 = vmatprep.subr.bf16.mxu0 0
    %10347 = vmatpush1.bf16.msra.mxu0 %v10278
    %10348 = vmatprep.subr.bf16.mxu0 0
    %10349 = vmatpush1.bf16.msra.mxu0 %v10279
    %10350 = vmatprep.subr.bf16.mxu0 0
    %10351 = vmatpush1.bf16.msra.mxu0 %v10280
    %10352 = vmatprep.subr.bf16.mxu0 0
    %10353 = vmatpush1.bf16.msra.mxu0 %v10281
    %10354 = vmatprep.subr.bf16.mxu0 0
    %10355 = vmatpush1.bf16.msra.mxu0 %v10282
    %10356 = vmatprep.mubr.bf16.mxu0 %v10250
    %10357 = vmatmul.mubr.bf16.gmra.mrb[0].mxu0 %v10249
    %v10358 = vpop.f32.mrb[0].mxu0
    %v10359 = vadd.f32 %v10318, %v10358
    %v10360 = vpop.f32.mrb[0].mxu0
    %v10361 = vpop.f32.mrb[0].mxu0
    %v10362 = vadd.f32 %v10321, %v10361
    %v10363 = vpop.f32.mrb[0].mxu0
    %10364 = vdwg.mxu0
    %10365 = vst [vmem:[%s23] sm:$0xff] %v10359
    %10366 = vst [vmem:[%s23 + $0x8] sm:$0xff] %v10362
    %v10367 = vld [vmem:[#allocation17] sm:$0x3]
    %v10368 = vld [vmem:[#allocation30] sm:$0x1]
    %v10370 = vlaneseq
    %v10371 = vshrl.u32 %v10370, 7
    %v10372 = vsub.s32 0, %v10371
    %v10373 = vrot.slane %v10368, %v10372
    %v10376 = vsel %vm578, %v10367, 0
    %10378 = vmatprep.subr.mxu0 0.0
    %10379 = vmatpush1.msra.mxu0 %v10359
    %10380 = vmatprep.subr.mxu0 0.0
    %10381 = vmatpush1.msra.mxu0 %v10362
    %10382 = vmatprep.subr.mxu0 0.0
    %10383 = vmatpush1.msra.mxu0 0.0
    %10384 = vmatprep.subr.mxu0 0.0
    %10385 = vmatpush1.msra.mxu0 0.0
    %10386 = vmatprep.subr.mxu0 0.0
    %10387 = vmatpush1.msra.mxu0 0.0
    %10388 = vmatprep.subr.mxu0 0.0
    %10389 = vmatpush1.msra.mxu0 0.0
    %10390 = vmatprep.subr.mxu0 0.0
    %10391 = vmatpush1.msra.mxu0 0.0
    %10392 = vmatprep.subr.mxu0 0.0
    %10393 = vmatpush1.msra.mxu0 0.0
    %10394 = vmatprep.subr.mxu0 0.0
    %10395 = vmatpush1.msra.mxu0 0.0
    %10396 = vmatprep.subr.mxu0 0.0
    %10397 = vmatpush1.msra.mxu0 0.0
    %10398 = vmatprep.subr.mxu0 0.0
    %10399 = vmatpush1.msra.mxu0 0.0
    %10400 = vmatprep.subr.mxu0 0.0
    %10401 = vmatpush1.msra.mxu0 0.0
    %10402 = vmatprep.subr.mxu0 0.0
    %10403 = vmatpush1.msra.mxu0 0.0
    %10404 = vmatprep.subr.mxu0 0.0
    %10405 = vmatpush1.msra.mxu0 0.0
    %10406 = vmatprep.subr.mxu0 0.0
    %10407 = vmatpush1.msra.mxu0 0.0
    %10408 = vmatprep.subr.mxu0 0.0
    %10409 = vmatpush1.msra.mxu0 0.0
    %10410 = vmatprep.subr.mxu0 0.0
    %10411 = vmatpush1.msra.mxu0 0.0
    %10412 = vmatprep.subr.mxu0 0.0
    %10413 = vmatpush1.msra.mxu0 0.0
    %10414 = vmatprep.subr.mxu0 0.0
    %10415 = vmatpush1.msra.mxu0 0.0
    %10416 = vmatprep.subr.mxu0 0.0
    %10417 = vmatpush1.msra.mxu0 0.0
    %10418 = vmatprep.subr.mxu0 0.0
    %10419 = vmatpush1.msra.mxu0 0.0
    %10420 = vmatprep.subr.mxu0 0.0
    %10421 = vmatpush1.msra.mxu0 0.0
    %10422 = vmatprep.subr.mxu0 0.0
    %10423 = vmatpush1.msra.mxu0 0.0
    %10424 = vmatprep.subr.mxu0 0.0
    %10425 = vmatpush1.msra.mxu0 0.0
    %10426 = vmatprep.subr.mxu0 0.0
    %10427 = vmatpush1.msra.mxu0 0.0
    %10428 = vmatprep.subr.mxu0 0.0
    %10429 = vmatpush1.msra.mxu0 0.0
    %10430 = vmatprep.subr.mxu0 0.0
    %10431 = vmatpush1.msra.mxu0 0.0
    %10432 = vmatprep.subr.mxu0 0.0
    %10433 = vmatpush1.msra.mxu0 0.0
    %10434 = vmatprep.subr.mxu0 0.0
    %10435 = vmatpush1.msra.mxu0 0.0
    %10436 = vmatprep.subr.mxu0 0.0
    %10437 = vmatpush1.msra.mxu0 0.0
    %10438 = vmatprep.subr.mxu0 0.0
    %10439 = vmatpush1.msra.mxu0 0.0
    %10440 = vmatprep.subr.mxu0 0.0
    %10441 = vmatpush1.msra.mxu0 0.0
    %10442 = vmatprep.mubr.f32.mxu0 0.0
    %10443 = vmatmul.mubr.f32.gmra.mrb[0].mxu0 %v10376
    %v10444 = vpop.f32.mrb[0].mxu0
    %v10445 = vadd.f32 %v10373, %v10444
    %v10446 = vpop.f32.mrb[0].mxu0
    %10447 = vdwg.mxu0
    %10448 = vst [vmem:[#allocation33] sm:$0x3] %v10445
    // Predicated region
    $region134: #{deep_taad_forward.1} parent=1 // pred_check
      _
    $region135: #{deep_taad_forward.1} parent=1 // pred_check_branch
      %10450 = sbr.rel (0) target = $region137
    $region136: #{deep_taad_forward.1} parent=1 // pred_region
      %s10452 = ssub.s32 1024, 1024
      %10453 = vsyncadd [#allocation11], %s10452
      %s10454 = sshll.u32 [#allocation32], 4
      %s10455 = int_to_ptr.vmem [resolvable:$true] %s10454
      %10460 = dma.vmem_to_hbm [thread:$0]  %s10455, 1024, %s22, [#allocation11], 512, 512, 32
    $region137: #{deep_taad_forward.1} parent=1 // pred_fallthru
      _
    // Predicated region
    $region138: #{deep_taad_forward.1} parent=1 // pred_check
      _
    $region139: #{deep_taad_forward.1} parent=1 // pred_check_branch
      %10462 = sbr.rel (0) target = $region141
    $region140: #{deep_taad_forward.1} parent=1 // pred_region
      _
    $region141: #{deep_taad_forward.1} parent=1 // pred_fallthru
      _
    // Predicated region
    $region142: #{deep_taad_forward.1} parent=1 // pred_check
      _
    $region143: #{deep_taad_forward.1} parent=1 // pred_check_branch
      %10464 = sbr.rel (0) target = $region145
    $region144: #{deep_taad_forward.1} parent=1 // pred_region
      %s10466 = ssub.s32 32, 32
      %10467 = vsyncadd [#allocation34], %s10466
      %s10469 = sshll.u32 [#allocation33], 4
      %s10470 = int_to_ptr.vmem [resolvable:$true] %s10469
      %10472 = dma.vmem_to_hbm [thread:$0]  %s10470, 32, %s24, [#allocation34]
    $region145: #{deep_taad_forward.1} parent=1 // pred_fallthru
      _
    // Predicated region
    $region146: #{deep_taad_forward.1} parent=1 // pred_check
      _
    $region147: #{deep_taad_forward.1} parent=1 // pred_check_branch
      %10474 = sbr.rel (0) target = $region149
    $region148: #{deep_taad_forward.1} parent=1 // pred_region
      %10475 = dma.done [#allocation11], 1024
    $region149: #{deep_taad_forward.1} parent=1 // pred_fallthru
      _
    // Predicated region
    $region150: #{deep_taad_forward.1} parent=1 // pred_check
      _
    $region151: #{deep_taad_forward.1} parent=1 // pred_check_branch
      %10477 = sbr.rel (0) target = $region153
    $region152: #{deep_taad_forward.1} parent=1 // pred_region
      _
    $region153: #{deep_taad_forward.1} parent=1 // pred_fallthru
      _
    // Predicated region
    $region154: #{deep_taad_forward.1} parent=1 // pred_check
      _
    $region155: #{deep_taad_forward.1} parent=1 // pred_check_branch
      %10479 = sbr.rel (0) target = $region157
    $region156: #{deep_taad_forward.1} parent=1 // pred_region
      %10480 = dma.done [#allocation34], 32
    $region157: #{deep_taad_forward.1} parent=1 // pred_fallthru
      _
    %10481 = vsyncpa [#allocation10], 1
    %10482 = vsyncpa [#allocation13], 1
    %10483 = vsyncpa [#allocation16], 1
    %10484 = vsyncpa [#allocation19], 1
    %10485 = vsyncpa [#allocation22], 1
    %10486 = vsyncpa [#allocation25], 1
    %10487 = vsyncpa [#allocation28], 1
    %10488 = vsyncpa [#allocation31], 1
    %10489 = vsyncpa [#allocation11], 1
    %10490 = vsyncpa [#allocation34], 1
  %10491 = vsyncmov [#allocation8]
  %s10492 = vpop.sfrf %10491
  %p10493 = scmp.eq.s32.totalorder %s10492, 0
  %p10494 = pneg %p10493
  %10496 = shalt.err (%p10494)
  %s10497 = scalar_lea.sflag [#allocation8], 1
  %10498 = vsyncmov %s10497
  %s10499 = vpop.sfrf %10498
  %p10500 = scmp.eq.s32.totalorder %s10499, 0
  %p10501 = pneg %p10500
  %10503 = shalt.err (%p10501)
  %s10504 = scalar_lea.sflag [#allocation8], 2
  %10505 = vsyncmov %s10504
  %s10506 = vpop.sfrf %10505
  %p10507 = scmp.eq.s32.totalorder %s10506, 0
  %p10508 = pneg %p10507
  %10510 = shalt.err (%p10508)
  %s10511 = scalar_lea.sflag [#allocation8], 3
  %10512 = vsyncmov %s10511
  %s10513 = vpop.sfrf %10512
  %p10514 = scmp.eq.s32.totalorder %s10513, 0
  %p10515 = pneg %p10514
  %10517 = shalt.err (%p10515)
  %s10518 = scalar_lea.sflag [#allocation8], 4
  %10519 = vsyncmov %s10518
  %s10520 = vpop.sfrf %10519
  %p10521 = scmp.eq.s32.totalorder %s10520, 0
  %p10522 = pneg %p10521
  %10524 = shalt.err (%p10522)

</llo_original>
